<compile_context>
chip_gen: v5e
topology: v5e:2x2
jax: 0.10.0
libtpu: 0.0.40
codegen_flags: <defaults>
</compile_context>

<pallas_src>
import numpy as np
import jax
import jax.numpy as jnp
from jax.experimental import pallas as pl
from jax.experimental.pallas import tpu as pltpu

THRESHOLD = 0.5  # RRL binarization threshold for rule weights

# ----------------------- model configuration (small, synthetic) ---------------
ITEM_NUM = 10
USER_NUM = 12
EMB_DIM = 8
DB_ENCS = [(3, 5), (4, 4)]                  # (discrete_flen, continuous_flen) per bottom net
BOTTOM_STRUCTURES = [[3, 4, 3, 2], [3, 4]]  # "3@4@3@2" and "3@4"
TOP_STRUCTURE = [4, 3]                      # "4@3"
BATCH = 8


def next_pow2(n):
    p = 1
    while p < n:
        p *= 2
    return p


# ============================== parameters ====================================

def binarize_w(w):
    # RRL: Binarize(W - THRESHOLD) -> hard 0/1 weights for the binarized path
    return (w > THRESHOLD).astype(jnp.float32)


def make_params(key):
    params = {}
    key, k1, k2 = jax.random.split(key, 3)
    item_emb = jax.random.normal(k1, (ITEM_NUM + 1, EMB_DIM), jnp.float32).at[0].set(0.0)
    user_emb = jax.random.normal(k2, (USER_NUM + 1, EMB_DIM), jnp.float32).at[0].set(0.0)
    params['item_emb'] = item_emb
    params['user_emb'] = user_emb

    bottoms = []
    bottom_total = 0
    for (disc, cont), struct in zip(DB_ENCS, BOTTOM_STRUCTURES):
        p = {'disc': disc, 'cont': cont}
        n1 = struct[0]
        key, k = jax.random.split(key)
        p['cl'] = jax.random.normal(k, (n1, cont), jnp.float32)   # BinarizeLayer thresholds
        layer_out_dims = [disc + 2 * n1 * cont]                   # use_not=False
        prev = layer_out_dims[0]
        unions = []
        for idx, n in enumerate(struct[1:]):
            i_torch = idx + 2                       # torch layer index in dim_list
            num = prev
            if i_torch >= 4:
                num += layer_out_dims[-2]
            key, ka, kb = jax.random.split(key, 3)
            wc = jax.random.uniform(ka, (n, num), jnp.float32)
            wd = jax.random.uniform(kb, (n, num), jnp.float32)
            unions.append((wc, wd))
            prev = 2 * n
            layer_out_dims.append(prev)
        p['unions'] = unions
        bottoms.append(p)
        bottom_total += prev
    params['bottoms'] = bottoms

    prev = bottom_total
    layer_dim_list = [prev]
    top_unions = []
    for i, n in enumerate(TOP_STRUCTURE):
        num = prev
        if i >= 1:
            num += layer_dim_list[-2]
        key, ka, kb = jax.random.split(key, 3)
        wc = jax.random.uniform(ka, (n, num), jnp.float32)
        wd = jax.random.uniform(kb, (n, num), jnp.float32)
        top_unions.append((wc, wd))
        prev = 2 * n
        layer_dim_list.append(prev)
    params['top_unions'] = top_unions
    top_out = prev

    # TODO(synk): weight_net definition is not in the provided source; assumed a
    # single nn.Linear(2*EMB_DIM -> top_out_dim) with uniform init.
    bound = 1.0 / float(np.sqrt(2 * EMB_DIM))
    key, ka, kb, kc, kd = jax.random.split(key, 5)
    params['w0'] = jax.random.uniform(ka, (top_out, 2 * EMB_DIM), jnp.float32, -bound, bound)
    params['b0'] = jax.random.uniform(kb, (1, top_out), jnp.float32, -bound, bound)
    params['w1'] = jax.random.uniform(kc, (top_out, 2 * EMB_DIM), jnp.float32, -bound, bound)
    params['b1'] = jax.random.uniform(kd, (1, top_out), jnp.float32, -bound, bound)
    return params


# ================ static kernel-input preparation (hoisted, done once) ========

def _first_layer_perm(disc, cont, n1):
    """Column permutation for the first union layer so that the binarized
    features can be produced in-kernel with ONE full-width compare.
    New h layout: [x_disc | binv(k*cont+c) | 1-binv(k*cont+c)];
    original torch layout was c*n1+k.  perm[new] = old."""
    perm = list(range(disc))
    for k in range(n1):
        for c in range(cont):
            perm.append(disc + c * n1 + k)
    base = disc + cont * n1
    for k in range(n1):
        for c in range(cont):
            perm.append(base + c * n1 + k)
    return np.array(perm, dtype=np.int64)


def prepare_static(params):
    """Pack every static tensor (thresholds, rule weights + their >0.5 binarized
    versions split at skip-connection block boundaries, weight_net) into ONE
    tile-aligned [R, 128] f32 slab, with a Python offset table consumed at
    trace time.  One HBM->VMEM DMA at run time instead of ~29."""
    TILE_R, LANES = 8, 128
    pieces = []
    cur_rows = [0]

    def add(arr):
        arr = np.asarray(arr, np.float32)
        n, w = arr.shape
        assert w <= LANES
        rows = ((n + TILE_R - 1) // TILE_R) * TILE_R
        buf = np.zeros((rows, LANES), np.float32)
        buf[:n, :w] = arr
        pieces.append(buf)
        off = cur_rows[0]
        cur_rows[0] += rows
        return off

    def add_union_layer(wc, wd, block_real, perm=None):
        wc = np.asarray(wc, np.float32)
        wd = np.asarray(wd, np.float32)
        wcb = (wc > THRESHOLD).astype(np.float32)
        wdb = (wd > THRESHOLD).astype(np.float32)
        if perm is not None:
            wc, wd, wcb, wdb = (m[:, perm] for m in (wc, wd, wcb, wdb))
        n = wc.shape[0]
        assert sum(block_real) == wc.shape[1]
        layer = {'n': n, 'out_real': 2 * n, 'out_pad': next_pow2(2 * n), 'blocks': []}
        col = 0
        for wr in block_real:
            blk = {'w_pad': next_pow2(wr),
                   'wc':  add(wc[:,  col:col + wr]),
                   'wd':  add(wd[:,  col:col + wr]),
                   'wcb': add(wcb[:, col:col + wr]),
                   'wdb': add(wdb[:, col:col + wr])}
            layer['blocks'].append(blk)
            col += wr
        return layer

    meta = {'bottoms': [], 'top_layers': []}
    x_off = 0
    for p in params['bottoms']:
        disc, cont = p['disc'], p['cont']
        cl = np.asarray(p['cl'], np.float32)            # [n1, cont]
        n1 = cl.shape[0]
        bm = {'disc': disc, 'cont': cont, 'n1': n1, 'x_off': x_off}
        x_off += disc + cont
        bm['thr_off'] = add(cl.reshape(1, n1 * cont))   # k*cont+c ordering
        h_real = disc + 2 * cont * n1
        bm['h_pad'] = next_pow2(h_real)
        perm = _first_layer_perm(disc, cont, n1)
        out_hist = []
        layers = []
        for j, (wc, wd) in enumerate(p['unions']):
            if j == 0:
                block_real, use_perm = [h_real], perm
            elif j == 1:
                block_real, use_perm = [out_hist[0]], None
            else:
                block_real, use_perm = [out_hist[j - 1], out_hist[j - 2]], None
            layer = add_union_layer(wc, wd, block_real, perm=use_perm)
            out_hist.append(layer['out_real'])
            layers.append(layer)
        bm['layers'] = layers
        bm['out_real'] = out_hist[-1]
        meta['bottoms'].append(bm)

    bc_real = sum(bm['out_real'] for bm in meta['bottoms'])
    meta['bc_real'] = bc_real
    meta['bc_pad'] = next_pow2(bc_real)
    top_hist = []
    for i, (wc, wd) in enumerate(params['top_unions']):
        if i == 0:
            block_real = [bc_real]
        elif i == 1:
            block_real = [top_hist[0], bc_real]
        else:
            block_real = [top_hist[i - 1], top_hist[i - 2]]
        layer = add_union_layer(wc, wd, block_real)
        top_hist.append(layer['out_real'])
        meta['top_layers'].append(layer)

    w0 = np.asarray(params['w0'], np.float32)
    w1 = np.asarray(params['w1'], np.float32)
    b0 = np.asarray(params['b0'], np.float32)
    b1 = np.asarray(params['b1'], np.float32)
    top_out = w0.shape[0]
    assert top_hist[-1] == top_out
    meta['top_out'] = top_out
    meta['emb2'] = w0.shape[1]
    meta['wnet_off'] = add(np.concatenate([w0, w1], axis=0))   # [2*top_out, 2E]
    meta['bnet_off'] = add(np.concatenate([b0, b1], axis=1))   # [1, 2*top_out]
    meta['ui_off'] = x_off
    meta['xin_w'] = x_off + meta['emb2']

    slab = jnp.asarray(np.concatenate(pieces, axis=0))
    return slab, meta


# ============================== fused Pallas kernel ===========================

def make_fused_forward(params, batch):
    slab, meta = prepare_static(params)
    top_out = meta['top_out']
    emb2 = meta['emb2']
    ui_off = meta['ui_off']

    def kernel(xin_ref, slab_ref, out_ref):
        xin = xin_ref[...]                                   # [B, 32]

        def view(off, n, w):
            # Static slab window -> cheap masked vld, no runtime index math.
            return slab_ref[off:off + n, 0:w]

        def tree_prod(t):
            # Product over the lane axis of a [B, W] tile (W power of two) via
            # log2(W) halving multiplies (Mosaic has no lane prod-reduce).
            w = t.shape[-1]
            while w > 1:
                w //= 2
                t = t[:, :w] * t[:, w:]
            return t                                         # [B, 1]

        def pad_lanes(x, w):
            cur = x.shape[-1]
            if cur == w:
                return x
            return jnp.concatenate(
                [x, jnp.zeros((x.shape[0], w - cur), jnp.float32)], axis=-1)

        def union(blocks_c, blocks_b, lm):
            # Fuzzy AND/OR (continuous + binarized paths):
            #   conj_q = prod_i (1 - (1 - x_i) * Wc[q, i])
            #   disj_q = 1 - prod_i (1 - x_i * Wd[q, i])
            # Skip connections arrive as extra (activation, pre-split weight)
            # blocks, so the concatenated input is never materialized.  Lane
            # padding contributes exact 1.0 factors (weights are zero there).
            n = lm['n']
            pc_c = [None] * n
            pd_c = [None] * n
            pc_b = [None] * n
            pd_b = [None] * n
            for (xc, xb), blk in zip(zip(blocks_c, blocks_b), lm['blocks']):
                wp = blk['w_pad']
                assert xc.shape[-1] == wp and xb.shape[-1] == wp
                wc = view(blk['wc'], n, wp)
                wd = view(blk['wd'], n, wp)
                wcb = view(blk['wcb'], n, wp)
                wdb = view(blk['wdb'], n, wp)
                nxc = 1.0 - xc
                nxb = 1.0 - xb
                for q in range(n):
                    t_cc = tree_prod(1.0 - nxc * wc[q:q + 1, :])
                    t_dc = tree_prod(1.0 - xc * wd[q:q + 1, :])
                    t_cb = tree_prod(1.0 - nxb * wcb[q:q + 1, :])
                    t_db = tree_prod(1.0 - xb * wdb[q:q + 1, :])
                    pc_c[q] = t_cc if pc_c[q] is None else pc_c[q] * t_cc
                    pd_c[q] = t_dc if pd_c[q] is None else pd_c[q] * t_dc
                    pc_b[q] = t_cb if pc_b[q] is None else pc_b[q] * t_cb
                    pd_b[q] = t_db if pd_b[q] is None else pd_b[q] * t_db
            out_c = jnp.concatenate(pc_c + [1.0 - v for v in pd_c], axis=-1)
            out_b = jnp.concatenate(pc_b + [1.0 - v for v in pd_b], axis=-1)
            return out_c, out_b                              # [B, 2N] each

        # ---------------- bottom nets: binarize + union stack ----------------
        bottom_c, bottom_b = [], []
        for bm in meta['bottoms']:
            disc, cont, n1 = bm['disc'], bm['cont'], bm['n1']
            xo = bm['x_off']
            x_disc = xin[:, xo:xo + disc]
            x_cont = xin[:, xo + disc:xo + disc + cont]
            thr = view(bm['thr_off'], 1, n1 * cont)          # [1, n1*cont]
            # feature order k*cont+c (first-union weights permuted to match)
            x_rep = jnp.concatenate([x_cont] * n1, axis=-1)  # one full-width compare
            binv = (x_rep - thr > 0.0).astype(jnp.float32)
            h = pad_lanes(jnp.concatenate([x_disc, binv, 1.0 - binv], axis=-1),
                          bm['h_pad'])
            cur_c = cur_b = h
            prev_c = prev_b = None
            for j, lm in enumerate(bm['layers']):
                if prev_c is None:
                    blocks_c, blocks_b = [cur_c], [cur_b]
                else:
                    blocks_c, blocks_b = [cur_c, prev_c], [cur_b, prev_b]
                if j >= 1:
                    prev_c, prev_b = cur_c, cur_b
                oc, ob = union(blocks_c, blocks_b, lm)
                cur_c = pad_lanes(oc, lm['out_pad'])
                cur_b = pad_lanes(ob, lm['out_pad'])
            bottom_c.append(cur_c[:, :bm['out_real']])
            bottom_b.append(cur_b[:, :bm['out_real']])

        # ---------------- top net --------------------------------------------
        bc = pad_lanes(jnp.concatenate(bottom_c, axis=-1), meta['bc_pad'])
        bb = pad_lanes(jnp.concatenate(bottom_b, axis=-1), meta['bc_pad'])
        cur_c, cur_b = bc, bb
        prev_c = prev_b = None
        for lm in meta['top_layers']:
            if prev_c is None:
                blocks_c, blocks_b = [cur_c], [cur_b]
            else:
                blocks_c, blocks_b = [cur_c, prev_c], [cur_b, prev_b]
            prev_c, prev_b = cur_c, cur_b
            oc, ob = union(blocks_c, blocks_b, lm)
            cur_c = pad_lanes(oc, lm['out_pad'])
            cur_b = pad_lanes(ob, lm['out_pad'])

        # --------------- final weight_net + row-wise diag dot ----------------
        ui = xin[:, ui_off:ui_off + emb2]                    # [B, 2E]
        wnet = view(meta['wnet_off'], 2 * top_out, emb2)     # [2D, 2E]
        bnet = view(meta['bnet_off'], 1, 2 * top_out)        # [1, 2D]
        # broadcast-mul + lane sum reduce per output column (MXU skipped on
        # purpose: tiny shapes + exact-f32 match with the reference)
        fw_cols = [jnp.sum(ui * wnet[d:d + 1, :], axis=-1, keepdims=True)
                   for d in range(2 * top_out)]
        fw = jnp.concatenate(fw_cols, axis=-1) + bnet        # [B, 2D]
        fw0 = fw[:, :top_out]
        fw1 = fw[:, top_out:]
        xc = cur_c[:, :top_out]
        xb = cur_b[:, :top_out]
        c0 = jnp.sum(xc * fw0, axis=-1, keepdims=True)
        c1 = jnp.sum(xc * fw1, axis=-1, keepdims=True)
        b0 = jnp.sum(xb * fw0, axis=-1, keepdims=True)
        b1 = jnp.sum(xb * fw1, axis=-1, keepdims=True)
        # single lane-contiguous [B, 4] store: [cont0 | cont1 | bin0 | bin1]
        out_ref[...] = jnp.concatenate([c0, c1, b0, b1], axis=-1)

    vmem_spec = pl.BlockSpec(memory_space=pltpu.MemorySpace.VMEM)
    fused = pl.pallas_call(
        kernel,
        out_shape=jax.ShapeDtypeStruct((batch, 4), jnp.float32),
        in_specs=[vmem_spec, vmem_spec],
        out_specs=vmem_spec,
    )

    user_emb = params['user_emb']
    item_emb = params['item_emb']

    @jax.jit
    def forward(u, i, x_list):
        # glue: embedding gathers + one packed [B, 32] input stay in plain JAX
        user_vec = jnp.take(user_emb, u, axis=0)
        item_vec = jnp.take(item_emb, i, axis=0)
        xin = jnp.concatenate(list(x_list) + [user_vec, item_vec], axis=1)
        out = fused(xin, slab)
        return out[:, 0:2], out[:, 2:4]

    return forward


# =========================== pure-JAX reference ===============================

def union_ref(x, wc, wd):
    con = jnp.prod(1.0 - (1.0 - x)[:, :, None] * jnp.transpose(wc)[None, :, :], axis=1)
    dis = 1.0 - jnp.prod(1.0 - x[:, :, None] * jnp.transpose(wd)[None, :, :], axis=1)
    return jnp.concatenate([con, dis], axis=1)


def bottom_ref(x, p):
    disc, cont = p['disc'], p['cont']
    n1 = p['cl'].shape[0]
    x_disc, x_cont = x[:, :disc], x[:, disc:]
    x_rep = jnp.repeat(x_cont, n1, axis=1)
    thr = jnp.transpose(p['cl']).reshape(1, cont * n1)
    binv = (x_rep - thr > 0).astype(jnp.float32)
    h = jnp.concatenate([x_disc, binv, 1.0 - binv], axis=1)
    xc = xb = h
    xc_res = xb_res = None
    for j, (wc, wd) in enumerate(p['unions']):
        if j == 0:
            inp_c, inp_b = xc, xb
        else:
            inp_c = jnp.concatenate([xc, xc_res], axis=1) if xc_res is not None else xc
            inp_b = jnp.concatenate([xb, xb_res], axis=1) if xb_res is not None else xb
            xc_res, xb_res = xc, xb
        xc = union_ref(inp_c, wc, wd)
        xb = union_ref(inp_b, binarize_w(wc), binarize_w(wd))
    return xc, xb


def ref_forward(u, i, x_list, params):
    user_vec = jnp.take(params['user_emb'], u, axis=0)
    item_vec = jnp.take(params['item_emb'], i, axis=0)
    bc, bb = [], []
    for x, p in zip(x_list, params['bottoms']):
        c, b = bottom_ref(x, p)
        bc.append(c)
        bb.append(b)
    xc = jnp.concatenate(bc, axis=1)
    xb = jnp.concatenate(bb, axis=1)
    xc_res = xb_res = None
    for (wc, wd) in params['top_unions']:
        inp_c = jnp.concatenate([xc, xc_res], axis=1) if xc_res is not None else xc
        inp_b = jnp.concatenate([xb, xb_res], axis=1) if xb_res is not None else xb
        xc_res, xb_res = xc, xb
        xc = union_ref(inp_c, wc, wd)
        xb = union_ref(inp_b, binarize_w(wc), binarize_w(wd))
    ui = jnp.concatenate([user_vec, item_vec], axis=1)
    fw0 = jnp.matmul(ui, params['w0'].T, precision='highest') + params['b0']
    fw1 = jnp.matmul(ui, params['w1'].T, precision='highest') + params['b1']

    def diag_col(a, w):  # diag(a @ w.T) == row-wise dot
        return jnp.sum(a * w, axis=1, keepdims=True)

    cont = jnp.concatenate([diag_col(xc, fw0), diag_col(xc, fw1)], axis=1)
    binz = jnp.concatenate([diag_col(xb, fw0), diag_col(xb, fw1)], axis=1)
    return cont, binz


# ==================================== main ====================================

if __name__ == "__main__":
    root = jax.random.PRNGKey(0)
    pkey, dkey = jax.random.split(root)
    params = make_params(pkey)

    du, di, dx = jax.random.split(dkey, 3)
    u = jax.random.randint(du, (BATCH,), 0, USER_NUM + 1)
    i = jax.random.randint(di, (BATCH,), 0, ITEM_NUM + 1)
    x_list = []
    for idx, (disc, cont) in enumerate(DB_ENCS):
        kk = jax.random.fold_in(dx, idx)
        kd, kc = jax.random.split(kk)
        xd = (jax.random.uniform(kd, (BATCH, disc)) > 0.5).astype(jnp.float32)
        xc = jax.random.normal(kc, (BATCH, cont), jnp.float32)
        x_list.append(jnp.concatenate([xd, xc], axis=1))

    forward = make_fused_forward(params, BATCH)
    out_c, out_b = forward(u, i, x_list)
    jax.block_until_ready((out_c, out_b))

    ref_c, ref_b = ref_forward(u, i, x_list, params)
    jax.block_until_ready((ref_c, ref_b))

    assert out_c.shape == (BATCH, 2) and out_b.shape == (BATCH, 2)
    np.testing.assert_allclose(np.asarray(out_c), np.asarray(ref_c), rtol=1e-4, atol=1e-5)
    np.testing.assert_allclose(np.asarray(out_b), np.asarray(ref_b), rtol=1e-4, atol=1e-5)
    print("KERNEL_OK")
</pallas_src>

<mosaic_0001>
module attributes {stable_mosaic.version = 11 : i64} {
  func.func @kernel(%arg0: memref<8x32xf32, #tpu.memory_space<vmem>>, %arg1: memref<296x128xf32, #tpu.memory_space<vmem>>, %arg2: memref<8x4xf32, #tpu.memory_space<vmem>>) attributes {dimension_semantics = [], scalar_prefetch = 0 : i64, scratch_operands = 0 : i64, tpu.core_type = #tpu.core_type<tc>} {
    %c0 = arith.constant 0 : index
    %c0_0 = arith.constant 0 : index
    %0 = vector.load %arg0[%c0, %c0_0] : memref<8x32xf32, #tpu.memory_space<vmem>>, vector<8x32xf32>
    %1 = vector.extract_strided_slice %0 {offsets = [0, 0], sizes = [8, 3], strides = [1, 1]} : vector<8x32xf32> to vector<8x3xf32>
    %2 = vector.extract_strided_slice %0 {offsets = [0, 3], sizes = [8, 5], strides = [1, 1]} : vector<8x32xf32> to vector<8x5xf32>
    %c0_1 = arith.constant 0 : index
    %c0_2 = arith.constant 0 : index
    %3 = vector.load %arg1[%c0_1, %c0_2] : memref<296x128xf32, #tpu.memory_space<vmem>>, vector<1x15xf32>
    %4 = tpu.concatenate %2, %2, %2 in 1 : vector<8x5xf32>, vector<8x5xf32>, vector<8x5xf32> -> vector<8x15xf32>
    %5 = vector.broadcast %3 : vector<1x15xf32> to vector<8x15xf32>
    %6 = arith.subf %4, %5 : vector<8x15xf32>
    %cst = arith.constant 0.000000e+00 : f32
    %7 = vector.broadcast %cst : f32 to vector<8x15xf32>
    %8 = arith.cmpf ogt, %6, %7 : vector<8x15xf32>
    %9 = arith.extui %8 : vector<8x15xi1> to vector<8x15xi32>
    %10 = arith.sitofp %9 : vector<8x15xi32> to vector<8x15xf32>
    %cst_3 = arith.constant 1.000000e+00 : f32
    %11 = vector.broadcast %cst_3 : f32 to vector<8x15xf32>
    %12 = arith.subf %11, %10 : vector<8x15xf32>
    %13 = tpu.concatenate %1, %10, %12 in 1 : vector<8x3xf32>, vector<8x15xf32>, vector<8x15xf32> -> vector<8x33xf32>
    %cst_4 = arith.constant 0.000000e+00 : f32
    %14 = vector.broadcast %cst_4 : f32 to vector<8x31xf32>
    %15 = tpu.concatenate %13, %14 in 1 : vector<8x33xf32>, vector<8x31xf32> -> vector<8x64xf32>
    %c8 = arith.constant 8 : index
    %c0_5 = arith.constant 0 : index
    %16 = vector.load %arg1[%c8, %c0_5] : memref<296x128xf32, #tpu.memory_space<vmem>>, vector<4x64xf32>
    %c16 = arith.constant 16 : index
    %c0_6 = arith.constant 0 : index
    %17 = vector.load %arg1[%c16, %c0_6] : memref<296x128xf32, #tpu.memory_space<vmem>>, vector<4x64xf32>
    %c24 = arith.constant 24 : index
    %c0_7 = arith.constant 0 : index
    %18 = vector.load %arg1[%c24, %c0_7] : memref<296x128xf32, #tpu.memory_space<vmem>>, vector<4x64xf32>
    %c32 = arith.constant 32 : index
    %c0_8 = arith.constant 0 : index
    %19 = vector.load %arg1[%c32, %c0_8] : memref<296x128xf32, #tpu.memory_space<vmem>>, vector<4x64xf32>
    %cst_9 = arith.constant 1.000000e+00 : f32
    %20 = vector.broadcast %cst_9 : f32 to vector<8x64xf32>
    %21 = arith.subf %20, %15 : vector<8x64xf32>
    %cst_10 = arith.constant 1.000000e+00 : f32
    %22 = vector.broadcast %cst_10 : f32 to vector<8x64xf32>
    %23 = arith.subf %22, %15 : vector<8x64xf32>
    %24 = vector.extract_strided_slice %16 {offsets = [0, 0], sizes = [1, 64], strides = [1, 1]} : vector<4x64xf32> to vector<1x64xf32>
    %25 = vector.broadcast %24 : vector<1x64xf32> to vector<8x64xf32>
    %26 = arith.mulf %21, %25 : vector<8x64xf32>
    %cst_11 = arith.constant 1.000000e+00 : f32
    %27 = vector.broadcast %cst_11 : f32 to vector<8x64xf32>
    %28 = arith.subf %27, %26 : vector<8x64xf32>
    %29 = vector.extract_strided_slice %28 {offsets = [0, 0], sizes = [8, 32], strides = [1, 1]} : vector<8x64xf32> to vector<8x32xf32>
    %30 = vector.extract_strided_slice %28 {offsets = [0, 32], sizes = [8, 32], strides = [1, 1]} : vector<8x64xf32> to vector<8x32xf32>
    %31 = arith.mulf %29, %30 : vector<8x32xf32>
    %32 = vector.extract_strided_slice %31 {offsets = [0, 0], sizes = [8, 16], strides = [1, 1]} : vector<8x32xf32> to vector<8x16xf32>
    %33 = vector.extract_strided_slice %31 {offsets = [0, 16], sizes = [8, 16], strides = [1, 1]} : vector<8x32xf32> to vector<8x16xf32>
    %34 = arith.mulf %32, %33 : vector<8x16xf32>
    %35 = vector.extract_strided_slice %34 {offsets = [0, 0], sizes = [8, 8], strides = [1, 1]} : vector<8x16xf32> to vector<8x8xf32>
    %36 = vector.extract_strided_slice %34 {offsets = [0, 8], sizes = [8, 8], strides = [1, 1]} : vector<8x16xf32> to vector<8x8xf32>
    %37 = arith.mulf %35, %36 : vector<8x8xf32>
    %38 = vector.extract_strided_slice %37 {offsets = [0, 0], sizes = [8, 4], strides = [1, 1]} : vector<8x8xf32> to vector<8x4xf32>
    %39 = vector.extract_strided_slice %37 {offsets = [0, 4], sizes = [8, 4], strides = [1, 1]} : vector<8x8xf32> to vector<8x4xf32>
    %40 = arith.mulf %38, %39 : vector<8x4xf32>
    %41 = vector.extract_strided_slice %40 {offsets = [0, 0], sizes = [8, 2], strides = [1, 1]} : vector<8x4xf32> to vector<8x2xf32>
    %42 = vector.extract_strided_slice %40 {offsets = [0, 2], sizes = [8, 2], strides = [1, 1]} : vector<8x4xf32> to vector<8x2xf32>
    %43 = arith.mulf %41, %42 : vector<8x2xf32>
    %44 = vector.extract_strided_slice %43 {offsets = [0, 0], sizes = [8, 1], strides = [1, 1]} : vector<8x2xf32> to vector<8x1xf32>
    %45 = vector.extract_strided_slice %43 {offsets = [0, 1], sizes = [8, 1], strides = [1, 1]} : vector<8x2xf32> to vector<8x1xf32>
    %46 = arith.mulf %44, %45 : vector<8x1xf32>
    %47 = vector.extract_strided_slice %17 {offsets = [0, 0], sizes = [1, 64], strides = [1, 1]} : vector<4x64xf32> to vector<1x64xf32>
    %48 = vector.broadcast %47 : vector<1x64xf32> to vector<8x64xf32>
    %49 = arith.mulf %15, %48 : vector<8x64xf32>
    %cst_12 = arith.constant 1.000000e+00 : f32
    %50 = vector.broadcast %cst_12 : f32 to vector<8x64xf32>
    %51 = arith.subf %50, %49 : vector<8x64xf32>
    %52 = vector.extract_strided_slice %51 {offsets = [0, 0], sizes = [8, 32], strides = [1, 1]} : vector<8x64xf32> to vector<8x32xf32>
    %53 = vector.extract_strided_slice %51 {offsets = [0, 32], sizes = [8, 32], strides = [1, 1]} : vector<8x64xf32> to vector<8x32xf32>
    %54 = arith.mulf %52, %53 : vector<8x32xf32>
    %55 = vector.extract_strided_slice %54 {offsets = [0, 0], sizes = [8, 16], strides = [1, 1]} : vector<8x32xf32> to vector<8x16xf32>
    %56 = vector.extract_strided_slice %54 {offsets = [0, 16], sizes = [8, 16], strides = [1, 1]} : vector<8x32xf32> to vector<8x16xf32>
    %57 = arith.mulf %55, %56 : vector<8x16xf32>
    %58 = vector.extract_strided_slice %57 {offsets = [0, 0], sizes = [8, 8], strides = [1, 1]} : vector<8x16xf32> to vector<8x8xf32>
    %59 = vector.extract_strided_slice %57 {offsets = [0, 8], sizes = [8, 8], strides = [1, 1]} : vector<8x16xf32> to vector<8x8xf32>
    %60 = arith.mulf %58, %59 : vector<8x8xf32>
    %61 = vector.extract_strided_slice %60 {offsets = [0, 0], sizes = [8, 4], strides = [1, 1]} : vector<8x8xf32> to vector<8x4xf32>
    %62 = vector.extract_strided_slice %60 {offsets = [0, 4], sizes = [8, 4], strides = [1, 1]} : vector<8x8xf32> to vector<8x4xf32>
    %63 = arith.mulf %61, %62 : vector<8x4xf32>
    %64 = vector.extract_strided_slice %63 {offsets = [0, 0], sizes = [8, 2], strides = [1, 1]} : vector<8x4xf32> to vector<8x2xf32>
    %65 = vector.extract_strided_slice %63 {offsets = [0, 2], sizes = [8, 2], strides = [1, 1]} : vector<8x4xf32> to vector<8x2xf32>
    %66 = arith.mulf %64, %65 : vector<8x2xf32>
    %67 = vector.extract_strided_slice %66 {offsets = [0, 0], sizes = [8, 1], strides = [1, 1]} : vector<8x2xf32> to vector<8x1xf32>
    %68 = vector.extract_strided_slice %66 {offsets = [0, 1], sizes = [8, 1], strides = [1, 1]} : vector<8x2xf32> to vector<8x1xf32>
    %69 = arith.mulf %67, %68 : vector<8x1xf32>
    %70 = vector.extract_strided_slice %18 {offsets = [0, 0], sizes = [1, 64], strides = [1, 1]} : vector<4x64xf32> to vector<1x64xf32>
    %71 = vector.broadcast %70 : vector<1x64xf32> to vector<8x64xf32>
    %72 = arith.mulf %23, %71 : vector<8x64xf32>
    %cst_13 = arith.constant 1.000000e+00 : f32
    %73 = vector.broadcast %cst_13 : f32 to vector<8x64xf32>
    %74 = arith.subf %73, %72 : vector<8x64xf32>
    %75 = vector.extract_strided_slice %74 {offsets = [0, 0], sizes = [8, 32], strides = [1, 1]} : vector<8x64xf32> to vector<8x32xf32>
    %76 = vector.extract_strided_slice %74 {offsets = [0, 32], sizes = [8, 32], strides = [1, 1]} : vector<8x64xf32> to vector<8x32xf32>
    %77 = arith.mulf %75, %76 : vector<8x32xf32>
    %78 = vector.extract_strided_slice %77 {offsets = [0, 0], sizes = [8, 16], strides = [1, 1]} : vector<8x32xf32> to vector<8x16xf32>
    %79 = vector.extract_strided_slice %77 {offsets = [0, 16], sizes = [8, 16], strides = [1, 1]} : vector<8x32xf32> to vector<8x16xf32>
    %80 = arith.mulf %78, %79 : vector<8x16xf32>
    %81 = vector.extract_strided_slice %80 {offsets = [0, 0], sizes = [8, 8], strides = [1, 1]} : vector<8x16xf32> to vector<8x8xf32>
    %82 = vector.extract_strided_slice %80 {offsets = [0, 8], sizes = [8, 8], strides = [1, 1]} : vector<8x16xf32> to vector<8x8xf32>
    %83 = arith.mulf %81, %82 : vector<8x8xf32>
    %84 = vector.extract_strided_slice %83 {offsets = [0, 0], sizes = [8, 4], strides = [1, 1]} : vector<8x8xf32> to vector<8x4xf32>
    %85 = vector.extract_strided_slice %83 {offsets = [0, 4], sizes = [8, 4], strides = [1, 1]} : vector<8x8xf32> to vector<8x4xf32>
    %86 = arith.mulf %84, %85 : vector<8x4xf32>
    %87 = vector.extract_strided_slice %86 {offsets = [0, 0], sizes = [8, 2], strides = [1, 1]} : vector<8x4xf32> to vector<8x2xf32>
    %88 = vector.extract_strided_slice %86 {offsets = [0, 2], sizes = [8, 2], strides = [1, 1]} : vector<8x4xf32> to vector<8x2xf32>
    %89 = arith.mulf %87, %88 : vector<8x2xf32>
    %90 = vector.extract_strided_slice %89 {offsets = [0, 0], sizes = [8, 1], strides = [1, 1]} : vector<8x2xf32> to vector<8x1xf32>
    %91 = vector.extract_strided_slice %89 {offsets = [0, 1], sizes = [8, 1], strides = [1, 1]} : vector<8x2xf32> to vector<8x1xf32>
    %92 = arith.mulf %90, %91 : vector<8x1xf32>
    %93 = vector.extract_strided_slice %19 {offsets = [0, 0], sizes = [1, 64], strides = [1, 1]} : vector<4x64xf32> to vector<1x64xf32>
    %94 = vector.broadcast %93 : vector<1x64xf32> to vector<8x64xf32>
    %95 = arith.mulf %15, %94 : vector<8x64xf32>
    %cst_14 = arith.constant 1.000000e+00 : f32
    %96 = vector.broadcast %cst_14 : f32 to vector<8x64xf32>
    %97 = arith.subf %96, %95 : vector<8x64xf32>
    %98 = vector.extract_strided_slice %97 {offsets = [0, 0], sizes = [8, 32], strides = [1, 1]} : vector<8x64xf32> to vector<8x32xf32>
    %99 = vector.extract_strided_slice %97 {offsets = [0, 32], sizes = [8, 32], strides = [1, 1]} : vector<8x64xf32> to vector<8x32xf32>
    %100 = arith.mulf %98, %99 : vector<8x32xf32>
    %101 = vector.extract_strided_slice %100 {offsets = [0, 0], sizes = [8, 16], strides = [1, 1]} : vector<8x32xf32> to vector<8x16xf32>
    %102 = vector.extract_strided_slice %100 {offsets = [0, 16], sizes = [8, 16], strides = [1, 1]} : vector<8x32xf32> to vector<8x16xf32>
    %103 = arith.mulf %101, %102 : vector<8x16xf32>
    %104 = vector.extract_strided_slice %103 {offsets = [0, 0], sizes = [8, 8], strides = [1, 1]} : vector<8x16xf32> to vector<8x8xf32>
    %105 = vector.extract_strided_slice %103 {offsets = [0, 8], sizes = [8, 8], strides = [1, 1]} : vector<8x16xf32> to vector<8x8xf32>
    %106 = arith.mulf %104, %105 : vector<8x8xf32>
    %107 = vector.extract_strided_slice %106 {offsets = [0, 0], sizes = [8, 4], strides = [1, 1]} : vector<8x8xf32> to vector<8x4xf32>
    %108 = vector.extract_strided_slice %106 {offsets = [0, 4], sizes = [8, 4], strides = [1, 1]} : vector<8x8xf32> to vector<8x4xf32>
    %109 = arith.mulf %107, %108 : vector<8x4xf32>
    %110 = vector.extract_strided_slice %109 {offsets = [0, 0], sizes = [8, 2], strides = [1, 1]} : vector<8x4xf32> to vector<8x2xf32>
    %111 = vector.extract_strided_slice %109 {offsets = [0, 2], sizes = [8, 2], strides = [1, 1]} : vector<8x4xf32> to vector<8x2xf32>
    %112 = arith.mulf %110, %111 : vector<8x2xf32>
    %113 = vector.extract_strided_slice %112 {offsets = [0, 0], sizes = [8, 1], strides = [1, 1]} : vector<8x2xf32> to vector<8x1xf32>
    %114 = vector.extract_strided_slice %112 {offsets = [0, 1], sizes = [8, 1], strides = [1, 1]} : vector<8x2xf32> to vector<8x1xf32>
    %115 = arith.mulf %113, %114 : vector<8x1xf32>
    %116 = vector.extract_strided_slice %16 {offsets = [1, 0], sizes = [1, 64], strides = [1, 1]} : vector<4x64xf32> to vector<1x64xf32>
    %117 = vector.broadcast %116 : vector<1x64xf32> to vector<8x64xf32>
    %118 = arith.mulf %21, %117 : vector<8x64xf32>
    %cst_15 = arith.constant 1.000000e+00 : f32
    %119 = vector.broadcast %cst_15 : f32 to vector<8x64xf32>
    %120 = arith.subf %119, %118 : vector<8x64xf32>
    %121 = vector.extract_strided_slice %120 {offsets = [0, 0], sizes = [8, 32], strides = [1, 1]} : vector<8x64xf32> to vector<8x32xf32>
    %122 = vector.extract_strided_slice %120 {offsets = [0, 32], sizes = [8, 32], strides = [1, 1]} : vector<8x64xf32> to vector<8x32xf32>
    %123 = arith.mulf %121, %122 : vector<8x32xf32>
    %124 = vector.extract_strided_slice %123 {offsets = [0, 0], sizes = [8, 16], strides = [1, 1]} : vector<8x32xf32> to vector<8x16xf32>
    %125 = vector.extract_strided_slice %123 {offsets = [0, 16], sizes = [8, 16], strides = [1, 1]} : vector<8x32xf32> to vector<8x16xf32>
    %126 = arith.mulf %124, %125 : vector<8x16xf32>
    %127 = vector.extract_strided_slice %126 {offsets = [0, 0], sizes = [8, 8], strides = [1, 1]} : vector<8x16xf32> to vector<8x8xf32>
    %128 = vector.extract_strided_slice %126 {offsets = [0, 8], sizes = [8, 8], strides = [1, 1]} : vector<8x16xf32> to vector<8x8xf32>
    %129 = arith.mulf %127, %128 : vector<8x8xf32>
    %130 = vector.extract_strided_slice %129 {offsets = [0, 0], sizes = [8, 4], strides = [1, 1]} : vector<8x8xf32> to vector<8x4xf32>
    %131 = vector.extract_strided_slice %129 {offsets = [0, 4], sizes = [8, 4], strides = [1, 1]} : vector<8x8xf32> to vector<8x4xf32>
    %132 = arith.mulf %130, %131 : vector<8x4xf32>
    %133 = vector.extract_strided_slice %132 {offsets = [0, 0], sizes = [8, 2], strides = [1, 1]} : vector<8x4xf32> to vector<8x2xf32>
    %134 = vector.extract_strided_slice %132 {offsets = [0, 2], sizes = [8, 2], strides = [1, 1]} : vector<8x4xf32> to vector<8x2xf32>
    %135 = arith.mulf %133, %134 : vector<8x2xf32>
    %136 = vector.extract_strided_slice %135 {offsets = [0, 0], sizes = [8, 1], strides = [1, 1]} : vector<8x2xf32> to vector<8x1xf32>
    %137 = vector.extract_strided_slice %135 {offsets = [0, 1], sizes = [8, 1], strides = [1, 1]} : vector<8x2xf32> to vector<8x1xf32>
    %138 = arith.mulf %136, %137 : vector<8x1xf32>
    %139 = vector.extract_strided_slice %17 {offsets = [1, 0], sizes = [1, 64], strides = [1, 1]} : vector<4x64xf32> to vector<1x64xf32>
    %140 = vector.broadcast %139 : vector<1x64xf32> to vector<8x64xf32>
    %141 = arith.mulf %15, %140 : vector<8x64xf32>
    %cst_16 = arith.constant 1.000000e+00 : f32
    %142 = vector.broadcast %cst_16 : f32 to vector<8x64xf32>
    %143 = arith.subf %142, %141 : vector<8x64xf32>
    %144 = vector.extract_strided_slice %143 {offsets = [0, 0], sizes = [8, 32], strides = [1, 1]} : vector<8x64xf32> to vector<8x32xf32>
    %145 = vector.extract_strided_slice %143 {offsets = [0, 32], sizes = [8, 32], strides = [1, 1]} : vector<8x64xf32> to vector<8x32xf32>
    %146 = arith.mulf %144, %145 : vector<8x32xf32>
    %147 = vector.extract_strided_slice %146 {offsets = [0, 0], sizes = [8, 16], strides = [1, 1]} : vector<8x32xf32> to vector<8x16xf32>
    %148 = vector.extract_strided_slice %146 {offsets = [0, 16], sizes = [8, 16], strides = [1, 1]} : vector<8x32xf32> to vector<8x16xf32>
    %149 = arith.mulf %147, %148 : vector<8x16xf32>
    %150 = vector.extract_strided_slice %149 {offsets = [0, 0], sizes = [8, 8], strides = [1, 1]} : vector<8x16xf32> to vector<8x8xf32>
    %151 = vector.extract_strided_slice %149 {offsets = [0, 8], sizes = [8, 8], strides = [1, 1]} : vector<8x16xf32> to vector<8x8xf32>
    %152 = arith.mulf %150, %151 : vector<8x8xf32>
    %153 = vector.extract_strided_slice %152 {offsets = [0, 0], sizes = [8, 4], strides = [1, 1]} : vector<8x8xf32> to vector<8x4xf32>
    %154 = vector.extract_strided_slice %152 {offsets = [0, 4], sizes = [8, 4], strides = [1, 1]} : vector<8x8xf32> to vector<8x4xf32>
    %155 = arith.mulf %153, %154 : vector<8x4xf32>
    %156 = vector.extract_strided_slice %155 {offsets = [0, 0], sizes = [8, 2], strides = [1, 1]} : vector<8x4xf32> to vector<8x2xf32>
    %157 = vector.extract_strided_slice %155 {offsets = [0, 2], sizes = [8, 2], strides = [1, 1]} : vector<8x4xf32> to vector<8x2xf32>
    %158 = arith.mulf %156, %157 : vector<8x2xf32>
    %159 = vector.extract_strided_slice %158 {offsets = [0, 0], sizes = [8, 1], strides = [1, 1]} : vector<8x2xf32> to vector<8x1xf32>
    %160 = vector.extract_strided_slice %158 {offsets = [0, 1], sizes = [8, 1], strides = [1, 1]} : vector<8x2xf32> to vector<8x1xf32>
    %161 = arith.mulf %159, %160 : vector<8x1xf32>
    %162 = vector.extract_strided_slice %18 {offsets = [1, 0], sizes = [1, 64], strides = [1, 1]} : vector<4x64xf32> to vector<1x64xf32>
    %163 = vector.broadcast %162 : vector<1x64xf32> to vector<8x64xf32>
    %164 = arith.mulf %23, %163 : vector<8x64xf32>
    %cst_17 = arith.constant 1.000000e+00 : f32
    %165 = vector.broadcast %cst_17 : f32 to vector<8x64xf32>
    %166 = arith.subf %165, %164 : vector<8x64xf32>
    %167 = vector.extract_strided_slice %166 {offsets = [0, 0], sizes = [8, 32], strides = [1, 1]} : vector<8x64xf32> to vector<8x32xf32>
    %168 = vector.extract_strided_slice %166 {offsets = [0, 32], sizes = [8, 32], strides = [1, 1]} : vector<8x64xf32> to vector<8x32xf32>
    %169 = arith.mulf %167, %168 : vector<8x32xf32>
    %170 = vector.extract_strided_slice %169 {offsets = [0, 0], sizes = [8, 16], strides = [1, 1]} : vector<8x32xf32> to vector<8x16xf32>
    %171 = vector.extract_strided_slice %169 {offsets = [0, 16], sizes = [8, 16], strides = [1, 1]} : vector<8x32xf32> to vector<8x16xf32>
    %172 = arith.mulf %170, %171 : vector<8x16xf32>
    %173 = vector.extract_strided_slice %172 {offsets = [0, 0], sizes = [8, 8], strides = [1, 1]} : vector<8x16xf32> to vector<8x8xf32>
    %174 = vector.extract_strided_slice %172 {offsets = [0, 8], sizes = [8, 8], strides = [1, 1]} : vector<8x16xf32> to vector<8x8xf32>
    %175 = arith.mulf %173, %174 : vector<8x8xf32>
    %176 = vector.extract_strided_slice %175 {offsets = [0, 0], sizes = [8, 4], strides = [1, 1]} : vector<8x8xf32> to vector<8x4xf32>
    %177 = vector.extract_strided_slice %175 {offsets = [0, 4], sizes = [8, 4], strides = [1, 1]} : vector<8x8xf32> to vector<8x4xf32>
    %178 = arith.mulf %176, %177 : vector<8x4xf32>
    %179 = vector.extract_strided_slice %178 {offsets = [0, 0], sizes = [8, 2], strides = [1, 1]} : vector<8x4xf32> to vector<8x2xf32>
    %180 = vector.extract_strided_slice %178 {offsets = [0, 2], sizes = [8, 2], strides = [1, 1]} : vector<8x4xf32> to vector<8x2xf32>
    %181 = arith.mulf %179, %180 : vector<8x2xf32>
    %182 = vector.extract_strided_slice %181 {offsets = [0, 0], sizes = [8, 1], strides = [1, 1]} : vector<8x2xf32> to vector<8x1xf32>
    %183 = vector.extract_strided_slice %181 {offsets = [0, 1], sizes = [8, 1], strides = [1, 1]} : vector<8x2xf32> to vector<8x1xf32>
    %184 = arith.mulf %182, %183 : vector<8x1xf32>
    %185 = vector.extract_strided_slice %19 {offsets = [1, 0], sizes = [1, 64], strides = [1, 1]} : vector<4x64xf32> to vector<1x64xf32>
    %186 = vector.broadcast %185 : vector<1x64xf32> to vector<8x64xf32>
    %187 = arith.mulf %15, %186 : vector<8x64xf32>
    %cst_18 = arith.constant 1.000000e+00 : f32
    %188 = vector.broadcast %cst_18 : f32 to vector<8x64xf32>
    %189 = arith.subf %188, %187 : vector<8x64xf32>
    %190 = vector.extract_strided_slice %189 {offsets = [0, 0], sizes = [8, 32], strides = [1, 1]} : vector<8x64xf32> to vector<8x32xf32>
    %191 = vector.extract_strided_slice %189 {offsets = [0, 32], sizes = [8, 32], strides = [1, 1]} : vector<8x64xf32> to vector<8x32xf32>
    %192 = arith.mulf %190, %191 : vector<8x32xf32>
    %193 = vector.extract_strided_slice %192 {offsets = [0, 0], sizes = [8, 16], strides = [1, 1]} : vector<8x32xf32> to vector<8x16xf32>
    %194 = vector.extract_strided_slice %192 {offsets = [0, 16], sizes = [8, 16], strides = [1, 1]} : vector<8x32xf32> to vector<8x16xf32>
    %195 = arith.mulf %193, %194 : vector<8x16xf32>
    %196 = vector.extract_strided_slice %195 {offsets = [0, 0], sizes = [8, 8], strides = [1, 1]} : vector<8x16xf32> to vector<8x8xf32>
    %197 = vector.extract_strided_slice %195 {offsets = [0, 8], sizes = [8, 8], strides = [1, 1]} : vector<8x16xf32> to vector<8x8xf32>
    %198 = arith.mulf %196, %197 : vector<8x8xf32>
    %199 = vector.extract_strided_slice %198 {offsets = [0, 0], sizes = [8, 4], strides = [1, 1]} : vector<8x8xf32> to vector<8x4xf32>
    %200 = vector.extract_strided_slice %198 {offsets = [0, 4], sizes = [8, 4], strides = [1, 1]} : vector<8x8xf32> to vector<8x4xf32>
    %201 = arith.mulf %199, %200 : vector<8x4xf32>
    %202 = vector.extract_strided_slice %201 {offsets = [0, 0], sizes = [8, 2], strides = [1, 1]} : vector<8x4xf32> to vector<8x2xf32>
    %203 = vector.extract_strided_slice %201 {offsets = [0, 2], sizes = [8, 2], strides = [1, 1]} : vector<8x4xf32> to vector<8x2xf32>
    %204 = arith.mulf %202, %203 : vector<8x2xf32>
    %205 = vector.extract_strided_slice %204 {offsets = [0, 0], sizes = [8, 1], strides = [1, 1]} : vector<8x2xf32> to vector<8x1xf32>
    %206 = vector.extract_strided_slice %204 {offsets = [0, 1], sizes = [8, 1], strides = [1, 1]} : vector<8x2xf32> to vector<8x1xf32>
    %207 = arith.mulf %205, %206 : vector<8x1xf32>
    %208 = vector.extract_strided_slice %16 {offsets = [2, 0], sizes = [1, 64], strides = [1, 1]} : vector<4x64xf32> to vector<1x64xf32>
    %209 = vector.broadcast %208 : vector<1x64xf32> to vector<8x64xf32>
    %210 = arith.mulf %21, %209 : vector<8x64xf32>
    %cst_19 = arith.constant 1.000000e+00 : f32
    %211 = vector.broadcast %cst_19 : f32 to vector<8x64xf32>
    %212 = arith.subf %211, %210 : vector<8x64xf32>
    %213 = vector.extract_strided_slice %212 {offsets = [0, 0], sizes = [8, 32], strides = [1, 1]} : vector<8x64xf32> to vector<8x32xf32>
    %214 = vector.extract_strided_slice %212 {offsets = [0, 32], sizes = [8, 32], strides = [1, 1]} : vector<8x64xf32> to vector<8x32xf32>
    %215 = arith.mulf %213, %214 : vector<8x32xf32>
    %216 = vector.extract_strided_slice %215 {offsets = [0, 0], sizes = [8, 16], strides = [1, 1]} : vector<8x32xf32> to vector<8x16xf32>
    %217 = vector.extract_strided_slice %215 {offsets = [0, 16], sizes = [8, 16], strides = [1, 1]} : vector<8x32xf32> to vector<8x16xf32>
    %218 = arith.mulf %216, %217 : vector<8x16xf32>
    %219 = vector.extract_strided_slice %218 {offsets = [0, 0], sizes = [8, 8], strides = [1, 1]} : vector<8x16xf32> to vector<8x8xf32>
    %220 = vector.extract_strided_slice %218 {offsets = [0, 8], sizes = [8, 8], strides = [1, 1]} : vector<8x16xf32> to vector<8x8xf32>
    %221 = arith.mulf %219, %220 : vector<8x8xf32>
    %222 = vector.extract_strided_slice %221 {offsets = [0, 0], sizes = [8, 4], strides = [1, 1]} : vector<8x8xf32> to vector<8x4xf32>
    %223 = vector.extract_strided_slice %221 {offsets = [0, 4], sizes = [8, 4], strides = [1, 1]} : vector<8x8xf32> to vector<8x4xf32>
    %224 = arith.mulf %222, %223 : vector<8x4xf32>
    %225 = vector.extract_strided_slice %224 {offsets = [0, 0], sizes = [8, 2], strides = [1, 1]} : vector<8x4xf32> to vector<8x2xf32>
    %226 = vector.extract_strided_slice %224 {offsets = [0, 2], sizes = [8, 2], strides = [1, 1]} : vector<8x4xf32> to vector<8x2xf32>
    %227 = arith.mulf %225, %226 : vector<8x2xf32>
    %228 = vector.extract_strided_slice %227 {offsets = [0, 0], sizes = [8, 1], strides = [1, 1]} : vector<8x2xf32> to vector<8x1xf32>
    %229 = vector.extract_strided_slice %227 {offsets = [0, 1], sizes = [8, 1], strides = [1, 1]} : vector<8x2xf32> to vector<8x1xf32>
    %230 = arith.mulf %228, %229 : vector<8x1xf32>
    %231 = vector.extract_strided_slice %17 {offsets = [2, 0], sizes = [1, 64], strides = [1, 1]} : vector<4x64xf32> to vector<1x64xf32>
    %232 = vector.broadcast %231 : vector<1x64xf32> to vector<8x64xf32>
    %233 = arith.mulf %15, %232 : vector<8x64xf32>
    %cst_20 = arith.constant 1.000000e+00 : f32
    %234 = vector.broadcast %cst_20 : f32 to vector<8x64xf32>
    %235 = arith.subf %234, %233 : vector<8x64xf32>
    %236 = vector.extract_strided_slice %235 {offsets = [0, 0], sizes = [8, 32], strides = [1, 1]} : vector<8x64xf32> to vector<8x32xf32>
    %237 = vector.extract_strided_slice %235 {offsets = [0, 32], sizes = [8, 32], strides = [1, 1]} : vector<8x64xf32> to vector<8x32xf32>
    %238 = arith.mulf %236, %237 : vector<8x32xf32>
    %239 = vector.extract_strided_slice %238 {offsets = [0, 0], sizes = [8, 16], strides = [1, 1]} : vector<8x32xf32> to vector<8x16xf32>
    %240 = vector.extract_strided_slice %238 {offsets = [0, 16], sizes = [8, 16], strides = [1, 1]} : vector<8x32xf32> to vector<8x16xf32>
    %241 = arith.mulf %239, %240 : vector<8x16xf32>
    %242 = vector.extract_strided_slice %241 {offsets = [0, 0], sizes = [8, 8], strides = [1, 1]} : vector<8x16xf32> to vector<8x8xf32>
    %243 = vector.extract_strided_slice %241 {offsets = [0, 8], sizes = [8, 8], strides = [1, 1]} : vector<8x16xf32> to vector<8x8xf32>
    %244 = arith.mulf %242, %243 : vector<8x8xf32>
    %245 = vector.extract_strided_slice %244 {offsets = [0, 0], sizes = [8, 4], strides = [1, 1]} : vector<8x8xf32> to vector<8x4xf32>
    %246 = vector.extract_strided_slice %244 {offsets = [0, 4], sizes = [8, 4], strides = [1, 1]} : vector<8x8xf32> to vector<8x4xf32>
    %247 = arith.mulf %245, %246 : vector<8x4xf32>
    %248 = vector.extract_strided_slice %247 {offsets = [0, 0], sizes = [8, 2], strides = [1, 1]} : vector<8x4xf32> to vector<8x2xf32>
    %249 = vector.extract_strided_slice %247 {offsets = [0, 2], sizes = [8, 2], strides = [1, 1]} : vector<8x4xf32> to vector<8x2xf32>
    %250 = arith.mulf %248, %249 : vector<8x2xf32>
    %251 = vector.extract_strided_slice %250 {offsets = [0, 0], sizes = [8, 1], strides = [1, 1]} : vector<8x2xf32> to vector<8x1xf32>
    %252 = vector.extract_strided_slice %250 {offsets = [0, 1], sizes = [8, 1], strides = [1, 1]} : vector<8x2xf32> to vector<8x1xf32>
    %253 = arith.mulf %251, %252 : vector<8x1xf32>
    %254 = vector.extract_strided_slice %18 {offsets = [2, 0], sizes = [1, 64], strides = [1, 1]} : vector<4x64xf32> to vector<1x64xf32>
    %255 = vector.broadcast %254 : vector<1x64xf32> to vector<8x64xf32>
    %256 = arith.mulf %23, %255 : vector<8x64xf32>
    %cst_21 = arith.constant 1.000000e+00 : f32
    %257 = vector.broadcast %cst_21 : f32 to vector<8x64xf32>
    %258 = arith.subf %257, %256 : vector<8x64xf32>
    %259 = vector.extract_strided_slice %258 {offsets = [0, 0], sizes = [8, 32], strides = [1, 1]} : vector<8x64xf32> to vector<8x32xf32>
    %260 = vector.extract_strided_slice %258 {offsets = [0, 32], sizes = [8, 32], strides = [1, 1]} : vector<8x64xf32> to vector<8x32xf32>
    %261 = arith.mulf %259, %260 : vector<8x32xf32>
    %262 = vector.extract_strided_slice %261 {offsets = [0, 0], sizes = [8, 16], strides = [1, 1]} : vector<8x32xf32> to vector<8x16xf32>
    %263 = vector.extract_strided_slice %261 {offsets = [0, 16], sizes = [8, 16], strides = [1, 1]} : vector<8x32xf32> to vector<8x16xf32>
    %264 = arith.mulf %262, %263 : vector<8x16xf32>
    %265 = vector.extract_strided_slice %264 {offsets = [0, 0], sizes = [8, 8], strides = [1, 1]} : vector<8x16xf32> to vector<8x8xf32>
    %266 = vector.extract_strided_slice %264 {offsets = [0, 8], sizes = [8, 8], strides = [1, 1]} : vector<8x16xf32> to vector<8x8xf32>
    %267 = arith.mulf %265, %266 : vector<8x8xf32>
    %268 = vector.extract_strided_slice %267 {offsets = [0, 0], sizes = [8, 4], strides = [1, 1]} : vector<8x8xf32> to vector<8x4xf32>
    %269 = vector.extract_strided_slice %267 {offsets = [0, 4], sizes = [8, 4], strides = [1, 1]} : vector<8x8xf32> to vector<8x4xf32>
    %270 = arith.mulf %268, %269 : vector<8x4xf32>
    %271 = vector.extract_strided_slice %270 {offsets = [0, 0], sizes = [8, 2], strides = [1, 1]} : vector<8x4xf32> to vector<8x2xf32>
    %272 = vector.extract_strided_slice %270 {offsets = [0, 2], sizes = [8, 2], strides = [1, 1]} : vector<8x4xf32> to vector<8x2xf32>
    %273 = arith.mulf %271, %272 : vector<8x2xf32>
    %274 = vector.extract_strided_slice %273 {offsets = [0, 0], sizes = [8, 1], strides = [1, 1]} : vector<8x2xf32> to vector<8x1xf32>
    %275 = vector.extract_strided_slice %273 {offsets = [0, 1], sizes = [8, 1], strides = [1, 1]} : vector<8x2xf32> to vector<8x1xf32>
    %276 = arith.mulf %274, %275 : vector<8x1xf32>
    %277 = vector.extract_strided_slice %19 {offsets = [2, 0], sizes = [1, 64], strides = [1, 1]} : vector<4x64xf32> to vector<1x64xf32>
    %278 = vector.broadcast %277 : vector<1x64xf32> to vector<8x64xf32>
    %279 = arith.mulf %15, %278 : vector<8x64xf32>
    %cst_22 = arith.constant 1.000000e+00 : f32
    %280 = vector.broadcast %cst_22 : f32 to vector<8x64xf32>
    %281 = arith.subf %280, %279 : vector<8x64xf32>
    %282 = vector.extract_strided_slice %281 {offsets = [0, 0], sizes = [8, 32], strides = [1, 1]} : vector<8x64xf32> to vector<8x32xf32>
    %283 = vector.extract_strided_slice %281 {offsets = [0, 32], sizes = [8, 32], strides = [1, 1]} : vector<8x64xf32> to vector<8x32xf32>
    %284 = arith.mulf %282, %283 : vector<8x32xf32>
    %285 = vector.extract_strided_slice %284 {offsets = [0, 0], sizes = [8, 16], strides = [1, 1]} : vector<8x32xf32> to vector<8x16xf32>
    %286 = vector.extract_strided_slice %284 {offsets = [0, 16], sizes = [8, 16], strides = [1, 1]} : vector<8x32xf32> to vector<8x16xf32>
    %287 = arith.mulf %285, %286 : vector<8x16xf32>
    %288 = vector.extract_strided_slice %287 {offsets = [0, 0], sizes = [8, 8], strides = [1, 1]} : vector<8x16xf32> to vector<8x8xf32>
    %289 = vector.extract_strided_slice %287 {offsets = [0, 8], sizes = [8, 8], strides = [1, 1]} : vector<8x16xf32> to vector<8x8xf32>
    %290 = arith.mulf %288, %289 : vector<8x8xf32>
    %291 = vector.extract_strided_slice %290 {offsets = [0, 0], sizes = [8, 4], strides = [1, 1]} : vector<8x8xf32> to vector<8x4xf32>
    %292 = vector.extract_strided_slice %290 {offsets = [0, 4], sizes = [8, 4], strides = [1, 1]} : vector<8x8xf32> to vector<8x4xf32>
    %293 = arith.mulf %291, %292 : vector<8x4xf32>
    %294 = vector.extract_strided_slice %293 {offsets = [0, 0], sizes = [8, 2], strides = [1, 1]} : vector<8x4xf32> to vector<8x2xf32>
    %295 = vector.extract_strided_slice %293 {offsets = [0, 2], sizes = [8, 2], strides = [1, 1]} : vector<8x4xf32> to vector<8x2xf32>
    %296 = arith.mulf %294, %295 : vector<8x2xf32>
    %297 = vector.extract_strided_slice %296 {offsets = [0, 0], sizes = [8, 1], strides = [1, 1]} : vector<8x2xf32> to vector<8x1xf32>
    %298 = vector.extract_strided_slice %296 {offsets = [0, 1], sizes = [8, 1], strides = [1, 1]} : vector<8x2xf32> to vector<8x1xf32>
    %299 = arith.mulf %297, %298 : vector<8x1xf32>
    %300 = vector.extract_strided_slice %16 {offsets = [3, 0], sizes = [1, 64], strides = [1, 1]} : vector<4x64xf32> to vector<1x64xf32>
    %301 = vector.broadcast %300 : vector<1x64xf32> to vector<8x64xf32>
    %302 = arith.mulf %21, %301 : vector<8x64xf32>
    %cst_23 = arith.constant 1.000000e+00 : f32
    %303 = vector.broadcast %cst_23 : f32 to vector<8x64xf32>
    %304 = arith.subf %303, %302 : vector<8x64xf32>
    %305 = vector.extract_strided_slice %304 {offsets = [0, 0], sizes = [8, 32], strides = [1, 1]} : vector<8x64xf32> to vector<8x32xf32>
    %306 = vector.extract_strided_slice %304 {offsets = [0, 32], sizes = [8, 32], strides = [1, 1]} : vector<8x64xf32> to vector<8x32xf32>
    %307 = arith.mulf %305, %306 : vector<8x32xf32>
    %308 = vector.extract_strided_slice %307 {offsets = [0, 0], sizes = [8, 16], strides = [1, 1]} : vector<8x32xf32> to vector<8x16xf32>
    %309 = vector.extract_strided_slice %307 {offsets = [0, 16], sizes = [8, 16], strides = [1, 1]} : vector<8x32xf32> to vector<8x16xf32>
    %310 = arith.mulf %308, %309 : vector<8x16xf32>
    %311 = vector.extract_strided_slice %310 {offsets = [0, 0], sizes = [8, 8], strides = [1, 1]} : vector<8x16xf32> to vector<8x8xf32>
    %312 = vector.extract_strided_slice %310 {offsets = [0, 8], sizes = [8, 8], strides = [1, 1]} : vector<8x16xf32> to vector<8x8xf32>
    %313 = arith.mulf %311, %312 : vector<8x8xf32>
    %314 = vector.extract_strided_slice %313 {offsets = [0, 0], sizes = [8, 4], strides = [1, 1]} : vector<8x8xf32> to vector<8x4xf32>
    %315 = vector.extract_strided_slice %313 {offsets = [0, 4], sizes = [8, 4], strides = [1, 1]} : vector<8x8xf32> to vector<8x4xf32>
    %316 = arith.mulf %314, %315 : vector<8x4xf32>
    %317 = vector.extract_strided_slice %316 {offsets = [0, 0], sizes = [8, 2], strides = [1, 1]} : vector<8x4xf32> to vector<8x2xf32>
    %318 = vector.extract_strided_slice %316 {offsets = [0, 2], sizes = [8, 2], strides = [1, 1]} : vector<8x4xf32> to vector<8x2xf32>
    %319 = arith.mulf %317, %318 : vector<8x2xf32>
    %320 = vector.extract_strided_slice %319 {offsets = [0, 0], sizes = [8, 1], strides = [1, 1]} : vector<8x2xf32> to vector<8x1xf32>
    %321 = vector.extract_strided_slice %319 {offsets = [0, 1], sizes = [8, 1], strides = [1, 1]} : vector<8x2xf32> to vector<8x1xf32>
    %322 = arith.mulf %320, %321 : vector<8x1xf32>
    %323 = vector.extract_strided_slice %17 {offsets = [3, 0], sizes = [1, 64], strides = [1, 1]} : vector<4x64xf32> to vector<1x64xf32>
    %324 = vector.broadcast %323 : vector<1x64xf32> to vector<8x64xf32>
    %325 = arith.mulf %15, %324 : vector<8x64xf32>
    %cst_24 = arith.constant 1.000000e+00 : f32
    %326 = vector.broadcast %cst_24 : f32 to vector<8x64xf32>
    %327 = arith.subf %326, %325 : vector<8x64xf32>
    %328 = vector.extract_strided_slice %327 {offsets = [0, 0], sizes = [8, 32], strides = [1, 1]} : vector<8x64xf32> to vector<8x32xf32>
    %329 = vector.extract_strided_slice %327 {offsets = [0, 32], sizes = [8, 32], strides = [1, 1]} : vector<8x64xf32> to vector<8x32xf32>
    %330 = arith.mulf %328, %329 : vector<8x32xf32>
    %331 = vector.extract_strided_slice %330 {offsets = [0, 0], sizes = [8, 16], strides = [1, 1]} : vector<8x32xf32> to vector<8x16xf32>
    %332 = vector.extract_strided_slice %330 {offsets = [0, 16], sizes = [8, 16], strides = [1, 1]} : vector<8x32xf32> to vector<8x16xf32>
    %333 = arith.mulf %331, %332 : vector<8x16xf32>
    %334 = vector.extract_strided_slice %333 {offsets = [0, 0], sizes = [8, 8], strides = [1, 1]} : vector<8x16xf32> to vector<8x8xf32>
    %335 = vector.extract_strided_slice %333 {offsets = [0, 8], sizes = [8, 8], strides = [1, 1]} : vector<8x16xf32> to vector<8x8xf32>
    %336 = arith.mulf %334, %335 : vector<8x8xf32>
    %337 = vector.extract_strided_slice %336 {offsets = [0, 0], sizes = [8, 4], strides = [1, 1]} : vector<8x8xf32> to vector<8x4xf32>
    %338 = vector.extract_strided_slice %336 {offsets = [0, 4], sizes = [8, 4], strides = [1, 1]} : vector<8x8xf32> to vector<8x4xf32>
    %339 = arith.mulf %337, %338 : vector<8x4xf32>
    %340 = vector.extract_strided_slice %339 {offsets = [0, 0], sizes = [8, 2], strides = [1, 1]} : vector<8x4xf32> to vector<8x2xf32>
    %341 = vector.extract_strided_slice %339 {offsets = [0, 2], sizes = [8, 2], strides = [1, 1]} : vector<8x4xf32> to vector<8x2xf32>
    %342 = arith.mulf %340, %341 : vector<8x2xf32>
    %343 = vector.extract_strided_slice %342 {offsets = [0, 0], sizes = [8, 1], strides = [1, 1]} : vector<8x2xf32> to vector<8x1xf32>
    %344 = vector.extract_strided_slice %342 {offsets = [0, 1], sizes = [8, 1], strides = [1, 1]} : vector<8x2xf32> to vector<8x1xf32>
    %345 = arith.mulf %343, %344 : vector<8x1xf32>
    %346 = vector.extract_strided_slice %18 {offsets = [3, 0], sizes = [1, 64], strides = [1, 1]} : vector<4x64xf32> to vector<1x64xf32>
    %347 = vector.broadcast %346 : vector<1x64xf32> to vector<8x64xf32>
    %348 = arith.mulf %23, %347 : vector<8x64xf32>
    %cst_25 = arith.constant 1.000000e+00 : f32
    %349 = vector.broadcast %cst_25 : f32 to vector<8x64xf32>
    %350 = arith.subf %349, %348 : vector<8x64xf32>
    %351 = vector.extract_strided_slice %350 {offsets = [0, 0], sizes = [8, 32], strides = [1, 1]} : vector<8x64xf32> to vector<8x32xf32>
    %352 = vector.extract_strided_slice %350 {offsets = [0, 32], sizes = [8, 32], strides = [1, 1]} : vector<8x64xf32> to vector<8x32xf32>
    %353 = arith.mulf %351, %352 : vector<8x32xf32>
    %354 = vector.extract_strided_slice %353 {offsets = [0, 0], sizes = [8, 16], strides = [1, 1]} : vector<8x32xf32> to vector<8x16xf32>
    %355 = vector.extract_strided_slice %353 {offsets = [0, 16], sizes = [8, 16], strides = [1, 1]} : vector<8x32xf32> to vector<8x16xf32>
    %356 = arith.mulf %354, %355 : vector<8x16xf32>
    %357 = vector.extract_strided_slice %356 {offsets = [0, 0], sizes = [8, 8], strides = [1, 1]} : vector<8x16xf32> to vector<8x8xf32>
    %358 = vector.extract_strided_slice %356 {offsets = [0, 8], sizes = [8, 8], strides = [1, 1]} : vector<8x16xf32> to vector<8x8xf32>
    %359 = arith.mulf %357, %358 : vector<8x8xf32>
    %360 = vector.extract_strided_slice %359 {offsets = [0, 0], sizes = [8, 4], strides = [1, 1]} : vector<8x8xf32> to vector<8x4xf32>
    %361 = vector.extract_strided_slice %359 {offsets = [0, 4], sizes = [8, 4], strides = [1, 1]} : vector<8x8xf32> to vector<8x4xf32>
    %362 = arith.mulf %360, %361 : vector<8x4xf32>
    %363 = vector.extract_strided_slice %362 {offsets = [0, 0], sizes = [8, 2], strides = [1, 1]} : vector<8x4xf32> to vector<8x2xf32>
    %364 = vector.extract_strided_slice %362 {offsets = [0, 2], sizes = [8, 2], strides = [1, 1]} : vector<8x4xf32> to vector<8x2xf32>
    %365 = arith.mulf %363, %364 : vector<8x2xf32>
    %366 = vector.extract_strided_slice %365 {offsets = [0, 0], sizes = [8, 1], strides = [1, 1]} : vector<8x2xf32> to vector<8x1xf32>
    %367 = vector.extract_strided_slice %365 {offsets = [0, 1], sizes = [8, 1], strides = [1, 1]} : vector<8x2xf32> to vector<8x1xf32>
    %368 = arith.mulf %366, %367 : vector<8x1xf32>
    %369 = vector.extract_strided_slice %19 {offsets = [3, 0], sizes = [1, 64], strides = [1, 1]} : vector<4x64xf32> to vector<1x64xf32>
    %370 = vector.broadcast %369 : vector<1x64xf32> to vector<8x64xf32>
    %371 = arith.mulf %15, %370 : vector<8x64xf32>
    %cst_26 = arith.constant 1.000000e+00 : f32
    %372 = vector.broadcast %cst_26 : f32 to vector<8x64xf32>
    %373 = arith.subf %372, %371 : vector<8x64xf32>
    %374 = vector.extract_strided_slice %373 {offsets = [0, 0], sizes = [8, 32], strides = [1, 1]} : vector<8x64xf32> to vector<8x32xf32>
    %375 = vector.extract_strided_slice %373 {offsets = [0, 32], sizes = [8, 32], strides = [1, 1]} : vector<8x64xf32> to vector<8x32xf32>
    %376 = arith.mulf %374, %375 : vector<8x32xf32>
    %377 = vector.extract_strided_slice %376 {offsets = [0, 0], sizes = [8, 16], strides = [1, 1]} : vector<8x32xf32> to vector<8x16xf32>
    %378 = vector.extract_strided_slice %376 {offsets = [0, 16], sizes = [8, 16], strides = [1, 1]} : vector<8x32xf32> to vector<8x16xf32>
    %379 = arith.mulf %377, %378 : vector<8x16xf32>
    %380 = vector.extract_strided_slice %379 {offsets = [0, 0], sizes = [8, 8], strides = [1, 1]} : vector<8x16xf32> to vector<8x8xf32>
    %381 = vector.extract_strided_slice %379 {offsets = [0, 8], sizes = [8, 8], strides = [1, 1]} : vector<8x16xf32> to vector<8x8xf32>
    %382 = arith.mulf %380, %381 : vector<8x8xf32>
    %383 = vector.extract_strided_slice %382 {offsets = [0, 0], sizes = [8, 4], strides = [1, 1]} : vector<8x8xf32> to vector<8x4xf32>
    %384 = vector.extract_strided_slice %382 {offsets = [0, 4], sizes = [8, 4], strides = [1, 1]} : vector<8x8xf32> to vector<8x4xf32>
    %385 = arith.mulf %383, %384 : vector<8x4xf32>
    %386 = vector.extract_strided_slice %385 {offsets = [0, 0], sizes = [8, 2], strides = [1, 1]} : vector<8x4xf32> to vector<8x2xf32>
    %387 = vector.extract_strided_slice %385 {offsets = [0, 2], sizes = [8, 2], strides = [1, 1]} : vector<8x4xf32> to vector<8x2xf32>
    %388 = arith.mulf %386, %387 : vector<8x2xf32>
    %389 = vector.extract_strided_slice %388 {offsets = [0, 0], sizes = [8, 1], strides = [1, 1]} : vector<8x2xf32> to vector<8x1xf32>
    %390 = vector.extract_strided_slice %388 {offsets = [0, 1], sizes = [8, 1], strides = [1, 1]} : vector<8x2xf32> to vector<8x1xf32>
    %391 = arith.mulf %389, %390 : vector<8x1xf32>
    %cst_27 = arith.constant 1.000000e+00 : f32
    %392 = vector.broadcast %cst_27 : f32 to vector<8x1xf32>
    %393 = arith.subf %392, %69 : vector<8x1xf32>
    %cst_28 = arith.constant 1.000000e+00 : f32
    %394 = vector.broadcast %cst_28 : f32 to vector<8x1xf32>
    %395 = arith.subf %394, %161 : vector<8x1xf32>
    %cst_29 = arith.constant 1.000000e+00 : f32
    %396 = vector.broadcast %cst_29 : f32 to vector<8x1xf32>
    %397 = arith.subf %396, %253 : vector<8x1xf32>
    %cst_30 = arith.constant 1.000000e+00 : f32
    %398 = vector.broadcast %cst_30 : f32 to vector<8x1xf32>
    %399 = arith.subf %398, %345 : vector<8x1xf32>
    %400 = tpu.concatenate %46, %138, %230, %322, %393, %395, %397, %399 in 1 : vector<8x1xf32>, vector<8x1xf32>, vector<8x1xf32>, vector<8x1xf32>, vector<8x1xf32>, vector<8x1xf32>, vector<8x1xf32>, vector<8x1xf32> -> vector<8x8xf32>
    %cst_31 = arith.constant 1.000000e+00 : f32
    %401 = vector.broadcast %cst_31 : f32 to vector<8x1xf32>
    %402 = arith.subf %401, %115 : vector<8x1xf32>
    %cst_32 = arith.constant 1.000000e+00 : f32
    %403 = vector.broadcast %cst_32 : f32 to vector<8x1xf32>
    %404 = arith.subf %403, %207 : vector<8x1xf32>
    %cst_33 = arith.constant 1.000000e+00 : f32
    %405 = vector.broadcast %cst_33 : f32 to vector<8x1xf32>
    %406 = arith.subf %405, %299 : vector<8x1xf32>
    %cst_34 = arith.constant 1.000000e+00 : f32
    %407 = vector.broadcast %cst_34 : f32 to vector<8x1xf32>
    %408 = arith.subf %407, %391 : vector<8x1xf32>
    %409 = tpu.concatenate %92, %184, %276, %368, %402, %404, %406, %408 in 1 : vector<8x1xf32>, vector<8x1xf32>, vector<8x1xf32>, vector<8x1xf32>, vector<8x1xf32>, vector<8x1xf32>, vector<8x1xf32>, vector<8x1xf32> -> vector<8x8xf32>
    %c40 = arith.constant 40 : index
    %c0_35 = arith.constant 0 : index
    %410 = vector.load %arg1[%c40, %c0_35] : memref<296x128xf32, #tpu.memory_space<vmem>>, vector<3x8xf32>
    %c48 = arith.constant 48 : index
    %c0_36 = arith.constant 0 : index
    %411 = vector.load %arg1[%c48, %c0_36] : memref<296x128xf32, #tpu.memory_space<vmem>>, vector<3x8xf32>
    %c56 = arith.constant 56 : index
    %c0_37 = arith.constant 0 : index
    %412 = vector.load %arg1[%c56, %c0_37] : memref<296x128xf32, #tpu.memory_space<vmem>>, vector<3x8xf32>
    %c64 = arith.constant 64 : index
    %c0_38 = arith.constant 0 : index
    %413 = vector.load %arg1[%c64, %c0_38] : memref<296x128xf32, #tpu.memory_space<vmem>>, vector<3x8xf32>
    %cst_39 = arith.constant 1.000000e+00 : f32
    %414 = vector.broadcast %cst_39 : f32 to vector<8x8xf32>
    %415 = arith.subf %414, %400 : vector<8x8xf32>
    %cst_40 = arith.constant 1.000000e+00 : f32
    %416 = vector.broadcast %cst_40 : f32 to vector<8x8xf32>
    %417 = arith.subf %416, %409 : vector<8x8xf32>
    %418 = vector.extract_strided_slice %410 {offsets = [0, 0], sizes = [1, 8], strides = [1, 1]} : vector<3x8xf32> to vector<1x8xf32>
    %419 = vector.broadcast %418 : vector<1x8xf32> to vector<8x8xf32>
    %420 = arith.mulf %415, %419 : vector<8x8xf32>
    %cst_41 = arith.constant 1.000000e+00 : f32
    %421 = vector.broadcast %cst_41 : f32 to vector<8x8xf32>
    %422 = arith.subf %421, %420 : vector<8x8xf32>
    %423 = vector.extract_strided_slice %422 {offsets = [0, 0], sizes = [8, 4], strides = [1, 1]} : vector<8x8xf32> to vector<8x4xf32>
    %424 = vector.extract_strided_slice %422 {offsets = [0, 4], sizes = [8, 4], strides = [1, 1]} : vector<8x8xf32> to vector<8x4xf32>
    %425 = arith.mulf %423, %424 : vector<8x4xf32>
    %426 = vector.extract_strided_slice %425 {offsets = [0, 0], sizes = [8, 2], strides = [1, 1]} : vector<8x4xf32> to vector<8x2xf32>
    %427 = vector.extract_strided_slice %425 {offsets = [0, 2], sizes = [8, 2], strides = [1, 1]} : vector<8x4xf32> to vector<8x2xf32>
    %428 = arith.mulf %426, %427 : vector<8x2xf32>
    %429 = vector.extract_strided_slice %428 {offsets = [0, 0], sizes = [8, 1], strides = [1, 1]} : vector<8x2xf32> to vector<8x1xf32>
    %430 = vector.extract_strided_slice %428 {offsets = [0, 1], sizes = [8, 1], strides = [1, 1]} : vector<8x2xf32> to vector<8x1xf32>
    %431 = arith.mulf %429, %430 : vector<8x1xf32>
    %432 = vector.extract_strided_slice %411 {offsets = [0, 0], sizes = [1, 8], strides = [1, 1]} : vector<3x8xf32> to vector<1x8xf32>
    %433 = vector.broadcast %432 : vector<1x8xf32> to vector<8x8xf32>
    %434 = arith.mulf %400, %433 : vector<8x8xf32>
    %cst_42 = arith.constant 1.000000e+00 : f32
    %435 = vector.broadcast %cst_42 : f32 to vector<8x8xf32>
    %436 = arith.subf %435, %434 : vector<8x8xf32>
    %437 = vector.extract_strided_slice %436 {offsets = [0, 0], sizes = [8, 4], strides = [1, 1]} : vector<8x8xf32> to vector<8x4xf32>
    %438 = vector.extract_strided_slice %436 {offsets = [0, 4], sizes = [8, 4], strides = [1, 1]} : vector<8x8xf32> to vector<8x4xf32>
    %439 = arith.mulf %437, %438 : vector<8x4xf32>
    %440 = vector.extract_strided_slice %439 {offsets = [0, 0], sizes = [8, 2], strides = [1, 1]} : vector<8x4xf32> to vector<8x2xf32>
    %441 = vector.extract_strided_slice %439 {offsets = [0, 2], sizes = [8, 2], strides = [1, 1]} : vector<8x4xf32> to vector<8x2xf32>
    %442 = arith.mulf %440, %441 : vector<8x2xf32>
    %443 = vector.extract_strided_slice %442 {offsets = [0, 0], sizes = [8, 1], strides = [1, 1]} : vector<8x2xf32> to vector<8x1xf32>
    %444 = vector.extract_strided_slice %442 {offsets = [0, 1], sizes = [8, 1], strides = [1, 1]} : vector<8x2xf32> to vector<8x1xf32>
    %445 = arith.mulf %443, %444 : vector<8x1xf32>
    %446 = vector.extract_strided_slice %412 {offsets = [0, 0], sizes = [1, 8], strides = [1, 1]} : vector<3x8xf32> to vector<1x8xf32>
    %447 = vector.broadcast %446 : vector<1x8xf32> to vector<8x8xf32>
    %448 = arith.mulf %417, %447 : vector<8x8xf32>
    %cst_43 = arith.constant 1.000000e+00 : f32
    %449 = vector.broadcast %cst_43 : f32 to vector<8x8xf32>
    %450 = arith.subf %449, %448 : vector<8x8xf32>
    %451 = vector.extract_strided_slice %450 {offsets = [0, 0], sizes = [8, 4], strides = [1, 1]} : vector<8x8xf32> to vector<8x4xf32>
    %452 = vector.extract_strided_slice %450 {offsets = [0, 4], sizes = [8, 4], strides = [1, 1]} : vector<8x8xf32> to vector<8x4xf32>
    %453 = arith.mulf %451, %452 : vector<8x4xf32>
    %454 = vector.extract_strided_slice %453 {offsets = [0, 0], sizes = [8, 2], strides = [1, 1]} : vector<8x4xf32> to vector<8x2xf32>
    %455 = vector.extract_strided_slice %453 {offsets = [0, 2], sizes = [8, 2], strides = [1, 1]} : vector<8x4xf32> to vector<8x2xf32>
    %456 = arith.mulf %454, %455 : vector<8x2xf32>
    %457 = vector.extract_strided_slice %456 {offsets = [0, 0], sizes = [8, 1], strides = [1, 1]} : vector<8x2xf32> to vector<8x1xf32>
    %458 = vector.extract_strided_slice %456 {offsets = [0, 1], sizes = [8, 1], strides = [1, 1]} : vector<8x2xf32> to vector<8x1xf32>
    %459 = arith.mulf %457, %458 : vector<8x1xf32>
    %460 = vector.extract_strided_slice %413 {offsets = [0, 0], sizes = [1, 8], strides = [1, 1]} : vector<3x8xf32> to vector<1x8xf32>
    %461 = vector.broadcast %460 : vector<1x8xf32> to vector<8x8xf32>
    %462 = arith.mulf %409, %461 : vector<8x8xf32>
    %cst_44 = arith.constant 1.000000e+00 : f32
    %463 = vector.broadcast %cst_44 : f32 to vector<8x8xf32>
    %464 = arith.subf %463, %462 : vector<8x8xf32>
    %465 = vector.extract_strided_slice %464 {offsets = [0, 0], sizes = [8, 4], strides = [1, 1]} : vector<8x8xf32> to vector<8x4xf32>
    %466 = vector.extract_strided_slice %464 {offsets = [0, 4], sizes = [8, 4], strides = [1, 1]} : vector<8x8xf32> to vector<8x4xf32>
    %467 = arith.mulf %465, %466 : vector<8x4xf32>
    %468 = vector.extract_strided_slice %467 {offsets = [0, 0], sizes = [8, 2], strides = [1, 1]} : vector<8x4xf32> to vector<8x2xf32>
    %469 = vector.extract_strided_slice %467 {offsets = [0, 2], sizes = [8, 2], strides = [1, 1]} : vector<8x4xf32> to vector<8x2xf32>
    %470 = arith.mulf %468, %469 : vector<8x2xf32>
    %471 = vector.extract_strided_slice %470 {offsets = [0, 0], sizes = [8, 1], strides = [1, 1]} : vector<8x2xf32> to vector<8x1xf32>
    %472 = vector.extract_strided_slice %470 {offsets = [0, 1], sizes = [8, 1], strides = [1, 1]} : vector<8x2xf32> to vector<8x1xf32>
    %473 = arith.mulf %471, %472 : vector<8x1xf32>
    %474 = vector.extract_strided_slice %410 {offsets = [1, 0], sizes = [1, 8], strides = [1, 1]} : vector<3x8xf32> to vector<1x8xf32>
    %475 = vector.broadcast %474 : vector<1x8xf32> to vector<8x8xf32>
    %476 = arith.mulf %415, %475 : vector<8x8xf32>
    %cst_45 = arith.constant 1.000000e+00 : f32
    %477 = vector.broadcast %cst_45 : f32 to vector<8x8xf32>
    %478 = arith.subf %477, %476 : vector<8x8xf32>
    %479 = vector.extract_strided_slice %478 {offsets = [0, 0], sizes = [8, 4], strides = [1, 1]} : vector<8x8xf32> to vector<8x4xf32>
    %480 = vector.extract_strided_slice %478 {offsets = [0, 4], sizes = [8, 4], strides = [1, 1]} : vector<8x8xf32> to vector<8x4xf32>
    %481 = arith.mulf %479, %480 : vector<8x4xf32>
    %482 = vector.extract_strided_slice %481 {offsets = [0, 0], sizes = [8, 2], strides = [1, 1]} : vector<8x4xf32> to vector<8x2xf32>
    %483 = vector.extract_strided_slice %481 {offsets = [0, 2], sizes = [8, 2], strides = [1, 1]} : vector<8x4xf32> to vector<8x2xf32>
    %484 = arith.mulf %482, %483 : vector<8x2xf32>
    %485 = vector.extract_strided_slice %484 {offsets = [0, 0], sizes = [8, 1], strides = [1, 1]} : vector<8x2xf32> to vector<8x1xf32>
    %486 = vector.extract_strided_slice %484 {offsets = [0, 1], sizes = [8, 1], strides = [1, 1]} : vector<8x2xf32> to vector<8x1xf32>
    %487 = arith.mulf %485, %486 : vector<8x1xf32>
    %488 = vector.extract_strided_slice %411 {offsets = [1, 0], sizes = [1, 8], strides = [1, 1]} : vector<3x8xf32> to vector<1x8xf32>
    %489 = vector.broadcast %488 : vector<1x8xf32> to vector<8x8xf32>
    %490 = arith.mulf %400, %489 : vector<8x8xf32>
    %cst_46 = arith.constant 1.000000e+00 : f32
    %491 = vector.broadcast %cst_46 : f32 to vector<8x8xf32>
    %492 = arith.subf %491, %490 : vector<8x8xf32>
    %493 = vector.extract_strided_slice %492 {offsets = [0, 0], sizes = [8, 4], strides = [1, 1]} : vector<8x8xf32> to vector<8x4xf32>
    %494 = vector.extract_strided_slice %492 {offsets = [0, 4], sizes = [8, 4], strides = [1, 1]} : vector<8x8xf32> to vector<8x4xf32>
    %495 = arith.mulf %493, %494 : vector<8x4xf32>
    %496 = vector.extract_strided_slice %495 {offsets = [0, 0], sizes = [8, 2], strides = [1, 1]} : vector<8x4xf32> to vector<8x2xf32>
    %497 = vector.extract_strided_slice %495 {offsets = [0, 2], sizes = [8, 2], strides = [1, 1]} : vector<8x4xf32> to vector<8x2xf32>
    %498 = arith.mulf %496, %497 : vector<8x2xf32>
    %499 = vector.extract_strided_slice %498 {offsets = [0, 0], sizes = [8, 1], strides = [1, 1]} : vector<8x2xf32> to vector<8x1xf32>
    %500 = vector.extract_strided_slice %498 {offsets = [0, 1], sizes = [8, 1], strides = [1, 1]} : vector<8x2xf32> to vector<8x1xf32>
    %501 = arith.mulf %499, %500 : vector<8x1xf32>
    %502 = vector.extract_strided_slice %412 {offsets = [1, 0], sizes = [1, 8], strides = [1, 1]} : vector<3x8xf32> to vector<1x8xf32>
    %503 = vector.broadcast %502 : vector<1x8xf32> to vector<8x8xf32>
    %504 = arith.mulf %417, %503 : vector<8x8xf32>
    %cst_47 = arith.constant 1.000000e+00 : f32
    %505 = vector.broadcast %cst_47 : f32 to vector<8x8xf32>
    %506 = arith.subf %505, %504 : vector<8x8xf32>
    %507 = vector.extract_strided_slice %506 {offsets = [0, 0], sizes = [8, 4], strides = [1, 1]} : vector<8x8xf32> to vector<8x4xf32>
    %508 = vector.extract_strided_slice %506 {offsets = [0, 4], sizes = [8, 4], strides = [1, 1]} : vector<8x8xf32> to vector<8x4xf32>
    %509 = arith.mulf %507, %508 : vector<8x4xf32>
    %510 = vector.extract_strided_slice %509 {offsets = [0, 0], sizes = [8, 2], strides = [1, 1]} : vector<8x4xf32> to vector<8x2xf32>
    %511 = vector.extract_strided_slice %509 {offsets = [0, 2], sizes = [8, 2], strides = [1, 1]} : vector<8x4xf32> to vector<8x2xf32>
    %512 = arith.mulf %510, %511 : vector<8x2xf32>
    %513 = vector.extract_strided_slice %512 {offsets = [0, 0], sizes = [8, 1], strides = [1, 1]} : vector<8x2xf32> to vector<8x1xf32>
    %514 = vector.extract_strided_slice %512 {offsets = [0, 1], sizes = [8, 1], strides = [1, 1]} : vector<8x2xf32> to vector<8x1xf32>
    %515 = arith.mulf %513, %514 : vector<8x1xf32>
    %516 = vector.extract_strided_slice %413 {offsets = [1, 0], sizes = [1, 8], strides = [1, 1]} : vector<3x8xf32> to vector<1x8xf32>
    %517 = vector.broadcast %516 : vector<1x8xf32> to vector<8x8xf32>
    %518 = arith.mulf %409, %517 : vector<8x8xf32>
    %cst_48 = arith.constant 1.000000e+00 : f32
    %519 = vector.broadcast %cst_48 : f32 to vector<8x8xf32>
    %520 = arith.subf %519, %518 : vector<8x8xf32>
    %521 = vector.extract_strided_slice %520 {offsets = [0, 0], sizes = [8, 4], strides = [1, 1]} : vector<8x8xf32> to vector<8x4xf32>
    %522 = vector.extract_strided_slice %520 {offsets = [0, 4], sizes = [8, 4], strides = [1, 1]} : vector<8x8xf32> to vector<8x4xf32>
    %523 = arith.mulf %521, %522 : vector<8x4xf32>
    %524 = vector.extract_strided_slice %523 {offsets = [0, 0], sizes = [8, 2], strides = [1, 1]} : vector<8x4xf32> to vector<8x2xf32>
    %525 = vector.extract_strided_slice %523 {offsets = [0, 2], sizes = [8, 2], strides = [1, 1]} : vector<8x4xf32> to vector<8x2xf32>
    %526 = arith.mulf %524, %525 : vector<8x2xf32>
    %527 = vector.extract_strided_slice %526 {offsets = [0, 0], sizes = [8, 1], strides = [1, 1]} : vector<8x2xf32> to vector<8x1xf32>
    %528 = vector.extract_strided_slice %526 {offsets = [0, 1], sizes = [8, 1], strides = [1, 1]} : vector<8x2xf32> to vector<8x1xf32>
    %529 = arith.mulf %527, %528 : vector<8x1xf32>
    %530 = vector.extract_strided_slice %410 {offsets = [2, 0], sizes = [1, 8], strides = [1, 1]} : vector<3x8xf32> to vector<1x8xf32>
    %531 = vector.broadcast %530 : vector<1x8xf32> to vector<8x8xf32>
    %532 = arith.mulf %415, %531 : vector<8x8xf32>
    %cst_49 = arith.constant 1.000000e+00 : f32
    %533 = vector.broadcast %cst_49 : f32 to vector<8x8xf32>
    %534 = arith.subf %533, %532 : vector<8x8xf32>
    %535 = vector.extract_strided_slice %534 {offsets = [0, 0], sizes = [8, 4], strides = [1, 1]} : vector<8x8xf32> to vector<8x4xf32>
    %536 = vector.extract_strided_slice %534 {offsets = [0, 4], sizes = [8, 4], strides = [1, 1]} : vector<8x8xf32> to vector<8x4xf32>
    %537 = arith.mulf %535, %536 : vector<8x4xf32>
    %538 = vector.extract_strided_slice %537 {offsets = [0, 0], sizes = [8, 2], strides = [1, 1]} : vector<8x4xf32> to vector<8x2xf32>
    %539 = vector.extract_strided_slice %537 {offsets = [0, 2], sizes = [8, 2], strides = [1, 1]} : vector<8x4xf32> to vector<8x2xf32>
    %540 = arith.mulf %538, %539 : vector<8x2xf32>
    %541 = vector.extract_strided_slice %540 {offsets = [0, 0], sizes = [8, 1], strides = [1, 1]} : vector<8x2xf32> to vector<8x1xf32>
    %542 = vector.extract_strided_slice %540 {offsets = [0, 1], sizes = [8, 1], strides = [1, 1]} : vector<8x2xf32> to vector<8x1xf32>
    %543 = arith.mulf %541, %542 : vector<8x1xf32>
    %544 = vector.extract_strided_slice %411 {offsets = [2, 0], sizes = [1, 8], strides = [1, 1]} : vector<3x8xf32> to vector<1x8xf32>
    %545 = vector.broadcast %544 : vector<1x8xf32> to vector<8x8xf32>
    %546 = arith.mulf %400, %545 : vector<8x8xf32>
    %cst_50 = arith.constant 1.000000e+00 : f32
    %547 = vector.broadcast %cst_50 : f32 to vector<8x8xf32>
    %548 = arith.subf %547, %546 : vector<8x8xf32>
    %549 = vector.extract_strided_slice %548 {offsets = [0, 0], sizes = [8, 4], strides = [1, 1]} : vector<8x8xf32> to vector<8x4xf32>
    %550 = vector.extract_strided_slice %548 {offsets = [0, 4], sizes = [8, 4], strides = [1, 1]} : vector<8x8xf32> to vector<8x4xf32>
    %551 = arith.mulf %549, %550 : vector<8x4xf32>
    %552 = vector.extract_strided_slice %551 {offsets = [0, 0], sizes = [8, 2], strides = [1, 1]} : vector<8x4xf32> to vector<8x2xf32>
    %553 = vector.extract_strided_slice %551 {offsets = [0, 2], sizes = [8, 2], strides = [1, 1]} : vector<8x4xf32> to vector<8x2xf32>
    %554 = arith.mulf %552, %553 : vector<8x2xf32>
    %555 = vector.extract_strided_slice %554 {offsets = [0, 0], sizes = [8, 1], strides = [1, 1]} : vector<8x2xf32> to vector<8x1xf32>
    %556 = vector.extract_strided_slice %554 {offsets = [0, 1], sizes = [8, 1], strides = [1, 1]} : vector<8x2xf32> to vector<8x1xf32>
    %557 = arith.mulf %555, %556 : vector<8x1xf32>
    %558 = vector.extract_strided_slice %412 {offsets = [2, 0], sizes = [1, 8], strides = [1, 1]} : vector<3x8xf32> to vector<1x8xf32>
    %559 = vector.broadcast %558 : vector<1x8xf32> to vector<8x8xf32>
    %560 = arith.mulf %417, %559 : vector<8x8xf32>
    %cst_51 = arith.constant 1.000000e+00 : f32
    %561 = vector.broadcast %cst_51 : f32 to vector<8x8xf32>
    %562 = arith.subf %561, %560 : vector<8x8xf32>
    %563 = vector.extract_strided_slice %562 {offsets = [0, 0], sizes = [8, 4], strides = [1, 1]} : vector<8x8xf32> to vector<8x4xf32>
    %564 = vector.extract_strided_slice %562 {offsets = [0, 4], sizes = [8, 4], strides = [1, 1]} : vector<8x8xf32> to vector<8x4xf32>
    %565 = arith.mulf %563, %564 : vector<8x4xf32>
    %566 = vector.extract_strided_slice %565 {offsets = [0, 0], sizes = [8, 2], strides = [1, 1]} : vector<8x4xf32> to vector<8x2xf32>
    %567 = vector.extract_strided_slice %565 {offsets = [0, 2], sizes = [8, 2], strides = [1, 1]} : vector<8x4xf32> to vector<8x2xf32>
    %568 = arith.mulf %566, %567 : vector<8x2xf32>
    %569 = vector.extract_strided_slice %568 {offsets = [0, 0], sizes = [8, 1], strides = [1, 1]} : vector<8x2xf32> to vector<8x1xf32>
    %570 = vector.extract_strided_slice %568 {offsets = [0, 1], sizes = [8, 1], strides = [1, 1]} : vector<8x2xf32> to vector<8x1xf32>
    %571 = arith.mulf %569, %570 : vector<8x1xf32>
    %572 = vector.extract_strided_slice %413 {offsets = [2, 0], sizes = [1, 8], strides = [1, 1]} : vector<3x8xf32> to vector<1x8xf32>
    %573 = vector.broadcast %572 : vector<1x8xf32> to vector<8x8xf32>
    %574 = arith.mulf %409, %573 : vector<8x8xf32>
    %cst_52 = arith.constant 1.000000e+00 : f32
    %575 = vector.broadcast %cst_52 : f32 to vector<8x8xf32>
    %576 = arith.subf %575, %574 : vector<8x8xf32>
    %577 = vector.extract_strided_slice %576 {offsets = [0, 0], sizes = [8, 4], strides = [1, 1]} : vector<8x8xf32> to vector<8x4xf32>
    %578 = vector.extract_strided_slice %576 {offsets = [0, 4], sizes = [8, 4], strides = [1, 1]} : vector<8x8xf32> to vector<8x4xf32>
    %579 = arith.mulf %577, %578 : vector<8x4xf32>
    %580 = vector.extract_strided_slice %579 {offsets = [0, 0], sizes = [8, 2], strides = [1, 1]} : vector<8x4xf32> to vector<8x2xf32>
    %581 = vector.extract_strided_slice %579 {offsets = [0, 2], sizes = [8, 2], strides = [1, 1]} : vector<8x4xf32> to vector<8x2xf32>
    %582 = arith.mulf %580, %581 : vector<8x2xf32>
    %583 = vector.extract_strided_slice %582 {offsets = [0, 0], sizes = [8, 1], strides = [1, 1]} : vector<8x2xf32> to vector<8x1xf32>
    %584 = vector.extract_strided_slice %582 {offsets = [0, 1], sizes = [8, 1], strides = [1, 1]} : vector<8x2xf32> to vector<8x1xf32>
    %585 = arith.mulf %583, %584 : vector<8x1xf32>
    %cst_53 = arith.constant 1.000000e+00 : f32
    %586 = vector.broadcast %cst_53 : f32 to vector<8x1xf32>
    %587 = arith.subf %586, %445 : vector<8x1xf32>
    %cst_54 = arith.constant 1.000000e+00 : f32
    %588 = vector.broadcast %cst_54 : f32 to vector<8x1xf32>
    %589 = arith.subf %588, %501 : vector<8x1xf32>
    %cst_55 = arith.constant 1.000000e+00 : f32
    %590 = vector.broadcast %cst_55 : f32 to vector<8x1xf32>
    %591 = arith.subf %590, %557 : vector<8x1xf32>
    %592 = tpu.concatenate %431, %487, %543, %587, %589, %591 in 1 : vector<8x1xf32>, vector<8x1xf32>, vector<8x1xf32>, vector<8x1xf32>, vector<8x1xf32>, vector<8x1xf32> -> vector<8x6xf32>
    %cst_56 = arith.constant 1.000000e+00 : f32
    %593 = vector.broadcast %cst_56 : f32 to vector<8x1xf32>
    %594 = arith.subf %593, %473 : vector<8x1xf32>
    %cst_57 = arith.constant 1.000000e+00 : f32
    %595 = vector.broadcast %cst_57 : f32 to vector<8x1xf32>
    %596 = arith.subf %595, %529 : vector<8x1xf32>
    %cst_58 = arith.constant 1.000000e+00 : f32
    %597 = vector.broadcast %cst_58 : f32 to vector<8x1xf32>
    %598 = arith.subf %597, %585 : vector<8x1xf32>
    %599 = tpu.concatenate %459, %515, %571, %594, %596, %598 in 1 : vector<8x1xf32>, vector<8x1xf32>, vector<8x1xf32>, vector<8x1xf32>, vector<8x1xf32>, vector<8x1xf32> -> vector<8x6xf32>
    %cst_59 = arith.constant 0.000000e+00 : f32
    %600 = vector.broadcast %cst_59 : f32 to vector<8x2xf32>
    %601 = tpu.concatenate %592, %600 in 1 : vector<8x6xf32>, vector<8x2xf32> -> vector<8x8xf32>
    %cst_60 = arith.constant 0.000000e+00 : f32
    %602 = vector.broadcast %cst_60 : f32 to vector<8x2xf32>
    %603 = tpu.concatenate %599, %602 in 1 : vector<8x6xf32>, vector<8x2xf32> -> vector<8x8xf32>
    %c72 = arith.constant 72 : index
    %c0_61 = arith.constant 0 : index
    %604 = vector.load %arg1[%c72, %c0_61] : memref<296x128xf32, #tpu.memory_space<vmem>>, vector<2x8xf32>
    %c80 = arith.constant 80 : index
    %c0_62 = arith.constant 0 : index
    %605 = vector.load %arg1[%c80, %c0_62] : memref<296x128xf32, #tpu.memory_space<vmem>>, vector<2x8xf32>
    %c88 = arith.constant 88 : index
    %c0_63 = arith.constant 0 : index
    %606 = vector.load %arg1[%c88, %c0_63] : memref<296x128xf32, #tpu.memory_space<vmem>>, vector<2x8xf32>
    %c96 = arith.constant 96 : index
    %c0_64 = arith.constant 0 : index
    %607 = vector.load %arg1[%c96, %c0_64] : memref<296x128xf32, #tpu.memory_space<vmem>>, vector<2x8xf32>
    %cst_65 = arith.constant 1.000000e+00 : f32
    %608 = vector.broadcast %cst_65 : f32 to vector<8x8xf32>
    %609 = arith.subf %608, %601 : vector<8x8xf32>
    %cst_66 = arith.constant 1.000000e+00 : f32
    %610 = vector.broadcast %cst_66 : f32 to vector<8x8xf32>
    %611 = arith.subf %610, %603 : vector<8x8xf32>
    %612 = vector.extract_strided_slice %604 {offsets = [0, 0], sizes = [1, 8], strides = [1, 1]} : vector<2x8xf32> to vector<1x8xf32>
    %613 = vector.broadcast %612 : vector<1x8xf32> to vector<8x8xf32>
    %614 = arith.mulf %609, %613 : vector<8x8xf32>
    %cst_67 = arith.constant 1.000000e+00 : f32
    %615 = vector.broadcast %cst_67 : f32 to vector<8x8xf32>
    %616 = arith.subf %615, %614 : vector<8x8xf32>
    %617 = vector.extract_strided_slice %616 {offsets = [0, 0], sizes = [8, 4], strides = [1, 1]} : vector<8x8xf32> to vector<8x4xf32>
    %618 = vector.extract_strided_slice %616 {offsets = [0, 4], sizes = [8, 4], strides = [1, 1]} : vector<8x8xf32> to vector<8x4xf32>
    %619 = arith.mulf %617, %618 : vector<8x4xf32>
    %620 = vector.extract_strided_slice %619 {offsets = [0, 0], sizes = [8, 2], strides = [1, 1]} : vector<8x4xf32> to vector<8x2xf32>
    %621 = vector.extract_strided_slice %619 {offsets = [0, 2], sizes = [8, 2], strides = [1, 1]} : vector<8x4xf32> to vector<8x2xf32>
    %622 = arith.mulf %620, %621 : vector<8x2xf32>
    %623 = vector.extract_strided_slice %622 {offsets = [0, 0], sizes = [8, 1], strides = [1, 1]} : vector<8x2xf32> to vector<8x1xf32>
    %624 = vector.extract_strided_slice %622 {offsets = [0, 1], sizes = [8, 1], strides = [1, 1]} : vector<8x2xf32> to vector<8x1xf32>
    %625 = arith.mulf %623, %624 : vector<8x1xf32>
    %626 = vector.extract_strided_slice %605 {offsets = [0, 0], sizes = [1, 8], strides = [1, 1]} : vector<2x8xf32> to vector<1x8xf32>
    %627 = vector.broadcast %626 : vector<1x8xf32> to vector<8x8xf32>
    %628 = arith.mulf %601, %627 : vector<8x8xf32>
    %cst_68 = arith.constant 1.000000e+00 : f32
    %629 = vector.broadcast %cst_68 : f32 to vector<8x8xf32>
    %630 = arith.subf %629, %628 : vector<8x8xf32>
    %631 = vector.extract_strided_slice %630 {offsets = [0, 0], sizes = [8, 4], strides = [1, 1]} : vector<8x8xf32> to vector<8x4xf32>
    %632 = vector.extract_strided_slice %630 {offsets = [0, 4], sizes = [8, 4], strides = [1, 1]} : vector<8x8xf32> to vector<8x4xf32>
    %633 = arith.mulf %631, %632 : vector<8x4xf32>
    %634 = vector.extract_strided_slice %633 {offsets = [0, 0], sizes = [8, 2], strides = [1, 1]} : vector<8x4xf32> to vector<8x2xf32>
    %635 = vector.extract_strided_slice %633 {offsets = [0, 2], sizes = [8, 2], strides = [1, 1]} : vector<8x4xf32> to vector<8x2xf32>
    %636 = arith.mulf %634, %635 : vector<8x2xf32>
    %637 = vector.extract_strided_slice %636 {offsets = [0, 0], sizes = [8, 1], strides = [1, 1]} : vector<8x2xf32> to vector<8x1xf32>
    %638 = vector.extract_strided_slice %636 {offsets = [0, 1], sizes = [8, 1], strides = [1, 1]} : vector<8x2xf32> to vector<8x1xf32>
    %639 = arith.mulf %637, %638 : vector<8x1xf32>
    %640 = vector.extract_strided_slice %606 {offsets = [0, 0], sizes = [1, 8], strides = [1, 1]} : vector<2x8xf32> to vector<1x8xf32>
    %641 = vector.broadcast %640 : vector<1x8xf32> to vector<8x8xf32>
    %642 = arith.mulf %611, %641 : vector<8x8xf32>
    %cst_69 = arith.constant 1.000000e+00 : f32
    %643 = vector.broadcast %cst_69 : f32 to vector<8x8xf32>
    %644 = arith.subf %643, %642 : vector<8x8xf32>
    %645 = vector.extract_strided_slice %644 {offsets = [0, 0], sizes = [8, 4], strides = [1, 1]} : vector<8x8xf32> to vector<8x4xf32>
    %646 = vector.extract_strided_slice %644 {offsets = [0, 4], sizes = [8, 4], strides = [1, 1]} : vector<8x8xf32> to vector<8x4xf32>
    %647 = arith.mulf %645, %646 : vector<8x4xf32>
    %648 = vector.extract_strided_slice %647 {offsets = [0, 0], sizes = [8, 2], strides = [1, 1]} : vector<8x4xf32> to vector<8x2xf32>
    %649 = vector.extract_strided_slice %647 {offsets = [0, 2], sizes = [8, 2], strides = [1, 1]} : vector<8x4xf32> to vector<8x2xf32>
    %650 = arith.mulf %648, %649 : vector<8x2xf32>
    %651 = vector.extract_strided_slice %650 {offsets = [0, 0], sizes = [8, 1], strides = [1, 1]} : vector<8x2xf32> to vector<8x1xf32>
    %652 = vector.extract_strided_slice %650 {offsets = [0, 1], sizes = [8, 1], strides = [1, 1]} : vector<8x2xf32> to vector<8x1xf32>
    %653 = arith.mulf %651, %652 : vector<8x1xf32>
    %654 = vector.extract_strided_slice %607 {offsets = [0, 0], sizes = [1, 8], strides = [1, 1]} : vector<2x8xf32> to vector<1x8xf32>
    %655 = vector.broadcast %654 : vector<1x8xf32> to vector<8x8xf32>
    %656 = arith.mulf %603, %655 : vector<8x8xf32>
    %cst_70 = arith.constant 1.000000e+00 : f32
    %657 = vector.broadcast %cst_70 : f32 to vector<8x8xf32>
    %658 = arith.subf %657, %656 : vector<8x8xf32>
    %659 = vector.extract_strided_slice %658 {offsets = [0, 0], sizes = [8, 4], strides = [1, 1]} : vector<8x8xf32> to vector<8x4xf32>
    %660 = vector.extract_strided_slice %658 {offsets = [0, 4], sizes = [8, 4], strides = [1, 1]} : vector<8x8xf32> to vector<8x4xf32>
    %661 = arith.mulf %659, %660 : vector<8x4xf32>
    %662 = vector.extract_strided_slice %661 {offsets = [0, 0], sizes = [8, 2], strides = [1, 1]} : vector<8x4xf32> to vector<8x2xf32>
    %663 = vector.extract_strided_slice %661 {offsets = [0, 2], sizes = [8, 2], strides = [1, 1]} : vector<8x4xf32> to vector<8x2xf32>
    %664 = arith.mulf %662, %663 : vector<8x2xf32>
    %665 = vector.extract_strided_slice %664 {offsets = [0, 0], sizes = [8, 1], strides = [1, 1]} : vector<8x2xf32> to vector<8x1xf32>
    %666 = vector.extract_strided_slice %664 {offsets = [0, 1], sizes = [8, 1], strides = [1, 1]} : vector<8x2xf32> to vector<8x1xf32>
    %667 = arith.mulf %665, %666 : vector<8x1xf32>
    %668 = vector.extract_strided_slice %604 {offsets = [1, 0], sizes = [1, 8], strides = [1, 1]} : vector<2x8xf32> to vector<1x8xf32>
    %669 = vector.broadcast %668 : vector<1x8xf32> to vector<8x8xf32>
    %670 = arith.mulf %609, %669 : vector<8x8xf32>
    %cst_71 = arith.constant 1.000000e+00 : f32
    %671 = vector.broadcast %cst_71 : f32 to vector<8x8xf32>
    %672 = arith.subf %671, %670 : vector<8x8xf32>
    %673 = vector.extract_strided_slice %672 {offsets = [0, 0], sizes = [8, 4], strides = [1, 1]} : vector<8x8xf32> to vector<8x4xf32>
    %674 = vector.extract_strided_slice %672 {offsets = [0, 4], sizes = [8, 4], strides = [1, 1]} : vector<8x8xf32> to vector<8x4xf32>
    %675 = arith.mulf %673, %674 : vector<8x4xf32>
    %676 = vector.extract_strided_slice %675 {offsets = [0, 0], sizes = [8, 2], strides = [1, 1]} : vector<8x4xf32> to vector<8x2xf32>
    %677 = vector.extract_strided_slice %675 {offsets = [0, 2], sizes = [8, 2], strides = [1, 1]} : vector<8x4xf32> to vector<8x2xf32>
    %678 = arith.mulf %676, %677 : vector<8x2xf32>
    %679 = vector.extract_strided_slice %678 {offsets = [0, 0], sizes = [8, 1], strides = [1, 1]} : vector<8x2xf32> to vector<8x1xf32>
    %680 = vector.extract_strided_slice %678 {offsets = [0, 1], sizes = [8, 1], strides = [1, 1]} : vector<8x2xf32> to vector<8x1xf32>
    %681 = arith.mulf %679, %680 : vector<8x1xf32>
    %682 = vector.extract_strided_slice %605 {offsets = [1, 0], sizes = [1, 8], strides = [1, 1]} : vector<2x8xf32> to vector<1x8xf32>
    %683 = vector.broadcast %682 : vector<1x8xf32> to vector<8x8xf32>
    %684 = arith.mulf %601, %683 : vector<8x8xf32>
    %cst_72 = arith.constant 1.000000e+00 : f32
    %685 = vector.broadcast %cst_72 : f32 to vector<8x8xf32>
    %686 = arith.subf %685, %684 : vector<8x8xf32>
    %687 = vector.extract_strided_slice %686 {offsets = [0, 0], sizes = [8, 4], strides = [1, 1]} : vector<8x8xf32> to vector<8x4xf32>
    %688 = vector.extract_strided_slice %686 {offsets = [0, 4], sizes = [8, 4], strides = [1, 1]} : vector<8x8xf32> to vector<8x4xf32>
    %689 = arith.mulf %687, %688 : vector<8x4xf32>
    %690 = vector.extract_strided_slice %689 {offsets = [0, 0], sizes = [8, 2], strides = [1, 1]} : vector<8x4xf32> to vector<8x2xf32>
    %691 = vector.extract_strided_slice %689 {offsets = [0, 2], sizes = [8, 2], strides = [1, 1]} : vector<8x4xf32> to vector<8x2xf32>
    %692 = arith.mulf %690, %691 : vector<8x2xf32>
    %693 = vector.extract_strided_slice %692 {offsets = [0, 0], sizes = [8, 1], strides = [1, 1]} : vector<8x2xf32> to vector<8x1xf32>
    %694 = vector.extract_strided_slice %692 {offsets = [0, 1], sizes = [8, 1], strides = [1, 1]} : vector<8x2xf32> to vector<8x1xf32>
    %695 = arith.mulf %693, %694 : vector<8x1xf32>
    %696 = vector.extract_strided_slice %606 {offsets = [1, 0], sizes = [1, 8], strides = [1, 1]} : vector<2x8xf32> to vector<1x8xf32>
    %697 = vector.broadcast %696 : vector<1x8xf32> to vector<8x8xf32>
    %698 = arith.mulf %611, %697 : vector<8x8xf32>
    %cst_73 = arith.constant 1.000000e+00 : f32
    %699 = vector.broadcast %cst_73 : f32 to vector<8x8xf32>
    %700 = arith.subf %699, %698 : vector<8x8xf32>
    %701 = vector.extract_strided_slice %700 {offsets = [0, 0], sizes = [8, 4], strides = [1, 1]} : vector<8x8xf32> to vector<8x4xf32>
    %702 = vector.extract_strided_slice %700 {offsets = [0, 4], sizes = [8, 4], strides = [1, 1]} : vector<8x8xf32> to vector<8x4xf32>
    %703 = arith.mulf %701, %702 : vector<8x4xf32>
    %704 = vector.extract_strided_slice %703 {offsets = [0, 0], sizes = [8, 2], strides = [1, 1]} : vector<8x4xf32> to vector<8x2xf32>
    %705 = vector.extract_strided_slice %703 {offsets = [0, 2], sizes = [8, 2], strides = [1, 1]} : vector<8x4xf32> to vector<8x2xf32>
    %706 = arith.mulf %704, %705 : vector<8x2xf32>
    %707 = vector.extract_strided_slice %706 {offsets = [0, 0], sizes = [8, 1], strides = [1, 1]} : vector<8x2xf32> to vector<8x1xf32>
    %708 = vector.extract_strided_slice %706 {offsets = [0, 1], sizes = [8, 1], strides = [1, 1]} : vector<8x2xf32> to vector<8x1xf32>
    %709 = arith.mulf %707, %708 : vector<8x1xf32>
    %710 = vector.extract_strided_slice %607 {offsets = [1, 0], sizes = [1, 8], strides = [1, 1]} : vector<2x8xf32> to vector<1x8xf32>
    %711 = vector.broadcast %710 : vector<1x8xf32> to vector<8x8xf32>
    %712 = arith.mulf %603, %711 : vector<8x8xf32>
    %cst_74 = arith.constant 1.000000e+00 : f32
    %713 = vector.broadcast %cst_74 : f32 to vector<8x8xf32>
    %714 = arith.subf %713, %712 : vector<8x8xf32>
    %715 = vector.extract_strided_slice %714 {offsets = [0, 0], sizes = [8, 4], strides = [1, 1]} : vector<8x8xf32> to vector<8x4xf32>
    %716 = vector.extract_strided_slice %714 {offsets = [0, 4], sizes = [8, 4], strides = [1, 1]} : vector<8x8xf32> to vector<8x4xf32>
    %717 = arith.mulf %715, %716 : vector<8x4xf32>
    %718 = vector.extract_strided_slice %717 {offsets = [0, 0], sizes = [8, 2], strides = [1, 1]} : vector<8x4xf32> to vector<8x2xf32>
    %719 = vector.extract_strided_slice %717 {offsets = [0, 2], sizes = [8, 2], strides = [1, 1]} : vector<8x4xf32> to vector<8x2xf32>
    %720 = arith.mulf %718, %719 : vector<8x2xf32>
    %721 = vector.extract_strided_slice %720 {offsets = [0, 0], sizes = [8, 1], strides = [1, 1]} : vector<8x2xf32> to vector<8x1xf32>
    %722 = vector.extract_strided_slice %720 {offsets = [0, 1], sizes = [8, 1], strides = [1, 1]} : vector<8x2xf32> to vector<8x1xf32>
    %723 = arith.mulf %721, %722 : vector<8x1xf32>
    %c104 = arith.constant 104 : index
    %c0_75 = arith.constant 0 : index
    %724 = vector.load %arg1[%c104, %c0_75] : memref<296x128xf32, #tpu.memory_space<vmem>>, vector<2x8xf32>
    %c112 = arith.constant 112 : index
    %c0_76 = arith.constant 0 : index
    %725 = vector.load %arg1[%c112, %c0_76] : memref<296x128xf32, #tpu.memory_space<vmem>>, vector<2x8xf32>
    %c120 = arith.constant 120 : index
    %c0_77 = arith.constant 0 : index
    %726 = vector.load %arg1[%c120, %c0_77] : memref<296x128xf32, #tpu.memory_space<vmem>>, vector<2x8xf32>
    %c128 = arith.constant 128 : index
    %c0_78 = arith.constant 0 : index
    %727 = vector.load %arg1[%c128, %c0_78] : memref<296x128xf32, #tpu.memory_space<vmem>>, vector<2x8xf32>
    %cst_79 = arith.constant 1.000000e+00 : f32
    %728 = vector.broadcast %cst_79 : f32 to vector<8x8xf32>
    %729 = arith.subf %728, %400 : vector<8x8xf32>
    %cst_80 = arith.constant 1.000000e+00 : f32
    %730 = vector.broadcast %cst_80 : f32 to vector<8x8xf32>
    %731 = arith.subf %730, %409 : vector<8x8xf32>
    %732 = vector.extract_strided_slice %724 {offsets = [0, 0], sizes = [1, 8], strides = [1, 1]} : vector<2x8xf32> to vector<1x8xf32>
    %733 = vector.broadcast %732 : vector<1x8xf32> to vector<8x8xf32>
    %734 = arith.mulf %729, %733 : vector<8x8xf32>
    %cst_81 = arith.constant 1.000000e+00 : f32
    %735 = vector.broadcast %cst_81 : f32 to vector<8x8xf32>
    %736 = arith.subf %735, %734 : vector<8x8xf32>
    %737 = vector.extract_strided_slice %736 {offsets = [0, 0], sizes = [8, 4], strides = [1, 1]} : vector<8x8xf32> to vector<8x4xf32>
    %738 = vector.extract_strided_slice %736 {offsets = [0, 4], sizes = [8, 4], strides = [1, 1]} : vector<8x8xf32> to vector<8x4xf32>
    %739 = arith.mulf %737, %738 : vector<8x4xf32>
    %740 = vector.extract_strided_slice %739 {offsets = [0, 0], sizes = [8, 2], strides = [1, 1]} : vector<8x4xf32> to vector<8x2xf32>
    %741 = vector.extract_strided_slice %739 {offsets = [0, 2], sizes = [8, 2], strides = [1, 1]} : vector<8x4xf32> to vector<8x2xf32>
    %742 = arith.mulf %740, %741 : vector<8x2xf32>
    %743 = vector.extract_strided_slice %742 {offsets = [0, 0], sizes = [8, 1], strides = [1, 1]} : vector<8x2xf32> to vector<8x1xf32>
    %744 = vector.extract_strided_slice %742 {offsets = [0, 1], sizes = [8, 1], strides = [1, 1]} : vector<8x2xf32> to vector<8x1xf32>
    %745 = arith.mulf %743, %744 : vector<8x1xf32>
    %746 = vector.extract_strided_slice %725 {offsets = [0, 0], sizes = [1, 8], strides = [1, 1]} : vector<2x8xf32> to vector<1x8xf32>
    %747 = vector.broadcast %746 : vector<1x8xf32> to vector<8x8xf32>
    %748 = arith.mulf %400, %747 : vector<8x8xf32>
    %cst_82 = arith.constant 1.000000e+00 : f32
    %749 = vector.broadcast %cst_82 : f32 to vector<8x8xf32>
    %750 = arith.subf %749, %748 : vector<8x8xf32>
    %751 = vector.extract_strided_slice %750 {offsets = [0, 0], sizes = [8, 4], strides = [1, 1]} : vector<8x8xf32> to vector<8x4xf32>
    %752 = vector.extract_strided_slice %750 {offsets = [0, 4], sizes = [8, 4], strides = [1, 1]} : vector<8x8xf32> to vector<8x4xf32>
    %753 = arith.mulf %751, %752 : vector<8x4xf32>
    %754 = vector.extract_strided_slice %753 {offsets = [0, 0], sizes = [8, 2], strides = [1, 1]} : vector<8x4xf32> to vector<8x2xf32>
    %755 = vector.extract_strided_slice %753 {offsets = [0, 2], sizes = [8, 2], strides = [1, 1]} : vector<8x4xf32> to vector<8x2xf32>
    %756 = arith.mulf %754, %755 : vector<8x2xf32>
    %757 = vector.extract_strided_slice %756 {offsets = [0, 0], sizes = [8, 1], strides = [1, 1]} : vector<8x2xf32> to vector<8x1xf32>
    %758 = vector.extract_strided_slice %756 {offsets = [0, 1], sizes = [8, 1], strides = [1, 1]} : vector<8x2xf32> to vector<8x1xf32>
    %759 = arith.mulf %757, %758 : vector<8x1xf32>
    %760 = vector.extract_strided_slice %726 {offsets = [0, 0], sizes = [1, 8], strides = [1, 1]} : vector<2x8xf32> to vector<1x8xf32>
    %761 = vector.broadcast %760 : vector<1x8xf32> to vector<8x8xf32>
    %762 = arith.mulf %731, %761 : vector<8x8xf32>
    %cst_83 = arith.constant 1.000000e+00 : f32
    %763 = vector.broadcast %cst_83 : f32 to vector<8x8xf32>
    %764 = arith.subf %763, %762 : vector<8x8xf32>
    %765 = vector.extract_strided_slice %764 {offsets = [0, 0], sizes = [8, 4], strides = [1, 1]} : vector<8x8xf32> to vector<8x4xf32>
    %766 = vector.extract_strided_slice %764 {offsets = [0, 4], sizes = [8, 4], strides = [1, 1]} : vector<8x8xf32> to vector<8x4xf32>
    %767 = arith.mulf %765, %766 : vector<8x4xf32>
    %768 = vector.extract_strided_slice %767 {offsets = [0, 0], sizes = [8, 2], strides = [1, 1]} : vector<8x4xf32> to vector<8x2xf32>
    %769 = vector.extract_strided_slice %767 {offsets = [0, 2], sizes = [8, 2], strides = [1, 1]} : vector<8x4xf32> to vector<8x2xf32>
    %770 = arith.mulf %768, %769 : vector<8x2xf32>
    %771 = vector.extract_strided_slice %770 {offsets = [0, 0], sizes = [8, 1], strides = [1, 1]} : vector<8x2xf32> to vector<8x1xf32>
    %772 = vector.extract_strided_slice %770 {offsets = [0, 1], sizes = [8, 1], strides = [1, 1]} : vector<8x2xf32> to vector<8x1xf32>
    %773 = arith.mulf %771, %772 : vector<8x1xf32>
    %774 = vector.extract_strided_slice %727 {offsets = [0, 0], sizes = [1, 8], strides = [1, 1]} : vector<2x8xf32> to vector<1x8xf32>
    %775 = vector.broadcast %774 : vector<1x8xf32> to vector<8x8xf32>
    %776 = arith.mulf %409, %775 : vector<8x8xf32>
    %cst_84 = arith.constant 1.000000e+00 : f32
    %777 = vector.broadcast %cst_84 : f32 to vector<8x8xf32>
    %778 = arith.subf %777, %776 : vector<8x8xf32>
    %779 = vector.extract_strided_slice %778 {offsets = [0, 0], sizes = [8, 4], strides = [1, 1]} : vector<8x8xf32> to vector<8x4xf32>
    %780 = vector.extract_strided_slice %778 {offsets = [0, 4], sizes = [8, 4], strides = [1, 1]} : vector<8x8xf32> to vector<8x4xf32>
    %781 = arith.mulf %779, %780 : vector<8x4xf32>
    %782 = vector.extract_strided_slice %781 {offsets = [0, 0], sizes = [8, 2], strides = [1, 1]} : vector<8x4xf32> to vector<8x2xf32>
    %783 = vector.extract_strided_slice %781 {offsets = [0, 2], sizes = [8, 2], strides = [1, 1]} : vector<8x4xf32> to vector<8x2xf32>
    %784 = arith.mulf %782, %783 : vector<8x2xf32>
    %785 = vector.extract_strided_slice %784 {offsets = [0, 0], sizes = [8, 1], strides = [1, 1]} : vector<8x2xf32> to vector<8x1xf32>
    %786 = vector.extract_strided_slice %784 {offsets = [0, 1], sizes = [8, 1], strides = [1, 1]} : vector<8x2xf32> to vector<8x1xf32>
    %787 = arith.mulf %785, %786 : vector<8x1xf32>
    %788 = arith.mulf %625, %745 : vector<8x1xf32>
    %789 = arith.mulf %639, %759 : vector<8x1xf32>
    %790 = arith.mulf %653, %773 : vector<8x1xf32>
    %791 = arith.mulf %667, %787 : vector<8x1xf32>
    %792 = vector.extract_strided_slice %724 {offsets = [1, 0], sizes = [1, 8], strides = [1, 1]} : vector<2x8xf32> to vector<1x8xf32>
    %793 = vector.broadcast %792 : vector<1x8xf32> to vector<8x8xf32>
    %794 = arith.mulf %729, %793 : vector<8x8xf32>
    %cst_85 = arith.constant 1.000000e+00 : f32
    %795 = vector.broadcast %cst_85 : f32 to vector<8x8xf32>
    %796 = arith.subf %795, %794 : vector<8x8xf32>
    %797 = vector.extract_strided_slice %796 {offsets = [0, 0], sizes = [8, 4], strides = [1, 1]} : vector<8x8xf32> to vector<8x4xf32>
    %798 = vector.extract_strided_slice %796 {offsets = [0, 4], sizes = [8, 4], strides = [1, 1]} : vector<8x8xf32> to vector<8x4xf32>
    %799 = arith.mulf %797, %798 : vector<8x4xf32>
    %800 = vector.extract_strided_slice %799 {offsets = [0, 0], sizes = [8, 2], strides = [1, 1]} : vector<8x4xf32> to vector<8x2xf32>
    %801 = vector.extract_strided_slice %799 {offsets = [0, 2], sizes = [8, 2], strides = [1, 1]} : vector<8x4xf32> to vector<8x2xf32>
    %802 = arith.mulf %800, %801 : vector<8x2xf32>
    %803 = vector.extract_strided_slice %802 {offsets = [0, 0], sizes = [8, 1], strides = [1, 1]} : vector<8x2xf32> to vector<8x1xf32>
    %804 = vector.extract_strided_slice %802 {offsets = [0, 1], sizes = [8, 1], strides = [1, 1]} : vector<8x2xf32> to vector<8x1xf32>
    %805 = arith.mulf %803, %804 : vector<8x1xf32>
    %806 = vector.extract_strided_slice %725 {offsets = [1, 0], sizes = [1, 8], strides = [1, 1]} : vector<2x8xf32> to vector<1x8xf32>
    %807 = vector.broadcast %806 : vector<1x8xf32> to vector<8x8xf32>
    %808 = arith.mulf %400, %807 : vector<8x8xf32>
    %cst_86 = arith.constant 1.000000e+00 : f32
    %809 = vector.broadcast %cst_86 : f32 to vector<8x8xf32>
    %810 = arith.subf %809, %808 : vector<8x8xf32>
    %811 = vector.extract_strided_slice %810 {offsets = [0, 0], sizes = [8, 4], strides = [1, 1]} : vector<8x8xf32> to vector<8x4xf32>
    %812 = vector.extract_strided_slice %810 {offsets = [0, 4], sizes = [8, 4], strides = [1, 1]} : vector<8x8xf32> to vector<8x4xf32>
    %813 = arith.mulf %811, %812 : vector<8x4xf32>
    %814 = vector.extract_strided_slice %813 {offsets = [0, 0], sizes = [8, 2], strides = [1, 1]} : vector<8x4xf32> to vector<8x2xf32>
    %815 = vector.extract_strided_slice %813 {offsets = [0, 2], sizes = [8, 2], strides = [1, 1]} : vector<8x4xf32> to vector<8x2xf32>
    %816 = arith.mulf %814, %815 : vector<8x2xf32>
    %817 = vector.extract_strided_slice %816 {offsets = [0, 0], sizes = [8, 1], strides = [1, 1]} : vector<8x2xf32> to vector<8x1xf32>
    %818 = vector.extract_strided_slice %816 {offsets = [0, 1], sizes = [8, 1], strides = [1, 1]} : vector<8x2xf32> to vector<8x1xf32>
    %819 = arith.mulf %817, %818 : vector<8x1xf32>
    %820 = vector.extract_strided_slice %726 {offsets = [1, 0], sizes = [1, 8], strides = [1, 1]} : vector<2x8xf32> to vector<1x8xf32>
    %821 = vector.broadcast %820 : vector<1x8xf32> to vector<8x8xf32>
    %822 = arith.mulf %731, %821 : vector<8x8xf32>
    %cst_87 = arith.constant 1.000000e+00 : f32
    %823 = vector.broadcast %cst_87 : f32 to vector<8x8xf32>
    %824 = arith.subf %823, %822 : vector<8x8xf32>
    %825 = vector.extract_strided_slice %824 {offsets = [0, 0], sizes = [8, 4], strides = [1, 1]} : vector<8x8xf32> to vector<8x4xf32>
    %826 = vector.extract_strided_slice %824 {offsets = [0, 4], sizes = [8, 4], strides = [1, 1]} : vector<8x8xf32> to vector<8x4xf32>
    %827 = arith.mulf %825, %826 : vector<8x4xf32>
    %828 = vector.extract_strided_slice %827 {offsets = [0, 0], sizes = [8, 2], strides = [1, 1]} : vector<8x4xf32> to vector<8x2xf32>
    %829 = vector.extract_strided_slice %827 {offsets = [0, 2], sizes = [8, 2], strides = [1, 1]} : vector<8x4xf32> to vector<8x2xf32>
    %830 = arith.mulf %828, %829 : vector<8x2xf32>
    %831 = vector.extract_strided_slice %830 {offsets = [0, 0], sizes = [8, 1], strides = [1, 1]} : vector<8x2xf32> to vector<8x1xf32>
    %832 = vector.extract_strided_slice %830 {offsets = [0, 1], sizes = [8, 1], strides = [1, 1]} : vector<8x2xf32> to vector<8x1xf32>
    %833 = arith.mulf %831, %832 : vector<8x1xf32>
    %834 = vector.extract_strided_slice %727 {offsets = [1, 0], sizes = [1, 8], strides = [1, 1]} : vector<2x8xf32> to vector<1x8xf32>
    %835 = vector.broadcast %834 : vector<1x8xf32> to vector<8x8xf32>
    %836 = arith.mulf %409, %835 : vector<8x8xf32>
    %cst_88 = arith.constant 1.000000e+00 : f32
    %837 = vector.broadcast %cst_88 : f32 to vector<8x8xf32>
    %838 = arith.subf %837, %836 : vector<8x8xf32>
    %839 = vector.extract_strided_slice %838 {offsets = [0, 0], sizes = [8, 4], strides = [1, 1]} : vector<8x8xf32> to vector<8x4xf32>
    %840 = vector.extract_strided_slice %838 {offsets = [0, 4], sizes = [8, 4], strides = [1, 1]} : vector<8x8xf32> to vector<8x4xf32>
    %841 = arith.mulf %839, %840 : vector<8x4xf32>
    %842 = vector.extract_strided_slice %841 {offsets = [0, 0], sizes = [8, 2], strides = [1, 1]} : vector<8x4xf32> to vector<8x2xf32>
    %843 = vector.extract_strided_slice %841 {offsets = [0, 2], sizes = [8, 2], strides = [1, 1]} : vector<8x4xf32> to vector<8x2xf32>
    %844 = arith.mulf %842, %843 : vector<8x2xf32>
    %845 = vector.extract_strided_slice %844 {offsets = [0, 0], sizes = [8, 1], strides = [1, 1]} : vector<8x2xf32> to vector<8x1xf32>
    %846 = vector.extract_strided_slice %844 {offsets = [0, 1], sizes = [8, 1], strides = [1, 1]} : vector<8x2xf32> to vector<8x1xf32>
    %847 = arith.mulf %845, %846 : vector<8x1xf32>
    %848 = arith.mulf %681, %805 : vector<8x1xf32>
    %849 = arith.mulf %695, %819 : vector<8x1xf32>
    %850 = arith.mulf %709, %833 : vector<8x1xf32>
    %851 = arith.mulf %723, %847 : vector<8x1xf32>
    %cst_89 = arith.constant 1.000000e+00 : f32
    %852 = vector.broadcast %cst_89 : f32 to vector<8x1xf32>
    %853 = arith.subf %852, %789 : vector<8x1xf32>
    %cst_90 = arith.constant 1.000000e+00 : f32
    %854 = vector.broadcast %cst_90 : f32 to vector<8x1xf32>
    %855 = arith.subf %854, %849 : vector<8x1xf32>
    %856 = tpu.concatenate %788, %848, %853, %855 in 1 : vector<8x1xf32>, vector<8x1xf32>, vector<8x1xf32>, vector<8x1xf32> -> vector<8x4xf32>
    %cst_91 = arith.constant 1.000000e+00 : f32
    %857 = vector.broadcast %cst_91 : f32 to vector<8x1xf32>
    %858 = arith.subf %857, %791 : vector<8x1xf32>
    %cst_92 = arith.constant 1.000000e+00 : f32
    %859 = vector.broadcast %cst_92 : f32 to vector<8x1xf32>
    %860 = arith.subf %859, %851 : vector<8x1xf32>
    %861 = tpu.concatenate %790, %850, %858, %860 in 1 : vector<8x1xf32>, vector<8x1xf32>, vector<8x1xf32>, vector<8x1xf32> -> vector<8x4xf32>
    %862 = vector.extract_strided_slice %0 {offsets = [0, 8], sizes = [8, 4], strides = [1, 1]} : vector<8x32xf32> to vector<8x4xf32>
    %863 = vector.extract_strided_slice %0 {offsets = [0, 12], sizes = [8, 4], strides = [1, 1]} : vector<8x32xf32> to vector<8x4xf32>
    %c136 = arith.constant 136 : index
    %c0_93 = arith.constant 0 : index
    %864 = vector.load %arg1[%c136, %c0_93] : memref<296x128xf32, #tpu.memory_space<vmem>>, vector<1x12xf32>
    %865 = tpu.concatenate %863, %863, %863 in 1 : vector<8x4xf32>, vector<8x4xf32>, vector<8x4xf32> -> vector<8x12xf32>
    %866 = vector.broadcast %864 : vector<1x12xf32> to vector<8x12xf32>
    %867 = arith.subf %865, %866 : vector<8x12xf32>
    %cst_94 = arith.constant 0.000000e+00 : f32
    %868 = vector.broadcast %cst_94 : f32 to vector<8x12xf32>
    %869 = arith.cmpf ogt, %867, %868 : vector<8x12xf32>
    %870 = arith.extui %869 : vector<8x12xi1> to vector<8x12xi32>
    %871 = arith.sitofp %870 : vector<8x12xi32> to vector<8x12xf32>
    %cst_95 = arith.constant 1.000000e+00 : f32
    %872 = vector.broadcast %cst_95 : f32 to vector<8x12xf32>
    %873 = arith.subf %872, %871 : vector<8x12xf32>
    %874 = tpu.concatenate %862, %871, %873 in 1 : vector<8x4xf32>, vector<8x12xf32>, vector<8x12xf32> -> vector<8x28xf32>
    %cst_96 = arith.constant 0.000000e+00 : f32
    %875 = vector.broadcast %cst_96 : f32 to vector<8x4xf32>
    %876 = tpu.concatenate %874, %875 in 1 : vector<8x28xf32>, vector<8x4xf32> -> vector<8x32xf32>
    %c144 = arith.constant 144 : index
    %c0_97 = arith.constant 0 : index
    %877 = vector.load %arg1[%c144, %c0_97] : memref<296x128xf32, #tpu.memory_space<vmem>>, vector<4x32xf32>
    %c152 = arith.constant 152 : index
    %c0_98 = arith.constant 0 : index
    %878 = vector.load %arg1[%c152, %c0_98] : memref<296x128xf32, #tpu.memory_space<vmem>>, vector<4x32xf32>
    %c160 = arith.constant 160 : index
    %c0_99 = arith.constant 0 : index
    %879 = vector.load %arg1[%c160, %c0_99] : memref<296x128xf32, #tpu.memory_space<vmem>>, vector<4x32xf32>
    %c168 = arith.constant 168 : index
    %c0_100 = arith.constant 0 : index
    %880 = vector.load %arg1[%c168, %c0_100] : memref<296x128xf32, #tpu.memory_space<vmem>>, vector<4x32xf32>
    %cst_101 = arith.constant 1.000000e+00 : f32
    %881 = vector.broadcast %cst_101 : f32 to vector<8x32xf32>
    %882 = arith.subf %881, %876 : vector<8x32xf32>
    %cst_102 = arith.constant 1.000000e+00 : f32
    %883 = vector.broadcast %cst_102 : f32 to vector<8x32xf32>
    %884 = arith.subf %883, %876 : vector<8x32xf32>
    %885 = vector.extract_strided_slice %877 {offsets = [0, 0], sizes = [1, 32], strides = [1, 1]} : vector<4x32xf32> to vector<1x32xf32>
    %886 = vector.broadcast %885 : vector<1x32xf32> to vector<8x32xf32>
    %887 = arith.mulf %882, %886 : vector<8x32xf32>
    %cst_103 = arith.constant 1.000000e+00 : f32
    %888 = vector.broadcast %cst_103 : f32 to vector<8x32xf32>
    %889 = arith.subf %888, %887 : vector<8x32xf32>
    %890 = vector.extract_strided_slice %889 {offsets = [0, 0], sizes = [8, 16], strides = [1, 1]} : vector<8x32xf32> to vector<8x16xf32>
    %891 = vector.extract_strided_slice %889 {offsets = [0, 16], sizes = [8, 16], strides = [1, 1]} : vector<8x32xf32> to vector<8x16xf32>
    %892 = arith.mulf %890, %891 : vector<8x16xf32>
    %893 = vector.extract_strided_slice %892 {offsets = [0, 0], sizes = [8, 8], strides = [1, 1]} : vector<8x16xf32> to vector<8x8xf32>
    %894 = vector.extract_strided_slice %892 {offsets = [0, 8], sizes = [8, 8], strides = [1, 1]} : vector<8x16xf32> to vector<8x8xf32>
    %895 = arith.mulf %893, %894 : vector<8x8xf32>
    %896 = vector.extract_strided_slice %895 {offsets = [0, 0], sizes = [8, 4], strides = [1, 1]} : vector<8x8xf32> to vector<8x4xf32>
    %897 = vector.extract_strided_slice %895 {offsets = [0, 4], sizes = [8, 4], strides = [1, 1]} : vector<8x8xf32> to vector<8x4xf32>
    %898 = arith.mulf %896, %897 : vector<8x4xf32>
    %899 = vector.extract_strided_slice %898 {offsets = [0, 0], sizes = [8, 2], strides = [1, 1]} : vector<8x4xf32> to vector<8x2xf32>
    %900 = vector.extract_strided_slice %898 {offsets = [0, 2], sizes = [8, 2], strides = [1, 1]} : vector<8x4xf32> to vector<8x2xf32>
    %901 = arith.mulf %899, %900 : vector<8x2xf32>
    %902 = vector.extract_strided_slice %901 {offsets = [0, 0], sizes = [8, 1], strides = [1, 1]} : vector<8x2xf32> to vector<8x1xf32>
    %903 = vector.extract_strided_slice %901 {offsets = [0, 1], sizes = [8, 1], strides = [1, 1]} : vector<8x2xf32> to vector<8x1xf32>
    %904 = arith.mulf %902, %903 : vector<8x1xf32>
    %905 = vector.extract_strided_slice %878 {offsets = [0, 0], sizes = [1, 32], strides = [1, 1]} : vector<4x32xf32> to vector<1x32xf32>
    %906 = vector.broadcast %905 : vector<1x32xf32> to vector<8x32xf32>
    %907 = arith.mulf %876, %906 : vector<8x32xf32>
    %cst_104 = arith.constant 1.000000e+00 : f32
    %908 = vector.broadcast %cst_104 : f32 to vector<8x32xf32>
    %909 = arith.subf %908, %907 : vector<8x32xf32>
    %910 = vector.extract_strided_slice %909 {offsets = [0, 0], sizes = [8, 16], strides = [1, 1]} : vector<8x32xf32> to vector<8x16xf32>
    %911 = vector.extract_strided_slice %909 {offsets = [0, 16], sizes = [8, 16], strides = [1, 1]} : vector<8x32xf32> to vector<8x16xf32>
    %912 = arith.mulf %910, %911 : vector<8x16xf32>
    %913 = vector.extract_strided_slice %912 {offsets = [0, 0], sizes = [8, 8], strides = [1, 1]} : vector<8x16xf32> to vector<8x8xf32>
    %914 = vector.extract_strided_slice %912 {offsets = [0, 8], sizes = [8, 8], strides = [1, 1]} : vector<8x16xf32> to vector<8x8xf32>
    %915 = arith.mulf %913, %914 : vector<8x8xf32>
    %916 = vector.extract_strided_slice %915 {offsets = [0, 0], sizes = [8, 4], strides = [1, 1]} : vector<8x8xf32> to vector<8x4xf32>
    %917 = vector.extract_strided_slice %915 {offsets = [0, 4], sizes = [8, 4], strides = [1, 1]} : vector<8x8xf32> to vector<8x4xf32>
    %918 = arith.mulf %916, %917 : vector<8x4xf32>
    %919 = vector.extract_strided_slice %918 {offsets = [0, 0], sizes = [8, 2], strides = [1, 1]} : vector<8x4xf32> to vector<8x2xf32>
    %920 = vector.extract_strided_slice %918 {offsets = [0, 2], sizes = [8, 2], strides = [1, 1]} : vector<8x4xf32> to vector<8x2xf32>
    %921 = arith.mulf %919, %920 : vector<8x2xf32>
    %922 = vector.extract_strided_slice %921 {offsets = [0, 0], sizes = [8, 1], strides = [1, 1]} : vector<8x2xf32> to vector<8x1xf32>
    %923 = vector.extract_strided_slice %921 {offsets = [0, 1], sizes = [8, 1], strides = [1, 1]} : vector<8x2xf32> to vector<8x1xf32>
    %924 = arith.mulf %922, %923 : vector<8x1xf32>
    %925 = vector.extract_strided_slice %879 {offsets = [0, 0], sizes = [1, 32], strides = [1, 1]} : vector<4x32xf32> to vector<1x32xf32>
    %926 = vector.broadcast %925 : vector<1x32xf32> to vector<8x32xf32>
    %927 = arith.mulf %884, %926 : vector<8x32xf32>
    %cst_105 = arith.constant 1.000000e+00 : f32
    %928 = vector.broadcast %cst_105 : f32 to vector<8x32xf32>
    %929 = arith.subf %928, %927 : vector<8x32xf32>
    %930 = vector.extract_strided_slice %929 {offsets = [0, 0], sizes = [8, 16], strides = [1, 1]} : vector<8x32xf32> to vector<8x16xf32>
    %931 = vector.extract_strided_slice %929 {offsets = [0, 16], sizes = [8, 16], strides = [1, 1]} : vector<8x32xf32> to vector<8x16xf32>
    %932 = arith.mulf %930, %931 : vector<8x16xf32>
    %933 = vector.extract_strided_slice %932 {offsets = [0, 0], sizes = [8, 8], strides = [1, 1]} : vector<8x16xf32> to vector<8x8xf32>
    %934 = vector.extract_strided_slice %932 {offsets = [0, 8], sizes = [8, 8], strides = [1, 1]} : vector<8x16xf32> to vector<8x8xf32>
    %935 = arith.mulf %933, %934 : vector<8x8xf32>
    %936 = vector.extract_strided_slice %935 {offsets = [0, 0], sizes = [8, 4], strides = [1, 1]} : vector<8x8xf32> to vector<8x4xf32>
    %937 = vector.extract_strided_slice %935 {offsets = [0, 4], sizes = [8, 4], strides = [1, 1]} : vector<8x8xf32> to vector<8x4xf32>
    %938 = arith.mulf %936, %937 : vector<8x4xf32>
    %939 = vector.extract_strided_slice %938 {offsets = [0, 0], sizes = [8, 2], strides = [1, 1]} : vector<8x4xf32> to vector<8x2xf32>
    %940 = vector.extract_strided_slice %938 {offsets = [0, 2], sizes = [8, 2], strides = [1, 1]} : vector<8x4xf32> to vector<8x2xf32>
    %941 = arith.mulf %939, %940 : vector<8x2xf32>
    %942 = vector.extract_strided_slice %941 {offsets = [0, 0], sizes = [8, 1], strides = [1, 1]} : vector<8x2xf32> to vector<8x1xf32>
    %943 = vector.extract_strided_slice %941 {offsets = [0, 1], sizes = [8, 1], strides = [1, 1]} : vector<8x2xf32> to vector<8x1xf32>
    %944 = arith.mulf %942, %943 : vector<8x1xf32>
    %945 = vector.extract_strided_slice %880 {offsets = [0, 0], sizes = [1, 32], strides = [1, 1]} : vector<4x32xf32> to vector<1x32xf32>
    %946 = vector.broadcast %945 : vector<1x32xf32> to vector<8x32xf32>
    %947 = arith.mulf %876, %946 : vector<8x32xf32>
    %cst_106 = arith.constant 1.000000e+00 : f32
    %948 = vector.broadcast %cst_106 : f32 to vector<8x32xf32>
    %949 = arith.subf %948, %947 : vector<8x32xf32>
    %950 = vector.extract_strided_slice %949 {offsets = [0, 0], sizes = [8, 16], strides = [1, 1]} : vector<8x32xf32> to vector<8x16xf32>
    %951 = vector.extract_strided_slice %949 {offsets = [0, 16], sizes = [8, 16], strides = [1, 1]} : vector<8x32xf32> to vector<8x16xf32>
    %952 = arith.mulf %950, %951 : vector<8x16xf32>
    %953 = vector.extract_strided_slice %952 {offsets = [0, 0], sizes = [8, 8], strides = [1, 1]} : vector<8x16xf32> to vector<8x8xf32>
    %954 = vector.extract_strided_slice %952 {offsets = [0, 8], sizes = [8, 8], strides = [1, 1]} : vector<8x16xf32> to vector<8x8xf32>
    %955 = arith.mulf %953, %954 : vector<8x8xf32>
    %956 = vector.extract_strided_slice %955 {offsets = [0, 0], sizes = [8, 4], strides = [1, 1]} : vector<8x8xf32> to vector<8x4xf32>
    %957 = vector.extract_strided_slice %955 {offsets = [0, 4], sizes = [8, 4], strides = [1, 1]} : vector<8x8xf32> to vector<8x4xf32>
    %958 = arith.mulf %956, %957 : vector<8x4xf32>
    %959 = vector.extract_strided_slice %958 {offsets = [0, 0], sizes = [8, 2], strides = [1, 1]} : vector<8x4xf32> to vector<8x2xf32>
    %960 = vector.extract_strided_slice %958 {offsets = [0, 2], sizes = [8, 2], strides = [1, 1]} : vector<8x4xf32> to vector<8x2xf32>
    %961 = arith.mulf %959, %960 : vector<8x2xf32>
    %962 = vector.extract_strided_slice %961 {offsets = [0, 0], sizes = [8, 1], strides = [1, 1]} : vector<8x2xf32> to vector<8x1xf32>
    %963 = vector.extract_strided_slice %961 {offsets = [0, 1], sizes = [8, 1], strides = [1, 1]} : vector<8x2xf32> to vector<8x1xf32>
    %964 = arith.mulf %962, %963 : vector<8x1xf32>
    %965 = vector.extract_strided_slice %877 {offsets = [1, 0], sizes = [1, 32], strides = [1, 1]} : vector<4x32xf32> to vector<1x32xf32>
    %966 = vector.broadcast %965 : vector<1x32xf32> to vector<8x32xf32>
    %967 = arith.mulf %882, %966 : vector<8x32xf32>
    %cst_107 = arith.constant 1.000000e+00 : f32
    %968 = vector.broadcast %cst_107 : f32 to vector<8x32xf32>
    %969 = arith.subf %968, %967 : vector<8x32xf32>
    %970 = vector.extract_strided_slice %969 {offsets = [0, 0], sizes = [8, 16], strides = [1, 1]} : vector<8x32xf32> to vector<8x16xf32>
    %971 = vector.extract_strided_slice %969 {offsets = [0, 16], sizes = [8, 16], strides = [1, 1]} : vector<8x32xf32> to vector<8x16xf32>
    %972 = arith.mulf %970, %971 : vector<8x16xf32>
    %973 = vector.extract_strided_slice %972 {offsets = [0, 0], sizes = [8, 8], strides = [1, 1]} : vector<8x16xf32> to vector<8x8xf32>
    %974 = vector.extract_strided_slice %972 {offsets = [0, 8], sizes = [8, 8], strides = [1, 1]} : vector<8x16xf32> to vector<8x8xf32>
    %975 = arith.mulf %973, %974 : vector<8x8xf32>
    %976 = vector.extract_strided_slice %975 {offsets = [0, 0], sizes = [8, 4], strides = [1, 1]} : vector<8x8xf32> to vector<8x4xf32>
    %977 = vector.extract_strided_slice %975 {offsets = [0, 4], sizes = [8, 4], strides = [1, 1]} : vector<8x8xf32> to vector<8x4xf32>
    %978 = arith.mulf %976, %977 : vector<8x4xf32>
    %979 = vector.extract_strided_slice %978 {offsets = [0, 0], sizes = [8, 2], strides = [1, 1]} : vector<8x4xf32> to vector<8x2xf32>
    %980 = vector.extract_strided_slice %978 {offsets = [0, 2], sizes = [8, 2], strides = [1, 1]} : vector<8x4xf32> to vector<8x2xf32>
    %981 = arith.mulf %979, %980 : vector<8x2xf32>
    %982 = vector.extract_strided_slice %981 {offsets = [0, 0], sizes = [8, 1], strides = [1, 1]} : vector<8x2xf32> to vector<8x1xf32>
    %983 = vector.extract_strided_slice %981 {offsets = [0, 1], sizes = [8, 1], strides = [1, 1]} : vector<8x2xf32> to vector<8x1xf32>
    %984 = arith.mulf %982, %983 : vector<8x1xf32>
    %985 = vector.extract_strided_slice %878 {offsets = [1, 0], sizes = [1, 32], strides = [1, 1]} : vector<4x32xf32> to vector<1x32xf32>
    %986 = vector.broadcast %985 : vector<1x32xf32> to vector<8x32xf32>
    %987 = arith.mulf %876, %986 : vector<8x32xf32>
    %cst_108 = arith.constant 1.000000e+00 : f32
    %988 = vector.broadcast %cst_108 : f32 to vector<8x32xf32>
    %989 = arith.subf %988, %987 : vector<8x32xf32>
    %990 = vector.extract_strided_slice %989 {offsets = [0, 0], sizes = [8, 16], strides = [1, 1]} : vector<8x32xf32> to vector<8x16xf32>
    %991 = vector.extract_strided_slice %989 {offsets = [0, 16], sizes = [8, 16], strides = [1, 1]} : vector<8x32xf32> to vector<8x16xf32>
    %992 = arith.mulf %990, %991 : vector<8x16xf32>
    %993 = vector.extract_strided_slice %992 {offsets = [0, 0], sizes = [8, 8], strides = [1, 1]} : vector<8x16xf32> to vector<8x8xf32>
    %994 = vector.extract_strided_slice %992 {offsets = [0, 8], sizes = [8, 8], strides = [1, 1]} : vector<8x16xf32> to vector<8x8xf32>
    %995 = arith.mulf %993, %994 : vector<8x8xf32>
    %996 = vector.extract_strided_slice %995 {offsets = [0, 0], sizes = [8, 4], strides = [1, 1]} : vector<8x8xf32> to vector<8x4xf32>
    %997 = vector.extract_strided_slice %995 {offsets = [0, 4], sizes = [8, 4], strides = [1, 1]} : vector<8x8xf32> to vector<8x4xf32>
    %998 = arith.mulf %996, %997 : vector<8x4xf32>
    %999 = vector.extract_strided_slice %998 {offsets = [0, 0], sizes = [8, 2], strides = [1, 1]} : vector<8x4xf32> to vector<8x2xf32>
    %1000 = vector.extract_strided_slice %998 {offsets = [0, 2], sizes = [8, 2], strides = [1, 1]} : vector<8x4xf32> to vector<8x2xf32>
    %1001 = arith.mulf %999, %1000 : vector<8x2xf32>
    %1002 = vector.extract_strided_slice %1001 {offsets = [0, 0], sizes = [8, 1], strides = [1, 1]} : vector<8x2xf32> to vector<8x1xf32>
    %1003 = vector.extract_strided_slice %1001 {offsets = [0, 1], sizes = [8, 1], strides = [1, 1]} : vector<8x2xf32> to vector<8x1xf32>
    %1004 = arith.mulf %1002, %1003 : vector<8x1xf32>
    %1005 = vector.extract_strided_slice %879 {offsets = [1, 0], sizes = [1, 32], strides = [1, 1]} : vector<4x32xf32> to vector<1x32xf32>
    %1006 = vector.broadcast %1005 : vector<1x32xf32> to vector<8x32xf32>
    %1007 = arith.mulf %884, %1006 : vector<8x32xf32>
    %cst_109 = arith.constant 1.000000e+00 : f32
    %1008 = vector.broadcast %cst_109 : f32 to vector<8x32xf32>
    %1009 = arith.subf %1008, %1007 : vector<8x32xf32>
    %1010 = vector.extract_strided_slice %1009 {offsets = [0, 0], sizes = [8, 16], strides = [1, 1]} : vector<8x32xf32> to vector<8x16xf32>
    %1011 = vector.extract_strided_slice %1009 {offsets = [0, 16], sizes = [8, 16], strides = [1, 1]} : vector<8x32xf32> to vector<8x16xf32>
    %1012 = arith.mulf %1010, %1011 : vector<8x16xf32>
    %1013 = vector.extract_strided_slice %1012 {offsets = [0, 0], sizes = [8, 8], strides = [1, 1]} : vector<8x16xf32> to vector<8x8xf32>
    %1014 = vector.extract_strided_slice %1012 {offsets = [0, 8], sizes = [8, 8], strides = [1, 1]} : vector<8x16xf32> to vector<8x8xf32>
    %1015 = arith.mulf %1013, %1014 : vector<8x8xf32>
    %1016 = vector.extract_strided_slice %1015 {offsets = [0, 0], sizes = [8, 4], strides = [1, 1]} : vector<8x8xf32> to vector<8x4xf32>
    %1017 = vector.extract_strided_slice %1015 {offsets = [0, 4], sizes = [8, 4], strides = [1, 1]} : vector<8x8xf32> to vector<8x4xf32>
    %1018 = arith.mulf %1016, %1017 : vector<8x4xf32>
    %1019 = vector.extract_strided_slice %1018 {offsets = [0, 0], sizes = [8, 2], strides = [1, 1]} : vector<8x4xf32> to vector<8x2xf32>
    %1020 = vector.extract_strided_slice %1018 {offsets = [0, 2], sizes = [8, 2], strides = [1, 1]} : vector<8x4xf32> to vector<8x2xf32>
    %1021 = arith.mulf %1019, %1020 : vector<8x2xf32>
    %1022 = vector.extract_strided_slice %1021 {offsets = [0, 0], sizes = [8, 1], strides = [1, 1]} : vector<8x2xf32> to vector<8x1xf32>
    %1023 = vector.extract_strided_slice %1021 {offsets = [0, 1], sizes = [8, 1], strides = [1, 1]} : vector<8x2xf32> to vector<8x1xf32>
    %1024 = arith.mulf %1022, %1023 : vector<8x1xf32>
    %1025 = vector.extract_strided_slice %880 {offsets = [1, 0], sizes = [1, 32], strides = [1, 1]} : vector<4x32xf32> to vector<1x32xf32>
    %1026 = vector.broadcast %1025 : vector<1x32xf32> to vector<8x32xf32>
    %1027 = arith.mulf %876, %1026 : vector<8x32xf32>
    %cst_110 = arith.constant 1.000000e+00 : f32
    %1028 = vector.broadcast %cst_110 : f32 to vector<8x32xf32>
    %1029 = arith.subf %1028, %1027 : vector<8x32xf32>
    %1030 = vector.extract_strided_slice %1029 {offsets = [0, 0], sizes = [8, 16], strides = [1, 1]} : vector<8x32xf32> to vector<8x16xf32>
    %1031 = vector.extract_strided_slice %1029 {offsets = [0, 16], sizes = [8, 16], strides = [1, 1]} : vector<8x32xf32> to vector<8x16xf32>
    %1032 = arith.mulf %1030, %1031 : vector<8x16xf32>
    %1033 = vector.extract_strided_slice %1032 {offsets = [0, 0], sizes = [8, 8], strides = [1, 1]} : vector<8x16xf32> to vector<8x8xf32>
    %1034 = vector.extract_strided_slice %1032 {offsets = [0, 8], sizes = [8, 8], strides = [1, 1]} : vector<8x16xf32> to vector<8x8xf32>
    %1035 = arith.mulf %1033, %1034 : vector<8x8xf32>
    %1036 = vector.extract_strided_slice %1035 {offsets = [0, 0], sizes = [8, 4], strides = [1, 1]} : vector<8x8xf32> to vector<8x4xf32>
    %1037 = vector.extract_strided_slice %1035 {offsets = [0, 4], sizes = [8, 4], strides = [1, 1]} : vector<8x8xf32> to vector<8x4xf32>
    %1038 = arith.mulf %1036, %1037 : vector<8x4xf32>
    %1039 = vector.extract_strided_slice %1038 {offsets = [0, 0], sizes = [8, 2], strides = [1, 1]} : vector<8x4xf32> to vector<8x2xf32>
    %1040 = vector.extract_strided_slice %1038 {offsets = [0, 2], sizes = [8, 2], strides = [1, 1]} : vector<8x4xf32> to vector<8x2xf32>
    %1041 = arith.mulf %1039, %1040 : vector<8x2xf32>
    %1042 = vector.extract_strided_slice %1041 {offsets = [0, 0], sizes = [8, 1], strides = [1, 1]} : vector<8x2xf32> to vector<8x1xf32>
    %1043 = vector.extract_strided_slice %1041 {offsets = [0, 1], sizes = [8, 1], strides = [1, 1]} : vector<8x2xf32> to vector<8x1xf32>
    %1044 = arith.mulf %1042, %1043 : vector<8x1xf32>
    %1045 = vector.extract_strided_slice %877 {offsets = [2, 0], sizes = [1, 32], strides = [1, 1]} : vector<4x32xf32> to vector<1x32xf32>
    %1046 = vector.broadcast %1045 : vector<1x32xf32> to vector<8x32xf32>
    %1047 = arith.mulf %882, %1046 : vector<8x32xf32>
    %cst_111 = arith.constant 1.000000e+00 : f32
    %1048 = vector.broadcast %cst_111 : f32 to vector<8x32xf32>
    %1049 = arith.subf %1048, %1047 : vector<8x32xf32>
    %1050 = vector.extract_strided_slice %1049 {offsets = [0, 0], sizes = [8, 16], strides = [1, 1]} : vector<8x32xf32> to vector<8x16xf32>
    %1051 = vector.extract_strided_slice %1049 {offsets = [0, 16], sizes = [8, 16], strides = [1, 1]} : vector<8x32xf32> to vector<8x16xf32>
    %1052 = arith.mulf %1050, %1051 : vector<8x16xf32>
    %1053 = vector.extract_strided_slice %1052 {offsets = [0, 0], sizes = [8, 8], strides = [1, 1]} : vector<8x16xf32> to vector<8x8xf32>
    %1054 = vector.extract_strided_slice %1052 {offsets = [0, 8], sizes = [8, 8], strides = [1, 1]} : vector<8x16xf32> to vector<8x8xf32>
    %1055 = arith.mulf %1053, %1054 : vector<8x8xf32>
    %1056 = vector.extract_strided_slice %1055 {offsets = [0, 0], sizes = [8, 4], strides = [1, 1]} : vector<8x8xf32> to vector<8x4xf32>
    %1057 = vector.extract_strided_slice %1055 {offsets = [0, 4], sizes = [8, 4], strides = [1, 1]} : vector<8x8xf32> to vector<8x4xf32>
    %1058 = arith.mulf %1056, %1057 : vector<8x4xf32>
    %1059 = vector.extract_strided_slice %1058 {offsets = [0, 0], sizes = [8, 2], strides = [1, 1]} : vector<8x4xf32> to vector<8x2xf32>
    %1060 = vector.extract_strided_slice %1058 {offsets = [0, 2], sizes = [8, 2], strides = [1, 1]} : vector<8x4xf32> to vector<8x2xf32>
    %1061 = arith.mulf %1059, %1060 : vector<8x2xf32>
    %1062 = vector.extract_strided_slice %1061 {offsets = [0, 0], sizes = [8, 1], strides = [1, 1]} : vector<8x2xf32> to vector<8x1xf32>
    %1063 = vector.extract_strided_slice %1061 {offsets = [0, 1], sizes = [8, 1], strides = [1, 1]} : vector<8x2xf32> to vector<8x1xf32>
    %1064 = arith.mulf %1062, %1063 : vector<8x1xf32>
    %1065 = vector.extract_strided_slice %878 {offsets = [2, 0], sizes = [1, 32], strides = [1, 1]} : vector<4x32xf32> to vector<1x32xf32>
    %1066 = vector.broadcast %1065 : vector<1x32xf32> to vector<8x32xf32>
    %1067 = arith.mulf %876, %1066 : vector<8x32xf32>
    %cst_112 = arith.constant 1.000000e+00 : f32
    %1068 = vector.broadcast %cst_112 : f32 to vector<8x32xf32>
    %1069 = arith.subf %1068, %1067 : vector<8x32xf32>
    %1070 = vector.extract_strided_slice %1069 {offsets = [0, 0], sizes = [8, 16], strides = [1, 1]} : vector<8x32xf32> to vector<8x16xf32>
    %1071 = vector.extract_strided_slice %1069 {offsets = [0, 16], sizes = [8, 16], strides = [1, 1]} : vector<8x32xf32> to vector<8x16xf32>
    %1072 = arith.mulf %1070, %1071 : vector<8x16xf32>
    %1073 = vector.extract_strided_slice %1072 {offsets = [0, 0], sizes = [8, 8], strides = [1, 1]} : vector<8x16xf32> to vector<8x8xf32>
    %1074 = vector.extract_strided_slice %1072 {offsets = [0, 8], sizes = [8, 8], strides = [1, 1]} : vector<8x16xf32> to vector<8x8xf32>
    %1075 = arith.mulf %1073, %1074 : vector<8x8xf32>
    %1076 = vector.extract_strided_slice %1075 {offsets = [0, 0], sizes = [8, 4], strides = [1, 1]} : vector<8x8xf32> to vector<8x4xf32>
    %1077 = vector.extract_strided_slice %1075 {offsets = [0, 4], sizes = [8, 4], strides = [1, 1]} : vector<8x8xf32> to vector<8x4xf32>
    %1078 = arith.mulf %1076, %1077 : vector<8x4xf32>
    %1079 = vector.extract_strided_slice %1078 {offsets = [0, 0], sizes = [8, 2], strides = [1, 1]} : vector<8x4xf32> to vector<8x2xf32>
    %1080 = vector.extract_strided_slice %1078 {offsets = [0, 2], sizes = [8, 2], strides = [1, 1]} : vector<8x4xf32> to vector<8x2xf32>
    %1081 = arith.mulf %1079, %1080 : vector<8x2xf32>
    %1082 = vector.extract_strided_slice %1081 {offsets = [0, 0], sizes = [8, 1], strides = [1, 1]} : vector<8x2xf32> to vector<8x1xf32>
    %1083 = vector.extract_strided_slice %1081 {offsets = [0, 1], sizes = [8, 1], strides = [1, 1]} : vector<8x2xf32> to vector<8x1xf32>
    %1084 = arith.mulf %1082, %1083 : vector<8x1xf32>
    %1085 = vector.extract_strided_slice %879 {offsets = [2, 0], sizes = [1, 32], strides = [1, 1]} : vector<4x32xf32> to vector<1x32xf32>
    %1086 = vector.broadcast %1085 : vector<1x32xf32> to vector<8x32xf32>
    %1087 = arith.mulf %884, %1086 : vector<8x32xf32>
    %cst_113 = arith.constant 1.000000e+00 : f32
    %1088 = vector.broadcast %cst_113 : f32 to vector<8x32xf32>
    %1089 = arith.subf %1088, %1087 : vector<8x32xf32>
    %1090 = vector.extract_strided_slice %1089 {offsets = [0, 0], sizes = [8, 16], strides = [1, 1]} : vector<8x32xf32> to vector<8x16xf32>
    %1091 = vector.extract_strided_slice %1089 {offsets = [0, 16], sizes = [8, 16], strides = [1, 1]} : vector<8x32xf32> to vector<8x16xf32>
    %1092 = arith.mulf %1090, %1091 : vector<8x16xf32>
    %1093 = vector.extract_strided_slice %1092 {offsets = [0, 0], sizes = [8, 8], strides = [1, 1]} : vector<8x16xf32> to vector<8x8xf32>
    %1094 = vector.extract_strided_slice %1092 {offsets = [0, 8], sizes = [8, 8], strides = [1, 1]} : vector<8x16xf32> to vector<8x8xf32>
    %1095 = arith.mulf %1093, %1094 : vector<8x8xf32>
    %1096 = vector.extract_strided_slice %1095 {offsets = [0, 0], sizes = [8, 4], strides = [1, 1]} : vector<8x8xf32> to vector<8x4xf32>
    %1097 = vector.extract_strided_slice %1095 {offsets = [0, 4], sizes = [8, 4], strides = [1, 1]} : vector<8x8xf32> to vector<8x4xf32>
    %1098 = arith.mulf %1096, %1097 : vector<8x4xf32>
    %1099 = vector.extract_strided_slice %1098 {offsets = [0, 0], sizes = [8, 2], strides = [1, 1]} : vector<8x4xf32> to vector<8x2xf32>
    %1100 = vector.extract_strided_slice %1098 {offsets = [0, 2], sizes = [8, 2], strides = [1, 1]} : vector<8x4xf32> to vector<8x2xf32>
    %1101 = arith.mulf %1099, %1100 : vector<8x2xf32>
    %1102 = vector.extract_strided_slice %1101 {offsets = [0, 0], sizes = [8, 1], strides = [1, 1]} : vector<8x2xf32> to vector<8x1xf32>
    %1103 = vector.extract_strided_slice %1101 {offsets = [0, 1], sizes = [8, 1], strides = [1, 1]} : vector<8x2xf32> to vector<8x1xf32>
    %1104 = arith.mulf %1102, %1103 : vector<8x1xf32>
    %1105 = vector.extract_strided_slice %880 {offsets = [2, 0], sizes = [1, 32], strides = [1, 1]} : vector<4x32xf32> to vector<1x32xf32>
    %1106 = vector.broadcast %1105 : vector<1x32xf32> to vector<8x32xf32>
    %1107 = arith.mulf %876, %1106 : vector<8x32xf32>
    %cst_114 = arith.constant 1.000000e+00 : f32
    %1108 = vector.broadcast %cst_114 : f32 to vector<8x32xf32>
    %1109 = arith.subf %1108, %1107 : vector<8x32xf32>
    %1110 = vector.extract_strided_slice %1109 {offsets = [0, 0], sizes = [8, 16], strides = [1, 1]} : vector<8x32xf32> to vector<8x16xf32>
    %1111 = vector.extract_strided_slice %1109 {offsets = [0, 16], sizes = [8, 16], strides = [1, 1]} : vector<8x32xf32> to vector<8x16xf32>
    %1112 = arith.mulf %1110, %1111 : vector<8x16xf32>
    %1113 = vector.extract_strided_slice %1112 {offsets = [0, 0], sizes = [8, 8], strides = [1, 1]} : vector<8x16xf32> to vector<8x8xf32>
    %1114 = vector.extract_strided_slice %1112 {offsets = [0, 8], sizes = [8, 8], strides = [1, 1]} : vector<8x16xf32> to vector<8x8xf32>
    %1115 = arith.mulf %1113, %1114 : vector<8x8xf32>
    %1116 = vector.extract_strided_slice %1115 {offsets = [0, 0], sizes = [8, 4], strides = [1, 1]} : vector<8x8xf32> to vector<8x4xf32>
    %1117 = vector.extract_strided_slice %1115 {offsets = [0, 4], sizes = [8, 4], strides = [1, 1]} : vector<8x8xf32> to vector<8x4xf32>
    %1118 = arith.mulf %1116, %1117 : vector<8x4xf32>
    %1119 = vector.extract_strided_slice %1118 {offsets = [0, 0], sizes = [8, 2], strides = [1, 1]} : vector<8x4xf32> to vector<8x2xf32>
    %1120 = vector.extract_strided_slice %1118 {offsets = [0, 2], sizes = [8, 2], strides = [1, 1]} : vector<8x4xf32> to vector<8x2xf32>
    %1121 = arith.mulf %1119, %1120 : vector<8x2xf32>
    %1122 = vector.extract_strided_slice %1121 {offsets = [0, 0], sizes = [8, 1], strides = [1, 1]} : vector<8x2xf32> to vector<8x1xf32>
    %1123 = vector.extract_strided_slice %1121 {offsets = [0, 1], sizes = [8, 1], strides = [1, 1]} : vector<8x2xf32> to vector<8x1xf32>
    %1124 = arith.mulf %1122, %1123 : vector<8x1xf32>
    %1125 = vector.extract_strided_slice %877 {offsets = [3, 0], sizes = [1, 32], strides = [1, 1]} : vector<4x32xf32> to vector<1x32xf32>
    %1126 = vector.broadcast %1125 : vector<1x32xf32> to vector<8x32xf32>
    %1127 = arith.mulf %882, %1126 : vector<8x32xf32>
    %cst_115 = arith.constant 1.000000e+00 : f32
    %1128 = vector.broadcast %cst_115 : f32 to vector<8x32xf32>
    %1129 = arith.subf %1128, %1127 : vector<8x32xf32>
    %1130 = vector.extract_strided_slice %1129 {offsets = [0, 0], sizes = [8, 16], strides = [1, 1]} : vector<8x32xf32> to vector<8x16xf32>
    %1131 = vector.extract_strided_slice %1129 {offsets = [0, 16], sizes = [8, 16], strides = [1, 1]} : vector<8x32xf32> to vector<8x16xf32>
    %1132 = arith.mulf %1130, %1131 : vector<8x16xf32>
    %1133 = vector.extract_strided_slice %1132 {offsets = [0, 0], sizes = [8, 8], strides = [1, 1]} : vector<8x16xf32> to vector<8x8xf32>
    %1134 = vector.extract_strided_slice %1132 {offsets = [0, 8], sizes = [8, 8], strides = [1, 1]} : vector<8x16xf32> to vector<8x8xf32>
    %1135 = arith.mulf %1133, %1134 : vector<8x8xf32>
    %1136 = vector.extract_strided_slice %1135 {offsets = [0, 0], sizes = [8, 4], strides = [1, 1]} : vector<8x8xf32> to vector<8x4xf32>
    %1137 = vector.extract_strided_slice %1135 {offsets = [0, 4], sizes = [8, 4], strides = [1, 1]} : vector<8x8xf32> to vector<8x4xf32>
    %1138 = arith.mulf %1136, %1137 : vector<8x4xf32>
    %1139 = vector.extract_strided_slice %1138 {offsets = [0, 0], sizes = [8, 2], strides = [1, 1]} : vector<8x4xf32> to vector<8x2xf32>
    %1140 = vector.extract_strided_slice %1138 {offsets = [0, 2], sizes = [8, 2], strides = [1, 1]} : vector<8x4xf32> to vector<8x2xf32>
    %1141 = arith.mulf %1139, %1140 : vector<8x2xf32>
    %1142 = vector.extract_strided_slice %1141 {offsets = [0, 0], sizes = [8, 1], strides = [1, 1]} : vector<8x2xf32> to vector<8x1xf32>
    %1143 = vector.extract_strided_slice %1141 {offsets = [0, 1], sizes = [8, 1], strides = [1, 1]} : vector<8x2xf32> to vector<8x1xf32>
    %1144 = arith.mulf %1142, %1143 : vector<8x1xf32>
    %1145 = vector.extract_strided_slice %878 {offsets = [3, 0], sizes = [1, 32], strides = [1, 1]} : vector<4x32xf32> to vector<1x32xf32>
    %1146 = vector.broadcast %1145 : vector<1x32xf32> to vector<8x32xf32>
    %1147 = arith.mulf %876, %1146 : vector<8x32xf32>
    %cst_116 = arith.constant 1.000000e+00 : f32
    %1148 = vector.broadcast %cst_116 : f32 to vector<8x32xf32>
    %1149 = arith.subf %1148, %1147 : vector<8x32xf32>
    %1150 = vector.extract_strided_slice %1149 {offsets = [0, 0], sizes = [8, 16], strides = [1, 1]} : vector<8x32xf32> to vector<8x16xf32>
    %1151 = vector.extract_strided_slice %1149 {offsets = [0, 16], sizes = [8, 16], strides = [1, 1]} : vector<8x32xf32> to vector<8x16xf32>
    %1152 = arith.mulf %1150, %1151 : vector<8x16xf32>
    %1153 = vector.extract_strided_slice %1152 {offsets = [0, 0], sizes = [8, 8], strides = [1, 1]} : vector<8x16xf32> to vector<8x8xf32>
    %1154 = vector.extract_strided_slice %1152 {offsets = [0, 8], sizes = [8, 8], strides = [1, 1]} : vector<8x16xf32> to vector<8x8xf32>
    %1155 = arith.mulf %1153, %1154 : vector<8x8xf32>
    %1156 = vector.extract_strided_slice %1155 {offsets = [0, 0], sizes = [8, 4], strides = [1, 1]} : vector<8x8xf32> to vector<8x4xf32>
    %1157 = vector.extract_strided_slice %1155 {offsets = [0, 4], sizes = [8, 4], strides = [1, 1]} : vector<8x8xf32> to vector<8x4xf32>
    %1158 = arith.mulf %1156, %1157 : vector<8x4xf32>
    %1159 = vector.extract_strided_slice %1158 {offsets = [0, 0], sizes = [8, 2], strides = [1, 1]} : vector<8x4xf32> to vector<8x2xf32>
    %1160 = vector.extract_strided_slice %1158 {offsets = [0, 2], sizes = [8, 2], strides = [1, 1]} : vector<8x4xf32> to vector<8x2xf32>
    %1161 = arith.mulf %1159, %1160 : vector<8x2xf32>
    %1162 = vector.extract_strided_slice %1161 {offsets = [0, 0], sizes = [8, 1], strides = [1, 1]} : vector<8x2xf32> to vector<8x1xf32>
    %1163 = vector.extract_strided_slice %1161 {offsets = [0, 1], sizes = [8, 1], strides = [1, 1]} : vector<8x2xf32> to vector<8x1xf32>
    %1164 = arith.mulf %1162, %1163 : vector<8x1xf32>
    %1165 = vector.extract_strided_slice %879 {offsets = [3, 0], sizes = [1, 32], strides = [1, 1]} : vector<4x32xf32> to vector<1x32xf32>
    %1166 = vector.broadcast %1165 : vector<1x32xf32> to vector<8x32xf32>
    %1167 = arith.mulf %884, %1166 : vector<8x32xf32>
    %cst_117 = arith.constant 1.000000e+00 : f32
    %1168 = vector.broadcast %cst_117 : f32 to vector<8x32xf32>
    %1169 = arith.subf %1168, %1167 : vector<8x32xf32>
    %1170 = vector.extract_strided_slice %1169 {offsets = [0, 0], sizes = [8, 16], strides = [1, 1]} : vector<8x32xf32> to vector<8x16xf32>
    %1171 = vector.extract_strided_slice %1169 {offsets = [0, 16], sizes = [8, 16], strides = [1, 1]} : vector<8x32xf32> to vector<8x16xf32>
    %1172 = arith.mulf %1170, %1171 : vector<8x16xf32>
    %1173 = vector.extract_strided_slice %1172 {offsets = [0, 0], sizes = [8, 8], strides = [1, 1]} : vector<8x16xf32> to vector<8x8xf32>
    %1174 = vector.extract_strided_slice %1172 {offsets = [0, 8], sizes = [8, 8], strides = [1, 1]} : vector<8x16xf32> to vector<8x8xf32>
    %1175 = arith.mulf %1173, %1174 : vector<8x8xf32>
    %1176 = vector.extract_strided_slice %1175 {offsets = [0, 0], sizes = [8, 4], strides = [1, 1]} : vector<8x8xf32> to vector<8x4xf32>
    %1177 = vector.extract_strided_slice %1175 {offsets = [0, 4], sizes = [8, 4], strides = [1, 1]} : vector<8x8xf32> to vector<8x4xf32>
    %1178 = arith.mulf %1176, %1177 : vector<8x4xf32>
    %1179 = vector.extract_strided_slice %1178 {offsets = [0, 0], sizes = [8, 2], strides = [1, 1]} : vector<8x4xf32> to vector<8x2xf32>
    %1180 = vector.extract_strided_slice %1178 {offsets = [0, 2], sizes = [8, 2], strides = [1, 1]} : vector<8x4xf32> to vector<8x2xf32>
    %1181 = arith.mulf %1179, %1180 : vector<8x2xf32>
    %1182 = vector.extract_strided_slice %1181 {offsets = [0, 0], sizes = [8, 1], strides = [1, 1]} : vector<8x2xf32> to vector<8x1xf32>
    %1183 = vector.extract_strided_slice %1181 {offsets = [0, 1], sizes = [8, 1], strides = [1, 1]} : vector<8x2xf32> to vector<8x1xf32>
    %1184 = arith.mulf %1182, %1183 : vector<8x1xf32>
    %1185 = vector.extract_strided_slice %880 {offsets = [3, 0], sizes = [1, 32], strides = [1, 1]} : vector<4x32xf32> to vector<1x32xf32>
    %1186 = vector.broadcast %1185 : vector<1x32xf32> to vector<8x32xf32>
    %1187 = arith.mulf %876, %1186 : vector<8x32xf32>
    %cst_118 = arith.constant 1.000000e+00 : f32
    %1188 = vector.broadcast %cst_118 : f32 to vector<8x32xf32>
    %1189 = arith.subf %1188, %1187 : vector<8x32xf32>
    %1190 = vector.extract_strided_slice %1189 {offsets = [0, 0], sizes = [8, 16], strides = [1, 1]} : vector<8x32xf32> to vector<8x16xf32>
    %1191 = vector.extract_strided_slice %1189 {offsets = [0, 16], sizes = [8, 16], strides = [1, 1]} : vector<8x32xf32> to vector<8x16xf32>
    %1192 = arith.mulf %1190, %1191 : vector<8x16xf32>
    %1193 = vector.extract_strided_slice %1192 {offsets = [0, 0], sizes = [8, 8], strides = [1, 1]} : vector<8x16xf32> to vector<8x8xf32>
    %1194 = vector.extract_strided_slice %1192 {offsets = [0, 8], sizes = [8, 8], strides = [1, 1]} : vector<8x16xf32> to vector<8x8xf32>
    %1195 = arith.mulf %1193, %1194 : vector<8x8xf32>
    %1196 = vector.extract_strided_slice %1195 {offsets = [0, 0], sizes = [8, 4], strides = [1, 1]} : vector<8x8xf32> to vector<8x4xf32>
    %1197 = vector.extract_strided_slice %1195 {offsets = [0, 4], sizes = [8, 4], strides = [1, 1]} : vector<8x8xf32> to vector<8x4xf32>
    %1198 = arith.mulf %1196, %1197 : vector<8x4xf32>
    %1199 = vector.extract_strided_slice %1198 {offsets = [0, 0], sizes = [8, 2], strides = [1, 1]} : vector<8x4xf32> to vector<8x2xf32>
    %1200 = vector.extract_strided_slice %1198 {offsets = [0, 2], sizes = [8, 2], strides = [1, 1]} : vector<8x4xf32> to vector<8x2xf32>
    %1201 = arith.mulf %1199, %1200 : vector<8x2xf32>
    %1202 = vector.extract_strided_slice %1201 {offsets = [0, 0], sizes = [8, 1], strides = [1, 1]} : vector<8x2xf32> to vector<8x1xf32>
    %1203 = vector.extract_strided_slice %1201 {offsets = [0, 1], sizes = [8, 1], strides = [1, 1]} : vector<8x2xf32> to vector<8x1xf32>
    %1204 = arith.mulf %1202, %1203 : vector<8x1xf32>
    %cst_119 = arith.constant 1.000000e+00 : f32
    %1205 = vector.broadcast %cst_119 : f32 to vector<8x1xf32>
    %1206 = arith.subf %1205, %924 : vector<8x1xf32>
    %cst_120 = arith.constant 1.000000e+00 : f32
    %1207 = vector.broadcast %cst_120 : f32 to vector<8x1xf32>
    %1208 = arith.subf %1207, %1004 : vector<8x1xf32>
    %cst_121 = arith.constant 1.000000e+00 : f32
    %1209 = vector.broadcast %cst_121 : f32 to vector<8x1xf32>
    %1210 = arith.subf %1209, %1084 : vector<8x1xf32>
    %cst_122 = arith.constant 1.000000e+00 : f32
    %1211 = vector.broadcast %cst_122 : f32 to vector<8x1xf32>
    %1212 = arith.subf %1211, %1164 : vector<8x1xf32>
    %1213 = tpu.concatenate %904, %984, %1064, %1144, %1206, %1208, %1210, %1212 in 1 : vector<8x1xf32>, vector<8x1xf32>, vector<8x1xf32>, vector<8x1xf32>, vector<8x1xf32>, vector<8x1xf32>, vector<8x1xf32>, vector<8x1xf32> -> vector<8x8xf32>
    %cst_123 = arith.constant 1.000000e+00 : f32
    %1214 = vector.broadcast %cst_123 : f32 to vector<8x1xf32>
    %1215 = arith.subf %1214, %964 : vector<8x1xf32>
    %cst_124 = arith.constant 1.000000e+00 : f32
    %1216 = vector.broadcast %cst_124 : f32 to vector<8x1xf32>
    %1217 = arith.subf %1216, %1044 : vector<8x1xf32>
    %cst_125 = arith.constant 1.000000e+00 : f32
    %1218 = vector.broadcast %cst_125 : f32 to vector<8x1xf32>
    %1219 = arith.subf %1218, %1124 : vector<8x1xf32>
    %cst_126 = arith.constant 1.000000e+00 : f32
    %1220 = vector.broadcast %cst_126 : f32 to vector<8x1xf32>
    %1221 = arith.subf %1220, %1204 : vector<8x1xf32>
    %1222 = tpu.concatenate %944, %1024, %1104, %1184, %1215, %1217, %1219, %1221 in 1 : vector<8x1xf32>, vector<8x1xf32>, vector<8x1xf32>, vector<8x1xf32>, vector<8x1xf32>, vector<8x1xf32>, vector<8x1xf32>, vector<8x1xf32> -> vector<8x8xf32>
    %1223 = tpu.concatenate %856, %1213 in 1 : vector<8x4xf32>, vector<8x8xf32> -> vector<8x12xf32>
    %cst_127 = arith.constant 0.000000e+00 : f32
    %1224 = vector.broadcast %cst_127 : f32 to vector<8x4xf32>
    %1225 = tpu.concatenate %1223, %1224 in 1 : vector<8x12xf32>, vector<8x4xf32> -> vector<8x16xf32>
    %1226 = tpu.concatenate %861, %1222 in 1 : vector<8x4xf32>, vector<8x8xf32> -> vector<8x12xf32>
    %cst_128 = arith.constant 0.000000e+00 : f32
    %1227 = vector.broadcast %cst_128 : f32 to vector<8x4xf32>
    %1228 = tpu.concatenate %1226, %1227 in 1 : vector<8x12xf32>, vector<8x4xf32> -> vector<8x16xf32>
    %c176 = arith.constant 176 : index
    %c0_129 = arith.constant 0 : index
    %1229 = vector.load %arg1[%c176, %c0_129] : memref<296x128xf32, #tpu.memory_space<vmem>>, vector<4x16xf32>
    %c184 = arith.constant 184 : index
    %c0_130 = arith.constant 0 : index
    %1230 = vector.load %arg1[%c184, %c0_130] : memref<296x128xf32, #tpu.memory_space<vmem>>, vector<4x16xf32>
    %c192 = arith.constant 192 : index
    %c0_131 = arith.constant 0 : index
    %1231 = vector.load %arg1[%c192, %c0_131] : memref<296x128xf32, #tpu.memory_space<vmem>>, vector<4x16xf32>
    %c200 = arith.constant 200 : index
    %c0_132 = arith.constant 0 : index
    %1232 = vector.load %arg1[%c200, %c0_132] : memref<296x128xf32, #tpu.memory_space<vmem>>, vector<4x16xf32>
    %cst_133 = arith.constant 1.000000e+00 : f32
    %1233 = vector.broadcast %cst_133 : f32 to vector<8x16xf32>
    %1234 = arith.subf %1233, %1225 : vector<8x16xf32>
    %cst_134 = arith.constant 1.000000e+00 : f32
    %1235 = vector.broadcast %cst_134 : f32 to vector<8x16xf32>
    %1236 = arith.subf %1235, %1228 : vector<8x16xf32>
    %1237 = vector.extract_strided_slice %1229 {offsets = [0, 0], sizes = [1, 16], strides = [1, 1]} : vector<4x16xf32> to vector<1x16xf32>
    %1238 = vector.broadcast %1237 : vector<1x16xf32> to vector<8x16xf32>
    %1239 = arith.mulf %1234, %1238 : vector<8x16xf32>
    %cst_135 = arith.constant 1.000000e+00 : f32
    %1240 = vector.broadcast %cst_135 : f32 to vector<8x16xf32>
    %1241 = arith.subf %1240, %1239 : vector<8x16xf32>
    %1242 = vector.extract_strided_slice %1241 {offsets = [0, 0], sizes = [8, 8], strides = [1, 1]} : vector<8x16xf32> to vector<8x8xf32>
    %1243 = vector.extract_strided_slice %1241 {offsets = [0, 8], sizes = [8, 8], strides = [1, 1]} : vector<8x16xf32> to vector<8x8xf32>
    %1244 = arith.mulf %1242, %1243 : vector<8x8xf32>
    %1245 = vector.extract_strided_slice %1244 {offsets = [0, 0], sizes = [8, 4], strides = [1, 1]} : vector<8x8xf32> to vector<8x4xf32>
    %1246 = vector.extract_strided_slice %1244 {offsets = [0, 4], sizes = [8, 4], strides = [1, 1]} : vector<8x8xf32> to vector<8x4xf32>
    %1247 = arith.mulf %1245, %1246 : vector<8x4xf32>
    %1248 = vector.extract_strided_slice %1247 {offsets = [0, 0], sizes = [8, 2], strides = [1, 1]} : vector<8x4xf32> to vector<8x2xf32>
    %1249 = vector.extract_strided_slice %1247 {offsets = [0, 2], sizes = [8, 2], strides = [1, 1]} : vector<8x4xf32> to vector<8x2xf32>
    %1250 = arith.mulf %1248, %1249 : vector<8x2xf32>
    %1251 = vector.extract_strided_slice %1250 {offsets = [0, 0], sizes = [8, 1], strides = [1, 1]} : vector<8x2xf32> to vector<8x1xf32>
    %1252 = vector.extract_strided_slice %1250 {offsets = [0, 1], sizes = [8, 1], strides = [1, 1]} : vector<8x2xf32> to vector<8x1xf32>
    %1253 = arith.mulf %1251, %1252 : vector<8x1xf32>
    %1254 = vector.extract_strided_slice %1230 {offsets = [0, 0], sizes = [1, 16], strides = [1, 1]} : vector<4x16xf32> to vector<1x16xf32>
    %1255 = vector.broadcast %1254 : vector<1x16xf32> to vector<8x16xf32>
    %1256 = arith.mulf %1225, %1255 : vector<8x16xf32>
    %cst_136 = arith.constant 1.000000e+00 : f32
    %1257 = vector.broadcast %cst_136 : f32 to vector<8x16xf32>
    %1258 = arith.subf %1257, %1256 : vector<8x16xf32>
    %1259 = vector.extract_strided_slice %1258 {offsets = [0, 0], sizes = [8, 8], strides = [1, 1]} : vector<8x16xf32> to vector<8x8xf32>
    %1260 = vector.extract_strided_slice %1258 {offsets = [0, 8], sizes = [8, 8], strides = [1, 1]} : vector<8x16xf32> to vector<8x8xf32>
    %1261 = arith.mulf %1259, %1260 : vector<8x8xf32>
    %1262 = vector.extract_strided_slice %1261 {offsets = [0, 0], sizes = [8, 4], strides = [1, 1]} : vector<8x8xf32> to vector<8x4xf32>
    %1263 = vector.extract_strided_slice %1261 {offsets = [0, 4], sizes = [8, 4], strides = [1, 1]} : vector<8x8xf32> to vector<8x4xf32>
    %1264 = arith.mulf %1262, %1263 : vector<8x4xf32>
    %1265 = vector.extract_strided_slice %1264 {offsets = [0, 0], sizes = [8, 2], strides = [1, 1]} : vector<8x4xf32> to vector<8x2xf32>
    %1266 = vector.extract_strided_slice %1264 {offsets = [0, 2], sizes = [8, 2], strides = [1, 1]} : vector<8x4xf32> to vector<8x2xf32>
    %1267 = arith.mulf %1265, %1266 : vector<8x2xf32>
    %1268 = vector.extract_strided_slice %1267 {offsets = [0, 0], sizes = [8, 1], strides = [1, 1]} : vector<8x2xf32> to vector<8x1xf32>
    %1269 = vector.extract_strided_slice %1267 {offsets = [0, 1], sizes = [8, 1], strides = [1, 1]} : vector<8x2xf32> to vector<8x1xf32>
    %1270 = arith.mulf %1268, %1269 : vector<8x1xf32>
    %1271 = vector.extract_strided_slice %1231 {offsets = [0, 0], sizes = [1, 16], strides = [1, 1]} : vector<4x16xf32> to vector<1x16xf32>
    %1272 = vector.broadcast %1271 : vector<1x16xf32> to vector<8x16xf32>
    %1273 = arith.mulf %1236, %1272 : vector<8x16xf32>
    %cst_137 = arith.constant 1.000000e+00 : f32
    %1274 = vector.broadcast %cst_137 : f32 to vector<8x16xf32>
    %1275 = arith.subf %1274, %1273 : vector<8x16xf32>
    %1276 = vector.extract_strided_slice %1275 {offsets = [0, 0], sizes = [8, 8], strides = [1, 1]} : vector<8x16xf32> to vector<8x8xf32>
    %1277 = vector.extract_strided_slice %1275 {offsets = [0, 8], sizes = [8, 8], strides = [1, 1]} : vector<8x16xf32> to vector<8x8xf32>
    %1278 = arith.mulf %1276, %1277 : vector<8x8xf32>
    %1279 = vector.extract_strided_slice %1278 {offsets = [0, 0], sizes = [8, 4], strides = [1, 1]} : vector<8x8xf32> to vector<8x4xf32>
    %1280 = vector.extract_strided_slice %1278 {offsets = [0, 4], sizes = [8, 4], strides = [1, 1]} : vector<8x8xf32> to vector<8x4xf32>
    %1281 = arith.mulf %1279, %1280 : vector<8x4xf32>
    %1282 = vector.extract_strided_slice %1281 {offsets = [0, 0], sizes = [8, 2], strides = [1, 1]} : vector<8x4xf32> to vector<8x2xf32>
    %1283 = vector.extract_strided_slice %1281 {offsets = [0, 2], sizes = [8, 2], strides = [1, 1]} : vector<8x4xf32> to vector<8x2xf32>
    %1284 = arith.mulf %1282, %1283 : vector<8x2xf32>
    %1285 = vector.extract_strided_slice %1284 {offsets = [0, 0], sizes = [8, 1], strides = [1, 1]} : vector<8x2xf32> to vector<8x1xf32>
    %1286 = vector.extract_strided_slice %1284 {offsets = [0, 1], sizes = [8, 1], strides = [1, 1]} : vector<8x2xf32> to vector<8x1xf32>
    %1287 = arith.mulf %1285, %1286 : vector<8x1xf32>
    %1288 = vector.extract_strided_slice %1232 {offsets = [0, 0], sizes = [1, 16], strides = [1, 1]} : vector<4x16xf32> to vector<1x16xf32>
    %1289 = vector.broadcast %1288 : vector<1x16xf32> to vector<8x16xf32>
    %1290 = arith.mulf %1228, %1289 : vector<8x16xf32>
    %cst_138 = arith.constant 1.000000e+00 : f32
    %1291 = vector.broadcast %cst_138 : f32 to vector<8x16xf32>
    %1292 = arith.subf %1291, %1290 : vector<8x16xf32>
    %1293 = vector.extract_strided_slice %1292 {offsets = [0, 0], sizes = [8, 8], strides = [1, 1]} : vector<8x16xf32> to vector<8x8xf32>
    %1294 = vector.extract_strided_slice %1292 {offsets = [0, 8], sizes = [8, 8], strides = [1, 1]} : vector<8x16xf32> to vector<8x8xf32>
    %1295 = arith.mulf %1293, %1294 : vector<8x8xf32>
    %1296 = vector.extract_strided_slice %1295 {offsets = [0, 0], sizes = [8, 4], strides = [1, 1]} : vector<8x8xf32> to vector<8x4xf32>
    %1297 = vector.extract_strided_slice %1295 {offsets = [0, 4], sizes = [8, 4], strides = [1, 1]} : vector<8x8xf32> to vector<8x4xf32>
    %1298 = arith.mulf %1296, %1297 : vector<8x4xf32>
    %1299 = vector.extract_strided_slice %1298 {offsets = [0, 0], sizes = [8, 2], strides = [1, 1]} : vector<8x4xf32> to vector<8x2xf32>
    %1300 = vector.extract_strided_slice %1298 {offsets = [0, 2], sizes = [8, 2], strides = [1, 1]} : vector<8x4xf32> to vector<8x2xf32>
    %1301 = arith.mulf %1299, %1300 : vector<8x2xf32>
    %1302 = vector.extract_strided_slice %1301 {offsets = [0, 0], sizes = [8, 1], strides = [1, 1]} : vector<8x2xf32> to vector<8x1xf32>
    %1303 = vector.extract_strided_slice %1301 {offsets = [0, 1], sizes = [8, 1], strides = [1, 1]} : vector<8x2xf32> to vector<8x1xf32>
    %1304 = arith.mulf %1302, %1303 : vector<8x1xf32>
    %1305 = vector.extract_strided_slice %1229 {offsets = [1, 0], sizes = [1, 16], strides = [1, 1]} : vector<4x16xf32> to vector<1x16xf32>
    %1306 = vector.broadcast %1305 : vector<1x16xf32> to vector<8x16xf32>
    %1307 = arith.mulf %1234, %1306 : vector<8x16xf32>
    %cst_139 = arith.constant 1.000000e+00 : f32
    %1308 = vector.broadcast %cst_139 : f32 to vector<8x16xf32>
    %1309 = arith.subf %1308, %1307 : vector<8x16xf32>
    %1310 = vector.extract_strided_slice %1309 {offsets = [0, 0], sizes = [8, 8], strides = [1, 1]} : vector<8x16xf32> to vector<8x8xf32>
    %1311 = vector.extract_strided_slice %1309 {offsets = [0, 8], sizes = [8, 8], strides = [1, 1]} : vector<8x16xf32> to vector<8x8xf32>
    %1312 = arith.mulf %1310, %1311 : vector<8x8xf32>
    %1313 = vector.extract_strided_slice %1312 {offsets = [0, 0], sizes = [8, 4], strides = [1, 1]} : vector<8x8xf32> to vector<8x4xf32>
    %1314 = vector.extract_strided_slice %1312 {offsets = [0, 4], sizes = [8, 4], strides = [1, 1]} : vector<8x8xf32> to vector<8x4xf32>
    %1315 = arith.mulf %1313, %1314 : vector<8x4xf32>
    %1316 = vector.extract_strided_slice %1315 {offsets = [0, 0], sizes = [8, 2], strides = [1, 1]} : vector<8x4xf32> to vector<8x2xf32>
    %1317 = vector.extract_strided_slice %1315 {offsets = [0, 2], sizes = [8, 2], strides = [1, 1]} : vector<8x4xf32> to vector<8x2xf32>
    %1318 = arith.mulf %1316, %1317 : vector<8x2xf32>
    %1319 = vector.extract_strided_slice %1318 {offsets = [0, 0], sizes = [8, 1], strides = [1, 1]} : vector<8x2xf32> to vector<8x1xf32>
    %1320 = vector.extract_strided_slice %1318 {offsets = [0, 1], sizes = [8, 1], strides = [1, 1]} : vector<8x2xf32> to vector<8x1xf32>
    %1321 = arith.mulf %1319, %1320 : vector<8x1xf32>
    %1322 = vector.extract_strided_slice %1230 {offsets = [1, 0], sizes = [1, 16], strides = [1, 1]} : vector<4x16xf32> to vector<1x16xf32>
    %1323 = vector.broadcast %1322 : vector<1x16xf32> to vector<8x16xf32>
    %1324 = arith.mulf %1225, %1323 : vector<8x16xf32>
    %cst_140 = arith.constant 1.000000e+00 : f32
    %1325 = vector.broadcast %cst_140 : f32 to vector<8x16xf32>
    %1326 = arith.subf %1325, %1324 : vector<8x16xf32>
    %1327 = vector.extract_strided_slice %1326 {offsets = [0, 0], sizes = [8, 8], strides = [1, 1]} : vector<8x16xf32> to vector<8x8xf32>
    %1328 = vector.extract_strided_slice %1326 {offsets = [0, 8], sizes = [8, 8], strides = [1, 1]} : vector<8x16xf32> to vector<8x8xf32>
    %1329 = arith.mulf %1327, %1328 : vector<8x8xf32>
    %1330 = vector.extract_strided_slice %1329 {offsets = [0, 0], sizes = [8, 4], strides = [1, 1]} : vector<8x8xf32> to vector<8x4xf32>
    %1331 = vector.extract_strided_slice %1329 {offsets = [0, 4], sizes = [8, 4], strides = [1, 1]} : vector<8x8xf32> to vector<8x4xf32>
    %1332 = arith.mulf %1330, %1331 : vector<8x4xf32>
    %1333 = vector.extract_strided_slice %1332 {offsets = [0, 0], sizes = [8, 2], strides = [1, 1]} : vector<8x4xf32> to vector<8x2xf32>
    %1334 = vector.extract_strided_slice %1332 {offsets = [0, 2], sizes = [8, 2], strides = [1, 1]} : vector<8x4xf32> to vector<8x2xf32>
    %1335 = arith.mulf %1333, %1334 : vector<8x2xf32>
    %1336 = vector.extract_strided_slice %1335 {offsets = [0, 0], sizes = [8, 1], strides = [1, 1]} : vector<8x2xf32> to vector<8x1xf32>
    %1337 = vector.extract_strided_slice %1335 {offsets = [0, 1], sizes = [8, 1], strides = [1, 1]} : vector<8x2xf32> to vector<8x1xf32>
    %1338 = arith.mulf %1336, %1337 : vector<8x1xf32>
    %1339 = vector.extract_strided_slice %1231 {offsets = [1, 0], sizes = [1, 16], strides = [1, 1]} : vector<4x16xf32> to vector<1x16xf32>
    %1340 = vector.broadcast %1339 : vector<1x16xf32> to vector<8x16xf32>
    %1341 = arith.mulf %1236, %1340 : vector<8x16xf32>
    %cst_141 = arith.constant 1.000000e+00 : f32
    %1342 = vector.broadcast %cst_141 : f32 to vector<8x16xf32>
    %1343 = arith.subf %1342, %1341 : vector<8x16xf32>
    %1344 = vector.extract_strided_slice %1343 {offsets = [0, 0], sizes = [8, 8], strides = [1, 1]} : vector<8x16xf32> to vector<8x8xf32>
    %1345 = vector.extract_strided_slice %1343 {offsets = [0, 8], sizes = [8, 8], strides = [1, 1]} : vector<8x16xf32> to vector<8x8xf32>
    %1346 = arith.mulf %1344, %1345 : vector<8x8xf32>
    %1347 = vector.extract_strided_slice %1346 {offsets = [0, 0], sizes = [8, 4], strides = [1, 1]} : vector<8x8xf32> to vector<8x4xf32>
    %1348 = vector.extract_strided_slice %1346 {offsets = [0, 4], sizes = [8, 4], strides = [1, 1]} : vector<8x8xf32> to vector<8x4xf32>
    %1349 = arith.mulf %1347, %1348 : vector<8x4xf32>
    %1350 = vector.extract_strided_slice %1349 {offsets = [0, 0], sizes = [8, 2], strides = [1, 1]} : vector<8x4xf32> to vector<8x2xf32>
    %1351 = vector.extract_strided_slice %1349 {offsets = [0, 2], sizes = [8, 2], strides = [1, 1]} : vector<8x4xf32> to vector<8x2xf32>
    %1352 = arith.mulf %1350, %1351 : vector<8x2xf32>
    %1353 = vector.extract_strided_slice %1352 {offsets = [0, 0], sizes = [8, 1], strides = [1, 1]} : vector<8x2xf32> to vector<8x1xf32>
    %1354 = vector.extract_strided_slice %1352 {offsets = [0, 1], sizes = [8, 1], strides = [1, 1]} : vector<8x2xf32> to vector<8x1xf32>
    %1355 = arith.mulf %1353, %1354 : vector<8x1xf32>
    %1356 = vector.extract_strided_slice %1232 {offsets = [1, 0], sizes = [1, 16], strides = [1, 1]} : vector<4x16xf32> to vector<1x16xf32>
    %1357 = vector.broadcast %1356 : vector<1x16xf32> to vector<8x16xf32>
    %1358 = arith.mulf %1228, %1357 : vector<8x16xf32>
    %cst_142 = arith.constant 1.000000e+00 : f32
    %1359 = vector.broadcast %cst_142 : f32 to vector<8x16xf32>
    %1360 = arith.subf %1359, %1358 : vector<8x16xf32>
    %1361 = vector.extract_strided_slice %1360 {offsets = [0, 0], sizes = [8, 8], strides = [1, 1]} : vector<8x16xf32> to vector<8x8xf32>
    %1362 = vector.extract_strided_slice %1360 {offsets = [0, 8], sizes = [8, 8], strides = [1, 1]} : vector<8x16xf32> to vector<8x8xf32>
    %1363 = arith.mulf %1361, %1362 : vector<8x8xf32>
    %1364 = vector.extract_strided_slice %1363 {offsets = [0, 0], sizes = [8, 4], strides = [1, 1]} : vector<8x8xf32> to vector<8x4xf32>
    %1365 = vector.extract_strided_slice %1363 {offsets = [0, 4], sizes = [8, 4], strides = [1, 1]} : vector<8x8xf32> to vector<8x4xf32>
    %1366 = arith.mulf %1364, %1365 : vector<8x4xf32>
    %1367 = vector.extract_strided_slice %1366 {offsets = [0, 0], sizes = [8, 2], strides = [1, 1]} : vector<8x4xf32> to vector<8x2xf32>
    %1368 = vector.extract_strided_slice %1366 {offsets = [0, 2], sizes = [8, 2], strides = [1, 1]} : vector<8x4xf32> to vector<8x2xf32>
    %1369 = arith.mulf %1367, %1368 : vector<8x2xf32>
    %1370 = vector.extract_strided_slice %1369 {offsets = [0, 0], sizes = [8, 1], strides = [1, 1]} : vector<8x2xf32> to vector<8x1xf32>
    %1371 = vector.extract_strided_slice %1369 {offsets = [0, 1], sizes = [8, 1], strides = [1, 1]} : vector<8x2xf32> to vector<8x1xf32>
    %1372 = arith.mulf %1370, %1371 : vector<8x1xf32>
    %1373 = vector.extract_strided_slice %1229 {offsets = [2, 0], sizes = [1, 16], strides = [1, 1]} : vector<4x16xf32> to vector<1x16xf32>
    %1374 = vector.broadcast %1373 : vector<1x16xf32> to vector<8x16xf32>
    %1375 = arith.mulf %1234, %1374 : vector<8x16xf32>
    %cst_143 = arith.constant 1.000000e+00 : f32
    %1376 = vector.broadcast %cst_143 : f32 to vector<8x16xf32>
    %1377 = arith.subf %1376, %1375 : vector<8x16xf32>
    %1378 = vector.extract_strided_slice %1377 {offsets = [0, 0], sizes = [8, 8], strides = [1, 1]} : vector<8x16xf32> to vector<8x8xf32>
    %1379 = vector.extract_strided_slice %1377 {offsets = [0, 8], sizes = [8, 8], strides = [1, 1]} : vector<8x16xf32> to vector<8x8xf32>
    %1380 = arith.mulf %1378, %1379 : vector<8x8xf32>
    %1381 = vector.extract_strided_slice %1380 {offsets = [0, 0], sizes = [8, 4], strides = [1, 1]} : vector<8x8xf32> to vector<8x4xf32>
    %1382 = vector.extract_strided_slice %1380 {offsets = [0, 4], sizes = [8, 4], strides = [1, 1]} : vector<8x8xf32> to vector<8x4xf32>
    %1383 = arith.mulf %1381, %1382 : vector<8x4xf32>
    %1384 = vector.extract_strided_slice %1383 {offsets = [0, 0], sizes = [8, 2], strides = [1, 1]} : vector<8x4xf32> to vector<8x2xf32>
    %1385 = vector.extract_strided_slice %1383 {offsets = [0, 2], sizes = [8, 2], strides = [1, 1]} : vector<8x4xf32> to vector<8x2xf32>
    %1386 = arith.mulf %1384, %1385 : vector<8x2xf32>
    %1387 = vector.extract_strided_slice %1386 {offsets = [0, 0], sizes = [8, 1], strides = [1, 1]} : vector<8x2xf32> to vector<8x1xf32>
    %1388 = vector.extract_strided_slice %1386 {offsets = [0, 1], sizes = [8, 1], strides = [1, 1]} : vector<8x2xf32> to vector<8x1xf32>
    %1389 = arith.mulf %1387, %1388 : vector<8x1xf32>
    %1390 = vector.extract_strided_slice %1230 {offsets = [2, 0], sizes = [1, 16], strides = [1, 1]} : vector<4x16xf32> to vector<1x16xf32>
    %1391 = vector.broadcast %1390 : vector<1x16xf32> to vector<8x16xf32>
    %1392 = arith.mulf %1225, %1391 : vector<8x16xf32>
    %cst_144 = arith.constant 1.000000e+00 : f32
    %1393 = vector.broadcast %cst_144 : f32 to vector<8x16xf32>
    %1394 = arith.subf %1393, %1392 : vector<8x16xf32>
    %1395 = vector.extract_strided_slice %1394 {offsets = [0, 0], sizes = [8, 8], strides = [1, 1]} : vector<8x16xf32> to vector<8x8xf32>
    %1396 = vector.extract_strided_slice %1394 {offsets = [0, 8], sizes = [8, 8], strides = [1, 1]} : vector<8x16xf32> to vector<8x8xf32>
    %1397 = arith.mulf %1395, %1396 : vector<8x8xf32>
    %1398 = vector.extract_strided_slice %1397 {offsets = [0, 0], sizes = [8, 4], strides = [1, 1]} : vector<8x8xf32> to vector<8x4xf32>
    %1399 = vector.extract_strided_slice %1397 {offsets = [0, 4], sizes = [8, 4], strides = [1, 1]} : vector<8x8xf32> to vector<8x4xf32>
    %1400 = arith.mulf %1398, %1399 : vector<8x4xf32>
    %1401 = vector.extract_strided_slice %1400 {offsets = [0, 0], sizes = [8, 2], strides = [1, 1]} : vector<8x4xf32> to vector<8x2xf32>
    %1402 = vector.extract_strided_slice %1400 {offsets = [0, 2], sizes = [8, 2], strides = [1, 1]} : vector<8x4xf32> to vector<8x2xf32>
    %1403 = arith.mulf %1401, %1402 : vector<8x2xf32>
    %1404 = vector.extract_strided_slice %1403 {offsets = [0, 0], sizes = [8, 1], strides = [1, 1]} : vector<8x2xf32> to vector<8x1xf32>
    %1405 = vector.extract_strided_slice %1403 {offsets = [0, 1], sizes = [8, 1], strides = [1, 1]} : vector<8x2xf32> to vector<8x1xf32>
    %1406 = arith.mulf %1404, %1405 : vector<8x1xf32>
    %1407 = vector.extract_strided_slice %1231 {offsets = [2, 0], sizes = [1, 16], strides = [1, 1]} : vector<4x16xf32> to vector<1x16xf32>
    %1408 = vector.broadcast %1407 : vector<1x16xf32> to vector<8x16xf32>
    %1409 = arith.mulf %1236, %1408 : vector<8x16xf32>
    %cst_145 = arith.constant 1.000000e+00 : f32
    %1410 = vector.broadcast %cst_145 : f32 to vector<8x16xf32>
    %1411 = arith.subf %1410, %1409 : vector<8x16xf32>
    %1412 = vector.extract_strided_slice %1411 {offsets = [0, 0], sizes = [8, 8], strides = [1, 1]} : vector<8x16xf32> to vector<8x8xf32>
    %1413 = vector.extract_strided_slice %1411 {offsets = [0, 8], sizes = [8, 8], strides = [1, 1]} : vector<8x16xf32> to vector<8x8xf32>
    %1414 = arith.mulf %1412, %1413 : vector<8x8xf32>
    %1415 = vector.extract_strided_slice %1414 {offsets = [0, 0], sizes = [8, 4], strides = [1, 1]} : vector<8x8xf32> to vector<8x4xf32>
    %1416 = vector.extract_strided_slice %1414 {offsets = [0, 4], sizes = [8, 4], strides = [1, 1]} : vector<8x8xf32> to vector<8x4xf32>
    %1417 = arith.mulf %1415, %1416 : vector<8x4xf32>
    %1418 = vector.extract_strided_slice %1417 {offsets = [0, 0], sizes = [8, 2], strides = [1, 1]} : vector<8x4xf32> to vector<8x2xf32>
    %1419 = vector.extract_strided_slice %1417 {offsets = [0, 2], sizes = [8, 2], strides = [1, 1]} : vector<8x4xf32> to vector<8x2xf32>
    %1420 = arith.mulf %1418, %1419 : vector<8x2xf32>
    %1421 = vector.extract_strided_slice %1420 {offsets = [0, 0], sizes = [8, 1], strides = [1, 1]} : vector<8x2xf32> to vector<8x1xf32>
    %1422 = vector.extract_strided_slice %1420 {offsets = [0, 1], sizes = [8, 1], strides = [1, 1]} : vector<8x2xf32> to vector<8x1xf32>
    %1423 = arith.mulf %1421, %1422 : vector<8x1xf32>
    %1424 = vector.extract_strided_slice %1232 {offsets = [2, 0], sizes = [1, 16], strides = [1, 1]} : vector<4x16xf32> to vector<1x16xf32>
    %1425 = vector.broadcast %1424 : vector<1x16xf32> to vector<8x16xf32>
    %1426 = arith.mulf %1228, %1425 : vector<8x16xf32>
    %cst_146 = arith.constant 1.000000e+00 : f32
    %1427 = vector.broadcast %cst_146 : f32 to vector<8x16xf32>
    %1428 = arith.subf %1427, %1426 : vector<8x16xf32>
    %1429 = vector.extract_strided_slice %1428 {offsets = [0, 0], sizes = [8, 8], strides = [1, 1]} : vector<8x16xf32> to vector<8x8xf32>
    %1430 = vector.extract_strided_slice %1428 {offsets = [0, 8], sizes = [8, 8], strides = [1, 1]} : vector<8x16xf32> to vector<8x8xf32>
    %1431 = arith.mulf %1429, %1430 : vector<8x8xf32>
    %1432 = vector.extract_strided_slice %1431 {offsets = [0, 0], sizes = [8, 4], strides = [1, 1]} : vector<8x8xf32> to vector<8x4xf32>
    %1433 = vector.extract_strided_slice %1431 {offsets = [0, 4], sizes = [8, 4], strides = [1, 1]} : vector<8x8xf32> to vector<8x4xf32>
    %1434 = arith.mulf %1432, %1433 : vector<8x4xf32>
    %1435 = vector.extract_strided_slice %1434 {offsets = [0, 0], sizes = [8, 2], strides = [1, 1]} : vector<8x4xf32> to vector<8x2xf32>
    %1436 = vector.extract_strided_slice %1434 {offsets = [0, 2], sizes = [8, 2], strides = [1, 1]} : vector<8x4xf32> to vector<8x2xf32>
    %1437 = arith.mulf %1435, %1436 : vector<8x2xf32>
    %1438 = vector.extract_strided_slice %1437 {offsets = [0, 0], sizes = [8, 1], strides = [1, 1]} : vector<8x2xf32> to vector<8x1xf32>
    %1439 = vector.extract_strided_slice %1437 {offsets = [0, 1], sizes = [8, 1], strides = [1, 1]} : vector<8x2xf32> to vector<8x1xf32>
    %1440 = arith.mulf %1438, %1439 : vector<8x1xf32>
    %1441 = vector.extract_strided_slice %1229 {offsets = [3, 0], sizes = [1, 16], strides = [1, 1]} : vector<4x16xf32> to vector<1x16xf32>
    %1442 = vector.broadcast %1441 : vector<1x16xf32> to vector<8x16xf32>
    %1443 = arith.mulf %1234, %1442 : vector<8x16xf32>
    %cst_147 = arith.constant 1.000000e+00 : f32
    %1444 = vector.broadcast %cst_147 : f32 to vector<8x16xf32>
    %1445 = arith.subf %1444, %1443 : vector<8x16xf32>
    %1446 = vector.extract_strided_slice %1445 {offsets = [0, 0], sizes = [8, 8], strides = [1, 1]} : vector<8x16xf32> to vector<8x8xf32>
    %1447 = vector.extract_strided_slice %1445 {offsets = [0, 8], sizes = [8, 8], strides = [1, 1]} : vector<8x16xf32> to vector<8x8xf32>
    %1448 = arith.mulf %1446, %1447 : vector<8x8xf32>
    %1449 = vector.extract_strided_slice %1448 {offsets = [0, 0], sizes = [8, 4], strides = [1, 1]} : vector<8x8xf32> to vector<8x4xf32>
    %1450 = vector.extract_strided_slice %1448 {offsets = [0, 4], sizes = [8, 4], strides = [1, 1]} : vector<8x8xf32> to vector<8x4xf32>
    %1451 = arith.mulf %1449, %1450 : vector<8x4xf32>
    %1452 = vector.extract_strided_slice %1451 {offsets = [0, 0], sizes = [8, 2], strides = [1, 1]} : vector<8x4xf32> to vector<8x2xf32>
    %1453 = vector.extract_strided_slice %1451 {offsets = [0, 2], sizes = [8, 2], strides = [1, 1]} : vector<8x4xf32> to vector<8x2xf32>
    %1454 = arith.mulf %1452, %1453 : vector<8x2xf32>
    %1455 = vector.extract_strided_slice %1454 {offsets = [0, 0], sizes = [8, 1], strides = [1, 1]} : vector<8x2xf32> to vector<8x1xf32>
    %1456 = vector.extract_strided_slice %1454 {offsets = [0, 1], sizes = [8, 1], strides = [1, 1]} : vector<8x2xf32> to vector<8x1xf32>
    %1457 = arith.mulf %1455, %1456 : vector<8x1xf32>
    %1458 = vector.extract_strided_slice %1230 {offsets = [3, 0], sizes = [1, 16], strides = [1, 1]} : vector<4x16xf32> to vector<1x16xf32>
    %1459 = vector.broadcast %1458 : vector<1x16xf32> to vector<8x16xf32>
    %1460 = arith.mulf %1225, %1459 : vector<8x16xf32>
    %cst_148 = arith.constant 1.000000e+00 : f32
    %1461 = vector.broadcast %cst_148 : f32 to vector<8x16xf32>
    %1462 = arith.subf %1461, %1460 : vector<8x16xf32>
    %1463 = vector.extract_strided_slice %1462 {offsets = [0, 0], sizes = [8, 8], strides = [1, 1]} : vector<8x16xf32> to vector<8x8xf32>
    %1464 = vector.extract_strided_slice %1462 {offsets = [0, 8], sizes = [8, 8], strides = [1, 1]} : vector<8x16xf32> to vector<8x8xf32>
    %1465 = arith.mulf %1463, %1464 : vector<8x8xf32>
    %1466 = vector.extract_strided_slice %1465 {offsets = [0, 0], sizes = [8, 4], strides = [1, 1]} : vector<8x8xf32> to vector<8x4xf32>
    %1467 = vector.extract_strided_slice %1465 {offsets = [0, 4], sizes = [8, 4], strides = [1, 1]} : vector<8x8xf32> to vector<8x4xf32>
    %1468 = arith.mulf %1466, %1467 : vector<8x4xf32>
    %1469 = vector.extract_strided_slice %1468 {offsets = [0, 0], sizes = [8, 2], strides = [1, 1]} : vector<8x4xf32> to vector<8x2xf32>
    %1470 = vector.extract_strided_slice %1468 {offsets = [0, 2], sizes = [8, 2], strides = [1, 1]} : vector<8x4xf32> to vector<8x2xf32>
    %1471 = arith.mulf %1469, %1470 : vector<8x2xf32>
    %1472 = vector.extract_strided_slice %1471 {offsets = [0, 0], sizes = [8, 1], strides = [1, 1]} : vector<8x2xf32> to vector<8x1xf32>
    %1473 = vector.extract_strided_slice %1471 {offsets = [0, 1], sizes = [8, 1], strides = [1, 1]} : vector<8x2xf32> to vector<8x1xf32>
    %1474 = arith.mulf %1472, %1473 : vector<8x1xf32>
    %1475 = vector.extract_strided_slice %1231 {offsets = [3, 0], sizes = [1, 16], strides = [1, 1]} : vector<4x16xf32> to vector<1x16xf32>
    %1476 = vector.broadcast %1475 : vector<1x16xf32> to vector<8x16xf32>
    %1477 = arith.mulf %1236, %1476 : vector<8x16xf32>
    %cst_149 = arith.constant 1.000000e+00 : f32
    %1478 = vector.broadcast %cst_149 : f32 to vector<8x16xf32>
    %1479 = arith.subf %1478, %1477 : vector<8x16xf32>
    %1480 = vector.extract_strided_slice %1479 {offsets = [0, 0], sizes = [8, 8], strides = [1, 1]} : vector<8x16xf32> to vector<8x8xf32>
    %1481 = vector.extract_strided_slice %1479 {offsets = [0, 8], sizes = [8, 8], strides = [1, 1]} : vector<8x16xf32> to vector<8x8xf32>
    %1482 = arith.mulf %1480, %1481 : vector<8x8xf32>
    %1483 = vector.extract_strided_slice %1482 {offsets = [0, 0], sizes = [8, 4], strides = [1, 1]} : vector<8x8xf32> to vector<8x4xf32>
    %1484 = vector.extract_strided_slice %1482 {offsets = [0, 4], sizes = [8, 4], strides = [1, 1]} : vector<8x8xf32> to vector<8x4xf32>
    %1485 = arith.mulf %1483, %1484 : vector<8x4xf32>
    %1486 = vector.extract_strided_slice %1485 {offsets = [0, 0], sizes = [8, 2], strides = [1, 1]} : vector<8x4xf32> to vector<8x2xf32>
    %1487 = vector.extract_strided_slice %1485 {offsets = [0, 2], sizes = [8, 2], strides = [1, 1]} : vector<8x4xf32> to vector<8x2xf32>
    %1488 = arith.mulf %1486, %1487 : vector<8x2xf32>
    %1489 = vector.extract_strided_slice %1488 {offsets = [0, 0], sizes = [8, 1], strides = [1, 1]} : vector<8x2xf32> to vector<8x1xf32>
    %1490 = vector.extract_strided_slice %1488 {offsets = [0, 1], sizes = [8, 1], strides = [1, 1]} : vector<8x2xf32> to vector<8x1xf32>
    %1491 = arith.mulf %1489, %1490 : vector<8x1xf32>
    %1492 = vector.extract_strided_slice %1232 {offsets = [3, 0], sizes = [1, 16], strides = [1, 1]} : vector<4x16xf32> to vector<1x16xf32>
    %1493 = vector.broadcast %1492 : vector<1x16xf32> to vector<8x16xf32>
    %1494 = arith.mulf %1228, %1493 : vector<8x16xf32>
    %cst_150 = arith.constant 1.000000e+00 : f32
    %1495 = vector.broadcast %cst_150 : f32 to vector<8x16xf32>
    %1496 = arith.subf %1495, %1494 : vector<8x16xf32>
    %1497 = vector.extract_strided_slice %1496 {offsets = [0, 0], sizes = [8, 8], strides = [1, 1]} : vector<8x16xf32> to vector<8x8xf32>
    %1498 = vector.extract_strided_slice %1496 {offsets = [0, 8], sizes = [8, 8], strides = [1, 1]} : vector<8x16xf32> to vector<8x8xf32>
    %1499 = arith.mulf %1497, %1498 : vector<8x8xf32>
    %1500 = vector.extract_strided_slice %1499 {offsets = [0, 0], sizes = [8, 4], strides = [1, 1]} : vector<8x8xf32> to vector<8x4xf32>
    %1501 = vector.extract_strided_slice %1499 {offsets = [0, 4], sizes = [8, 4], strides = [1, 1]} : vector<8x8xf32> to vector<8x4xf32>
    %1502 = arith.mulf %1500, %1501 : vector<8x4xf32>
    %1503 = vector.extract_strided_slice %1502 {offsets = [0, 0], sizes = [8, 2], strides = [1, 1]} : vector<8x4xf32> to vector<8x2xf32>
    %1504 = vector.extract_strided_slice %1502 {offsets = [0, 2], sizes = [8, 2], strides = [1, 1]} : vector<8x4xf32> to vector<8x2xf32>
    %1505 = arith.mulf %1503, %1504 : vector<8x2xf32>
    %1506 = vector.extract_strided_slice %1505 {offsets = [0, 0], sizes = [8, 1], strides = [1, 1]} : vector<8x2xf32> to vector<8x1xf32>
    %1507 = vector.extract_strided_slice %1505 {offsets = [0, 1], sizes = [8, 1], strides = [1, 1]} : vector<8x2xf32> to vector<8x1xf32>
    %1508 = arith.mulf %1506, %1507 : vector<8x1xf32>
    %cst_151 = arith.constant 1.000000e+00 : f32
    %1509 = vector.broadcast %cst_151 : f32 to vector<8x1xf32>
    %1510 = arith.subf %1509, %1270 : vector<8x1xf32>
    %cst_152 = arith.constant 1.000000e+00 : f32
    %1511 = vector.broadcast %cst_152 : f32 to vector<8x1xf32>
    %1512 = arith.subf %1511, %1338 : vector<8x1xf32>
    %cst_153 = arith.constant 1.000000e+00 : f32
    %1513 = vector.broadcast %cst_153 : f32 to vector<8x1xf32>
    %1514 = arith.subf %1513, %1406 : vector<8x1xf32>
    %cst_154 = arith.constant 1.000000e+00 : f32
    %1515 = vector.broadcast %cst_154 : f32 to vector<8x1xf32>
    %1516 = arith.subf %1515, %1474 : vector<8x1xf32>
    %1517 = tpu.concatenate %1253, %1321, %1389, %1457, %1510, %1512, %1514, %1516 in 1 : vector<8x1xf32>, vector<8x1xf32>, vector<8x1xf32>, vector<8x1xf32>, vector<8x1xf32>, vector<8x1xf32>, vector<8x1xf32>, vector<8x1xf32> -> vector<8x8xf32>
    %cst_155 = arith.constant 1.000000e+00 : f32
    %1518 = vector.broadcast %cst_155 : f32 to vector<8x1xf32>
    %1519 = arith.subf %1518, %1304 : vector<8x1xf32>
    %cst_156 = arith.constant 1.000000e+00 : f32
    %1520 = vector.broadcast %cst_156 : f32 to vector<8x1xf32>
    %1521 = arith.subf %1520, %1372 : vector<8x1xf32>
    %cst_157 = arith.constant 1.000000e+00 : f32
    %1522 = vector.broadcast %cst_157 : f32 to vector<8x1xf32>
    %1523 = arith.subf %1522, %1440 : vector<8x1xf32>
    %cst_158 = arith.constant 1.000000e+00 : f32
    %1524 = vector.broadcast %cst_158 : f32 to vector<8x1xf32>
    %1525 = arith.subf %1524, %1508 : vector<8x1xf32>
    %1526 = tpu.concatenate %1287, %1355, %1423, %1491, %1519, %1521, %1523, %1525 in 1 : vector<8x1xf32>, vector<8x1xf32>, vector<8x1xf32>, vector<8x1xf32>, vector<8x1xf32>, vector<8x1xf32>, vector<8x1xf32>, vector<8x1xf32> -> vector<8x8xf32>
    %c208 = arith.constant 208 : index
    %c0_159 = arith.constant 0 : index
    %1527 = vector.load %arg1[%c208, %c0_159] : memref<296x128xf32, #tpu.memory_space<vmem>>, vector<3x8xf32>
    %c216 = arith.constant 216 : index
    %c0_160 = arith.constant 0 : index
    %1528 = vector.load %arg1[%c216, %c0_160] : memref<296x128xf32, #tpu.memory_space<vmem>>, vector<3x8xf32>
    %c224 = arith.constant 224 : index
    %c0_161 = arith.constant 0 : index
    %1529 = vector.load %arg1[%c224, %c0_161] : memref<296x128xf32, #tpu.memory_space<vmem>>, vector<3x8xf32>
    %c232 = arith.constant 232 : index
    %c0_162 = arith.constant 0 : index
    %1530 = vector.load %arg1[%c232, %c0_162] : memref<296x128xf32, #tpu.memory_space<vmem>>, vector<3x8xf32>
    %cst_163 = arith.constant 1.000000e+00 : f32
    %1531 = vector.broadcast %cst_163 : f32 to vector<8x8xf32>
    %1532 = arith.subf %1531, %1517 : vector<8x8xf32>
    %cst_164 = arith.constant 1.000000e+00 : f32
    %1533 = vector.broadcast %cst_164 : f32 to vector<8x8xf32>
    %1534 = arith.subf %1533, %1526 : vector<8x8xf32>
    %1535 = vector.extract_strided_slice %1527 {offsets = [0, 0], sizes = [1, 8], strides = [1, 1]} : vector<3x8xf32> to vector<1x8xf32>
    %1536 = vector.broadcast %1535 : vector<1x8xf32> to vector<8x8xf32>
    %1537 = arith.mulf %1532, %1536 : vector<8x8xf32>
    %cst_165 = arith.constant 1.000000e+00 : f32
    %1538 = vector.broadcast %cst_165 : f32 to vector<8x8xf32>
    %1539 = arith.subf %1538, %1537 : vector<8x8xf32>
    %1540 = vector.extract_strided_slice %1539 {offsets = [0, 0], sizes = [8, 4], strides = [1, 1]} : vector<8x8xf32> to vector<8x4xf32>
    %1541 = vector.extract_strided_slice %1539 {offsets = [0, 4], sizes = [8, 4], strides = [1, 1]} : vector<8x8xf32> to vector<8x4xf32>
    %1542 = arith.mulf %1540, %1541 : vector<8x4xf32>
    %1543 = vector.extract_strided_slice %1542 {offsets = [0, 0], sizes = [8, 2], strides = [1, 1]} : vector<8x4xf32> to vector<8x2xf32>
    %1544 = vector.extract_strided_slice %1542 {offsets = [0, 2], sizes = [8, 2], strides = [1, 1]} : vector<8x4xf32> to vector<8x2xf32>
    %1545 = arith.mulf %1543, %1544 : vector<8x2xf32>
    %1546 = vector.extract_strided_slice %1545 {offsets = [0, 0], sizes = [8, 1], strides = [1, 1]} : vector<8x2xf32> to vector<8x1xf32>
    %1547 = vector.extract_strided_slice %1545 {offsets = [0, 1], sizes = [8, 1], strides = [1, 1]} : vector<8x2xf32> to vector<8x1xf32>
    %1548 = arith.mulf %1546, %1547 : vector<8x1xf32>
    %1549 = vector.extract_strided_slice %1528 {offsets = [0, 0], sizes = [1, 8], strides = [1, 1]} : vector<3x8xf32> to vector<1x8xf32>
    %1550 = vector.broadcast %1549 : vector<1x8xf32> to vector<8x8xf32>
    %1551 = arith.mulf %1517, %1550 : vector<8x8xf32>
    %cst_166 = arith.constant 1.000000e+00 : f32
    %1552 = vector.broadcast %cst_166 : f32 to vector<8x8xf32>
    %1553 = arith.subf %1552, %1551 : vector<8x8xf32>
    %1554 = vector.extract_strided_slice %1553 {offsets = [0, 0], sizes = [8, 4], strides = [1, 1]} : vector<8x8xf32> to vector<8x4xf32>
    %1555 = vector.extract_strided_slice %1553 {offsets = [0, 4], sizes = [8, 4], strides = [1, 1]} : vector<8x8xf32> to vector<8x4xf32>
    %1556 = arith.mulf %1554, %1555 : vector<8x4xf32>
    %1557 = vector.extract_strided_slice %1556 {offsets = [0, 0], sizes = [8, 2], strides = [1, 1]} : vector<8x4xf32> to vector<8x2xf32>
    %1558 = vector.extract_strided_slice %1556 {offsets = [0, 2], sizes = [8, 2], strides = [1, 1]} : vector<8x4xf32> to vector<8x2xf32>
    %1559 = arith.mulf %1557, %1558 : vector<8x2xf32>
    %1560 = vector.extract_strided_slice %1559 {offsets = [0, 0], sizes = [8, 1], strides = [1, 1]} : vector<8x2xf32> to vector<8x1xf32>
    %1561 = vector.extract_strided_slice %1559 {offsets = [0, 1], sizes = [8, 1], strides = [1, 1]} : vector<8x2xf32> to vector<8x1xf32>
    %1562 = arith.mulf %1560, %1561 : vector<8x1xf32>
    %1563 = vector.extract_strided_slice %1529 {offsets = [0, 0], sizes = [1, 8], strides = [1, 1]} : vector<3x8xf32> to vector<1x8xf32>
    %1564 = vector.broadcast %1563 : vector<1x8xf32> to vector<8x8xf32>
    %1565 = arith.mulf %1534, %1564 : vector<8x8xf32>
    %cst_167 = arith.constant 1.000000e+00 : f32
    %1566 = vector.broadcast %cst_167 : f32 to vector<8x8xf32>
    %1567 = arith.subf %1566, %1565 : vector<8x8xf32>
    %1568 = vector.extract_strided_slice %1567 {offsets = [0, 0], sizes = [8, 4], strides = [1, 1]} : vector<8x8xf32> to vector<8x4xf32>
    %1569 = vector.extract_strided_slice %1567 {offsets = [0, 4], sizes = [8, 4], strides = [1, 1]} : vector<8x8xf32> to vector<8x4xf32>
    %1570 = arith.mulf %1568, %1569 : vector<8x4xf32>
    %1571 = vector.extract_strided_slice %1570 {offsets = [0, 0], sizes = [8, 2], strides = [1, 1]} : vector<8x4xf32> to vector<8x2xf32>
    %1572 = vector.extract_strided_slice %1570 {offsets = [0, 2], sizes = [8, 2], strides = [1, 1]} : vector<8x4xf32> to vector<8x2xf32>
    %1573 = arith.mulf %1571, %1572 : vector<8x2xf32>
    %1574 = vector.extract_strided_slice %1573 {offsets = [0, 0], sizes = [8, 1], strides = [1, 1]} : vector<8x2xf32> to vector<8x1xf32>
    %1575 = vector.extract_strided_slice %1573 {offsets = [0, 1], sizes = [8, 1], strides = [1, 1]} : vector<8x2xf32> to vector<8x1xf32>
    %1576 = arith.mulf %1574, %1575 : vector<8x1xf32>
    %1577 = vector.extract_strided_slice %1530 {offsets = [0, 0], sizes = [1, 8], strides = [1, 1]} : vector<3x8xf32> to vector<1x8xf32>
    %1578 = vector.broadcast %1577 : vector<1x8xf32> to vector<8x8xf32>
    %1579 = arith.mulf %1526, %1578 : vector<8x8xf32>
    %cst_168 = arith.constant 1.000000e+00 : f32
    %1580 = vector.broadcast %cst_168 : f32 to vector<8x8xf32>
    %1581 = arith.subf %1580, %1579 : vector<8x8xf32>
    %1582 = vector.extract_strided_slice %1581 {offsets = [0, 0], sizes = [8, 4], strides = [1, 1]} : vector<8x8xf32> to vector<8x4xf32>
    %1583 = vector.extract_strided_slice %1581 {offsets = [0, 4], sizes = [8, 4], strides = [1, 1]} : vector<8x8xf32> to vector<8x4xf32>
    %1584 = arith.mulf %1582, %1583 : vector<8x4xf32>
    %1585 = vector.extract_strided_slice %1584 {offsets = [0, 0], sizes = [8, 2], strides = [1, 1]} : vector<8x4xf32> to vector<8x2xf32>
    %1586 = vector.extract_strided_slice %1584 {offsets = [0, 2], sizes = [8, 2], strides = [1, 1]} : vector<8x4xf32> to vector<8x2xf32>
    %1587 = arith.mulf %1585, %1586 : vector<8x2xf32>
    %1588 = vector.extract_strided_slice %1587 {offsets = [0, 0], sizes = [8, 1], strides = [1, 1]} : vector<8x2xf32> to vector<8x1xf32>
    %1589 = vector.extract_strided_slice %1587 {offsets = [0, 1], sizes = [8, 1], strides = [1, 1]} : vector<8x2xf32> to vector<8x1xf32>
    %1590 = arith.mulf %1588, %1589 : vector<8x1xf32>
    %1591 = vector.extract_strided_slice %1527 {offsets = [1, 0], sizes = [1, 8], strides = [1, 1]} : vector<3x8xf32> to vector<1x8xf32>
    %1592 = vector.broadcast %1591 : vector<1x8xf32> to vector<8x8xf32>
    %1593 = arith.mulf %1532, %1592 : vector<8x8xf32>
    %cst_169 = arith.constant 1.000000e+00 : f32
    %1594 = vector.broadcast %cst_169 : f32 to vector<8x8xf32>
    %1595 = arith.subf %1594, %1593 : vector<8x8xf32>
    %1596 = vector.extract_strided_slice %1595 {offsets = [0, 0], sizes = [8, 4], strides = [1, 1]} : vector<8x8xf32> to vector<8x4xf32>
    %1597 = vector.extract_strided_slice %1595 {offsets = [0, 4], sizes = [8, 4], strides = [1, 1]} : vector<8x8xf32> to vector<8x4xf32>
    %1598 = arith.mulf %1596, %1597 : vector<8x4xf32>
    %1599 = vector.extract_strided_slice %1598 {offsets = [0, 0], sizes = [8, 2], strides = [1, 1]} : vector<8x4xf32> to vector<8x2xf32>
    %1600 = vector.extract_strided_slice %1598 {offsets = [0, 2], sizes = [8, 2], strides = [1, 1]} : vector<8x4xf32> to vector<8x2xf32>
    %1601 = arith.mulf %1599, %1600 : vector<8x2xf32>
    %1602 = vector.extract_strided_slice %1601 {offsets = [0, 0], sizes = [8, 1], strides = [1, 1]} : vector<8x2xf32> to vector<8x1xf32>
    %1603 = vector.extract_strided_slice %1601 {offsets = [0, 1], sizes = [8, 1], strides = [1, 1]} : vector<8x2xf32> to vector<8x1xf32>
    %1604 = arith.mulf %1602, %1603 : vector<8x1xf32>
    %1605 = vector.extract_strided_slice %1528 {offsets = [1, 0], sizes = [1, 8], strides = [1, 1]} : vector<3x8xf32> to vector<1x8xf32>
    %1606 = vector.broadcast %1605 : vector<1x8xf32> to vector<8x8xf32>
    %1607 = arith.mulf %1517, %1606 : vector<8x8xf32>
    %cst_170 = arith.constant 1.000000e+00 : f32
    %1608 = vector.broadcast %cst_170 : f32 to vector<8x8xf32>
    %1609 = arith.subf %1608, %1607 : vector<8x8xf32>
    %1610 = vector.extract_strided_slice %1609 {offsets = [0, 0], sizes = [8, 4], strides = [1, 1]} : vector<8x8xf32> to vector<8x4xf32>
    %1611 = vector.extract_strided_slice %1609 {offsets = [0, 4], sizes = [8, 4], strides = [1, 1]} : vector<8x8xf32> to vector<8x4xf32>
    %1612 = arith.mulf %1610, %1611 : vector<8x4xf32>
    %1613 = vector.extract_strided_slice %1612 {offsets = [0, 0], sizes = [8, 2], strides = [1, 1]} : vector<8x4xf32> to vector<8x2xf32>
    %1614 = vector.extract_strided_slice %1612 {offsets = [0, 2], sizes = [8, 2], strides = [1, 1]} : vector<8x4xf32> to vector<8x2xf32>
    %1615 = arith.mulf %1613, %1614 : vector<8x2xf32>
    %1616 = vector.extract_strided_slice %1615 {offsets = [0, 0], sizes = [8, 1], strides = [1, 1]} : vector<8x2xf32> to vector<8x1xf32>
    %1617 = vector.extract_strided_slice %1615 {offsets = [0, 1], sizes = [8, 1], strides = [1, 1]} : vector<8x2xf32> to vector<8x1xf32>
    %1618 = arith.mulf %1616, %1617 : vector<8x1xf32>
    %1619 = vector.extract_strided_slice %1529 {offsets = [1, 0], sizes = [1, 8], strides = [1, 1]} : vector<3x8xf32> to vector<1x8xf32>
    %1620 = vector.broadcast %1619 : vector<1x8xf32> to vector<8x8xf32>
    %1621 = arith.mulf %1534, %1620 : vector<8x8xf32>
    %cst_171 = arith.constant 1.000000e+00 : f32
    %1622 = vector.broadcast %cst_171 : f32 to vector<8x8xf32>
    %1623 = arith.subf %1622, %1621 : vector<8x8xf32>
    %1624 = vector.extract_strided_slice %1623 {offsets = [0, 0], sizes = [8, 4], strides = [1, 1]} : vector<8x8xf32> to vector<8x4xf32>
    %1625 = vector.extract_strided_slice %1623 {offsets = [0, 4], sizes = [8, 4], strides = [1, 1]} : vector<8x8xf32> to vector<8x4xf32>
    %1626 = arith.mulf %1624, %1625 : vector<8x4xf32>
    %1627 = vector.extract_strided_slice %1626 {offsets = [0, 0], sizes = [8, 2], strides = [1, 1]} : vector<8x4xf32> to vector<8x2xf32>
    %1628 = vector.extract_strided_slice %1626 {offsets = [0, 2], sizes = [8, 2], strides = [1, 1]} : vector<8x4xf32> to vector<8x2xf32>
    %1629 = arith.mulf %1627, %1628 : vector<8x2xf32>
    %1630 = vector.extract_strided_slice %1629 {offsets = [0, 0], sizes = [8, 1], strides = [1, 1]} : vector<8x2xf32> to vector<8x1xf32>
    %1631 = vector.extract_strided_slice %1629 {offsets = [0, 1], sizes = [8, 1], strides = [1, 1]} : vector<8x2xf32> to vector<8x1xf32>
    %1632 = arith.mulf %1630, %1631 : vector<8x1xf32>
    %1633 = vector.extract_strided_slice %1530 {offsets = [1, 0], sizes = [1, 8], strides = [1, 1]} : vector<3x8xf32> to vector<1x8xf32>
    %1634 = vector.broadcast %1633 : vector<1x8xf32> to vector<8x8xf32>
    %1635 = arith.mulf %1526, %1634 : vector<8x8xf32>
    %cst_172 = arith.constant 1.000000e+00 : f32
    %1636 = vector.broadcast %cst_172 : f32 to vector<8x8xf32>
    %1637 = arith.subf %1636, %1635 : vector<8x8xf32>
    %1638 = vector.extract_strided_slice %1637 {offsets = [0, 0], sizes = [8, 4], strides = [1, 1]} : vector<8x8xf32> to vector<8x4xf32>
    %1639 = vector.extract_strided_slice %1637 {offsets = [0, 4], sizes = [8, 4], strides = [1, 1]} : vector<8x8xf32> to vector<8x4xf32>
    %1640 = arith.mulf %1638, %1639 : vector<8x4xf32>
    %1641 = vector.extract_strided_slice %1640 {offsets = [0, 0], sizes = [8, 2], strides = [1, 1]} : vector<8x4xf32> to vector<8x2xf32>
    %1642 = vector.extract_strided_slice %1640 {offsets = [0, 2], sizes = [8, 2], strides = [1, 1]} : vector<8x4xf32> to vector<8x2xf32>
    %1643 = arith.mulf %1641, %1642 : vector<8x2xf32>
    %1644 = vector.extract_strided_slice %1643 {offsets = [0, 0], sizes = [8, 1], strides = [1, 1]} : vector<8x2xf32> to vector<8x1xf32>
    %1645 = vector.extract_strided_slice %1643 {offsets = [0, 1], sizes = [8, 1], strides = [1, 1]} : vector<8x2xf32> to vector<8x1xf32>
    %1646 = arith.mulf %1644, %1645 : vector<8x1xf32>
    %1647 = vector.extract_strided_slice %1527 {offsets = [2, 0], sizes = [1, 8], strides = [1, 1]} : vector<3x8xf32> to vector<1x8xf32>
    %1648 = vector.broadcast %1647 : vector<1x8xf32> to vector<8x8xf32>
    %1649 = arith.mulf %1532, %1648 : vector<8x8xf32>
    %cst_173 = arith.constant 1.000000e+00 : f32
    %1650 = vector.broadcast %cst_173 : f32 to vector<8x8xf32>
    %1651 = arith.subf %1650, %1649 : vector<8x8xf32>
    %1652 = vector.extract_strided_slice %1651 {offsets = [0, 0], sizes = [8, 4], strides = [1, 1]} : vector<8x8xf32> to vector<8x4xf32>
    %1653 = vector.extract_strided_slice %1651 {offsets = [0, 4], sizes = [8, 4], strides = [1, 1]} : vector<8x8xf32> to vector<8x4xf32>
    %1654 = arith.mulf %1652, %1653 : vector<8x4xf32>
    %1655 = vector.extract_strided_slice %1654 {offsets = [0, 0], sizes = [8, 2], strides = [1, 1]} : vector<8x4xf32> to vector<8x2xf32>
    %1656 = vector.extract_strided_slice %1654 {offsets = [0, 2], sizes = [8, 2], strides = [1, 1]} : vector<8x4xf32> to vector<8x2xf32>
    %1657 = arith.mulf %1655, %1656 : vector<8x2xf32>
    %1658 = vector.extract_strided_slice %1657 {offsets = [0, 0], sizes = [8, 1], strides = [1, 1]} : vector<8x2xf32> to vector<8x1xf32>
    %1659 = vector.extract_strided_slice %1657 {offsets = [0, 1], sizes = [8, 1], strides = [1, 1]} : vector<8x2xf32> to vector<8x1xf32>
    %1660 = arith.mulf %1658, %1659 : vector<8x1xf32>
    %1661 = vector.extract_strided_slice %1528 {offsets = [2, 0], sizes = [1, 8], strides = [1, 1]} : vector<3x8xf32> to vector<1x8xf32>
    %1662 = vector.broadcast %1661 : vector<1x8xf32> to vector<8x8xf32>
    %1663 = arith.mulf %1517, %1662 : vector<8x8xf32>
    %cst_174 = arith.constant 1.000000e+00 : f32
    %1664 = vector.broadcast %cst_174 : f32 to vector<8x8xf32>
    %1665 = arith.subf %1664, %1663 : vector<8x8xf32>
    %1666 = vector.extract_strided_slice %1665 {offsets = [0, 0], sizes = [8, 4], strides = [1, 1]} : vector<8x8xf32> to vector<8x4xf32>
    %1667 = vector.extract_strided_slice %1665 {offsets = [0, 4], sizes = [8, 4], strides = [1, 1]} : vector<8x8xf32> to vector<8x4xf32>
    %1668 = arith.mulf %1666, %1667 : vector<8x4xf32>
    %1669 = vector.extract_strided_slice %1668 {offsets = [0, 0], sizes = [8, 2], strides = [1, 1]} : vector<8x4xf32> to vector<8x2xf32>
    %1670 = vector.extract_strided_slice %1668 {offsets = [0, 2], sizes = [8, 2], strides = [1, 1]} : vector<8x4xf32> to vector<8x2xf32>
    %1671 = arith.mulf %1669, %1670 : vector<8x2xf32>
    %1672 = vector.extract_strided_slice %1671 {offsets = [0, 0], sizes = [8, 1], strides = [1, 1]} : vector<8x2xf32> to vector<8x1xf32>
    %1673 = vector.extract_strided_slice %1671 {offsets = [0, 1], sizes = [8, 1], strides = [1, 1]} : vector<8x2xf32> to vector<8x1xf32>
    %1674 = arith.mulf %1672, %1673 : vector<8x1xf32>
    %1675 = vector.extract_strided_slice %1529 {offsets = [2, 0], sizes = [1, 8], strides = [1, 1]} : vector<3x8xf32> to vector<1x8xf32>
    %1676 = vector.broadcast %1675 : vector<1x8xf32> to vector<8x8xf32>
    %1677 = arith.mulf %1534, %1676 : vector<8x8xf32>
    %cst_175 = arith.constant 1.000000e+00 : f32
    %1678 = vector.broadcast %cst_175 : f32 to vector<8x8xf32>
    %1679 = arith.subf %1678, %1677 : vector<8x8xf32>
    %1680 = vector.extract_strided_slice %1679 {offsets = [0, 0], sizes = [8, 4], strides = [1, 1]} : vector<8x8xf32> to vector<8x4xf32>
    %1681 = vector.extract_strided_slice %1679 {offsets = [0, 4], sizes = [8, 4], strides = [1, 1]} : vector<8x8xf32> to vector<8x4xf32>
    %1682 = arith.mulf %1680, %1681 : vector<8x4xf32>
    %1683 = vector.extract_strided_slice %1682 {offsets = [0, 0], sizes = [8, 2], strides = [1, 1]} : vector<8x4xf32> to vector<8x2xf32>
    %1684 = vector.extract_strided_slice %1682 {offsets = [0, 2], sizes = [8, 2], strides = [1, 1]} : vector<8x4xf32> to vector<8x2xf32>
    %1685 = arith.mulf %1683, %1684 : vector<8x2xf32>
    %1686 = vector.extract_strided_slice %1685 {offsets = [0, 0], sizes = [8, 1], strides = [1, 1]} : vector<8x2xf32> to vector<8x1xf32>
    %1687 = vector.extract_strided_slice %1685 {offsets = [0, 1], sizes = [8, 1], strides = [1, 1]} : vector<8x2xf32> to vector<8x1xf32>
    %1688 = arith.mulf %1686, %1687 : vector<8x1xf32>
    %1689 = vector.extract_strided_slice %1530 {offsets = [2, 0], sizes = [1, 8], strides = [1, 1]} : vector<3x8xf32> to vector<1x8xf32>
    %1690 = vector.broadcast %1689 : vector<1x8xf32> to vector<8x8xf32>
    %1691 = arith.mulf %1526, %1690 : vector<8x8xf32>
    %cst_176 = arith.constant 1.000000e+00 : f32
    %1692 = vector.broadcast %cst_176 : f32 to vector<8x8xf32>
    %1693 = arith.subf %1692, %1691 : vector<8x8xf32>
    %1694 = vector.extract_strided_slice %1693 {offsets = [0, 0], sizes = [8, 4], strides = [1, 1]} : vector<8x8xf32> to vector<8x4xf32>
    %1695 = vector.extract_strided_slice %1693 {offsets = [0, 4], sizes = [8, 4], strides = [1, 1]} : vector<8x8xf32> to vector<8x4xf32>
    %1696 = arith.mulf %1694, %1695 : vector<8x4xf32>
    %1697 = vector.extract_strided_slice %1696 {offsets = [0, 0], sizes = [8, 2], strides = [1, 1]} : vector<8x4xf32> to vector<8x2xf32>
    %1698 = vector.extract_strided_slice %1696 {offsets = [0, 2], sizes = [8, 2], strides = [1, 1]} : vector<8x4xf32> to vector<8x2xf32>
    %1699 = arith.mulf %1697, %1698 : vector<8x2xf32>
    %1700 = vector.extract_strided_slice %1699 {offsets = [0, 0], sizes = [8, 1], strides = [1, 1]} : vector<8x2xf32> to vector<8x1xf32>
    %1701 = vector.extract_strided_slice %1699 {offsets = [0, 1], sizes = [8, 1], strides = [1, 1]} : vector<8x2xf32> to vector<8x1xf32>
    %1702 = arith.mulf %1700, %1701 : vector<8x1xf32>
    %c240 = arith.constant 240 : index
    %c0_177 = arith.constant 0 : index
    %1703 = vector.load %arg1[%c240, %c0_177] : memref<296x128xf32, #tpu.memory_space<vmem>>, vector<3x16xf32>
    %c248 = arith.constant 248 : index
    %c0_178 = arith.constant 0 : index
    %1704 = vector.load %arg1[%c248, %c0_178] : memref<296x128xf32, #tpu.memory_space<vmem>>, vector<3x16xf32>
    %c256 = arith.constant 256 : index
    %c0_179 = arith.constant 0 : index
    %1705 = vector.load %arg1[%c256, %c0_179] : memref<296x128xf32, #tpu.memory_space<vmem>>, vector<3x16xf32>
    %c264 = arith.constant 264 : index
    %c0_180 = arith.constant 0 : index
    %1706 = vector.load %arg1[%c264, %c0_180] : memref<296x128xf32, #tpu.memory_space<vmem>>, vector<3x16xf32>
    %cst_181 = arith.constant 1.000000e+00 : f32
    %1707 = vector.broadcast %cst_181 : f32 to vector<8x16xf32>
    %1708 = arith.subf %1707, %1225 : vector<8x16xf32>
    %cst_182 = arith.constant 1.000000e+00 : f32
    %1709 = vector.broadcast %cst_182 : f32 to vector<8x16xf32>
    %1710 = arith.subf %1709, %1228 : vector<8x16xf32>
    %1711 = vector.extract_strided_slice %1703 {offsets = [0, 0], sizes = [1, 16], strides = [1, 1]} : vector<3x16xf32> to vector<1x16xf32>
    %1712 = vector.broadcast %1711 : vector<1x16xf32> to vector<8x16xf32>
    %1713 = arith.mulf %1708, %1712 : vector<8x16xf32>
    %cst_183 = arith.constant 1.000000e+00 : f32
    %1714 = vector.broadcast %cst_183 : f32 to vector<8x16xf32>
    %1715 = arith.subf %1714, %1713 : vector<8x16xf32>
    %1716 = vector.extract_strided_slice %1715 {offsets = [0, 0], sizes = [8, 8], strides = [1, 1]} : vector<8x16xf32> to vector<8x8xf32>
    %1717 = vector.extract_strided_slice %1715 {offsets = [0, 8], sizes = [8, 8], strides = [1, 1]} : vector<8x16xf32> to vector<8x8xf32>
    %1718 = arith.mulf %1716, %1717 : vector<8x8xf32>
    %1719 = vector.extract_strided_slice %1718 {offsets = [0, 0], sizes = [8, 4], strides = [1, 1]} : vector<8x8xf32> to vector<8x4xf32>
    %1720 = vector.extract_strided_slice %1718 {offsets = [0, 4], sizes = [8, 4], strides = [1, 1]} : vector<8x8xf32> to vector<8x4xf32>
    %1721 = arith.mulf %1719, %1720 : vector<8x4xf32>
    %1722 = vector.extract_strided_slice %1721 {offsets = [0, 0], sizes = [8, 2], strides = [1, 1]} : vector<8x4xf32> to vector<8x2xf32>
    %1723 = vector.extract_strided_slice %1721 {offsets = [0, 2], sizes = [8, 2], strides = [1, 1]} : vector<8x4xf32> to vector<8x2xf32>
    %1724 = arith.mulf %1722, %1723 : vector<8x2xf32>
    %1725 = vector.extract_strided_slice %1724 {offsets = [0, 0], sizes = [8, 1], strides = [1, 1]} : vector<8x2xf32> to vector<8x1xf32>
    %1726 = vector.extract_strided_slice %1724 {offsets = [0, 1], sizes = [8, 1], strides = [1, 1]} : vector<8x2xf32> to vector<8x1xf32>
    %1727 = arith.mulf %1725, %1726 : vector<8x1xf32>
    %1728 = vector.extract_strided_slice %1704 {offsets = [0, 0], sizes = [1, 16], strides = [1, 1]} : vector<3x16xf32> to vector<1x16xf32>
    %1729 = vector.broadcast %1728 : vector<1x16xf32> to vector<8x16xf32>
    %1730 = arith.mulf %1225, %1729 : vector<8x16xf32>
    %cst_184 = arith.constant 1.000000e+00 : f32
    %1731 = vector.broadcast %cst_184 : f32 to vector<8x16xf32>
    %1732 = arith.subf %1731, %1730 : vector<8x16xf32>
    %1733 = vector.extract_strided_slice %1732 {offsets = [0, 0], sizes = [8, 8], strides = [1, 1]} : vector<8x16xf32> to vector<8x8xf32>
    %1734 = vector.extract_strided_slice %1732 {offsets = [0, 8], sizes = [8, 8], strides = [1, 1]} : vector<8x16xf32> to vector<8x8xf32>
    %1735 = arith.mulf %1733, %1734 : vector<8x8xf32>
    %1736 = vector.extract_strided_slice %1735 {offsets = [0, 0], sizes = [8, 4], strides = [1, 1]} : vector<8x8xf32> to vector<8x4xf32>
    %1737 = vector.extract_strided_slice %1735 {offsets = [0, 4], sizes = [8, 4], strides = [1, 1]} : vector<8x8xf32> to vector<8x4xf32>
    %1738 = arith.mulf %1736, %1737 : vector<8x4xf32>
    %1739 = vector.extract_strided_slice %1738 {offsets = [0, 0], sizes = [8, 2], strides = [1, 1]} : vector<8x4xf32> to vector<8x2xf32>
    %1740 = vector.extract_strided_slice %1738 {offsets = [0, 2], sizes = [8, 2], strides = [1, 1]} : vector<8x4xf32> to vector<8x2xf32>
    %1741 = arith.mulf %1739, %1740 : vector<8x2xf32>
    %1742 = vector.extract_strided_slice %1741 {offsets = [0, 0], sizes = [8, 1], strides = [1, 1]} : vector<8x2xf32> to vector<8x1xf32>
    %1743 = vector.extract_strided_slice %1741 {offsets = [0, 1], sizes = [8, 1], strides = [1, 1]} : vector<8x2xf32> to vector<8x1xf32>
    %1744 = arith.mulf %1742, %1743 : vector<8x1xf32>
    %1745 = vector.extract_strided_slice %1705 {offsets = [0, 0], sizes = [1, 16], strides = [1, 1]} : vector<3x16xf32> to vector<1x16xf32>
    %1746 = vector.broadcast %1745 : vector<1x16xf32> to vector<8x16xf32>
    %1747 = arith.mulf %1710, %1746 : vector<8x16xf32>
    %cst_185 = arith.constant 1.000000e+00 : f32
    %1748 = vector.broadcast %cst_185 : f32 to vector<8x16xf32>
    %1749 = arith.subf %1748, %1747 : vector<8x16xf32>
    %1750 = vector.extract_strided_slice %1749 {offsets = [0, 0], sizes = [8, 8], strides = [1, 1]} : vector<8x16xf32> to vector<8x8xf32>
    %1751 = vector.extract_strided_slice %1749 {offsets = [0, 8], sizes = [8, 8], strides = [1, 1]} : vector<8x16xf32> to vector<8x8xf32>
    %1752 = arith.mulf %1750, %1751 : vector<8x8xf32>
    %1753 = vector.extract_strided_slice %1752 {offsets = [0, 0], sizes = [8, 4], strides = [1, 1]} : vector<8x8xf32> to vector<8x4xf32>
    %1754 = vector.extract_strided_slice %1752 {offsets = [0, 4], sizes = [8, 4], strides = [1, 1]} : vector<8x8xf32> to vector<8x4xf32>
    %1755 = arith.mulf %1753, %1754 : vector<8x4xf32>
    %1756 = vector.extract_strided_slice %1755 {offsets = [0, 0], sizes = [8, 2], strides = [1, 1]} : vector<8x4xf32> to vector<8x2xf32>
    %1757 = vector.extract_strided_slice %1755 {offsets = [0, 2], sizes = [8, 2], strides = [1, 1]} : vector<8x4xf32> to vector<8x2xf32>
    %1758 = arith.mulf %1756, %1757 : vector<8x2xf32>
    %1759 = vector.extract_strided_slice %1758 {offsets = [0, 0], sizes = [8, 1], strides = [1, 1]} : vector<8x2xf32> to vector<8x1xf32>
    %1760 = vector.extract_strided_slice %1758 {offsets = [0, 1], sizes = [8, 1], strides = [1, 1]} : vector<8x2xf32> to vector<8x1xf32>
    %1761 = arith.mulf %1759, %1760 : vector<8x1xf32>
    %1762 = vector.extract_strided_slice %1706 {offsets = [0, 0], sizes = [1, 16], strides = [1, 1]} : vector<3x16xf32> to vector<1x16xf32>
    %1763 = vector.broadcast %1762 : vector<1x16xf32> to vector<8x16xf32>
    %1764 = arith.mulf %1228, %1763 : vector<8x16xf32>
    %cst_186 = arith.constant 1.000000e+00 : f32
    %1765 = vector.broadcast %cst_186 : f32 to vector<8x16xf32>
    %1766 = arith.subf %1765, %1764 : vector<8x16xf32>
    %1767 = vector.extract_strided_slice %1766 {offsets = [0, 0], sizes = [8, 8], strides = [1, 1]} : vector<8x16xf32> to vector<8x8xf32>
    %1768 = vector.extract_strided_slice %1766 {offsets = [0, 8], sizes = [8, 8], strides = [1, 1]} : vector<8x16xf32> to vector<8x8xf32>
    %1769 = arith.mulf %1767, %1768 : vector<8x8xf32>
    %1770 = vector.extract_strided_slice %1769 {offsets = [0, 0], sizes = [8, 4], strides = [1, 1]} : vector<8x8xf32> to vector<8x4xf32>
    %1771 = vector.extract_strided_slice %1769 {offsets = [0, 4], sizes = [8, 4], strides = [1, 1]} : vector<8x8xf32> to vector<8x4xf32>
    %1772 = arith.mulf %1770, %1771 : vector<8x4xf32>
    %1773 = vector.extract_strided_slice %1772 {offsets = [0, 0], sizes = [8, 2], strides = [1, 1]} : vector<8x4xf32> to vector<8x2xf32>
    %1774 = vector.extract_strided_slice %1772 {offsets = [0, 2], sizes = [8, 2], strides = [1, 1]} : vector<8x4xf32> to vector<8x2xf32>
    %1775 = arith.mulf %1773, %1774 : vector<8x2xf32>
    %1776 = vector.extract_strided_slice %1775 {offsets = [0, 0], sizes = [8, 1], strides = [1, 1]} : vector<8x2xf32> to vector<8x1xf32>
    %1777 = vector.extract_strided_slice %1775 {offsets = [0, 1], sizes = [8, 1], strides = [1, 1]} : vector<8x2xf32> to vector<8x1xf32>
    %1778 = arith.mulf %1776, %1777 : vector<8x1xf32>
    %1779 = arith.mulf %1548, %1727 : vector<8x1xf32>
    %1780 = arith.mulf %1562, %1744 : vector<8x1xf32>
    %1781 = arith.mulf %1576, %1761 : vector<8x1xf32>
    %1782 = arith.mulf %1590, %1778 : vector<8x1xf32>
    %1783 = vector.extract_strided_slice %1703 {offsets = [1, 0], sizes = [1, 16], strides = [1, 1]} : vector<3x16xf32> to vector<1x16xf32>
    %1784 = vector.broadcast %1783 : vector<1x16xf32> to vector<8x16xf32>
    %1785 = arith.mulf %1708, %1784 : vector<8x16xf32>
    %cst_187 = arith.constant 1.000000e+00 : f32
    %1786 = vector.broadcast %cst_187 : f32 to vector<8x16xf32>
    %1787 = arith.subf %1786, %1785 : vector<8x16xf32>
    %1788 = vector.extract_strided_slice %1787 {offsets = [0, 0], sizes = [8, 8], strides = [1, 1]} : vector<8x16xf32> to vector<8x8xf32>
    %1789 = vector.extract_strided_slice %1787 {offsets = [0, 8], sizes = [8, 8], strides = [1, 1]} : vector<8x16xf32> to vector<8x8xf32>
    %1790 = arith.mulf %1788, %1789 : vector<8x8xf32>
    %1791 = vector.extract_strided_slice %1790 {offsets = [0, 0], sizes = [8, 4], strides = [1, 1]} : vector<8x8xf32> to vector<8x4xf32>
    %1792 = vector.extract_strided_slice %1790 {offsets = [0, 4], sizes = [8, 4], strides = [1, 1]} : vector<8x8xf32> to vector<8x4xf32>
    %1793 = arith.mulf %1791, %1792 : vector<8x4xf32>
    %1794 = vector.extract_strided_slice %1793 {offsets = [0, 0], sizes = [8, 2], strides = [1, 1]} : vector<8x4xf32> to vector<8x2xf32>
    %1795 = vector.extract_strided_slice %1793 {offsets = [0, 2], sizes = [8, 2], strides = [1, 1]} : vector<8x4xf32> to vector<8x2xf32>
    %1796 = arith.mulf %1794, %1795 : vector<8x2xf32>
    %1797 = vector.extract_strided_slice %1796 {offsets = [0, 0], sizes = [8, 1], strides = [1, 1]} : vector<8x2xf32> to vector<8x1xf32>
    %1798 = vector.extract_strided_slice %1796 {offsets = [0, 1], sizes = [8, 1], strides = [1, 1]} : vector<8x2xf32> to vector<8x1xf32>
    %1799 = arith.mulf %1797, %1798 : vector<8x1xf32>
    %1800 = vector.extract_strided_slice %1704 {offsets = [1, 0], sizes = [1, 16], strides = [1, 1]} : vector<3x16xf32> to vector<1x16xf32>
    %1801 = vector.broadcast %1800 : vector<1x16xf32> to vector<8x16xf32>
    %1802 = arith.mulf %1225, %1801 : vector<8x16xf32>
    %cst_188 = arith.constant 1.000000e+00 : f32
    %1803 = vector.broadcast %cst_188 : f32 to vector<8x16xf32>
    %1804 = arith.subf %1803, %1802 : vector<8x16xf32>
    %1805 = vector.extract_strided_slice %1804 {offsets = [0, 0], sizes = [8, 8], strides = [1, 1]} : vector<8x16xf32> to vector<8x8xf32>
    %1806 = vector.extract_strided_slice %1804 {offsets = [0, 8], sizes = [8, 8], strides = [1, 1]} : vector<8x16xf32> to vector<8x8xf32>
    %1807 = arith.mulf %1805, %1806 : vector<8x8xf32>
    %1808 = vector.extract_strided_slice %1807 {offsets = [0, 0], sizes = [8, 4], strides = [1, 1]} : vector<8x8xf32> to vector<8x4xf32>
    %1809 = vector.extract_strided_slice %1807 {offsets = [0, 4], sizes = [8, 4], strides = [1, 1]} : vector<8x8xf32> to vector<8x4xf32>
    %1810 = arith.mulf %1808, %1809 : vector<8x4xf32>
    %1811 = vector.extract_strided_slice %1810 {offsets = [0, 0], sizes = [8, 2], strides = [1, 1]} : vector<8x4xf32> to vector<8x2xf32>
    %1812 = vector.extract_strided_slice %1810 {offsets = [0, 2], sizes = [8, 2], strides = [1, 1]} : vector<8x4xf32> to vector<8x2xf32>
    %1813 = arith.mulf %1811, %1812 : vector<8x2xf32>
    %1814 = vector.extract_strided_slice %1813 {offsets = [0, 0], sizes = [8, 1], strides = [1, 1]} : vector<8x2xf32> to vector<8x1xf32>
    %1815 = vector.extract_strided_slice %1813 {offsets = [0, 1], sizes = [8, 1], strides = [1, 1]} : vector<8x2xf32> to vector<8x1xf32>
    %1816 = arith.mulf %1814, %1815 : vector<8x1xf32>
    %1817 = vector.extract_strided_slice %1705 {offsets = [1, 0], sizes = [1, 16], strides = [1, 1]} : vector<3x16xf32> to vector<1x16xf32>
    %1818 = vector.broadcast %1817 : vector<1x16xf32> to vector<8x16xf32>
    %1819 = arith.mulf %1710, %1818 : vector<8x16xf32>
    %cst_189 = arith.constant 1.000000e+00 : f32
    %1820 = vector.broadcast %cst_189 : f32 to vector<8x16xf32>
    %1821 = arith.subf %1820, %1819 : vector<8x16xf32>
    %1822 = vector.extract_strided_slice %1821 {offsets = [0, 0], sizes = [8, 8], strides = [1, 1]} : vector<8x16xf32> to vector<8x8xf32>
    %1823 = vector.extract_strided_slice %1821 {offsets = [0, 8], sizes = [8, 8], strides = [1, 1]} : vector<8x16xf32> to vector<8x8xf32>
    %1824 = arith.mulf %1822, %1823 : vector<8x8xf32>
    %1825 = vector.extract_strided_slice %1824 {offsets = [0, 0], sizes = [8, 4], strides = [1, 1]} : vector<8x8xf32> to vector<8x4xf32>
    %1826 = vector.extract_strided_slice %1824 {offsets = [0, 4], sizes = [8, 4], strides = [1, 1]} : vector<8x8xf32> to vector<8x4xf32>
    %1827 = arith.mulf %1825, %1826 : vector<8x4xf32>
    %1828 = vector.extract_strided_slice %1827 {offsets = [0, 0], sizes = [8, 2], strides = [1, 1]} : vector<8x4xf32> to vector<8x2xf32>
    %1829 = vector.extract_strided_slice %1827 {offsets = [0, 2], sizes = [8, 2], strides = [1, 1]} : vector<8x4xf32> to vector<8x2xf32>
    %1830 = arith.mulf %1828, %1829 : vector<8x2xf32>
    %1831 = vector.extract_strided_slice %1830 {offsets = [0, 0], sizes = [8, 1], strides = [1, 1]} : vector<8x2xf32> to vector<8x1xf32>
    %1832 = vector.extract_strided_slice %1830 {offsets = [0, 1], sizes = [8, 1], strides = [1, 1]} : vector<8x2xf32> to vector<8x1xf32>
    %1833 = arith.mulf %1831, %1832 : vector<8x1xf32>
    %1834 = vector.extract_strided_slice %1706 {offsets = [1, 0], sizes = [1, 16], strides = [1, 1]} : vector<3x16xf32> to vector<1x16xf32>
    %1835 = vector.broadcast %1834 : vector<1x16xf32> to vector<8x16xf32>
    %1836 = arith.mulf %1228, %1835 : vector<8x16xf32>
    %cst_190 = arith.constant 1.000000e+00 : f32
    %1837 = vector.broadcast %cst_190 : f32 to vector<8x16xf32>
    %1838 = arith.subf %1837, %1836 : vector<8x16xf32>
    %1839 = vector.extract_strided_slice %1838 {offsets = [0, 0], sizes = [8, 8], strides = [1, 1]} : vector<8x16xf32> to vector<8x8xf32>
    %1840 = vector.extract_strided_slice %1838 {offsets = [0, 8], sizes = [8, 8], strides = [1, 1]} : vector<8x16xf32> to vector<8x8xf32>
    %1841 = arith.mulf %1839, %1840 : vector<8x8xf32>
    %1842 = vector.extract_strided_slice %1841 {offsets = [0, 0], sizes = [8, 4], strides = [1, 1]} : vector<8x8xf32> to vector<8x4xf32>
    %1843 = vector.extract_strided_slice %1841 {offsets = [0, 4], sizes = [8, 4], strides = [1, 1]} : vector<8x8xf32> to vector<8x4xf32>
    %1844 = arith.mulf %1842, %1843 : vector<8x4xf32>
    %1845 = vector.extract_strided_slice %1844 {offsets = [0, 0], sizes = [8, 2], strides = [1, 1]} : vector<8x4xf32> to vector<8x2xf32>
    %1846 = vector.extract_strided_slice %1844 {offsets = [0, 2], sizes = [8, 2], strides = [1, 1]} : vector<8x4xf32> to vector<8x2xf32>
    %1847 = arith.mulf %1845, %1846 : vector<8x2xf32>
    %1848 = vector.extract_strided_slice %1847 {offsets = [0, 0], sizes = [8, 1], strides = [1, 1]} : vector<8x2xf32> to vector<8x1xf32>
    %1849 = vector.extract_strided_slice %1847 {offsets = [0, 1], sizes = [8, 1], strides = [1, 1]} : vector<8x2xf32> to vector<8x1xf32>
    %1850 = arith.mulf %1848, %1849 : vector<8x1xf32>
    %1851 = arith.mulf %1604, %1799 : vector<8x1xf32>
    %1852 = arith.mulf %1618, %1816 : vector<8x1xf32>
    %1853 = arith.mulf %1632, %1833 : vector<8x1xf32>
    %1854 = arith.mulf %1646, %1850 : vector<8x1xf32>
    %1855 = vector.extract_strided_slice %1703 {offsets = [2, 0], sizes = [1, 16], strides = [1, 1]} : vector<3x16xf32> to vector<1x16xf32>
    %1856 = vector.broadcast %1855 : vector<1x16xf32> to vector<8x16xf32>
    %1857 = arith.mulf %1708, %1856 : vector<8x16xf32>
    %cst_191 = arith.constant 1.000000e+00 : f32
    %1858 = vector.broadcast %cst_191 : f32 to vector<8x16xf32>
    %1859 = arith.subf %1858, %1857 : vector<8x16xf32>
    %1860 = vector.extract_strided_slice %1859 {offsets = [0, 0], sizes = [8, 8], strides = [1, 1]} : vector<8x16xf32> to vector<8x8xf32>
    %1861 = vector.extract_strided_slice %1859 {offsets = [0, 8], sizes = [8, 8], strides = [1, 1]} : vector<8x16xf32> to vector<8x8xf32>
    %1862 = arith.mulf %1860, %1861 : vector<8x8xf32>
    %1863 = vector.extract_strided_slice %1862 {offsets = [0, 0], sizes = [8, 4], strides = [1, 1]} : vector<8x8xf32> to vector<8x4xf32>
    %1864 = vector.extract_strided_slice %1862 {offsets = [0, 4], sizes = [8, 4], strides = [1, 1]} : vector<8x8xf32> to vector<8x4xf32>
    %1865 = arith.mulf %1863, %1864 : vector<8x4xf32>
    %1866 = vector.extract_strided_slice %1865 {offsets = [0, 0], sizes = [8, 2], strides = [1, 1]} : vector<8x4xf32> to vector<8x2xf32>
    %1867 = vector.extract_strided_slice %1865 {offsets = [0, 2], sizes = [8, 2], strides = [1, 1]} : vector<8x4xf32> to vector<8x2xf32>
    %1868 = arith.mulf %1866, %1867 : vector<8x2xf32>
    %1869 = vector.extract_strided_slice %1868 {offsets = [0, 0], sizes = [8, 1], strides = [1, 1]} : vector<8x2xf32> to vector<8x1xf32>
    %1870 = vector.extract_strided_slice %1868 {offsets = [0, 1], sizes = [8, 1], strides = [1, 1]} : vector<8x2xf32> to vector<8x1xf32>
    %1871 = arith.mulf %1869, %1870 : vector<8x1xf32>
    %1872 = vector.extract_strided_slice %1704 {offsets = [2, 0], sizes = [1, 16], strides = [1, 1]} : vector<3x16xf32> to vector<1x16xf32>
    %1873 = vector.broadcast %1872 : vector<1x16xf32> to vector<8x16xf32>
    %1874 = arith.mulf %1225, %1873 : vector<8x16xf32>
    %cst_192 = arith.constant 1.000000e+00 : f32
    %1875 = vector.broadcast %cst_192 : f32 to vector<8x16xf32>
    %1876 = arith.subf %1875, %1874 : vector<8x16xf32>
    %1877 = vector.extract_strided_slice %1876 {offsets = [0, 0], sizes = [8, 8], strides = [1, 1]} : vector<8x16xf32> to vector<8x8xf32>
    %1878 = vector.extract_strided_slice %1876 {offsets = [0, 8], sizes = [8, 8], strides = [1, 1]} : vector<8x16xf32> to vector<8x8xf32>
    %1879 = arith.mulf %1877, %1878 : vector<8x8xf32>
    %1880 = vector.extract_strided_slice %1879 {offsets = [0, 0], sizes = [8, 4], strides = [1, 1]} : vector<8x8xf32> to vector<8x4xf32>
    %1881 = vector.extract_strided_slice %1879 {offsets = [0, 4], sizes = [8, 4], strides = [1, 1]} : vector<8x8xf32> to vector<8x4xf32>
    %1882 = arith.mulf %1880, %1881 : vector<8x4xf32>
    %1883 = vector.extract_strided_slice %1882 {offsets = [0, 0], sizes = [8, 2], strides = [1, 1]} : vector<8x4xf32> to vector<8x2xf32>
    %1884 = vector.extract_strided_slice %1882 {offsets = [0, 2], sizes = [8, 2], strides = [1, 1]} : vector<8x4xf32> to vector<8x2xf32>
    %1885 = arith.mulf %1883, %1884 : vector<8x2xf32>
    %1886 = vector.extract_strided_slice %1885 {offsets = [0, 0], sizes = [8, 1], strides = [1, 1]} : vector<8x2xf32> to vector<8x1xf32>
    %1887 = vector.extract_strided_slice %1885 {offsets = [0, 1], sizes = [8, 1], strides = [1, 1]} : vector<8x2xf32> to vector<8x1xf32>
    %1888 = arith.mulf %1886, %1887 : vector<8x1xf32>
    %1889 = vector.extract_strided_slice %1705 {offsets = [2, 0], sizes = [1, 16], strides = [1, 1]} : vector<3x16xf32> to vector<1x16xf32>
    %1890 = vector.broadcast %1889 : vector<1x16xf32> to vector<8x16xf32>
    %1891 = arith.mulf %1710, %1890 : vector<8x16xf32>
    %cst_193 = arith.constant 1.000000e+00 : f32
    %1892 = vector.broadcast %cst_193 : f32 to vector<8x16xf32>
    %1893 = arith.subf %1892, %1891 : vector<8x16xf32>
    %1894 = vector.extract_strided_slice %1893 {offsets = [0, 0], sizes = [8, 8], strides = [1, 1]} : vector<8x16xf32> to vector<8x8xf32>
    %1895 = vector.extract_strided_slice %1893 {offsets = [0, 8], sizes = [8, 8], strides = [1, 1]} : vector<8x16xf32> to vector<8x8xf32>
    %1896 = arith.mulf %1894, %1895 : vector<8x8xf32>
    %1897 = vector.extract_strided_slice %1896 {offsets = [0, 0], sizes = [8, 4], strides = [1, 1]} : vector<8x8xf32> to vector<8x4xf32>
    %1898 = vector.extract_strided_slice %1896 {offsets = [0, 4], sizes = [8, 4], strides = [1, 1]} : vector<8x8xf32> to vector<8x4xf32>
    %1899 = arith.mulf %1897, %1898 : vector<8x4xf32>
    %1900 = vector.extract_strided_slice %1899 {offsets = [0, 0], sizes = [8, 2], strides = [1, 1]} : vector<8x4xf32> to vector<8x2xf32>
    %1901 = vector.extract_strided_slice %1899 {offsets = [0, 2], sizes = [8, 2], strides = [1, 1]} : vector<8x4xf32> to vector<8x2xf32>
    %1902 = arith.mulf %1900, %1901 : vector<8x2xf32>
    %1903 = vector.extract_strided_slice %1902 {offsets = [0, 0], sizes = [8, 1], strides = [1, 1]} : vector<8x2xf32> to vector<8x1xf32>
    %1904 = vector.extract_strided_slice %1902 {offsets = [0, 1], sizes = [8, 1], strides = [1, 1]} : vector<8x2xf32> to vector<8x1xf32>
    %1905 = arith.mulf %1903, %1904 : vector<8x1xf32>
    %1906 = vector.extract_strided_slice %1706 {offsets = [2, 0], sizes = [1, 16], strides = [1, 1]} : vector<3x16xf32> to vector<1x16xf32>
    %1907 = vector.broadcast %1906 : vector<1x16xf32> to vector<8x16xf32>
    %1908 = arith.mulf %1228, %1907 : vector<8x16xf32>
    %cst_194 = arith.constant 1.000000e+00 : f32
    %1909 = vector.broadcast %cst_194 : f32 to vector<8x16xf32>
    %1910 = arith.subf %1909, %1908 : vector<8x16xf32>
    %1911 = vector.extract_strided_slice %1910 {offsets = [0, 0], sizes = [8, 8], strides = [1, 1]} : vector<8x16xf32> to vector<8x8xf32>
    %1912 = vector.extract_strided_slice %1910 {offsets = [0, 8], sizes = [8, 8], strides = [1, 1]} : vector<8x16xf32> to vector<8x8xf32>
    %1913 = arith.mulf %1911, %1912 : vector<8x8xf32>
    %1914 = vector.extract_strided_slice %1913 {offsets = [0, 0], sizes = [8, 4], strides = [1, 1]} : vector<8x8xf32> to vector<8x4xf32>
    %1915 = vector.extract_strided_slice %1913 {offsets = [0, 4], sizes = [8, 4], strides = [1, 1]} : vector<8x8xf32> to vector<8x4xf32>
    %1916 = arith.mulf %1914, %1915 : vector<8x4xf32>
    %1917 = vector.extract_strided_slice %1916 {offsets = [0, 0], sizes = [8, 2], strides = [1, 1]} : vector<8x4xf32> to vector<8x2xf32>
    %1918 = vector.extract_strided_slice %1916 {offsets = [0, 2], sizes = [8, 2], strides = [1, 1]} : vector<8x4xf32> to vector<8x2xf32>
    %1919 = arith.mulf %1917, %1918 : vector<8x2xf32>
    %1920 = vector.extract_strided_slice %1919 {offsets = [0, 0], sizes = [8, 1], strides = [1, 1]} : vector<8x2xf32> to vector<8x1xf32>
    %1921 = vector.extract_strided_slice %1919 {offsets = [0, 1], sizes = [8, 1], strides = [1, 1]} : vector<8x2xf32> to vector<8x1xf32>
    %1922 = arith.mulf %1920, %1921 : vector<8x1xf32>
    %1923 = arith.mulf %1660, %1871 : vector<8x1xf32>
    %1924 = arith.mulf %1674, %1888 : vector<8x1xf32>
    %1925 = arith.mulf %1688, %1905 : vector<8x1xf32>
    %1926 = arith.mulf %1702, %1922 : vector<8x1xf32>
    %cst_195 = arith.constant 1.000000e+00 : f32
    %1927 = vector.broadcast %cst_195 : f32 to vector<8x1xf32>
    %1928 = arith.subf %1927, %1780 : vector<8x1xf32>
    %cst_196 = arith.constant 1.000000e+00 : f32
    %1929 = vector.broadcast %cst_196 : f32 to vector<8x1xf32>
    %1930 = arith.subf %1929, %1852 : vector<8x1xf32>
    %cst_197 = arith.constant 1.000000e+00 : f32
    %1931 = vector.broadcast %cst_197 : f32 to vector<8x1xf32>
    %1932 = arith.subf %1931, %1924 : vector<8x1xf32>
    %1933 = tpu.concatenate %1779, %1851, %1923, %1928, %1930, %1932 in 1 : vector<8x1xf32>, vector<8x1xf32>, vector<8x1xf32>, vector<8x1xf32>, vector<8x1xf32>, vector<8x1xf32> -> vector<8x6xf32>
    %cst_198 = arith.constant 1.000000e+00 : f32
    %1934 = vector.broadcast %cst_198 : f32 to vector<8x1xf32>
    %1935 = arith.subf %1934, %1782 : vector<8x1xf32>
    %cst_199 = arith.constant 1.000000e+00 : f32
    %1936 = vector.broadcast %cst_199 : f32 to vector<8x1xf32>
    %1937 = arith.subf %1936, %1854 : vector<8x1xf32>
    %cst_200 = arith.constant 1.000000e+00 : f32
    %1938 = vector.broadcast %cst_200 : f32 to vector<8x1xf32>
    %1939 = arith.subf %1938, %1926 : vector<8x1xf32>
    %1940 = tpu.concatenate %1781, %1853, %1925, %1935, %1937, %1939 in 1 : vector<8x1xf32>, vector<8x1xf32>, vector<8x1xf32>, vector<8x1xf32>, vector<8x1xf32>, vector<8x1xf32> -> vector<8x6xf32>
    %cst_201 = arith.constant 0.000000e+00 : f32
    %1941 = vector.broadcast %cst_201 : f32 to vector<8x2xf32>
    %1942 = tpu.concatenate %1933, %1941 in 1 : vector<8x6xf32>, vector<8x2xf32> -> vector<8x8xf32>
    %cst_202 = arith.constant 0.000000e+00 : f32
    %1943 = vector.broadcast %cst_202 : f32 to vector<8x2xf32>
    %1944 = tpu.concatenate %1940, %1943 in 1 : vector<8x6xf32>, vector<8x2xf32> -> vector<8x8xf32>
    %1945 = vector.extract_strided_slice %0 {offsets = [0, 16], sizes = [8, 16], strides = [1, 1]} : vector<8x32xf32> to vector<8x16xf32>
    %c272 = arith.constant 272 : index
    %c0_203 = arith.constant 0 : index
    %1946 = vector.load %arg1[%c272, %c0_203] : memref<296x128xf32, #tpu.memory_space<vmem>>, vector<12x16xf32>
    %c288 = arith.constant 288 : index
    %c0_204 = arith.constant 0 : index
    %1947 = vector.load %arg1[%c288, %c0_204] : memref<296x128xf32, #tpu.memory_space<vmem>>, vector<1x12xf32>
    %1948 = vector.extract_strided_slice %1946 {offsets = [0, 0], sizes = [1, 16], strides = [1, 1]} : vector<12x16xf32> to vector<1x16xf32>
    %1949 = vector.broadcast %1948 : vector<1x16xf32> to vector<8x16xf32>
    %1950 = arith.mulf %1945, %1949 : vector<8x16xf32>
    %cst_205 = arith.constant dense<0.000000e+00> : vector<8xf32>
    %1951 = vector.multi_reduction <add>, %1950, %cst_205 [1] : vector<8x16xf32> to vector<8xf32>
    %1952 = vector.shape_cast %1951 : vector<8xf32> to vector<8x1xf32>
    %1953 = vector.extract_strided_slice %1946 {offsets = [1, 0], sizes = [1, 16], strides = [1, 1]} : vector<12x16xf32> to vector<1x16xf32>
    %1954 = vector.broadcast %1953 : vector<1x16xf32> to vector<8x16xf32>
    %1955 = arith.mulf %1945, %1954 : vector<8x16xf32>
    %cst_206 = arith.constant dense<0.000000e+00> : vector<8xf32>
    %1956 = vector.multi_reduction <add>, %1955, %cst_206 [1] : vector<8x16xf32> to vector<8xf32>
    %1957 = vector.shape_cast %1956 : vector<8xf32> to vector<8x1xf32>
    %1958 = vector.extract_strided_slice %1946 {offsets = [2, 0], sizes = [1, 16], strides = [1, 1]} : vector<12x16xf32> to vector<1x16xf32>
    %1959 = vector.broadcast %1958 : vector<1x16xf32> to vector<8x16xf32>
    %1960 = arith.mulf %1945, %1959 : vector<8x16xf32>
    %cst_207 = arith.constant dense<0.000000e+00> : vector<8xf32>
    %1961 = vector.multi_reduction <add>, %1960, %cst_207 [1] : vector<8x16xf32> to vector<8xf32>
    %1962 = vector.shape_cast %1961 : vector<8xf32> to vector<8x1xf32>
    %1963 = vector.extract_strided_slice %1946 {offsets = [3, 0], sizes = [1, 16], strides = [1, 1]} : vector<12x16xf32> to vector<1x16xf32>
    %1964 = vector.broadcast %1963 : vector<1x16xf32> to vector<8x16xf32>
    %1965 = arith.mulf %1945, %1964 : vector<8x16xf32>
    %cst_208 = arith.constant dense<0.000000e+00> : vector<8xf32>
    %1966 = vector.multi_reduction <add>, %1965, %cst_208 [1] : vector<8x16xf32> to vector<8xf32>
    %1967 = vector.shape_cast %1966 : vector<8xf32> to vector<8x1xf32>
    %1968 = vector.extract_strided_slice %1946 {offsets = [4, 0], sizes = [1, 16], strides = [1, 1]} : vector<12x16xf32> to vector<1x16xf32>
    %1969 = vector.broadcast %1968 : vector<1x16xf32> to vector<8x16xf32>
    %1970 = arith.mulf %1945, %1969 : vector<8x16xf32>
    %cst_209 = arith.constant dense<0.000000e+00> : vector<8xf32>
    %1971 = vector.multi_reduction <add>, %1970, %cst_209 [1] : vector<8x16xf32> to vector<8xf32>
    %1972 = vector.shape_cast %1971 : vector<8xf32> to vector<8x1xf32>
    %1973 = vector.extract_strided_slice %1946 {offsets = [5, 0], sizes = [1, 16], strides = [1, 1]} : vector<12x16xf32> to vector<1x16xf32>
    %1974 = vector.broadcast %1973 : vector<1x16xf32> to vector<8x16xf32>
    %1975 = arith.mulf %1945, %1974 : vector<8x16xf32>
    %cst_210 = arith.constant dense<0.000000e+00> : vector<8xf32>
    %1976 = vector.multi_reduction <add>, %1975, %cst_210 [1] : vector<8x16xf32> to vector<8xf32>
    %1977 = vector.shape_cast %1976 : vector<8xf32> to vector<8x1xf32>
    %1978 = vector.extract_strided_slice %1946 {offsets = [6, 0], sizes = [1, 16], strides = [1, 1]} : vector<12x16xf32> to vector<1x16xf32>
    %1979 = vector.broadcast %1978 : vector<1x16xf32> to vector<8x16xf32>
    %1980 = arith.mulf %1945, %1979 : vector<8x16xf32>
    %cst_211 = arith.constant dense<0.000000e+00> : vector<8xf32>
    %1981 = vector.multi_reduction <add>, %1980, %cst_211 [1] : vector<8x16xf32> to vector<8xf32>
    %1982 = vector.shape_cast %1981 : vector<8xf32> to vector<8x1xf32>
    %1983 = vector.extract_strided_slice %1946 {offsets = [7, 0], sizes = [1, 16], strides = [1, 1]} : vector<12x16xf32> to vector<1x16xf32>
    %1984 = vector.broadcast %1983 : vector<1x16xf32> to vector<8x16xf32>
    %1985 = arith.mulf %1945, %1984 : vector<8x16xf32>
    %cst_212 = arith.constant dense<0.000000e+00> : vector<8xf32>
    %1986 = vector.multi_reduction <add>, %1985, %cst_212 [1] : vector<8x16xf32> to vector<8xf32>
    %1987 = vector.shape_cast %1986 : vector<8xf32> to vector<8x1xf32>
    %1988 = vector.extract_strided_slice %1946 {offsets = [8, 0], sizes = [1, 16], strides = [1, 1]} : vector<12x16xf32> to vector<1x16xf32>
    %1989 = vector.broadcast %1988 : vector<1x16xf32> to vector<8x16xf32>
    %1990 = arith.mulf %1945, %1989 : vector<8x16xf32>
    %cst_213 = arith.constant dense<0.000000e+00> : vector<8xf32>
    %1991 = vector.multi_reduction <add>, %1990, %cst_213 [1] : vector<8x16xf32> to vector<8xf32>
    %1992 = vector.shape_cast %1991 : vector<8xf32> to vector<8x1xf32>
    %1993 = vector.extract_strided_slice %1946 {offsets = [9, 0], sizes = [1, 16], strides = [1, 1]} : vector<12x16xf32> to vector<1x16xf32>
    %1994 = vector.broadcast %1993 : vector<1x16xf32> to vector<8x16xf32>
    %1995 = arith.mulf %1945, %1994 : vector<8x16xf32>
    %cst_214 = arith.constant dense<0.000000e+00> : vector<8xf32>
    %1996 = vector.multi_reduction <add>, %1995, %cst_214 [1] : vector<8x16xf32> to vector<8xf32>
    %1997 = vector.shape_cast %1996 : vector<8xf32> to vector<8x1xf32>
    %1998 = vector.extract_strided_slice %1946 {offsets = [10, 0], sizes = [1, 16], strides = [1, 1]} : vector<12x16xf32> to vector<1x16xf32>
    %1999 = vector.broadcast %1998 : vector<1x16xf32> to vector<8x16xf32>
    %2000 = arith.mulf %1945, %1999 : vector<8x16xf32>
    %cst_215 = arith.constant dense<0.000000e+00> : vector<8xf32>
    %2001 = vector.multi_reduction <add>, %2000, %cst_215 [1] : vector<8x16xf32> to vector<8xf32>
    %2002 = vector.shape_cast %2001 : vector<8xf32> to vector<8x1xf32>
    %2003 = vector.extract_strided_slice %1946 {offsets = [11, 0], sizes = [1, 16], strides = [1, 1]} : vector<12x16xf32> to vector<1x16xf32>
    %2004 = vector.broadcast %2003 : vector<1x16xf32> to vector<8x16xf32>
    %2005 = arith.mulf %1945, %2004 : vector<8x16xf32>
    %cst_216 = arith.constant dense<0.000000e+00> : vector<8xf32>
    %2006 = vector.multi_reduction <add>, %2005, %cst_216 [1] : vector<8x16xf32> to vector<8xf32>
    %2007 = vector.shape_cast %2006 : vector<8xf32> to vector<8x1xf32>
    %2008 = tpu.concatenate %1952, %1957, %1962, %1967, %1972, %1977, %1982, %1987, %1992, %1997, %2002, %2007 in 1 : vector<8x1xf32>, vector<8x1xf32>, vector<8x1xf32>, vector<8x1xf32>, vector<8x1xf32>, vector<8x1xf32>, vector<8x1xf32>, vector<8x1xf32>, vector<8x1xf32>, vector<8x1xf32>, vector<8x1xf32>, vector<8x1xf32> -> vector<8x12xf32>
    %2009 = vector.broadcast %1947 : vector<1x12xf32> to vector<8x12xf32>
    %2010 = arith.addf %2008, %2009 : vector<8x12xf32>
    %2011 = vector.extract_strided_slice %2010 {offsets = [0, 0], sizes = [8, 6], strides = [1, 1]} : vector<8x12xf32> to vector<8x6xf32>
    %2012 = vector.extract_strided_slice %2010 {offsets = [0, 6], sizes = [8, 6], strides = [1, 1]} : vector<8x12xf32> to vector<8x6xf32>
    %2013 = vector.extract_strided_slice %1942 {offsets = [0, 0], sizes = [8, 6], strides = [1, 1]} : vector<8x8xf32> to vector<8x6xf32>
    %2014 = vector.extract_strided_slice %1944 {offsets = [0, 0], sizes = [8, 6], strides = [1, 1]} : vector<8x8xf32> to vector<8x6xf32>
    %2015 = arith.mulf %2013, %2011 : vector<8x6xf32>
    %cst_217 = arith.constant dense<0.000000e+00> : vector<8xf32>
    %2016 = vector.multi_reduction <add>, %2015, %cst_217 [1] : vector<8x6xf32> to vector<8xf32>
    %2017 = vector.shape_cast %2016 : vector<8xf32> to vector<8x1xf32>
    %2018 = arith.mulf %2013, %2012 : vector<8x6xf32>
    %cst_218 = arith.constant dense<0.000000e+00> : vector<8xf32>
    %2019 = vector.multi_reduction <add>, %2018, %cst_218 [1] : vector<8x6xf32> to vector<8xf32>
    %2020 = vector.shape_cast %2019 : vector<8xf32> to vector<8x1xf32>
    %2021 = arith.mulf %2014, %2011 : vector<8x6xf32>
    %cst_219 = arith.constant dense<0.000000e+00> : vector<8xf32>
    %2022 = vector.multi_reduction <add>, %2021, %cst_219 [1] : vector<8x6xf32> to vector<8xf32>
    %2023 = vector.shape_cast %2022 : vector<8xf32> to vector<8x1xf32>
    %2024 = arith.mulf %2014, %2012 : vector<8x6xf32>
    %cst_220 = arith.constant dense<0.000000e+00> : vector<8xf32>
    %2025 = vector.multi_reduction <add>, %2024, %cst_220 [1] : vector<8x6xf32> to vector<8xf32>
    %2026 = vector.shape_cast %2025 : vector<8xf32> to vector<8x1xf32>
    %2027 = tpu.concatenate %2017, %2020, %2023, %2026 in 1 : vector<8x1xf32>, vector<8x1xf32>, vector<8x1xf32>, vector<8x1xf32> -> vector<8x4xf32>
    %c0_221 = arith.constant 0 : index
    %c0_222 = arith.constant 0 : index
    %2028 = vector.load %arg2[%c0_221, %c0_222] : memref<8x4xf32, #tpu.memory_space<vmem>>, vector<8x4xf32>
    tpu.vector_store %arg2[%c0_221, %c0_222], %2027 {strides = array<i32>} : memref<8x4xf32, #tpu.memory_space<vmem>>, vector<8x4xf32>,
    return
  }
}

</mosaic_0001>

<llo_original>
// kernel: forward.1
$region0: #{forward.1}
  #allocation0 [shape = 'u32[]', space=smem, size = 0x4, offset = 0x4, fixed_abs, tag = 'smem constant byte address 0x4 - core index']
  #allocation1 [shape = 'u32[72,128]{1,0:T(1,128)}', space=vmem, size = 0x9000, scoped, tag = 'internal scratch']
  %s0 = inlined_call_operand.vmem [shape: f32[8,32], index: 0, kind: input, shape index: {}]
  %s1 = inlined_call_operand.hbm [shape: f32[296,128], index: 1, kind: input, shape index: {}]
  %s2 = inlined_call_operand.vmem [shape: f32[8,4], index: 2, kind: output, shape index: {}]
  %s3 = sld [smem:[#allocation0]]
  $region22: #{forward.1} parent=0
    _
  %s5 = ssub.s32 1, %s3
  %s6 = scalar_select 0, %s5, %s3
  $region1: #{forward.1} parent=0
    #allocation2 [shape = 'u8[151552]{0}', space=vmem, size = 0x25000, scoped, tag = 'input window, operand 1, single buffered']
    #allocation3 [shape = 's32[1]{0}', space=sflag, size = 0x4, scoped, tag = 'scoped memory for forward.1']
    %7 = vsyncpa [#allocation3], 0
    // Predicated region
    $region2: #{forward.1} parent=1 // pred_check
      _
    $region3: #{forward.1} parent=1 // pred_check_branch
      %9 = sbr.rel (0) target = $region5
    $region4: #{forward.1} parent=1 // pred_region
      _
    $region5: #{forward.1} parent=1 // pred_fallthru
      _
    // Predicated region
    $region6: #{forward.1} parent=1 // pred_check
      _
    $region7: #{forward.1} parent=1 // pred_check_branch
      %11 = sbr.rel (0) target = $region9
    $region8: #{forward.1} parent=1 // pred_region
      %13 = vsyncadd [#allocation3], 0
      %s14 = sshll.u32 %s1, 4
      %s15 = int_to_ptr.hbm [resolvable:$true] %s14
      %s16 = sshll.u32 [#allocation2], 4
      %s17 = int_to_ptr.vmem [resolvable:$true] %s16
      %22 = dma.hbm_to_vmem [thread:$0]  %s15, 4736, %s17, [#allocation3], 128, 128, 8
    $region9: #{forward.1} parent=1 // pred_fallthru
      _
    // Predicated region
    $region10: #{forward.1} parent=1 // pred_check
      _
    $region11: #{forward.1} parent=1 // pred_check_branch
      %24 = sbr.rel (0) target = $region13
    $region12: #{forward.1} parent=1 // pred_region
      %26 = dma.done [#allocation3], 4736
    $region13: #{forward.1} parent=1 // pred_fallthru
      _
    %v27 = vld [vmem:[%s0] sm:$0xff]
    %v28 = vld [vmem:[#allocation2] sm:$0x1]
    %30 = vrot.lane.b32.xlu0 %v27, 125
    %v31 = vpop.permute.xlu0 %30
    %33 = vrot.lane.b32.xlu0 %v27, 2
    %v34 = vpop.permute.xlu0 %33
    %36 = vrot.lane.b32.xlu0 %v27, 7
    %v37 = vpop.permute.xlu0 %36
    %vm39 = vcmask 39936
    %v40 = vsel %vm39, %v31, %v34
    %vm41 = vcmask 80896
    %v42 = vsel %vm41, %v40, %v37
    %v43 = vperm.slane %v28, 0
    %v44 = vsub.f32 %v42, %v43
    %vm45 = vcmp.gt.f32.partialorder %v44, 0.0
    %v46 = vsel %vm45, 1, 0
    %v47 = vcvt.s32.f32 %v46
    %v48 = vsub.f32 1.0, %v47
    %50 = vrot.lane.b32.xlu0 %v47, 3
    %v51 = vpop.permute.xlu0 %50
    %54 = vrot.lane.b32.xlu0 %v48, 18
    %v55 = vpop.permute.xlu0 %54
    %vm57 = vcmask 23552
    %v58 = vsel %vm57, %v27, %v51
    %vm59 = vcmask 146432
    %v60 = vsel %vm59, %v58, %v55
    %vm61 = vcmask 269312
    %v62 = vsel %vm61, %v60, 0.0
    %v63 = vld [vmem:[#allocation2 + $0x8] sm:$0xf]
    %v64 = vld [vmem:[#allocation2 + $0x10] sm:$0xf]
    %v65 = vld [vmem:[#allocation2 + $0x18] sm:$0xf]
    %v66 = vld [vmem:[#allocation2 + $0x20] sm:$0xf]
    %v67 = vsub.f32 1.0, %v62
    %v68 = vperm.slane %v63, 0
    %v69 = vmul.f32 %v67, %v68
    %v70 = vsub.f32 1.0, %v69
    %72 = vrot.lane.b32.xlu0 %v70, 96
    %v73 = vpop.permute.xlu0 %72
    %v75 = vmul.f32 %v70, %v73
    %77 = vrot.lane.b32.xlu0 %v75, 112
    %v78 = vpop.permute.xlu0 %77
    %v80 = vmul.f32 %v75, %v78
    %82 = vrot.lane.b32.xlu0 %v80, 120
    %v83 = vpop.permute.xlu0 %82
    %v85 = vmul.f32 %v80, %v83
    %87 = vrot.lane.b32.xlu0 %v85, 124
    %v88 = vpop.permute.xlu0 %87
    %v90 = vmul.f32 %v85, %v88
    %92 = vrot.lane.b32.xlu0 %v90, 126
    %v93 = vpop.permute.xlu0 %92
    %v95 = vmul.f32 %v90, %v93
    %97 = vrot.lane.b32.xlu0 %v95, 127
    %v98 = vpop.permute.xlu0 %97
    %v100 = vmul.f32 %v95, %v98
    %v101 = vperm.slane %v64, 0
    %v102 = vmul.f32 %v62, %v101
    %v103 = vsub.f32 1.0, %v102
    %105 = vrot.lane.b32.xlu0 %v103, 96
    %v106 = vpop.permute.xlu0 %105
    %v108 = vmul.f32 %v103, %v106
    %110 = vrot.lane.b32.xlu0 %v108, 112
    %v111 = vpop.permute.xlu0 %110
    %v113 = vmul.f32 %v108, %v111
    %115 = vrot.lane.b32.xlu0 %v113, 120
    %v116 = vpop.permute.xlu0 %115
    %v118 = vmul.f32 %v113, %v116
    %120 = vrot.lane.b32.xlu0 %v118, 124
    %v121 = vpop.permute.xlu0 %120
    %v123 = vmul.f32 %v118, %v121
    %125 = vrot.lane.b32.xlu0 %v123, 126
    %v126 = vpop.permute.xlu0 %125
    %v128 = vmul.f32 %v123, %v126
    %130 = vrot.lane.b32.xlu0 %v128, 127
    %v131 = vpop.permute.xlu0 %130
    %v133 = vmul.f32 %v128, %v131
    %v134 = vperm.slane %v65, 0
    %v135 = vmul.f32 %v67, %v134
    %v136 = vsub.f32 1.0, %v135
    %138 = vrot.lane.b32.xlu0 %v136, 96
    %v139 = vpop.permute.xlu0 %138
    %v141 = vmul.f32 %v136, %v139
    %143 = vrot.lane.b32.xlu0 %v141, 112
    %v144 = vpop.permute.xlu0 %143
    %v146 = vmul.f32 %v141, %v144
    %148 = vrot.lane.b32.xlu0 %v146, 120
    %v149 = vpop.permute.xlu0 %148
    %v151 = vmul.f32 %v146, %v149
    %153 = vrot.lane.b32.xlu0 %v151, 124
    %v154 = vpop.permute.xlu0 %153
    %v156 = vmul.f32 %v151, %v154
    %158 = vrot.lane.b32.xlu0 %v156, 126
    %v159 = vpop.permute.xlu0 %158
    %v161 = vmul.f32 %v156, %v159
    %163 = vrot.lane.b32.xlu0 %v161, 127
    %v164 = vpop.permute.xlu0 %163
    %v166 = vmul.f32 %v161, %v164
    %v167 = vperm.slane %v66, 0
    %v168 = vmul.f32 %v62, %v167
    %v169 = vsub.f32 1.0, %v168
    %171 = vrot.lane.b32.xlu0 %v169, 96
    %v172 = vpop.permute.xlu0 %171
    %v174 = vmul.f32 %v169, %v172
    %176 = vrot.lane.b32.xlu0 %v174, 112
    %v177 = vpop.permute.xlu0 %176
    %v179 = vmul.f32 %v174, %v177
    %181 = vrot.lane.b32.xlu0 %v179, 120
    %v182 = vpop.permute.xlu0 %181
    %v184 = vmul.f32 %v179, %v182
    %186 = vrot.lane.b32.xlu0 %v184, 124
    %v187 = vpop.permute.xlu0 %186
    %v189 = vmul.f32 %v184, %v187
    %191 = vrot.lane.b32.xlu0 %v189, 126
    %v192 = vpop.permute.xlu0 %191
    %v194 = vmul.f32 %v189, %v192
    %196 = vrot.lane.b32.xlu0 %v194, 127
    %v197 = vpop.permute.xlu0 %196
    %v199 = vmul.f32 %v194, %v197
    %v200 = vperm.slane %v63, 1
    %v201 = vmul.f32 %v67, %v200
    %v202 = vsub.f32 1.0, %v201
    %204 = vrot.lane.b32.xlu0 %v202, 96
    %v205 = vpop.permute.xlu0 %204
    %v207 = vmul.f32 %v202, %v205
    %209 = vrot.lane.b32.xlu0 %v207, 112
    %v210 = vpop.permute.xlu0 %209
    %v212 = vmul.f32 %v207, %v210
    %214 = vrot.lane.b32.xlu0 %v212, 120
    %v215 = vpop.permute.xlu0 %214
    %v217 = vmul.f32 %v212, %v215
    %219 = vrot.lane.b32.xlu0 %v217, 124
    %v220 = vpop.permute.xlu0 %219
    %v222 = vmul.f32 %v217, %v220
    %224 = vrot.lane.b32.xlu0 %v222, 126
    %v225 = vpop.permute.xlu0 %224
    %v227 = vmul.f32 %v222, %v225
    %229 = vrot.lane.b32.xlu0 %v227, 127
    %v230 = vpop.permute.xlu0 %229
    %v232 = vmul.f32 %v227, %v230
    %v233 = vperm.slane %v64, 1
    %v234 = vmul.f32 %v62, %v233
    %v235 = vsub.f32 1.0, %v234
    %237 = vrot.lane.b32.xlu0 %v235, 96
    %v238 = vpop.permute.xlu0 %237
    %v240 = vmul.f32 %v235, %v238
    %242 = vrot.lane.b32.xlu0 %v240, 112
    %v243 = vpop.permute.xlu0 %242
    %v245 = vmul.f32 %v240, %v243
    %247 = vrot.lane.b32.xlu0 %v245, 120
    %v248 = vpop.permute.xlu0 %247
    %v250 = vmul.f32 %v245, %v248
    %252 = vrot.lane.b32.xlu0 %v250, 124
    %v253 = vpop.permute.xlu0 %252
    %v255 = vmul.f32 %v250, %v253
    %257 = vrot.lane.b32.xlu0 %v255, 126
    %v258 = vpop.permute.xlu0 %257
    %v260 = vmul.f32 %v255, %v258
    %262 = vrot.lane.b32.xlu0 %v260, 127
    %v263 = vpop.permute.xlu0 %262
    %v265 = vmul.f32 %v260, %v263
    %v266 = vperm.slane %v65, 1
    %v267 = vmul.f32 %v67, %v266
    %v268 = vsub.f32 1.0, %v267
    %270 = vrot.lane.b32.xlu0 %v268, 96
    %v271 = vpop.permute.xlu0 %270
    %v273 = vmul.f32 %v268, %v271
    %275 = vrot.lane.b32.xlu0 %v273, 112
    %v276 = vpop.permute.xlu0 %275
    %v278 = vmul.f32 %v273, %v276
    %280 = vrot.lane.b32.xlu0 %v278, 120
    %v281 = vpop.permute.xlu0 %280
    %v283 = vmul.f32 %v278, %v281
    %285 = vrot.lane.b32.xlu0 %v283, 124
    %v286 = vpop.permute.xlu0 %285
    %v288 = vmul.f32 %v283, %v286
    %290 = vrot.lane.b32.xlu0 %v288, 126
    %v291 = vpop.permute.xlu0 %290
    %v293 = vmul.f32 %v288, %v291
    %295 = vrot.lane.b32.xlu0 %v293, 127
    %v296 = vpop.permute.xlu0 %295
    %v298 = vmul.f32 %v293, %v296
    %v299 = vperm.slane %v66, 1
    %v300 = vmul.f32 %v62, %v299
    %v301 = vsub.f32 1.0, %v300
    %303 = vrot.lane.b32.xlu0 %v301, 96
    %v304 = vpop.permute.xlu0 %303
    %v306 = vmul.f32 %v301, %v304
    %308 = vrot.lane.b32.xlu0 %v306, 112
    %v309 = vpop.permute.xlu0 %308
    %v311 = vmul.f32 %v306, %v309
    %313 = vrot.lane.b32.xlu0 %v311, 120
    %v314 = vpop.permute.xlu0 %313
    %v316 = vmul.f32 %v311, %v314
    %318 = vrot.lane.b32.xlu0 %v316, 124
    %v319 = vpop.permute.xlu0 %318
    %v321 = vmul.f32 %v316, %v319
    %323 = vrot.lane.b32.xlu0 %v321, 126
    %v324 = vpop.permute.xlu0 %323
    %v326 = vmul.f32 %v321, %v324
    %328 = vrot.lane.b32.xlu0 %v326, 127
    %v329 = vpop.permute.xlu0 %328
    %v331 = vmul.f32 %v326, %v329
    %v332 = vperm.slane %v63, 2
    %v333 = vmul.f32 %v67, %v332
    %v334 = vsub.f32 1.0, %v333
    %336 = vrot.lane.b32.xlu0 %v334, 96
    %v337 = vpop.permute.xlu0 %336
    %v339 = vmul.f32 %v334, %v337
    %341 = vrot.lane.b32.xlu0 %v339, 112
    %v342 = vpop.permute.xlu0 %341
    %v344 = vmul.f32 %v339, %v342
    %346 = vrot.lane.b32.xlu0 %v344, 120
    %v347 = vpop.permute.xlu0 %346
    %v349 = vmul.f32 %v344, %v347
    %351 = vrot.lane.b32.xlu0 %v349, 124
    %v352 = vpop.permute.xlu0 %351
    %v354 = vmul.f32 %v349, %v352
    %356 = vrot.lane.b32.xlu0 %v354, 126
    %v357 = vpop.permute.xlu0 %356
    %v359 = vmul.f32 %v354, %v357
    %361 = vrot.lane.b32.xlu0 %v359, 127
    %v362 = vpop.permute.xlu0 %361
    %v364 = vmul.f32 %v359, %v362
    %v365 = vperm.slane %v64, 2
    %v366 = vmul.f32 %v62, %v365
    %v367 = vsub.f32 1.0, %v366
    %369 = vrot.lane.b32.xlu0 %v367, 96
    %v370 = vpop.permute.xlu0 %369
    %v372 = vmul.f32 %v367, %v370
    %374 = vrot.lane.b32.xlu0 %v372, 112
    %v375 = vpop.permute.xlu0 %374
    %v377 = vmul.f32 %v372, %v375
    %379 = vrot.lane.b32.xlu0 %v377, 120
    %v380 = vpop.permute.xlu0 %379
    %v382 = vmul.f32 %v377, %v380
    %384 = vrot.lane.b32.xlu0 %v382, 124
    %v385 = vpop.permute.xlu0 %384
    %v387 = vmul.f32 %v382, %v385
    %389 = vrot.lane.b32.xlu0 %v387, 126
    %v390 = vpop.permute.xlu0 %389
    %v392 = vmul.f32 %v387, %v390
    %394 = vrot.lane.b32.xlu0 %v392, 127
    %v395 = vpop.permute.xlu0 %394
    %v397 = vmul.f32 %v392, %v395
    %v398 = vperm.slane %v65, 2
    %v399 = vmul.f32 %v67, %v398
    %v400 = vsub.f32 1.0, %v399
    %402 = vrot.lane.b32.xlu0 %v400, 96
    %v403 = vpop.permute.xlu0 %402
    %v405 = vmul.f32 %v400, %v403
    %407 = vrot.lane.b32.xlu0 %v405, 112
    %v408 = vpop.permute.xlu0 %407
    %v410 = vmul.f32 %v405, %v408
    %412 = vrot.lane.b32.xlu0 %v410, 120
    %v413 = vpop.permute.xlu0 %412
    %v415 = vmul.f32 %v410, %v413
    %417 = vrot.lane.b32.xlu0 %v415, 124
    %v418 = vpop.permute.xlu0 %417
    %v420 = vmul.f32 %v415, %v418
    %422 = vrot.lane.b32.xlu0 %v420, 126
    %v423 = vpop.permute.xlu0 %422
    %v425 = vmul.f32 %v420, %v423
    %427 = vrot.lane.b32.xlu0 %v425, 127
    %v428 = vpop.permute.xlu0 %427
    %v430 = vmul.f32 %v425, %v428
    %v431 = vperm.slane %v66, 2
    %v432 = vmul.f32 %v62, %v431
    %v433 = vsub.f32 1.0, %v432
    %435 = vrot.lane.b32.xlu0 %v433, 96
    %v436 = vpop.permute.xlu0 %435
    %v438 = vmul.f32 %v433, %v436
    %440 = vrot.lane.b32.xlu0 %v438, 112
    %v441 = vpop.permute.xlu0 %440
    %v443 = vmul.f32 %v438, %v441
    %445 = vrot.lane.b32.xlu0 %v443, 120
    %v446 = vpop.permute.xlu0 %445
    %v448 = vmul.f32 %v443, %v446
    %450 = vrot.lane.b32.xlu0 %v448, 124
    %v451 = vpop.permute.xlu0 %450
    %v453 = vmul.f32 %v448, %v451
    %455 = vrot.lane.b32.xlu0 %v453, 126
    %v456 = vpop.permute.xlu0 %455
    %v458 = vmul.f32 %v453, %v456
    %460 = vrot.lane.b32.xlu0 %v458, 127
    %v461 = vpop.permute.xlu0 %460
    %v463 = vmul.f32 %v458, %v461
    %v464 = vperm.slane %v63, 3
    %v465 = vmul.f32 %v67, %v464
    %v466 = vsub.f32 1.0, %v465
    %468 = vrot.lane.b32.xlu0 %v466, 96
    %v469 = vpop.permute.xlu0 %468
    %v471 = vmul.f32 %v466, %v469
    %473 = vrot.lane.b32.xlu0 %v471, 112
    %v474 = vpop.permute.xlu0 %473
    %v476 = vmul.f32 %v471, %v474
    %478 = vrot.lane.b32.xlu0 %v476, 120
    %v479 = vpop.permute.xlu0 %478
    %v481 = vmul.f32 %v476, %v479
    %483 = vrot.lane.b32.xlu0 %v481, 124
    %v484 = vpop.permute.xlu0 %483
    %v486 = vmul.f32 %v481, %v484
    %488 = vrot.lane.b32.xlu0 %v486, 126
    %v489 = vpop.permute.xlu0 %488
    %v491 = vmul.f32 %v486, %v489
    %493 = vrot.lane.b32.xlu0 %v491, 127
    %v494 = vpop.permute.xlu0 %493
    %v496 = vmul.f32 %v491, %v494
    %v497 = vperm.slane %v64, 3
    %v498 = vmul.f32 %v62, %v497
    %v499 = vsub.f32 1.0, %v498
    %501 = vrot.lane.b32.xlu0 %v499, 96
    %v502 = vpop.permute.xlu0 %501
    %v504 = vmul.f32 %v499, %v502
    %506 = vrot.lane.b32.xlu0 %v504, 112
    %v507 = vpop.permute.xlu0 %506
    %v509 = vmul.f32 %v504, %v507
    %511 = vrot.lane.b32.xlu0 %v509, 120
    %v512 = vpop.permute.xlu0 %511
    %v514 = vmul.f32 %v509, %v512
    %516 = vrot.lane.b32.xlu0 %v514, 124
    %v517 = vpop.permute.xlu0 %516
    %v519 = vmul.f32 %v514, %v517
    %521 = vrot.lane.b32.xlu0 %v519, 126
    %v522 = vpop.permute.xlu0 %521
    %v524 = vmul.f32 %v519, %v522
    %526 = vrot.lane.b32.xlu0 %v524, 127
    %v527 = vpop.permute.xlu0 %526
    %v529 = vmul.f32 %v524, %v527
    %v530 = vperm.slane %v65, 3
    %v531 = vmul.f32 %v67, %v530
    %v532 = vsub.f32 1.0, %v531
    %534 = vrot.lane.b32.xlu0 %v532, 96
    %v535 = vpop.permute.xlu0 %534
    %v537 = vmul.f32 %v532, %v535
    %539 = vrot.lane.b32.xlu0 %v537, 112
    %v540 = vpop.permute.xlu0 %539
    %v542 = vmul.f32 %v537, %v540
    %544 = vrot.lane.b32.xlu0 %v542, 120
    %v545 = vpop.permute.xlu0 %544
    %v547 = vmul.f32 %v542, %v545
    %549 = vrot.lane.b32.xlu0 %v547, 124
    %v550 = vpop.permute.xlu0 %549
    %v552 = vmul.f32 %v547, %v550
    %554 = vrot.lane.b32.xlu0 %v552, 126
    %v555 = vpop.permute.xlu0 %554
    %v557 = vmul.f32 %v552, %v555
    %559 = vrot.lane.b32.xlu0 %v557, 127
    %v560 = vpop.permute.xlu0 %559
    %v562 = vmul.f32 %v557, %v560
    %v563 = vperm.slane %v66, 3
    %v564 = vmul.f32 %v62, %v563
    %v565 = vsub.f32 1.0, %v564
    %567 = vrot.lane.b32.xlu0 %v565, 96
    %v568 = vpop.permute.xlu0 %567
    %v570 = vmul.f32 %v565, %v568
    %572 = vrot.lane.b32.xlu0 %v570, 112
    %v573 = vpop.permute.xlu0 %572
    %v575 = vmul.f32 %v570, %v573
    %577 = vrot.lane.b32.xlu0 %v575, 120
    %v578 = vpop.permute.xlu0 %577
    %v580 = vmul.f32 %v575, %v578
    %582 = vrot.lane.b32.xlu0 %v580, 124
    %v583 = vpop.permute.xlu0 %582
    %v585 = vmul.f32 %v580, %v583
    %587 = vrot.lane.b32.xlu0 %v585, 126
    %v588 = vpop.permute.xlu0 %587
    %v590 = vmul.f32 %v585, %v588
    %592 = vrot.lane.b32.xlu0 %v590, 127
    %v593 = vpop.permute.xlu0 %592
    %v595 = vmul.f32 %v590, %v593
    %v596 = vsub.f32 1.0, %v133
    %v597 = vsub.f32 1.0, %v265
    %v598 = vsub.f32 1.0, %v397
    %v599 = vsub.f32 1.0, %v529
    %601 = vrot.lane.b32.xlu0 %v232, 1
    %v602 = vpop.permute.xlu0 %601
    %605 = vrot.lane.b32.xlu0 %v364, 2
    %v606 = vpop.permute.xlu0 %605
    %609 = vrot.lane.b32.xlu0 %v496, 3
    %v610 = vpop.permute.xlu0 %609
    %613 = vrot.lane.b32.xlu0 %v596, 4
    %v614 = vpop.permute.xlu0 %613
    %617 = vrot.lane.b32.xlu0 %v597, 5
    %v618 = vpop.permute.xlu0 %617
    %621 = vrot.lane.b32.xlu0 %v598, 6
    %v622 = vpop.permute.xlu0 %621
    %625 = vrot.lane.b32.xlu0 %v599, 7
    %v626 = vpop.permute.xlu0 %625
    %vm628 = vcmask 7168
    %v629 = vsel %vm628, %v100, %v602
    %vm630 = vcmask 15360
    %v631 = vsel %vm630, %v629, %v606
    %v632 = vsel %vm57, %v631, %v610
    %vm633 = vcmask 31744
    %v634 = vsel %vm633, %v632, %v614
    %v635 = vsel %vm39, %v634, %v618
    %vm636 = vcmask 48128
    %v637 = vsel %vm636, %v635, %v622
    %vm638 = vcmask 56320
    %v639 = vsel %vm638, %v637, %v626
    %v640 = vsub.f32 1.0, %v199
    %v641 = vsub.f32 1.0, %v331
    %v642 = vsub.f32 1.0, %v463
    %v643 = vsub.f32 1.0, %v595
    %645 = vrot.lane.b32.xlu0 %v298, 1
    %v646 = vpop.permute.xlu0 %645
    %649 = vrot.lane.b32.xlu0 %v430, 2
    %v650 = vpop.permute.xlu0 %649
    %653 = vrot.lane.b32.xlu0 %v562, 3
    %v654 = vpop.permute.xlu0 %653
    %657 = vrot.lane.b32.xlu0 %v640, 4
    %v658 = vpop.permute.xlu0 %657
    %661 = vrot.lane.b32.xlu0 %v641, 5
    %v662 = vpop.permute.xlu0 %661
    %665 = vrot.lane.b32.xlu0 %v642, 6
    %v666 = vpop.permute.xlu0 %665
    %669 = vrot.lane.b32.xlu0 %v643, 7
    %v670 = vpop.permute.xlu0 %669
    %v672 = vsel %vm628, %v166, %v646
    %v673 = vsel %vm630, %v672, %v650
    %v674 = vsel %vm57, %v673, %v654
    %v675 = vsel %vm633, %v674, %v658
    %v676 = vsel %vm39, %v675, %v662
    %v677 = vsel %vm636, %v676, %v666
    %v678 = vsel %vm638, %v677, %v670
    %v679 = vld [vmem:[#allocation2 + $0x28] sm:$0x7]
    %v680 = vld [vmem:[#allocation2 + $0x30] sm:$0x7]
    %v681 = vld [vmem:[#allocation2 + $0x38] sm:$0x7]
    %v682 = vld [vmem:[#allocation2 + $0x40] sm:$0x7]
    %v683 = vsub.f32 1.0, %v639
    %v684 = vsub.f32 1.0, %v678
    %v685 = vperm.slane %v679, 0
    %v686 = vmul.f32 %v683, %v685
    %v687 = vsub.f32 1.0, %v686
    %689 = vrot.lane.b32.xlu0 %v687, 124
    %v690 = vpop.permute.xlu0 %689
    %v692 = vmul.f32 %v687, %v690
    %694 = vrot.lane.b32.xlu0 %v692, 126
    %v695 = vpop.permute.xlu0 %694
    %v697 = vmul.f32 %v692, %v695
    %699 = vrot.lane.b32.xlu0 %v697, 127
    %v700 = vpop.permute.xlu0 %699
    %v702 = vmul.f32 %v697, %v700
    %v703 = vperm.slane %v680, 0
    %v704 = vmul.f32 %v639, %v703
    %v705 = vsub.f32 1.0, %v704
    %707 = vrot.lane.b32.xlu0 %v705, 124
    %v708 = vpop.permute.xlu0 %707
    %v710 = vmul.f32 %v705, %v708
    %712 = vrot.lane.b32.xlu0 %v710, 126
    %v713 = vpop.permute.xlu0 %712
    %v715 = vmul.f32 %v710, %v713
    %717 = vrot.lane.b32.xlu0 %v715, 127
    %v718 = vpop.permute.xlu0 %717
    %v720 = vmul.f32 %v715, %v718
    %v721 = vperm.slane %v681, 0
    %v722 = vmul.f32 %v684, %v721
    %v723 = vsub.f32 1.0, %v722
    %725 = vrot.lane.b32.xlu0 %v723, 124
    %v726 = vpop.permute.xlu0 %725
    %v728 = vmul.f32 %v723, %v726
    %730 = vrot.lane.b32.xlu0 %v728, 126
    %v731 = vpop.permute.xlu0 %730
    %v733 = vmul.f32 %v728, %v731
    %735 = vrot.lane.b32.xlu0 %v733, 127
    %v736 = vpop.permute.xlu0 %735
    %v738 = vmul.f32 %v733, %v736
    %v739 = vperm.slane %v682, 0
    %v740 = vmul.f32 %v678, %v739
    %v741 = vsub.f32 1.0, %v740
    %743 = vrot.lane.b32.xlu0 %v741, 124
    %v744 = vpop.permute.xlu0 %743
    %v746 = vmul.f32 %v741, %v744
    %748 = vrot.lane.b32.xlu0 %v746, 126
    %v749 = vpop.permute.xlu0 %748
    %v751 = vmul.f32 %v746, %v749
    %753 = vrot.lane.b32.xlu0 %v751, 127
    %v754 = vpop.permute.xlu0 %753
    %v756 = vmul.f32 %v751, %v754
    %v757 = vperm.slane %v679, 1
    %v758 = vmul.f32 %v683, %v757
    %v759 = vsub.f32 1.0, %v758
    %761 = vrot.lane.b32.xlu0 %v759, 124
    %v762 = vpop.permute.xlu0 %761
    %v764 = vmul.f32 %v759, %v762
    %766 = vrot.lane.b32.xlu0 %v764, 126
    %v767 = vpop.permute.xlu0 %766
    %v769 = vmul.f32 %v764, %v767
    %771 = vrot.lane.b32.xlu0 %v769, 127
    %v772 = vpop.permute.xlu0 %771
    %v774 = vmul.f32 %v769, %v772
    %v775 = vperm.slane %v680, 1
    %v776 = vmul.f32 %v639, %v775
    %v777 = vsub.f32 1.0, %v776
    %779 = vrot.lane.b32.xlu0 %v777, 124
    %v780 = vpop.permute.xlu0 %779
    %v782 = vmul.f32 %v777, %v780
    %784 = vrot.lane.b32.xlu0 %v782, 126
    %v785 = vpop.permute.xlu0 %784
    %v787 = vmul.f32 %v782, %v785
    %789 = vrot.lane.b32.xlu0 %v787, 127
    %v790 = vpop.permute.xlu0 %789
    %v792 = vmul.f32 %v787, %v790
    %v793 = vperm.slane %v681, 1
    %v794 = vmul.f32 %v684, %v793
    %v795 = vsub.f32 1.0, %v794
    %797 = vrot.lane.b32.xlu0 %v795, 124
    %v798 = vpop.permute.xlu0 %797
    %v800 = vmul.f32 %v795, %v798
    %802 = vrot.lane.b32.xlu0 %v800, 126
    %v803 = vpop.permute.xlu0 %802
    %v805 = vmul.f32 %v800, %v803
    %807 = vrot.lane.b32.xlu0 %v805, 127
    %v808 = vpop.permute.xlu0 %807
    %v810 = vmul.f32 %v805, %v808
    %v811 = vperm.slane %v682, 1
    %v812 = vmul.f32 %v678, %v811
    %v813 = vsub.f32 1.0, %v812
    %815 = vrot.lane.b32.xlu0 %v813, 124
    %v816 = vpop.permute.xlu0 %815
    %v818 = vmul.f32 %v813, %v816
    %820 = vrot.lane.b32.xlu0 %v818, 126
    %v821 = vpop.permute.xlu0 %820
    %v823 = vmul.f32 %v818, %v821
    %825 = vrot.lane.b32.xlu0 %v823, 127
    %v826 = vpop.permute.xlu0 %825
    %v828 = vmul.f32 %v823, %v826
    %v829 = vperm.slane %v679, 2
    %v830 = vmul.f32 %v683, %v829
    %v831 = vsub.f32 1.0, %v830
    %833 = vrot.lane.b32.xlu0 %v831, 124
    %v834 = vpop.permute.xlu0 %833
    %v836 = vmul.f32 %v831, %v834
    %838 = vrot.lane.b32.xlu0 %v836, 126
    %v839 = vpop.permute.xlu0 %838
    %v841 = vmul.f32 %v836, %v839
    %843 = vrot.lane.b32.xlu0 %v841, 127
    %v844 = vpop.permute.xlu0 %843
    %v846 = vmul.f32 %v841, %v844
    %v847 = vperm.slane %v680, 2
    %v848 = vmul.f32 %v639, %v847
    %v849 = vsub.f32 1.0, %v848
    %851 = vrot.lane.b32.xlu0 %v849, 124
    %v852 = vpop.permute.xlu0 %851
    %v854 = vmul.f32 %v849, %v852
    %856 = vrot.lane.b32.xlu0 %v854, 126
    %v857 = vpop.permute.xlu0 %856
    %v859 = vmul.f32 %v854, %v857
    %861 = vrot.lane.b32.xlu0 %v859, 127
    %v862 = vpop.permute.xlu0 %861
    %v864 = vmul.f32 %v859, %v862
    %v865 = vperm.slane %v681, 2
    %v866 = vmul.f32 %v684, %v865
    %v867 = vsub.f32 1.0, %v866
    %869 = vrot.lane.b32.xlu0 %v867, 124
    %v870 = vpop.permute.xlu0 %869
    %v872 = vmul.f32 %v867, %v870
    %874 = vrot.lane.b32.xlu0 %v872, 126
    %v875 = vpop.permute.xlu0 %874
    %v877 = vmul.f32 %v872, %v875
    %879 = vrot.lane.b32.xlu0 %v877, 127
    %v880 = vpop.permute.xlu0 %879
    %v882 = vmul.f32 %v877, %v880
    %v883 = vperm.slane %v682, 2
    %v884 = vmul.f32 %v678, %v883
    %v885 = vsub.f32 1.0, %v884
    %887 = vrot.lane.b32.xlu0 %v885, 124
    %v888 = vpop.permute.xlu0 %887
    %v890 = vmul.f32 %v885, %v888
    %892 = vrot.lane.b32.xlu0 %v890, 126
    %v893 = vpop.permute.xlu0 %892
    %v895 = vmul.f32 %v890, %v893
    %897 = vrot.lane.b32.xlu0 %v895, 127
    %v898 = vpop.permute.xlu0 %897
    %v900 = vmul.f32 %v895, %v898
    %v901 = vsub.f32 1.0, %v720
    %v902 = vsub.f32 1.0, %v792
    %v903 = vsub.f32 1.0, %v864
    %905 = vrot.lane.b32.xlu0 %v774, 1
    %v906 = vpop.permute.xlu0 %905
    %909 = vrot.lane.b32.xlu0 %v846, 2
    %v910 = vpop.permute.xlu0 %909
    %913 = vrot.lane.b32.xlu0 %v901, 3
    %v914 = vpop.permute.xlu0 %913
    %917 = vrot.lane.b32.xlu0 %v902, 4
    %v918 = vpop.permute.xlu0 %917
    %921 = vrot.lane.b32.xlu0 %v903, 5
    %v922 = vpop.permute.xlu0 %921
    %v924 = vsel %vm628, %v702, %v906
    %v925 = vsel %vm630, %v924, %v910
    %v926 = vsel %vm57, %v925, %v914
    %v927 = vsel %vm633, %v926, %v918
    %v928 = vsel %vm39, %v927, %v922
    %v929 = vsub.f32 1.0, %v756
    %v930 = vsub.f32 1.0, %v828
    %v931 = vsub.f32 1.0, %v900
    %933 = vrot.lane.b32.xlu0 %v810, 1
    %v934 = vpop.permute.xlu0 %933
    %937 = vrot.lane.b32.xlu0 %v882, 2
    %v938 = vpop.permute.xlu0 %937
    %941 = vrot.lane.b32.xlu0 %v929, 3
    %v942 = vpop.permute.xlu0 %941
    %945 = vrot.lane.b32.xlu0 %v930, 4
    %v946 = vpop.permute.xlu0 %945
    %949 = vrot.lane.b32.xlu0 %v931, 5
    %v950 = vpop.permute.xlu0 %949
    %v952 = vsel %vm628, %v738, %v934
    %v953 = vsel %vm630, %v952, %v938
    %v954 = vsel %vm57, %v953, %v942
    %v955 = vsel %vm633, %v954, %v946
    %v956 = vsel %vm39, %v955, %v950
    %v957 = vsel %vm636, %v928, 0.0
    %v958 = vsel %vm636, %v956, 0.0
    %v959 = vld [vmem:[#allocation2 + $0x48] sm:$0x3]
    %v960 = vld [vmem:[#allocation2 + $0x50] sm:$0x3]
    %v961 = vld [vmem:[#allocation2 + $0x58] sm:$0x3]
    %v962 = vld [vmem:[#allocation2 + $0x60] sm:$0x3]
    %v963 = vsub.f32 1.0, %v957
    %v964 = vsub.f32 1.0, %v958
    %v965 = vperm.slane %v959, 0
    %v966 = vmul.f32 %v963, %v965
    %v967 = vsub.f32 1.0, %v966
    %969 = vrot.lane.b32.xlu0 %v967, 124
    %v970 = vpop.permute.xlu0 %969
    %v972 = vmul.f32 %v967, %v970
    %974 = vrot.lane.b32.xlu0 %v972, 126
    %v975 = vpop.permute.xlu0 %974
    %v977 = vmul.f32 %v972, %v975
    %979 = vrot.lane.b32.xlu0 %v977, 127
    %v980 = vpop.permute.xlu0 %979
    %v982 = vmul.f32 %v977, %v980
    %v983 = vperm.slane %v960, 0
    %v984 = vmul.f32 %v957, %v983
    %v985 = vsub.f32 1.0, %v984
    %987 = vrot.lane.b32.xlu0 %v985, 124
    %v988 = vpop.permute.xlu0 %987
    %v990 = vmul.f32 %v985, %v988
    %992 = vrot.lane.b32.xlu0 %v990, 126
    %v993 = vpop.permute.xlu0 %992
    %v995 = vmul.f32 %v990, %v993
    %997 = vrot.lane.b32.xlu0 %v995, 127
    %v998 = vpop.permute.xlu0 %997
    %v1000 = vmul.f32 %v995, %v998
    %v1001 = vperm.slane %v961, 0
    %v1002 = vmul.f32 %v964, %v1001
    %v1003 = vsub.f32 1.0, %v1002
    %1005 = vrot.lane.b32.xlu0 %v1003, 124
    %v1006 = vpop.permute.xlu0 %1005
    %v1008 = vmul.f32 %v1003, %v1006
    %1010 = vrot.lane.b32.xlu0 %v1008, 126
    %v1011 = vpop.permute.xlu0 %1010
    %v1013 = vmul.f32 %v1008, %v1011
    %1015 = vrot.lane.b32.xlu0 %v1013, 127
    %v1016 = vpop.permute.xlu0 %1015
    %v1018 = vmul.f32 %v1013, %v1016
    %v1019 = vperm.slane %v962, 0
    %v1020 = vmul.f32 %v958, %v1019
    %v1021 = vsub.f32 1.0, %v1020
    %1023 = vrot.lane.b32.xlu0 %v1021, 124
    %v1024 = vpop.permute.xlu0 %1023
    %v1026 = vmul.f32 %v1021, %v1024
    %1028 = vrot.lane.b32.xlu0 %v1026, 126
    %v1029 = vpop.permute.xlu0 %1028
    %v1031 = vmul.f32 %v1026, %v1029
    %1033 = vrot.lane.b32.xlu0 %v1031, 127
    %v1034 = vpop.permute.xlu0 %1033
    %v1036 = vmul.f32 %v1031, %v1034
    %v1037 = vperm.slane %v959, 1
    %v1038 = vmul.f32 %v963, %v1037
    %v1039 = vsub.f32 1.0, %v1038
    %1041 = vrot.lane.b32.xlu0 %v1039, 124
    %v1042 = vpop.permute.xlu0 %1041
    %v1044 = vmul.f32 %v1039, %v1042
    %1046 = vrot.lane.b32.xlu0 %v1044, 126
    %v1047 = vpop.permute.xlu0 %1046
    %v1049 = vmul.f32 %v1044, %v1047
    %1051 = vrot.lane.b32.xlu0 %v1049, 127
    %v1052 = vpop.permute.xlu0 %1051
    %v1054 = vmul.f32 %v1049, %v1052
    %v1055 = vperm.slane %v960, 1
    %v1056 = vmul.f32 %v957, %v1055
    %v1057 = vsub.f32 1.0, %v1056
    %1059 = vrot.lane.b32.xlu0 %v1057, 124
    %v1060 = vpop.permute.xlu0 %1059
    %v1062 = vmul.f32 %v1057, %v1060
    %1064 = vrot.lane.b32.xlu0 %v1062, 126
    %v1065 = vpop.permute.xlu0 %1064
    %v1067 = vmul.f32 %v1062, %v1065
    %1069 = vrot.lane.b32.xlu0 %v1067, 127
    %v1070 = vpop.permute.xlu0 %1069
    %v1072 = vmul.f32 %v1067, %v1070
    %v1073 = vperm.slane %v961, 1
    %v1074 = vmul.f32 %v964, %v1073
    %v1075 = vsub.f32 1.0, %v1074
    %1077 = vrot.lane.b32.xlu0 %v1075, 124
    %v1078 = vpop.permute.xlu0 %1077
    %v1080 = vmul.f32 %v1075, %v1078
    %1082 = vrot.lane.b32.xlu0 %v1080, 126
    %v1083 = vpop.permute.xlu0 %1082
    %v1085 = vmul.f32 %v1080, %v1083
    %1087 = vrot.lane.b32.xlu0 %v1085, 127
    %v1088 = vpop.permute.xlu0 %1087
    %v1090 = vmul.f32 %v1085, %v1088
    %v1091 = vperm.slane %v962, 1
    %v1092 = vmul.f32 %v958, %v1091
    %v1093 = vsub.f32 1.0, %v1092
    %1095 = vrot.lane.b32.xlu0 %v1093, 124
    %v1096 = vpop.permute.xlu0 %1095
    %v1098 = vmul.f32 %v1093, %v1096
    %1100 = vrot.lane.b32.xlu0 %v1098, 126
    %v1101 = vpop.permute.xlu0 %1100
    %v1103 = vmul.f32 %v1098, %v1101
    %1105 = vrot.lane.b32.xlu0 %v1103, 127
    %v1106 = vpop.permute.xlu0 %1105
    %v1108 = vmul.f32 %v1103, %v1106
    %v1109 = vld [vmem:[#allocation2 + $0x68] sm:$0x3]
    %v1110 = vld [vmem:[#allocation2 + $0x70] sm:$0x3]
    %v1111 = vld [vmem:[#allocation2 + $0x78] sm:$0x3]
    %v1112 = vld [vmem:[#allocation2 + $0x80] sm:$0x3]
    %v1113 = vperm.slane %v1109, 0
    %v1114 = vmul.f32 %v683, %v1113
    %v1115 = vsub.f32 1.0, %v1114
    %1117 = vrot.lane.b32.xlu0 %v1115, 124
    %v1118 = vpop.permute.xlu0 %1117
    %v1120 = vmul.f32 %v1115, %v1118
    %1122 = vrot.lane.b32.xlu0 %v1120, 126
    %v1123 = vpop.permute.xlu0 %1122
    %v1125 = vmul.f32 %v1120, %v1123
    %1127 = vrot.lane.b32.xlu0 %v1125, 127
    %v1128 = vpop.permute.xlu0 %1127
    %v1130 = vmul.f32 %v1125, %v1128
    %v1131 = vperm.slane %v1110, 0
    %v1132 = vmul.f32 %v639, %v1131
    %v1133 = vsub.f32 1.0, %v1132
    %1135 = vrot.lane.b32.xlu0 %v1133, 124
    %v1136 = vpop.permute.xlu0 %1135
    %v1138 = vmul.f32 %v1133, %v1136
    %1140 = vrot.lane.b32.xlu0 %v1138, 126
    %v1141 = vpop.permute.xlu0 %1140
    %v1143 = vmul.f32 %v1138, %v1141
    %1145 = vrot.lane.b32.xlu0 %v1143, 127
    %v1146 = vpop.permute.xlu0 %1145
    %v1148 = vmul.f32 %v1143, %v1146
    %v1149 = vperm.slane %v1111, 0
    %v1150 = vmul.f32 %v684, %v1149
    %v1151 = vsub.f32 1.0, %v1150
    %1153 = vrot.lane.b32.xlu0 %v1151, 124
    %v1154 = vpop.permute.xlu0 %1153
    %v1156 = vmul.f32 %v1151, %v1154
    %1158 = vrot.lane.b32.xlu0 %v1156, 126
    %v1159 = vpop.permute.xlu0 %1158
    %v1161 = vmul.f32 %v1156, %v1159
    %1163 = vrot.lane.b32.xlu0 %v1161, 127
    %v1164 = vpop.permute.xlu0 %1163
    %v1166 = vmul.f32 %v1161, %v1164
    %v1167 = vperm.slane %v1112, 0
    %v1168 = vmul.f32 %v678, %v1167
    %v1169 = vsub.f32 1.0, %v1168
    %1171 = vrot.lane.b32.xlu0 %v1169, 124
    %v1172 = vpop.permute.xlu0 %1171
    %v1174 = vmul.f32 %v1169, %v1172
    %1176 = vrot.lane.b32.xlu0 %v1174, 126
    %v1177 = vpop.permute.xlu0 %1176
    %v1179 = vmul.f32 %v1174, %v1177
    %1181 = vrot.lane.b32.xlu0 %v1179, 127
    %v1182 = vpop.permute.xlu0 %1181
    %v1184 = vmul.f32 %v1179, %v1182
    %v1185 = vmul.f32 %v982, %v1130
    %v1186 = vmul.f32 %v1000, %v1148
    %v1187 = vmul.f32 %v1018, %v1166
    %v1188 = vmul.f32 %v1036, %v1184
    %v1189 = vperm.slane %v1109, 1
    %v1190 = vmul.f32 %v683, %v1189
    %v1191 = vsub.f32 1.0, %v1190
    %1193 = vrot.lane.b32.xlu0 %v1191, 124
    %v1194 = vpop.permute.xlu0 %1193
    %v1196 = vmul.f32 %v1191, %v1194
    %1198 = vrot.lane.b32.xlu0 %v1196, 126
    %v1199 = vpop.permute.xlu0 %1198
    %v1201 = vmul.f32 %v1196, %v1199
    %1203 = vrot.lane.b32.xlu0 %v1201, 127
    %v1204 = vpop.permute.xlu0 %1203
    %v1206 = vmul.f32 %v1201, %v1204
    %v1207 = vperm.slane %v1110, 1
    %v1208 = vmul.f32 %v639, %v1207
    %v1209 = vsub.f32 1.0, %v1208
    %1211 = vrot.lane.b32.xlu0 %v1209, 124
    %v1212 = vpop.permute.xlu0 %1211
    %v1214 = vmul.f32 %v1209, %v1212
    %1216 = vrot.lane.b32.xlu0 %v1214, 126
    %v1217 = vpop.permute.xlu0 %1216
    %v1219 = vmul.f32 %v1214, %v1217
    %1221 = vrot.lane.b32.xlu0 %v1219, 127
    %v1222 = vpop.permute.xlu0 %1221
    %v1224 = vmul.f32 %v1219, %v1222
    %v1225 = vperm.slane %v1111, 1
    %v1226 = vmul.f32 %v684, %v1225
    %v1227 = vsub.f32 1.0, %v1226
    %1229 = vrot.lane.b32.xlu0 %v1227, 124
    %v1230 = vpop.permute.xlu0 %1229
    %v1232 = vmul.f32 %v1227, %v1230
    %1234 = vrot.lane.b32.xlu0 %v1232, 126
    %v1235 = vpop.permute.xlu0 %1234
    %v1237 = vmul.f32 %v1232, %v1235
    %1239 = vrot.lane.b32.xlu0 %v1237, 127
    %v1240 = vpop.permute.xlu0 %1239
    %v1242 = vmul.f32 %v1237, %v1240
    %v1243 = vperm.slane %v1112, 1
    %v1244 = vmul.f32 %v678, %v1243
    %v1245 = vsub.f32 1.0, %v1244
    %1247 = vrot.lane.b32.xlu0 %v1245, 124
    %v1248 = vpop.permute.xlu0 %1247
    %v1250 = vmul.f32 %v1245, %v1248
    %1252 = vrot.lane.b32.xlu0 %v1250, 126
    %v1253 = vpop.permute.xlu0 %1252
    %v1255 = vmul.f32 %v1250, %v1253
    %1257 = vrot.lane.b32.xlu0 %v1255, 127
    %v1258 = vpop.permute.xlu0 %1257
    %v1260 = vmul.f32 %v1255, %v1258
    %v1261 = vmul.f32 %v1054, %v1206
    %v1262 = vmul.f32 %v1072, %v1224
    %v1263 = vmul.f32 %v1090, %v1242
    %v1264 = vmul.f32 %v1108, %v1260
    %v1265 = vsub.f32 1.0, %v1186
    %v1266 = vsub.f32 1.0, %v1262
    %1268 = vrot.lane.b32.xlu0 %v1261, 1
    %v1269 = vpop.permute.xlu0 %1268
    %1272 = vrot.lane.b32.xlu0 %v1265, 2
    %v1273 = vpop.permute.xlu0 %1272
    %1276 = vrot.lane.b32.xlu0 %v1266, 3
    %v1277 = vpop.permute.xlu0 %1276
    %v1279 = vsel %vm628, %v1185, %v1269
    %v1280 = vsel %vm630, %v1279, %v1273
    %v1281 = vsel %vm57, %v1280, %v1277
    %v1282 = vsub.f32 1.0, %v1188
    %v1283 = vsub.f32 1.0, %v1264
    %1285 = vrot.lane.b32.xlu0 %v1263, 1
    %v1286 = vpop.permute.xlu0 %1285
    %1289 = vrot.lane.b32.xlu0 %v1282, 2
    %v1290 = vpop.permute.xlu0 %1289
    %1293 = vrot.lane.b32.xlu0 %v1283, 3
    %v1294 = vpop.permute.xlu0 %1293
    %v1296 = vsel %vm628, %v1187, %v1286
    %v1297 = vsel %vm630, %v1296, %v1290
    %v1298 = vsel %vm57, %v1297, %v1294
    %v1299 = vld [vmem:[#allocation2 + $0x88] sm:$0x1]
    %1300 = vrot.lane.b32.xlu0 %v27, 116
    %v1301 = vpop.permute.xlu0 %1300
    %1303 = vrot.lane.b32.xlu0 %v27, 120
    %v1304 = vpop.permute.xlu0 %1303
    %1306 = vrot.lane.b32.xlu0 %v27, 124
    %v1307 = vpop.permute.xlu0 %1306
    %v1309 = vsel %vm633, %v1301, %v1304
    %vm1310 = vcmask 64512
    %v1311 = vsel %vm1310, %v1309, %v1307
    %v1312 = vperm.slane %v1299, 0
    %v1313 = vsub.f32 %v1311, %v1312
    %vm1314 = vcmp.gt.f32.partialorder %v1313, 0.0
    %v1315 = vsel %vm1314, 1, 0
    %v1316 = vcvt.s32.f32 %v1315
    %v1317 = vsub.f32 1.0, %v1316
    %1319 = vrot.lane.b32.xlu0 %v1316, 4
    %v1320 = vpop.permute.xlu0 %1319
    %1323 = vrot.lane.b32.xlu0 %v1317, 16
    %v1324 = vpop.permute.xlu0 %1323
    %v1326 = vsel %vm633, %v1304, %v1320
    %vm1327 = vcmask 130048
    %v1328 = vsel %vm1327, %v1326, %v1324
    %vm1329 = vcmask 228352
    %v1330 = vsel %vm1329, %v1328, 0.0
    %v1331 = vld [vmem:[#allocation2 + $0x90] sm:$0xf]
    %v1332 = vld [vmem:[#allocation2 + $0x98] sm:$0xf]
    %v1333 = vld [vmem:[#allocation2 + $0xa0] sm:$0xf]
    %v1334 = vld [vmem:[#allocation2 + $0xa8] sm:$0xf]
    %v1335 = vsub.f32 1.0, %v1330
    %v1336 = vperm.slane %v1331, 0
    %v1337 = vmul.f32 %v1335, %v1336
    %v1338 = vsub.f32 1.0, %v1337
    %1340 = vrot.lane.b32.xlu0 %v1338, 112
    %v1341 = vpop.permute.xlu0 %1340
    %v1343 = vmul.f32 %v1338, %v1341
    %1345 = vrot.lane.b32.xlu0 %v1343, 120
    %v1346 = vpop.permute.xlu0 %1345
    %v1348 = vmul.f32 %v1343, %v1346
    %1350 = vrot.lane.b32.xlu0 %v1348, 124
    %v1351 = vpop.permute.xlu0 %1350
    %v1353 = vmul.f32 %v1348, %v1351
    %1355 = vrot.lane.b32.xlu0 %v1353, 126
    %v1356 = vpop.permute.xlu0 %1355
    %v1358 = vmul.f32 %v1353, %v1356
    %1360 = vrot.lane.b32.xlu0 %v1358, 127
    %v1361 = vpop.permute.xlu0 %1360
    %v1363 = vmul.f32 %v1358, %v1361
    %v1364 = vperm.slane %v1332, 0
    %v1365 = vmul.f32 %v1330, %v1364
    %v1366 = vsub.f32 1.0, %v1365
    %1368 = vrot.lane.b32.xlu0 %v1366, 112
    %v1369 = vpop.permute.xlu0 %1368
    %v1371 = vmul.f32 %v1366, %v1369
    %1373 = vrot.lane.b32.xlu0 %v1371, 120
    %v1374 = vpop.permute.xlu0 %1373
    %v1376 = vmul.f32 %v1371, %v1374
    %1378 = vrot.lane.b32.xlu0 %v1376, 124
    %v1379 = vpop.permute.xlu0 %1378
    %v1381 = vmul.f32 %v1376, %v1379
    %1383 = vrot.lane.b32.xlu0 %v1381, 126
    %v1384 = vpop.permute.xlu0 %1383
    %v1386 = vmul.f32 %v1381, %v1384
    %1388 = vrot.lane.b32.xlu0 %v1386, 127
    %v1389 = vpop.permute.xlu0 %1388
    %v1391 = vmul.f32 %v1386, %v1389
    %v1392 = vperm.slane %v1333, 0
    %v1393 = vmul.f32 %v1335, %v1392
    %v1394 = vsub.f32 1.0, %v1393
    %1396 = vrot.lane.b32.xlu0 %v1394, 112
    %v1397 = vpop.permute.xlu0 %1396
    %v1399 = vmul.f32 %v1394, %v1397
    %1401 = vrot.lane.b32.xlu0 %v1399, 120
    %v1402 = vpop.permute.xlu0 %1401
    %v1404 = vmul.f32 %v1399, %v1402
    %1406 = vrot.lane.b32.xlu0 %v1404, 124
    %v1407 = vpop.permute.xlu0 %1406
    %v1409 = vmul.f32 %v1404, %v1407
    %1411 = vrot.lane.b32.xlu0 %v1409, 126
    %v1412 = vpop.permute.xlu0 %1411
    %v1414 = vmul.f32 %v1409, %v1412
    %1416 = vrot.lane.b32.xlu0 %v1414, 127
    %v1417 = vpop.permute.xlu0 %1416
    %v1419 = vmul.f32 %v1414, %v1417
    %v1420 = vperm.slane %v1334, 0
    %v1421 = vmul.f32 %v1330, %v1420
    %v1422 = vsub.f32 1.0, %v1421
    %1424 = vrot.lane.b32.xlu0 %v1422, 112
    %v1425 = vpop.permute.xlu0 %1424
    %v1427 = vmul.f32 %v1422, %v1425
    %1429 = vrot.lane.b32.xlu0 %v1427, 120
    %v1430 = vpop.permute.xlu0 %1429
    %v1432 = vmul.f32 %v1427, %v1430
    %1434 = vrot.lane.b32.xlu0 %v1432, 124
    %v1435 = vpop.permute.xlu0 %1434
    %v1437 = vmul.f32 %v1432, %v1435
    %1439 = vrot.lane.b32.xlu0 %v1437, 126
    %v1440 = vpop.permute.xlu0 %1439
    %v1442 = vmul.f32 %v1437, %v1440
    %1444 = vrot.lane.b32.xlu0 %v1442, 127
    %v1445 = vpop.permute.xlu0 %1444
    %v1447 = vmul.f32 %v1442, %v1445
    %v1448 = vperm.slane %v1331, 1
    %v1449 = vmul.f32 %v1335, %v1448
    %v1450 = vsub.f32 1.0, %v1449
    %1452 = vrot.lane.b32.xlu0 %v1450, 112
    %v1453 = vpop.permute.xlu0 %1452
    %v1455 = vmul.f32 %v1450, %v1453
    %1457 = vrot.lane.b32.xlu0 %v1455, 120
    %v1458 = vpop.permute.xlu0 %1457
    %v1460 = vmul.f32 %v1455, %v1458
    %1462 = vrot.lane.b32.xlu0 %v1460, 124
    %v1463 = vpop.permute.xlu0 %1462
    %v1465 = vmul.f32 %v1460, %v1463
    %1467 = vrot.lane.b32.xlu0 %v1465, 126
    %v1468 = vpop.permute.xlu0 %1467
    %v1470 = vmul.f32 %v1465, %v1468
    %1472 = vrot.lane.b32.xlu0 %v1470, 127
    %v1473 = vpop.permute.xlu0 %1472
    %v1475 = vmul.f32 %v1470, %v1473
    %v1476 = vperm.slane %v1332, 1
    %v1477 = vmul.f32 %v1330, %v1476
    %v1478 = vsub.f32 1.0, %v1477
    %1480 = vrot.lane.b32.xlu0 %v1478, 112
    %v1481 = vpop.permute.xlu0 %1480
    %v1483 = vmul.f32 %v1478, %v1481
    %1485 = vrot.lane.b32.xlu0 %v1483, 120
    %v1486 = vpop.permute.xlu0 %1485
    %v1488 = vmul.f32 %v1483, %v1486
    %1490 = vrot.lane.b32.xlu0 %v1488, 124
    %v1491 = vpop.permute.xlu0 %1490
    %v1493 = vmul.f32 %v1488, %v1491
    %1495 = vrot.lane.b32.xlu0 %v1493, 126
    %v1496 = vpop.permute.xlu0 %1495
    %v1498 = vmul.f32 %v1493, %v1496
    %1500 = vrot.lane.b32.xlu0 %v1498, 127
    %v1501 = vpop.permute.xlu0 %1500
    %v1503 = vmul.f32 %v1498, %v1501
    %v1504 = vperm.slane %v1333, 1
    %v1505 = vmul.f32 %v1335, %v1504
    %v1506 = vsub.f32 1.0, %v1505
    %1508 = vrot.lane.b32.xlu0 %v1506, 112
    %v1509 = vpop.permute.xlu0 %1508
    %v1511 = vmul.f32 %v1506, %v1509
    %1513 = vrot.lane.b32.xlu0 %v1511, 120
    %v1514 = vpop.permute.xlu0 %1513
    %v1516 = vmul.f32 %v1511, %v1514
    %1518 = vrot.lane.b32.xlu0 %v1516, 124
    %v1519 = vpop.permute.xlu0 %1518
    %v1521 = vmul.f32 %v1516, %v1519
    %1523 = vrot.lane.b32.xlu0 %v1521, 126
    %v1524 = vpop.permute.xlu0 %1523
    %v1526 = vmul.f32 %v1521, %v1524
    %1528 = vrot.lane.b32.xlu0 %v1526, 127
    %v1529 = vpop.permute.xlu0 %1528
    %v1531 = vmul.f32 %v1526, %v1529
    %v1532 = vperm.slane %v1334, 1
    %v1533 = vmul.f32 %v1330, %v1532
    %v1534 = vsub.f32 1.0, %v1533
    %1536 = vrot.lane.b32.xlu0 %v1534, 112
    %v1537 = vpop.permute.xlu0 %1536
    %v1539 = vmul.f32 %v1534, %v1537
    %1541 = vrot.lane.b32.xlu0 %v1539, 120
    %v1542 = vpop.permute.xlu0 %1541
    %v1544 = vmul.f32 %v1539, %v1542
    %1546 = vrot.lane.b32.xlu0 %v1544, 124
    %v1547 = vpop.permute.xlu0 %1546
    %v1549 = vmul.f32 %v1544, %v1547
    %1551 = vrot.lane.b32.xlu0 %v1549, 126
    %v1552 = vpop.permute.xlu0 %1551
    %v1554 = vmul.f32 %v1549, %v1552
    %1556 = vrot.lane.b32.xlu0 %v1554, 127
    %v1557 = vpop.permute.xlu0 %1556
    %v1559 = vmul.f32 %v1554, %v1557
    %v1560 = vperm.slane %v1331, 2
    %v1561 = vmul.f32 %v1335, %v1560
    %v1562 = vsub.f32 1.0, %v1561
    %1564 = vrot.lane.b32.xlu0 %v1562, 112
    %v1565 = vpop.permute.xlu0 %1564
    %v1567 = vmul.f32 %v1562, %v1565
    %1569 = vrot.lane.b32.xlu0 %v1567, 120
    %v1570 = vpop.permute.xlu0 %1569
    %v1572 = vmul.f32 %v1567, %v1570
    %1574 = vrot.lane.b32.xlu0 %v1572, 124
    %v1575 = vpop.permute.xlu0 %1574
    %v1577 = vmul.f32 %v1572, %v1575
    %1579 = vrot.lane.b32.xlu0 %v1577, 126
    %v1580 = vpop.permute.xlu0 %1579
    %v1582 = vmul.f32 %v1577, %v1580
    %1584 = vrot.lane.b32.xlu0 %v1582, 127
    %v1585 = vpop.permute.xlu0 %1584
    %v1587 = vmul.f32 %v1582, %v1585
    %v1588 = vperm.slane %v1332, 2
    %v1589 = vmul.f32 %v1330, %v1588
    %v1590 = vsub.f32 1.0, %v1589
    %1592 = vrot.lane.b32.xlu0 %v1590, 112
    %v1593 = vpop.permute.xlu0 %1592
    %v1595 = vmul.f32 %v1590, %v1593
    %1597 = vrot.lane.b32.xlu0 %v1595, 120
    %v1598 = vpop.permute.xlu0 %1597
    %v1600 = vmul.f32 %v1595, %v1598
    %1602 = vrot.lane.b32.xlu0 %v1600, 124
    %v1603 = vpop.permute.xlu0 %1602
    %v1605 = vmul.f32 %v1600, %v1603
    %1607 = vrot.lane.b32.xlu0 %v1605, 126
    %v1608 = vpop.permute.xlu0 %1607
    %v1610 = vmul.f32 %v1605, %v1608
    %1612 = vrot.lane.b32.xlu0 %v1610, 127
    %v1613 = vpop.permute.xlu0 %1612
    %v1615 = vmul.f32 %v1610, %v1613
    %v1616 = vperm.slane %v1333, 2
    %v1617 = vmul.f32 %v1335, %v1616
    %v1618 = vsub.f32 1.0, %v1617
    %1620 = vrot.lane.b32.xlu0 %v1618, 112
    %v1621 = vpop.permute.xlu0 %1620
    %v1623 = vmul.f32 %v1618, %v1621
    %1625 = vrot.lane.b32.xlu0 %v1623, 120
    %v1626 = vpop.permute.xlu0 %1625
    %v1628 = vmul.f32 %v1623, %v1626
    %1630 = vrot.lane.b32.xlu0 %v1628, 124
    %v1631 = vpop.permute.xlu0 %1630
    %v1633 = vmul.f32 %v1628, %v1631
    %1635 = vrot.lane.b32.xlu0 %v1633, 126
    %v1636 = vpop.permute.xlu0 %1635
    %v1638 = vmul.f32 %v1633, %v1636
    %1640 = vrot.lane.b32.xlu0 %v1638, 127
    %v1641 = vpop.permute.xlu0 %1640
    %v1643 = vmul.f32 %v1638, %v1641
    %v1644 = vperm.slane %v1334, 2
    %v1645 = vmul.f32 %v1330, %v1644
    %v1646 = vsub.f32 1.0, %v1645
    %1648 = vrot.lane.b32.xlu0 %v1646, 112
    %v1649 = vpop.permute.xlu0 %1648
    %v1651 = vmul.f32 %v1646, %v1649
    %1653 = vrot.lane.b32.xlu0 %v1651, 120
    %v1654 = vpop.permute.xlu0 %1653
    %v1656 = vmul.f32 %v1651, %v1654
    %1658 = vrot.lane.b32.xlu0 %v1656, 124
    %v1659 = vpop.permute.xlu0 %1658
    %v1661 = vmul.f32 %v1656, %v1659
    %1663 = vrot.lane.b32.xlu0 %v1661, 126
    %v1664 = vpop.permute.xlu0 %1663
    %v1666 = vmul.f32 %v1661, %v1664
    %1668 = vrot.lane.b32.xlu0 %v1666, 127
    %v1669 = vpop.permute.xlu0 %1668
    %v1671 = vmul.f32 %v1666, %v1669
    %v1672 = vperm.slane %v1331, 3
    %v1673 = vmul.f32 %v1335, %v1672
    %v1674 = vsub.f32 1.0, %v1673
    %1676 = vrot.lane.b32.xlu0 %v1674, 112
    %v1677 = vpop.permute.xlu0 %1676
    %v1679 = vmul.f32 %v1674, %v1677
    %1681 = vrot.lane.b32.xlu0 %v1679, 120
    %v1682 = vpop.permute.xlu0 %1681
    %v1684 = vmul.f32 %v1679, %v1682
    %1686 = vrot.lane.b32.xlu0 %v1684, 124
    %v1687 = vpop.permute.xlu0 %1686
    %v1689 = vmul.f32 %v1684, %v1687
    %1691 = vrot.lane.b32.xlu0 %v1689, 126
    %v1692 = vpop.permute.xlu0 %1691
    %v1694 = vmul.f32 %v1689, %v1692
    %1696 = vrot.lane.b32.xlu0 %v1694, 127
    %v1697 = vpop.permute.xlu0 %1696
    %v1699 = vmul.f32 %v1694, %v1697
    %v1700 = vperm.slane %v1332, 3
    %v1701 = vmul.f32 %v1330, %v1700
    %v1702 = vsub.f32 1.0, %v1701
    %1704 = vrot.lane.b32.xlu0 %v1702, 112
    %v1705 = vpop.permute.xlu0 %1704
    %v1707 = vmul.f32 %v1702, %v1705
    %1709 = vrot.lane.b32.xlu0 %v1707, 120
    %v1710 = vpop.permute.xlu0 %1709
    %v1712 = vmul.f32 %v1707, %v1710
    %1714 = vrot.lane.b32.xlu0 %v1712, 124
    %v1715 = vpop.permute.xlu0 %1714
    %v1717 = vmul.f32 %v1712, %v1715
    %1719 = vrot.lane.b32.xlu0 %v1717, 126
    %v1720 = vpop.permute.xlu0 %1719
    %v1722 = vmul.f32 %v1717, %v1720
    %1724 = vrot.lane.b32.xlu0 %v1722, 127
    %v1725 = vpop.permute.xlu0 %1724
    %v1727 = vmul.f32 %v1722, %v1725
    %v1728 = vperm.slane %v1333, 3
    %v1729 = vmul.f32 %v1335, %v1728
    %v1730 = vsub.f32 1.0, %v1729
    %1732 = vrot.lane.b32.xlu0 %v1730, 112
    %v1733 = vpop.permute.xlu0 %1732
    %v1735 = vmul.f32 %v1730, %v1733
    %1737 = vrot.lane.b32.xlu0 %v1735, 120
    %v1738 = vpop.permute.xlu0 %1737
    %v1740 = vmul.f32 %v1735, %v1738
    %1742 = vrot.lane.b32.xlu0 %v1740, 124
    %v1743 = vpop.permute.xlu0 %1742
    %v1745 = vmul.f32 %v1740, %v1743
    %1747 = vrot.lane.b32.xlu0 %v1745, 126
    %v1748 = vpop.permute.xlu0 %1747
    %v1750 = vmul.f32 %v1745, %v1748
    %1752 = vrot.lane.b32.xlu0 %v1750, 127
    %v1753 = vpop.permute.xlu0 %1752
    %v1755 = vmul.f32 %v1750, %v1753
    %v1756 = vperm.slane %v1334, 3
    %v1757 = vmul.f32 %v1330, %v1756
    %v1758 = vsub.f32 1.0, %v1757
    %1760 = vrot.lane.b32.xlu0 %v1758, 112
    %v1761 = vpop.permute.xlu0 %1760
    %v1763 = vmul.f32 %v1758, %v1761
    %1765 = vrot.lane.b32.xlu0 %v1763, 120
    %v1766 = vpop.permute.xlu0 %1765
    %v1768 = vmul.f32 %v1763, %v1766
    %1770 = vrot.lane.b32.xlu0 %v1768, 124
    %v1771 = vpop.permute.xlu0 %1770
    %v1773 = vmul.f32 %v1768, %v1771
    %1775 = vrot.lane.b32.xlu0 %v1773, 126
    %v1776 = vpop.permute.xlu0 %1775
    %v1778 = vmul.f32 %v1773, %v1776
    %1780 = vrot.lane.b32.xlu0 %v1778, 127
    %v1781 = vpop.permute.xlu0 %1780
    %v1783 = vmul.f32 %v1778, %v1781
    %v1784 = vsub.f32 1.0, %v1391
    %v1785 = vsub.f32 1.0, %v1503
    %v1786 = vsub.f32 1.0, %v1615
    %v1787 = vsub.f32 1.0, %v1727
    %1789 = vrot.lane.b32.xlu0 %v1475, 1
    %v1790 = vpop.permute.xlu0 %1789
    %1793 = vrot.lane.b32.xlu0 %v1587, 2
    %v1794 = vpop.permute.xlu0 %1793
    %1797 = vrot.lane.b32.xlu0 %v1699, 3
    %v1798 = vpop.permute.xlu0 %1797
    %1801 = vrot.lane.b32.xlu0 %v1784, 4
    %v1802 = vpop.permute.xlu0 %1801
    %1805 = vrot.lane.b32.xlu0 %v1785, 5
    %v1806 = vpop.permute.xlu0 %1805
    %1809 = vrot.lane.b32.xlu0 %v1786, 6
    %v1810 = vpop.permute.xlu0 %1809
    %1813 = vrot.lane.b32.xlu0 %v1787, 7
    %v1814 = vpop.permute.xlu0 %1813
    %v1816 = vsel %vm628, %v1363, %v1790
    %v1817 = vsel %vm630, %v1816, %v1794
    %v1818 = vsel %vm57, %v1817, %v1798
    %v1819 = vsel %vm633, %v1818, %v1802
    %v1820 = vsel %vm39, %v1819, %v1806
    %v1821 = vsel %vm636, %v1820, %v1810
    %v1822 = vsel %vm638, %v1821, %v1814
    %v1823 = vsub.f32 1.0, %v1447
    %v1824 = vsub.f32 1.0, %v1559
    %v1825 = vsub.f32 1.0, %v1671
    %v1826 = vsub.f32 1.0, %v1783
    %1828 = vrot.lane.b32.xlu0 %v1531, 1
    %v1829 = vpop.permute.xlu0 %1828
    %1832 = vrot.lane.b32.xlu0 %v1643, 2
    %v1833 = vpop.permute.xlu0 %1832
    %1836 = vrot.lane.b32.xlu0 %v1755, 3
    %v1837 = vpop.permute.xlu0 %1836
    %1840 = vrot.lane.b32.xlu0 %v1823, 4
    %v1841 = vpop.permute.xlu0 %1840
    %1844 = vrot.lane.b32.xlu0 %v1824, 5
    %v1845 = vpop.permute.xlu0 %1844
    %1848 = vrot.lane.b32.xlu0 %v1825, 6
    %v1849 = vpop.permute.xlu0 %1848
    %1852 = vrot.lane.b32.xlu0 %v1826, 7
    %v1853 = vpop.permute.xlu0 %1852
    %v1855 = vsel %vm628, %v1419, %v1829
    %v1856 = vsel %vm630, %v1855, %v1833
    %v1857 = vsel %vm57, %v1856, %v1837
    %v1858 = vsel %vm633, %v1857, %v1841
    %v1859 = vsel %vm39, %v1858, %v1845
    %v1860 = vsel %vm636, %v1859, %v1849
    %v1861 = vsel %vm638, %v1860, %v1853
    %1863 = vrot.lane.b32.xlu0 %v1822, 4
    %v1864 = vpop.permute.xlu0 %1863
    %v1866 = vsel %vm633, %v1281, %v1864
    %vm1867 = vcmask 97280
    %v1868 = vsel %vm1867, %v1866, 0.0
    %1870 = vrot.lane.b32.xlu0 %v1861, 4
    %v1871 = vpop.permute.xlu0 %1870
    %v1873 = vsel %vm633, %v1298, %v1871
    %v1874 = vsel %vm1867, %v1873, 0.0
    %v1875 = vld [vmem:[#allocation2 + $0xb0] sm:$0xf]
    %v1876 = vld [vmem:[#allocation2 + $0xb8] sm:$0xf]
    %v1877 = vld [vmem:[#allocation2 + $0xc0] sm:$0xf]
    %v1878 = vld [vmem:[#allocation2 + $0xc8] sm:$0xf]
    %v1879 = vsub.f32 1.0, %v1868
    %v1880 = vsub.f32 1.0, %v1874
    %v1881 = vperm.slane %v1875, 0
    %v1882 = vmul.f32 %v1879, %v1881
    %v1883 = vsub.f32 1.0, %v1882
    %1885 = vrot.lane.b32.xlu0 %v1883, 120
    %v1886 = vpop.permute.xlu0 %1885
    %v1888 = vmul.f32 %v1883, %v1886
    %1890 = vrot.lane.b32.xlu0 %v1888, 124
    %v1891 = vpop.permute.xlu0 %1890
    %v1893 = vmul.f32 %v1888, %v1891
    %1895 = vrot.lane.b32.xlu0 %v1893, 126
    %v1896 = vpop.permute.xlu0 %1895
    %v1898 = vmul.f32 %v1893, %v1896
    %1900 = vrot.lane.b32.xlu0 %v1898, 127
    %v1901 = vpop.permute.xlu0 %1900
    %v1903 = vmul.f32 %v1898, %v1901
    %v1904 = vperm.slane %v1876, 0
    %v1905 = vmul.f32 %v1868, %v1904
    %v1906 = vsub.f32 1.0, %v1905
    %1908 = vrot.lane.b32.xlu0 %v1906, 120
    %v1909 = vpop.permute.xlu0 %1908
    %v1911 = vmul.f32 %v1906, %v1909
    %1913 = vrot.lane.b32.xlu0 %v1911, 124
    %v1914 = vpop.permute.xlu0 %1913
    %v1916 = vmul.f32 %v1911, %v1914
    %1918 = vrot.lane.b32.xlu0 %v1916, 126
    %v1919 = vpop.permute.xlu0 %1918
    %v1921 = vmul.f32 %v1916, %v1919
    %1923 = vrot.lane.b32.xlu0 %v1921, 127
    %v1924 = vpop.permute.xlu0 %1923
    %v1926 = vmul.f32 %v1921, %v1924
    %v1927 = vperm.slane %v1877, 0
    %v1928 = vmul.f32 %v1880, %v1927
    %v1929 = vsub.f32 1.0, %v1928
    %1931 = vrot.lane.b32.xlu0 %v1929, 120
    %v1932 = vpop.permute.xlu0 %1931
    %v1934 = vmul.f32 %v1929, %v1932
    %1936 = vrot.lane.b32.xlu0 %v1934, 124
    %v1937 = vpop.permute.xlu0 %1936
    %v1939 = vmul.f32 %v1934, %v1937
    %1941 = vrot.lane.b32.xlu0 %v1939, 126
    %v1942 = vpop.permute.xlu0 %1941
    %v1944 = vmul.f32 %v1939, %v1942
    %1946 = vrot.lane.b32.xlu0 %v1944, 127
    %v1947 = vpop.permute.xlu0 %1946
    %v1949 = vmul.f32 %v1944, %v1947
    %v1950 = vperm.slane %v1878, 0
    %v1951 = vmul.f32 %v1874, %v1950
    %v1952 = vsub.f32 1.0, %v1951
    %1954 = vrot.lane.b32.xlu0 %v1952, 120
    %v1955 = vpop.permute.xlu0 %1954
    %v1957 = vmul.f32 %v1952, %v1955
    %1959 = vrot.lane.b32.xlu0 %v1957, 124
    %v1960 = vpop.permute.xlu0 %1959
    %v1962 = vmul.f32 %v1957, %v1960
    %1964 = vrot.lane.b32.xlu0 %v1962, 126
    %v1965 = vpop.permute.xlu0 %1964
    %v1967 = vmul.f32 %v1962, %v1965
    %1969 = vrot.lane.b32.xlu0 %v1967, 127
    %v1970 = vpop.permute.xlu0 %1969
    %v1972 = vmul.f32 %v1967, %v1970
    %v1973 = vperm.slane %v1875, 1
    %v1974 = vmul.f32 %v1879, %v1973
    %v1975 = vsub.f32 1.0, %v1974
    %1977 = vrot.lane.b32.xlu0 %v1975, 120
    %v1978 = vpop.permute.xlu0 %1977
    %v1980 = vmul.f32 %v1975, %v1978
    %1982 = vrot.lane.b32.xlu0 %v1980, 124
    %v1983 = vpop.permute.xlu0 %1982
    %v1985 = vmul.f32 %v1980, %v1983
    %1987 = vrot.lane.b32.xlu0 %v1985, 126
    %v1988 = vpop.permute.xlu0 %1987
    %v1990 = vmul.f32 %v1985, %v1988
    %1992 = vrot.lane.b32.xlu0 %v1990, 127
    %v1993 = vpop.permute.xlu0 %1992
    %v1995 = vmul.f32 %v1990, %v1993
    %v1996 = vperm.slane %v1876, 1
    %v1997 = vmul.f32 %v1868, %v1996
    %v1998 = vsub.f32 1.0, %v1997
    %2000 = vrot.lane.b32.xlu0 %v1998, 120
    %v2001 = vpop.permute.xlu0 %2000
    %v2003 = vmul.f32 %v1998, %v2001
    %2005 = vrot.lane.b32.xlu0 %v2003, 124
    %v2006 = vpop.permute.xlu0 %2005
    %v2008 = vmul.f32 %v2003, %v2006
    %2010 = vrot.lane.b32.xlu0 %v2008, 126
    %v2011 = vpop.permute.xlu0 %2010
    %v2013 = vmul.f32 %v2008, %v2011
    %2015 = vrot.lane.b32.xlu0 %v2013, 127
    %v2016 = vpop.permute.xlu0 %2015
    %v2018 = vmul.f32 %v2013, %v2016
    %v2019 = vperm.slane %v1877, 1
    %v2020 = vmul.f32 %v1880, %v2019
    %v2021 = vsub.f32 1.0, %v2020
    %2023 = vrot.lane.b32.xlu0 %v2021, 120
    %v2024 = vpop.permute.xlu0 %2023
    %v2026 = vmul.f32 %v2021, %v2024
    %2028 = vrot.lane.b32.xlu0 %v2026, 124
    %v2029 = vpop.permute.xlu0 %2028
    %v2031 = vmul.f32 %v2026, %v2029
    %2033 = vrot.lane.b32.xlu0 %v2031, 126
    %v2034 = vpop.permute.xlu0 %2033
    %v2036 = vmul.f32 %v2031, %v2034
    %2038 = vrot.lane.b32.xlu0 %v2036, 127
    %v2039 = vpop.permute.xlu0 %2038
    %v2041 = vmul.f32 %v2036, %v2039
    %v2042 = vperm.slane %v1878, 1
    %v2043 = vmul.f32 %v1874, %v2042
    %v2044 = vsub.f32 1.0, %v2043
    %2046 = vrot.lane.b32.xlu0 %v2044, 120
    %v2047 = vpop.permute.xlu0 %2046
    %v2049 = vmul.f32 %v2044, %v2047
    %2051 = vrot.lane.b32.xlu0 %v2049, 124
    %v2052 = vpop.permute.xlu0 %2051
    %v2054 = vmul.f32 %v2049, %v2052
    %2056 = vrot.lane.b32.xlu0 %v2054, 126
    %v2057 = vpop.permute.xlu0 %2056
    %v2059 = vmul.f32 %v2054, %v2057
    %2061 = vrot.lane.b32.xlu0 %v2059, 127
    %v2062 = vpop.permute.xlu0 %2061
    %v2064 = vmul.f32 %v2059, %v2062
    %v2065 = vperm.slane %v1875, 2
    %v2066 = vmul.f32 %v1879, %v2065
    %v2067 = vsub.f32 1.0, %v2066
    %2069 = vrot.lane.b32.xlu0 %v2067, 120
    %v2070 = vpop.permute.xlu0 %2069
    %v2072 = vmul.f32 %v2067, %v2070
    %2074 = vrot.lane.b32.xlu0 %v2072, 124
    %v2075 = vpop.permute.xlu0 %2074
    %v2077 = vmul.f32 %v2072, %v2075
    %2079 = vrot.lane.b32.xlu0 %v2077, 126
    %v2080 = vpop.permute.xlu0 %2079
    %v2082 = vmul.f32 %v2077, %v2080
    %2084 = vrot.lane.b32.xlu0 %v2082, 127
    %v2085 = vpop.permute.xlu0 %2084
    %v2087 = vmul.f32 %v2082, %v2085
    %v2088 = vperm.slane %v1876, 2
    %v2089 = vmul.f32 %v1868, %v2088
    %v2090 = vsub.f32 1.0, %v2089
    %2092 = vrot.lane.b32.xlu0 %v2090, 120
    %v2093 = vpop.permute.xlu0 %2092
    %v2095 = vmul.f32 %v2090, %v2093
    %2097 = vrot.lane.b32.xlu0 %v2095, 124
    %v2098 = vpop.permute.xlu0 %2097
    %v2100 = vmul.f32 %v2095, %v2098
    %2102 = vrot.lane.b32.xlu0 %v2100, 126
    %v2103 = vpop.permute.xlu0 %2102
    %v2105 = vmul.f32 %v2100, %v2103
    %2107 = vrot.lane.b32.xlu0 %v2105, 127
    %v2108 = vpop.permute.xlu0 %2107
    %v2110 = vmul.f32 %v2105, %v2108
    %v2111 = vperm.slane %v1877, 2
    %v2112 = vmul.f32 %v1880, %v2111
    %v2113 = vsub.f32 1.0, %v2112
    %2115 = vrot.lane.b32.xlu0 %v2113, 120
    %v2116 = vpop.permute.xlu0 %2115
    %v2118 = vmul.f32 %v2113, %v2116
    %2120 = vrot.lane.b32.xlu0 %v2118, 124
    %v2121 = vpop.permute.xlu0 %2120
    %v2123 = vmul.f32 %v2118, %v2121
    %2125 = vrot.lane.b32.xlu0 %v2123, 126
    %v2126 = vpop.permute.xlu0 %2125
    %v2128 = vmul.f32 %v2123, %v2126
    %2130 = vrot.lane.b32.xlu0 %v2128, 127
    %v2131 = vpop.permute.xlu0 %2130
    %v2133 = vmul.f32 %v2128, %v2131
    %v2134 = vperm.slane %v1878, 2
    %v2135 = vmul.f32 %v1874, %v2134
    %v2136 = vsub.f32 1.0, %v2135
    %2138 = vrot.lane.b32.xlu0 %v2136, 120
    %v2139 = vpop.permute.xlu0 %2138
    %v2141 = vmul.f32 %v2136, %v2139
    %2143 = vrot.lane.b32.xlu0 %v2141, 124
    %v2144 = vpop.permute.xlu0 %2143
    %v2146 = vmul.f32 %v2141, %v2144
    %2148 = vrot.lane.b32.xlu0 %v2146, 126
    %v2149 = vpop.permute.xlu0 %2148
    %v2151 = vmul.f32 %v2146, %v2149
    %2153 = vrot.lane.b32.xlu0 %v2151, 127
    %v2154 = vpop.permute.xlu0 %2153
    %v2156 = vmul.f32 %v2151, %v2154
    %v2157 = vperm.slane %v1875, 3
    %v2158 = vmul.f32 %v1879, %v2157
    %v2159 = vsub.f32 1.0, %v2158
    %2161 = vrot.lane.b32.xlu0 %v2159, 120
    %v2162 = vpop.permute.xlu0 %2161
    %v2164 = vmul.f32 %v2159, %v2162
    %2166 = vrot.lane.b32.xlu0 %v2164, 124
    %v2167 = vpop.permute.xlu0 %2166
    %v2169 = vmul.f32 %v2164, %v2167
    %2171 = vrot.lane.b32.xlu0 %v2169, 126
    %v2172 = vpop.permute.xlu0 %2171
    %v2174 = vmul.f32 %v2169, %v2172
    %2176 = vrot.lane.b32.xlu0 %v2174, 127
    %v2177 = vpop.permute.xlu0 %2176
    %v2179 = vmul.f32 %v2174, %v2177
    %v2180 = vperm.slane %v1876, 3
    %v2181 = vmul.f32 %v1868, %v2180
    %v2182 = vsub.f32 1.0, %v2181
    %2184 = vrot.lane.b32.xlu0 %v2182, 120
    %v2185 = vpop.permute.xlu0 %2184
    %v2187 = vmul.f32 %v2182, %v2185
    %2189 = vrot.lane.b32.xlu0 %v2187, 124
    %v2190 = vpop.permute.xlu0 %2189
    %v2192 = vmul.f32 %v2187, %v2190
    %2194 = vrot.lane.b32.xlu0 %v2192, 126
    %v2195 = vpop.permute.xlu0 %2194
    %v2197 = vmul.f32 %v2192, %v2195
    %2199 = vrot.lane.b32.xlu0 %v2197, 127
    %v2200 = vpop.permute.xlu0 %2199
    %v2202 = vmul.f32 %v2197, %v2200
    %v2203 = vperm.slane %v1877, 3
    %v2204 = vmul.f32 %v1880, %v2203
    %v2205 = vsub.f32 1.0, %v2204
    %2207 = vrot.lane.b32.xlu0 %v2205, 120
    %v2208 = vpop.permute.xlu0 %2207
    %v2210 = vmul.f32 %v2205, %v2208
    %2212 = vrot.lane.b32.xlu0 %v2210, 124
    %v2213 = vpop.permute.xlu0 %2212
    %v2215 = vmul.f32 %v2210, %v2213
    %2217 = vrot.lane.b32.xlu0 %v2215, 126
    %v2218 = vpop.permute.xlu0 %2217
    %v2220 = vmul.f32 %v2215, %v2218
    %2222 = vrot.lane.b32.xlu0 %v2220, 127
    %v2223 = vpop.permute.xlu0 %2222
    %v2225 = vmul.f32 %v2220, %v2223
    %v2226 = vperm.slane %v1878, 3
    %v2227 = vmul.f32 %v1874, %v2226
    %v2228 = vsub.f32 1.0, %v2227
    %2230 = vrot.lane.b32.xlu0 %v2228, 120
    %v2231 = vpop.permute.xlu0 %2230
    %v2233 = vmul.f32 %v2228, %v2231
    %2235 = vrot.lane.b32.xlu0 %v2233, 124
    %v2236 = vpop.permute.xlu0 %2235
    %v2238 = vmul.f32 %v2233, %v2236
    %2240 = vrot.lane.b32.xlu0 %v2238, 126
    %v2241 = vpop.permute.xlu0 %2240
    %v2243 = vmul.f32 %v2238, %v2241
    %2245 = vrot.lane.b32.xlu0 %v2243, 127
    %v2246 = vpop.permute.xlu0 %2245
    %v2248 = vmul.f32 %v2243, %v2246
    %v2249 = vsub.f32 1.0, %v1926
    %v2250 = vsub.f32 1.0, %v2018
    %v2251 = vsub.f32 1.0, %v2110
    %v2252 = vsub.f32 1.0, %v2202
    %2254 = vrot.lane.b32.xlu0 %v1995, 1
    %v2255 = vpop.permute.xlu0 %2254
    %2258 = vrot.lane.b32.xlu0 %v2087, 2
    %v2259 = vpop.permute.xlu0 %2258
    %2262 = vrot.lane.b32.xlu0 %v2179, 3
    %v2263 = vpop.permute.xlu0 %2262
    %2266 = vrot.lane.b32.xlu0 %v2249, 4
    %v2267 = vpop.permute.xlu0 %2266
    %2270 = vrot.lane.b32.xlu0 %v2250, 5
    %v2271 = vpop.permute.xlu0 %2270
    %2274 = vrot.lane.b32.xlu0 %v2251, 6
    %v2275 = vpop.permute.xlu0 %2274
    %2278 = vrot.lane.b32.xlu0 %v2252, 7
    %v2279 = vpop.permute.xlu0 %2278
    %v2281 = vsel %vm628, %v1903, %v2255
    %v2282 = vsel %vm630, %v2281, %v2259
    %v2283 = vsel %vm57, %v2282, %v2263
    %v2284 = vsel %vm633, %v2283, %v2267
    %v2285 = vsel %vm39, %v2284, %v2271
    %v2286 = vsel %vm636, %v2285, %v2275
    %v2287 = vsel %vm638, %v2286, %v2279
    %v2288 = vsub.f32 1.0, %v1972
    %v2289 = vsub.f32 1.0, %v2064
    %v2290 = vsub.f32 1.0, %v2156
    %v2291 = vsub.f32 1.0, %v2248
    %2293 = vrot.lane.b32.xlu0 %v2041, 1
    %v2294 = vpop.permute.xlu0 %2293
    %2297 = vrot.lane.b32.xlu0 %v2133, 2
    %v2298 = vpop.permute.xlu0 %2297
    %2301 = vrot.lane.b32.xlu0 %v2225, 3
    %v2302 = vpop.permute.xlu0 %2301
    %2305 = vrot.lane.b32.xlu0 %v2288, 4
    %v2306 = vpop.permute.xlu0 %2305
    %2309 = vrot.lane.b32.xlu0 %v2289, 5
    %v2310 = vpop.permute.xlu0 %2309
    %2313 = vrot.lane.b32.xlu0 %v2290, 6
    %v2314 = vpop.permute.xlu0 %2313
    %2317 = vrot.lane.b32.xlu0 %v2291, 7
    %v2318 = vpop.permute.xlu0 %2317
    %v2320 = vsel %vm628, %v1949, %v2294
    %v2321 = vsel %vm630, %v2320, %v2298
    %v2322 = vsel %vm57, %v2321, %v2302
    %v2323 = vsel %vm633, %v2322, %v2306
    %v2324 = vsel %vm39, %v2323, %v2310
    %v2325 = vsel %vm636, %v2324, %v2314
    %v2326 = vsel %vm638, %v2325, %v2318
    %v2327 = vld [vmem:[#allocation2 + $0xd0] sm:$0x7]
    %v2328 = vld [vmem:[#allocation2 + $0xd8] sm:$0x7]
    %v2329 = vld [vmem:[#allocation2 + $0xe0] sm:$0x7]
    %v2330 = vld [vmem:[#allocation2 + $0xe8] sm:$0x7]
    %v2331 = vsub.f32 1.0, %v2287
    %v2332 = vsub.f32 1.0, %v2326
    %v2333 = vperm.slane %v2327, 0
    %v2334 = vmul.f32 %v2331, %v2333
    %v2335 = vsub.f32 1.0, %v2334
    %2337 = vrot.lane.b32.xlu0 %v2335, 124
    %v2338 = vpop.permute.xlu0 %2337
    %v2340 = vmul.f32 %v2335, %v2338
    %2342 = vrot.lane.b32.xlu0 %v2340, 126
    %v2343 = vpop.permute.xlu0 %2342
    %v2345 = vmul.f32 %v2340, %v2343
    %2347 = vrot.lane.b32.xlu0 %v2345, 127
    %v2348 = vpop.permute.xlu0 %2347
    %v2350 = vmul.f32 %v2345, %v2348
    %v2351 = vperm.slane %v2328, 0
    %v2352 = vmul.f32 %v2287, %v2351
    %v2353 = vsub.f32 1.0, %v2352
    %2355 = vrot.lane.b32.xlu0 %v2353, 124
    %v2356 = vpop.permute.xlu0 %2355
    %v2358 = vmul.f32 %v2353, %v2356
    %2360 = vrot.lane.b32.xlu0 %v2358, 126
    %v2361 = vpop.permute.xlu0 %2360
    %v2363 = vmul.f32 %v2358, %v2361
    %2365 = vrot.lane.b32.xlu0 %v2363, 127
    %v2366 = vpop.permute.xlu0 %2365
    %v2368 = vmul.f32 %v2363, %v2366
    %v2369 = vperm.slane %v2329, 0
    %v2370 = vmul.f32 %v2332, %v2369
    %v2371 = vsub.f32 1.0, %v2370
    %2373 = vrot.lane.b32.xlu0 %v2371, 124
    %v2374 = vpop.permute.xlu0 %2373
    %v2376 = vmul.f32 %v2371, %v2374
    %2378 = vrot.lane.b32.xlu0 %v2376, 126
    %v2379 = vpop.permute.xlu0 %2378
    %v2381 = vmul.f32 %v2376, %v2379
    %2383 = vrot.lane.b32.xlu0 %v2381, 127
    %v2384 = vpop.permute.xlu0 %2383
    %v2386 = vmul.f32 %v2381, %v2384
    %v2387 = vperm.slane %v2330, 0
    %v2388 = vmul.f32 %v2326, %v2387
    %v2389 = vsub.f32 1.0, %v2388
    %2391 = vrot.lane.b32.xlu0 %v2389, 124
    %v2392 = vpop.permute.xlu0 %2391
    %v2394 = vmul.f32 %v2389, %v2392
    %2396 = vrot.lane.b32.xlu0 %v2394, 126
    %v2397 = vpop.permute.xlu0 %2396
    %v2399 = vmul.f32 %v2394, %v2397
    %2401 = vrot.lane.b32.xlu0 %v2399, 127
    %v2402 = vpop.permute.xlu0 %2401
    %v2404 = vmul.f32 %v2399, %v2402
    %v2405 = vperm.slane %v2327, 1
    %v2406 = vmul.f32 %v2331, %v2405
    %v2407 = vsub.f32 1.0, %v2406
    %2409 = vrot.lane.b32.xlu0 %v2407, 124
    %v2410 = vpop.permute.xlu0 %2409
    %v2412 = vmul.f32 %v2407, %v2410
    %2414 = vrot.lane.b32.xlu0 %v2412, 126
    %v2415 = vpop.permute.xlu0 %2414
    %v2417 = vmul.f32 %v2412, %v2415
    %2419 = vrot.lane.b32.xlu0 %v2417, 127
    %v2420 = vpop.permute.xlu0 %2419
    %v2422 = vmul.f32 %v2417, %v2420
    %v2423 = vperm.slane %v2328, 1
    %v2424 = vmul.f32 %v2287, %v2423
    %v2425 = vsub.f32 1.0, %v2424
    %2427 = vrot.lane.b32.xlu0 %v2425, 124
    %v2428 = vpop.permute.xlu0 %2427
    %v2430 = vmul.f32 %v2425, %v2428
    %2432 = vrot.lane.b32.xlu0 %v2430, 126
    %v2433 = vpop.permute.xlu0 %2432
    %v2435 = vmul.f32 %v2430, %v2433
    %2437 = vrot.lane.b32.xlu0 %v2435, 127
    %v2438 = vpop.permute.xlu0 %2437
    %v2440 = vmul.f32 %v2435, %v2438
    %v2441 = vperm.slane %v2329, 1
    %v2442 = vmul.f32 %v2332, %v2441
    %v2443 = vsub.f32 1.0, %v2442
    %2445 = vrot.lane.b32.xlu0 %v2443, 124
    %v2446 = vpop.permute.xlu0 %2445
    %v2448 = vmul.f32 %v2443, %v2446
    %2450 = vrot.lane.b32.xlu0 %v2448, 126
    %v2451 = vpop.permute.xlu0 %2450
    %v2453 = vmul.f32 %v2448, %v2451
    %2455 = vrot.lane.b32.xlu0 %v2453, 127
    %v2456 = vpop.permute.xlu0 %2455
    %v2458 = vmul.f32 %v2453, %v2456
    %v2459 = vperm.slane %v2330, 1
    %v2460 = vmul.f32 %v2326, %v2459
    %v2461 = vsub.f32 1.0, %v2460
    %2463 = vrot.lane.b32.xlu0 %v2461, 124
    %v2464 = vpop.permute.xlu0 %2463
    %v2466 = vmul.f32 %v2461, %v2464
    %2468 = vrot.lane.b32.xlu0 %v2466, 126
    %v2469 = vpop.permute.xlu0 %2468
    %v2471 = vmul.f32 %v2466, %v2469
    %2473 = vrot.lane.b32.xlu0 %v2471, 127
    %v2474 = vpop.permute.xlu0 %2473
    %v2476 = vmul.f32 %v2471, %v2474
    %v2477 = vperm.slane %v2327, 2
    %v2478 = vmul.f32 %v2331, %v2477
    %v2479 = vsub.f32 1.0, %v2478
    %2481 = vrot.lane.b32.xlu0 %v2479, 124
    %v2482 = vpop.permute.xlu0 %2481
    %v2484 = vmul.f32 %v2479, %v2482
    %2486 = vrot.lane.b32.xlu0 %v2484, 126
    %v2487 = vpop.permute.xlu0 %2486
    %v2489 = vmul.f32 %v2484, %v2487
    %2491 = vrot.lane.b32.xlu0 %v2489, 127
    %v2492 = vpop.permute.xlu0 %2491
    %v2494 = vmul.f32 %v2489, %v2492
    %v2495 = vperm.slane %v2328, 2
    %v2496 = vmul.f32 %v2287, %v2495
    %v2497 = vsub.f32 1.0, %v2496
    %2499 = vrot.lane.b32.xlu0 %v2497, 124
    %v2500 = vpop.permute.xlu0 %2499
    %v2502 = vmul.f32 %v2497, %v2500
    %2504 = vrot.lane.b32.xlu0 %v2502, 126
    %v2505 = vpop.permute.xlu0 %2504
    %v2507 = vmul.f32 %v2502, %v2505
    %2509 = vrot.lane.b32.xlu0 %v2507, 127
    %v2510 = vpop.permute.xlu0 %2509
    %v2512 = vmul.f32 %v2507, %v2510
    %v2513 = vperm.slane %v2329, 2
    %v2514 = vmul.f32 %v2332, %v2513
    %v2515 = vsub.f32 1.0, %v2514
    %2517 = vrot.lane.b32.xlu0 %v2515, 124
    %v2518 = vpop.permute.xlu0 %2517
    %v2520 = vmul.f32 %v2515, %v2518
    %2522 = vrot.lane.b32.xlu0 %v2520, 126
    %v2523 = vpop.permute.xlu0 %2522
    %v2525 = vmul.f32 %v2520, %v2523
    %2527 = vrot.lane.b32.xlu0 %v2525, 127
    %v2528 = vpop.permute.xlu0 %2527
    %v2530 = vmul.f32 %v2525, %v2528
    %v2531 = vperm.slane %v2330, 2
    %v2532 = vmul.f32 %v2326, %v2531
    %v2533 = vsub.f32 1.0, %v2532
    %2535 = vrot.lane.b32.xlu0 %v2533, 124
    %v2536 = vpop.permute.xlu0 %2535
    %v2538 = vmul.f32 %v2533, %v2536
    %2540 = vrot.lane.b32.xlu0 %v2538, 126
    %v2541 = vpop.permute.xlu0 %2540
    %v2543 = vmul.f32 %v2538, %v2541
    %2545 = vrot.lane.b32.xlu0 %v2543, 127
    %v2546 = vpop.permute.xlu0 %2545
    %v2548 = vmul.f32 %v2543, %v2546
    %v2549 = vld [vmem:[#allocation2 + $0xf0] sm:$0x7]
    %v2550 = vld [vmem:[#allocation2 + $0xf8] sm:$0x7]
    %v2551 = vld [vmem:[#allocation2 + $0x100] sm:$0x7]
    %v2552 = vld [vmem:[#allocation2 + $0x108] sm:$0x7]
    %v2553 = vperm.slane %v2549, 0
    %v2554 = vmul.f32 %v1879, %v2553
    %v2555 = vsub.f32 1.0, %v2554
    %2557 = vrot.lane.b32.xlu0 %v2555, 120
    %v2558 = vpop.permute.xlu0 %2557
    %v2560 = vmul.f32 %v2555, %v2558
    %2562 = vrot.lane.b32.xlu0 %v2560, 124
    %v2563 = vpop.permute.xlu0 %2562
    %v2565 = vmul.f32 %v2560, %v2563
    %2567 = vrot.lane.b32.xlu0 %v2565, 126
    %v2568 = vpop.permute.xlu0 %2567
    %v2570 = vmul.f32 %v2565, %v2568
    %2572 = vrot.lane.b32.xlu0 %v2570, 127
    %v2573 = vpop.permute.xlu0 %2572
    %v2575 = vmul.f32 %v2570, %v2573
    %v2576 = vperm.slane %v2550, 0
    %v2577 = vmul.f32 %v1868, %v2576
    %v2578 = vsub.f32 1.0, %v2577
    %2580 = vrot.lane.b32.xlu0 %v2578, 120
    %v2581 = vpop.permute.xlu0 %2580
    %v2583 = vmul.f32 %v2578, %v2581
    %2585 = vrot.lane.b32.xlu0 %v2583, 124
    %v2586 = vpop.permute.xlu0 %2585
    %v2588 = vmul.f32 %v2583, %v2586
    %2590 = vrot.lane.b32.xlu0 %v2588, 126
    %v2591 = vpop.permute.xlu0 %2590
    %v2593 = vmul.f32 %v2588, %v2591
    %2595 = vrot.lane.b32.xlu0 %v2593, 127
    %v2596 = vpop.permute.xlu0 %2595
    %v2598 = vmul.f32 %v2593, %v2596
    %v2599 = vperm.slane %v2551, 0
    %v2600 = vmul.f32 %v1880, %v2599
    %v2601 = vsub.f32 1.0, %v2600
    %2603 = vrot.lane.b32.xlu0 %v2601, 120
    %v2604 = vpop.permute.xlu0 %2603
    %v2606 = vmul.f32 %v2601, %v2604
    %2608 = vrot.lane.b32.xlu0 %v2606, 124
    %v2609 = vpop.permute.xlu0 %2608
    %v2611 = vmul.f32 %v2606, %v2609
    %2613 = vrot.lane.b32.xlu0 %v2611, 126
    %v2614 = vpop.permute.xlu0 %2613
    %v2616 = vmul.f32 %v2611, %v2614
    %2618 = vrot.lane.b32.xlu0 %v2616, 127
    %v2619 = vpop.permute.xlu0 %2618
    %v2621 = vmul.f32 %v2616, %v2619
    %v2622 = vperm.slane %v2552, 0
    %v2623 = vmul.f32 %v1874, %v2622
    %v2624 = vsub.f32 1.0, %v2623
    %2626 = vrot.lane.b32.xlu0 %v2624, 120
    %v2627 = vpop.permute.xlu0 %2626
    %v2629 = vmul.f32 %v2624, %v2627
    %2631 = vrot.lane.b32.xlu0 %v2629, 124
    %v2632 = vpop.permute.xlu0 %2631
    %v2634 = vmul.f32 %v2629, %v2632
    %2636 = vrot.lane.b32.xlu0 %v2634, 126
    %v2637 = vpop.permute.xlu0 %2636
    %v2639 = vmul.f32 %v2634, %v2637
    %2641 = vrot.lane.b32.xlu0 %v2639, 127
    %v2642 = vpop.permute.xlu0 %2641
    %v2644 = vmul.f32 %v2639, %v2642
    %v2645 = vmul.f32 %v2350, %v2575
    %v2646 = vmul.f32 %v2368, %v2598
    %v2647 = vmul.f32 %v2386, %v2621
    %v2648 = vmul.f32 %v2404, %v2644
    %v2649 = vperm.slane %v2549, 1
    %v2650 = vmul.f32 %v1879, %v2649
    %v2651 = vsub.f32 1.0, %v2650
    %2653 = vrot.lane.b32.xlu0 %v2651, 120
    %v2654 = vpop.permute.xlu0 %2653
    %v2656 = vmul.f32 %v2651, %v2654
    %2658 = vrot.lane.b32.xlu0 %v2656, 124
    %v2659 = vpop.permute.xlu0 %2658
    %v2661 = vmul.f32 %v2656, %v2659
    %2663 = vrot.lane.b32.xlu0 %v2661, 126
    %v2664 = vpop.permute.xlu0 %2663
    %v2666 = vmul.f32 %v2661, %v2664
    %2668 = vrot.lane.b32.xlu0 %v2666, 127
    %v2669 = vpop.permute.xlu0 %2668
    %v2671 = vmul.f32 %v2666, %v2669
    %v2672 = vperm.slane %v2550, 1
    %v2673 = vmul.f32 %v1868, %v2672
    %v2674 = vsub.f32 1.0, %v2673
    %2676 = vrot.lane.b32.xlu0 %v2674, 120
    %v2677 = vpop.permute.xlu0 %2676
    %v2679 = vmul.f32 %v2674, %v2677
    %2681 = vrot.lane.b32.xlu0 %v2679, 124
    %v2682 = vpop.permute.xlu0 %2681
    %v2684 = vmul.f32 %v2679, %v2682
    %2686 = vrot.lane.b32.xlu0 %v2684, 126
    %v2687 = vpop.permute.xlu0 %2686
    %v2689 = vmul.f32 %v2684, %v2687
    %2691 = vrot.lane.b32.xlu0 %v2689, 127
    %v2692 = vpop.permute.xlu0 %2691
    %v2694 = vmul.f32 %v2689, %v2692
    %v2695 = vperm.slane %v2551, 1
    %v2696 = vmul.f32 %v1880, %v2695
    %v2697 = vsub.f32 1.0, %v2696
    %2699 = vrot.lane.b32.xlu0 %v2697, 120
    %v2700 = vpop.permute.xlu0 %2699
    %v2702 = vmul.f32 %v2697, %v2700
    %2704 = vrot.lane.b32.xlu0 %v2702, 124
    %v2705 = vpop.permute.xlu0 %2704
    %v2707 = vmul.f32 %v2702, %v2705
    %2709 = vrot.lane.b32.xlu0 %v2707, 126
    %v2710 = vpop.permute.xlu0 %2709
    %v2712 = vmul.f32 %v2707, %v2710
    %2714 = vrot.lane.b32.xlu0 %v2712, 127
    %v2715 = vpop.permute.xlu0 %2714
    %v2717 = vmul.f32 %v2712, %v2715
    %v2718 = vperm.slane %v2552, 1
    %v2719 = vmul.f32 %v1874, %v2718
    %v2720 = vsub.f32 1.0, %v2719
    %2722 = vrot.lane.b32.xlu0 %v2720, 120
    %v2723 = vpop.permute.xlu0 %2722
    %v2725 = vmul.f32 %v2720, %v2723
    %2727 = vrot.lane.b32.xlu0 %v2725, 124
    %v2728 = vpop.permute.xlu0 %2727
    %v2730 = vmul.f32 %v2725, %v2728
    %2732 = vrot.lane.b32.xlu0 %v2730, 126
    %v2733 = vpop.permute.xlu0 %2732
    %v2735 = vmul.f32 %v2730, %v2733
    %2737 = vrot.lane.b32.xlu0 %v2735, 127
    %v2738 = vpop.permute.xlu0 %2737
    %v2740 = vmul.f32 %v2735, %v2738
    %v2741 = vmul.f32 %v2422, %v2671
    %v2742 = vmul.f32 %v2440, %v2694
    %v2743 = vmul.f32 %v2458, %v2717
    %v2744 = vmul.f32 %v2476, %v2740
    %v2745 = vperm.slane %v2549, 2
    %v2746 = vmul.f32 %v1879, %v2745
    %v2747 = vsub.f32 1.0, %v2746
    %2749 = vrot.lane.b32.xlu0 %v2747, 120
    %v2750 = vpop.permute.xlu0 %2749
    %v2752 = vmul.f32 %v2747, %v2750
    %2754 = vrot.lane.b32.xlu0 %v2752, 124
    %v2755 = vpop.permute.xlu0 %2754
    %v2757 = vmul.f32 %v2752, %v2755
    %2759 = vrot.lane.b32.xlu0 %v2757, 126
    %v2760 = vpop.permute.xlu0 %2759
    %v2762 = vmul.f32 %v2757, %v2760
    %2764 = vrot.lane.b32.xlu0 %v2762, 127
    %v2765 = vpop.permute.xlu0 %2764
    %v2767 = vmul.f32 %v2762, %v2765
    %v2768 = vperm.slane %v2550, 2
    %v2769 = vmul.f32 %v1868, %v2768
    %v2770 = vsub.f32 1.0, %v2769
    %2772 = vrot.lane.b32.xlu0 %v2770, 120
    %v2773 = vpop.permute.xlu0 %2772
    %v2775 = vmul.f32 %v2770, %v2773
    %2777 = vrot.lane.b32.xlu0 %v2775, 124
    %v2778 = vpop.permute.xlu0 %2777
    %v2780 = vmul.f32 %v2775, %v2778
    %2782 = vrot.lane.b32.xlu0 %v2780, 126
    %v2783 = vpop.permute.xlu0 %2782
    %v2785 = vmul.f32 %v2780, %v2783
    %2787 = vrot.lane.b32.xlu0 %v2785, 127
    %v2788 = vpop.permute.xlu0 %2787
    %v2790 = vmul.f32 %v2785, %v2788
    %v2791 = vperm.slane %v2551, 2
    %v2792 = vmul.f32 %v1880, %v2791
    %v2793 = vsub.f32 1.0, %v2792
    %2795 = vrot.lane.b32.xlu0 %v2793, 120
    %v2796 = vpop.permute.xlu0 %2795
    %v2798 = vmul.f32 %v2793, %v2796
    %2800 = vrot.lane.b32.xlu0 %v2798, 124
    %v2801 = vpop.permute.xlu0 %2800
    %v2803 = vmul.f32 %v2798, %v2801
    %2805 = vrot.lane.b32.xlu0 %v2803, 126
    %v2806 = vpop.permute.xlu0 %2805
    %v2808 = vmul.f32 %v2803, %v2806
    %2810 = vrot.lane.b32.xlu0 %v2808, 127
    %v2811 = vpop.permute.xlu0 %2810
    %v2813 = vmul.f32 %v2808, %v2811
    %v2814 = vperm.slane %v2552, 2
    %v2815 = vmul.f32 %v1874, %v2814
    %v2816 = vsub.f32 1.0, %v2815
    %2818 = vrot.lane.b32.xlu0 %v2816, 120
    %v2819 = vpop.permute.xlu0 %2818
    %v2821 = vmul.f32 %v2816, %v2819
    %2823 = vrot.lane.b32.xlu0 %v2821, 124
    %v2824 = vpop.permute.xlu0 %2823
    %v2826 = vmul.f32 %v2821, %v2824
    %2828 = vrot.lane.b32.xlu0 %v2826, 126
    %v2829 = vpop.permute.xlu0 %2828
    %v2831 = vmul.f32 %v2826, %v2829
    %2833 = vrot.lane.b32.xlu0 %v2831, 127
    %v2834 = vpop.permute.xlu0 %2833
    %v2836 = vmul.f32 %v2831, %v2834
    %v2837 = vmul.f32 %v2494, %v2767
    %v2838 = vmul.f32 %v2512, %v2790
    %v2839 = vmul.f32 %v2530, %v2813
    %v2840 = vmul.f32 %v2548, %v2836
    %v2841 = vsub.f32 1.0, %v2646
    %v2842 = vsub.f32 1.0, %v2742
    %v2843 = vsub.f32 1.0, %v2838
    %2845 = vrot.lane.b32.xlu0 %v2741, 1
    %v2846 = vpop.permute.xlu0 %2845
    %2849 = vrot.lane.b32.xlu0 %v2837, 2
    %v2850 = vpop.permute.xlu0 %2849
    %2853 = vrot.lane.b32.xlu0 %v2841, 3
    %v2854 = vpop.permute.xlu0 %2853
    %2857 = vrot.lane.b32.xlu0 %v2842, 4
    %v2858 = vpop.permute.xlu0 %2857
    %2861 = vrot.lane.b32.xlu0 %v2843, 5
    %v2862 = vpop.permute.xlu0 %2861
    %v2864 = vsel %vm628, %v2645, %v2846
    %v2865 = vsel %vm630, %v2864, %v2850
    %v2866 = vsel %vm57, %v2865, %v2854
    %v2867 = vsel %vm633, %v2866, %v2858
    %v2868 = vsel %vm39, %v2867, %v2862
    %v2869 = vsub.f32 1.0, %v2648
    %v2870 = vsub.f32 1.0, %v2744
    %v2871 = vsub.f32 1.0, %v2840
    %2873 = vrot.lane.b32.xlu0 %v2743, 1
    %v2874 = vpop.permute.xlu0 %2873
    %2877 = vrot.lane.b32.xlu0 %v2839, 2
    %v2878 = vpop.permute.xlu0 %2877
    %2881 = vrot.lane.b32.xlu0 %v2869, 3
    %v2882 = vpop.permute.xlu0 %2881
    %2885 = vrot.lane.b32.xlu0 %v2870, 4
    %v2886 = vpop.permute.xlu0 %2885
    %2889 = vrot.lane.b32.xlu0 %v2871, 5
    %v2890 = vpop.permute.xlu0 %2889
    %v2892 = vsel %vm628, %v2647, %v2874
    %v2893 = vsel %vm630, %v2892, %v2878
    %v2894 = vsel %vm57, %v2893, %v2882
    %v2895 = vsel %vm633, %v2894, %v2886
    %v2896 = vsel %vm39, %v2895, %v2890
    %v2897 = vsel %vm636, %v2868, 0.0
    %v2898 = vsel %vm636, %v2896, 0.0
    %v2899 = vld [vmem:[#allocation2 + $0x110] sm:$0xff]
    %v2900 = vld [vmem:[#allocation2 + $0x118] sm:$0xf]
    %v2901 = vld [vmem:[#allocation2 + $0x120] sm:$0x1]
    %v2902 = vperm.slane %v2899, 0
    %2904 = vrot.lane.b32.xlu0 %v2902, 16
    %v2905 = vpop.permute.xlu0 %2904
    %v2907 = vmul.f32 %v27, %v2905
    %2909 = vrot.lane.b32.xlu0 %v2907, 112
    %v2910 = vpop.permute.xlu0 %2909
    %v2912 = vsel %vm1327, %v2910, 0.0
    %2913 = vadd.xlane.f32.xlu0 %v2912
    %v2914 = vpop.xlane.xlu0 %2913
    %v2915 = vperm.slane %v2899, 1
    %2917 = vrot.lane.b32.xlu0 %v2915, 16
    %v2918 = vpop.permute.xlu0 %2917
    %v2920 = vmul.f32 %v27, %v2918
    %2922 = vrot.lane.b32.xlu0 %v2920, 112
    %v2923 = vpop.permute.xlu0 %2922
    %v2925 = vsel %vm1327, %v2923, 0.0
    %2926 = vadd.xlane.f32.xlu0 %v2925
    %v2927 = vpop.xlane.xlu0 %2926
    %v2928 = vperm.slane %v2899, 2
    %2930 = vrot.lane.b32.xlu0 %v2928, 16
    %v2931 = vpop.permute.xlu0 %2930
    %v2933 = vmul.f32 %v27, %v2931
    %2935 = vrot.lane.b32.xlu0 %v2933, 112
    %v2936 = vpop.permute.xlu0 %2935
    %v2938 = vsel %vm1327, %v2936, 0.0
    %2939 = vadd.xlane.f32.xlu0 %v2938
    %v2940 = vpop.xlane.xlu0 %2939
    %v2941 = vperm.slane %v2899, 3
    %2943 = vrot.lane.b32.xlu0 %v2941, 16
    %v2944 = vpop.permute.xlu0 %2943
    %v2946 = vmul.f32 %v27, %v2944
    %2948 = vrot.lane.b32.xlu0 %v2946, 112
    %v2949 = vpop.permute.xlu0 %2948
    %v2951 = vsel %vm1327, %v2949, 0.0
    %2952 = vadd.xlane.f32.xlu0 %v2951
    %v2953 = vpop.xlane.xlu0 %2952
    %v2954 = vperm.slane %v2899, 4
    %2956 = vrot.lane.b32.xlu0 %v2954, 16
    %v2957 = vpop.permute.xlu0 %2956
    %v2959 = vmul.f32 %v27, %v2957
    %2961 = vrot.lane.b32.xlu0 %v2959, 112
    %v2962 = vpop.permute.xlu0 %2961
    %v2964 = vsel %vm1327, %v2962, 0.0
    %2965 = vadd.xlane.f32.xlu0 %v2964
    %v2966 = vpop.xlane.xlu0 %2965
    %v2967 = vperm.slane %v2899, 5
    %2969 = vrot.lane.b32.xlu0 %v2967, 16
    %v2970 = vpop.permute.xlu0 %2969
    %v2972 = vmul.f32 %v27, %v2970
    %2974 = vrot.lane.b32.xlu0 %v2972, 112
    %v2975 = vpop.permute.xlu0 %2974
    %v2977 = vsel %vm1327, %v2975, 0.0
    %2978 = vadd.xlane.f32.xlu0 %v2977
    %v2979 = vpop.xlane.xlu0 %2978
    %v2980 = vperm.slane %v2899, 6
    %2982 = vrot.lane.b32.xlu0 %v2980, 16
    %v2983 = vpop.permute.xlu0 %2982
    %v2985 = vmul.f32 %v27, %v2983
    %2987 = vrot.lane.b32.xlu0 %v2985, 112
    %v2988 = vpop.permute.xlu0 %2987
    %v2990 = vsel %vm1327, %v2988, 0.0
    %2991 = vadd.xlane.f32.xlu0 %v2990
    %v2992 = vpop.xlane.xlu0 %2991
    %v2993 = vperm.slane %v2899, 7
    %2995 = vrot.lane.b32.xlu0 %v2993, 16
    %v2996 = vpop.permute.xlu0 %2995
    %v2998 = vmul.f32 %v27, %v2996
    %3000 = vrot.lane.b32.xlu0 %v2998, 112
    %v3001 = vpop.permute.xlu0 %3000
    %v3003 = vsel %vm1327, %v3001, 0.0
    %3004 = vadd.xlane.f32.xlu0 %v3003
    %v3005 = vpop.xlane.xlu0 %3004
    %v3006 = vperm.slane %v2900, 0
    %3008 = vrot.lane.b32.xlu0 %v3006, 16
    %v3009 = vpop.permute.xlu0 %3008
    %v3011 = vmul.f32 %v27, %v3009
    %3013 = vrot.lane.b32.xlu0 %v3011, 112
    %v3014 = vpop.permute.xlu0 %3013
    %v3016 = vsel %vm1327, %v3014, 0.0
    %3017 = vadd.xlane.f32.xlu0 %v3016
    %v3018 = vpop.xlane.xlu0 %3017
    %v3019 = vperm.slane %v2900, 1
    %3021 = vrot.lane.b32.xlu0 %v3019, 16
    %v3022 = vpop.permute.xlu0 %3021
    %v3024 = vmul.f32 %v27, %v3022
    %3026 = vrot.lane.b32.xlu0 %v3024, 112
    %v3027 = vpop.permute.xlu0 %3026
    %v3029 = vsel %vm1327, %v3027, 0.0
    %3030 = vadd.xlane.f32.xlu0 %v3029
    %v3031 = vpop.xlane.xlu0 %3030
    %v3032 = vperm.slane %v2900, 2
    %3034 = vrot.lane.b32.xlu0 %v3032, 16
    %v3035 = vpop.permute.xlu0 %3034
    %v3037 = vmul.f32 %v27, %v3035
    %3039 = vrot.lane.b32.xlu0 %v3037, 112
    %v3040 = vpop.permute.xlu0 %3039
    %v3042 = vsel %vm1327, %v3040, 0.0
    %3043 = vadd.xlane.f32.xlu0 %v3042
    %v3044 = vpop.xlane.xlu0 %3043
    %v3045 = vperm.slane %v2900, 3
    %3047 = vrot.lane.b32.xlu0 %v3045, 16
    %v3048 = vpop.permute.xlu0 %3047
    %v3050 = vmul.f32 %v27, %v3048
    %3052 = vrot.lane.b32.xlu0 %v3050, 112
    %v3053 = vpop.permute.xlu0 %3052
    %v3055 = vsel %vm1327, %v3053, 0.0
    %3056 = vadd.xlane.f32.xlu0 %v3055
    %v3057 = vpop.xlane.xlu0 %3056
    %v3058 = vsel %vm628, %v2914, %v2927
    %v3059 = vsel %vm630, %v3058, %v2940
    %v3060 = vsel %vm57, %v3059, %v2953
    %v3061 = vsel %vm633, %v3060, %v2966
    %v3062 = vsel %vm39, %v3061, %v2979
    %v3063 = vsel %vm636, %v3062, %v2992
    %v3064 = vsel %vm638, %v3063, %v3005
    %v3065 = vsel %vm1310, %v3064, %v3018
    %vm3066 = vcmask 72704
    %v3067 = vsel %vm3066, %v3065, %v3031
    %v3068 = vsel %vm41, %v3067, %v3044
    %vm3069 = vcmask 89088
    %v3070 = vsel %vm3069, %v3068, %v3057
    %v3071 = vperm.slane %v2901, 0
    %v3072 = vadd.f32 %v3070, %v3071
    %v3073 = vmul.f32 %v2897, %v3072
    %v3074 = vsel %vm636, %v3073, 0.0
    %3075 = vadd.xlane.f32.xlu0 %v3074
    %v3076 = vpop.xlane.xlu0 %3075
    %3078 = vrot.lane.b32.xlu0 %v3072, 122
    %v3079 = vpop.permute.xlu0 %3078
    %v3081 = vmul.f32 %v2897, %v3079
    %v3082 = vsel %vm636, %v3081, 0.0
    %3083 = vadd.xlane.f32.xlu0 %v3082
    %v3084 = vpop.xlane.xlu0 %3083
    %v3085 = vmul.f32 %v2898, %v3072
    %v3086 = vsel %vm636, %v3085, 0.0
    %3087 = vadd.xlane.f32.xlu0 %v3086
    %v3088 = vpop.xlane.xlu0 %3087
    %v3089 = vmul.f32 %v2898, %v3079
    %v3090 = vsel %vm636, %v3089, 0.0
    %3091 = vadd.xlane.f32.xlu0 %v3090
    %v3092 = vpop.xlane.xlu0 %3091
    %v3093 = vsel %vm628, %v3076, %v3084
    %v3094 = vsel %vm630, %v3093, %v3088
    %v3095 = vsel %vm57, %v3094, %v3092
    %3096 = vst.msk [vmem:[%s2] sm:$0xff] %vm633, %v3095
    // Predicated region
    $region14: #{forward.1} parent=1 // pred_check
      _
    $region15: #{forward.1} parent=1 // pred_check_branch
      %3098 = sbr.rel (0) target = $region17
    $region16: #{forward.1} parent=1 // pred_region
      _
    $region17: #{forward.1} parent=1 // pred_fallthru
      _
    // Predicated region
    $region18: #{forward.1} parent=1 // pred_check
      _
    $region19: #{forward.1} parent=1 // pred_check_branch
      %3100 = sbr.rel (0) target = $region21
    $region20: #{forward.1} parent=1 // pred_region
      _
    $region21: #{forward.1} parent=1 // pred_fallthru
      _
    %3101 = vsyncpa [#allocation3], 1

</llo_original>
